<compile_context>
chip_gen: v5e
topology: v5e:2x2
jax: 0.10.0
libtpu: 0.0.40
codegen_flags: <defaults>
</compile_context>

<pallas_src>
import numpy as np
import jax
import jax.numpy as jnp
from jax.experimental import pallas as pl
from jax.experimental.pallas import tpu as pltpu

F_IN = 13           # num_features
HID = 50            # LSTM hidden size
HP = 128            # per-gate padded hidden dim (lane-tile aligned)
PRED = 240          # prediction_size
PRED_PAD = 256      # padded output lanes (multiple of 128)
FC1, FC2 = 64, 32


# ------------------------- kernel -------------------------

def make_kernel(T, B):
    def kernel(x_ref,
               w1ih_ref, w1hh_ref, b1_ref,
               w2ih_ref, w2hh_ref, b2_ref,
               w3ih_ref, w3hh_ref, b3_ref,
               wf1_ref, bf1_ref, wf2_ref, bf2_ref, wf3_ref, bf3_ref,
               out_ref,
               seq_scr, proj_scr):

        def run_layer(in_seq, wih_ref, whh_ref, b_ref, write_seq):
            # Hoisted input projection for ALL timesteps: one big matmul + one
            # bias add instead of T small per-step matmuls / broadcasts.
            proj_scr[...] = (
                jnp.dot(in_seq, wih_ref[...], preferred_element_type=jnp.float32)
                + b_ref[...])                                     # (T*B, 4*HP)
            whh = whh_ref[...]                                    # (HP, 4*HP)
            h = jnp.zeros((B, HP), jnp.float32)
            c = jnp.zeros((B, HP), jnp.float32)
            # Fully unrolled recurrence (T static & small): only h @ W_hh stays
            # on the serial critical path.
            for t in range(T):
                gates = proj_scr[pl.ds(t * B, B), :] + jnp.dot(
                    h, whh, preferred_element_type=jnp.float32)   # (B, 4*HP)
                s = jax.nn.sigmoid(gates)       # single activation pass over fused gates
                i_g = s[:, 0 * HP:1 * HP]
                f_g = s[:, 1 * HP:2 * HP]
                # g-gate columns were pre-scaled by 2: tanh(x) = 2*sigmoid(2x) - 1
                g_g = 2.0 * s[:, 2 * HP:3 * HP] - 1.0
                o_g = s[:, 3 * HP:4 * HP]
                c = f_g * c + i_g * g_g
                h = o_g * jnp.tanh(c)
                if write_seq:
                    seq_scr[pl.ds(t * B, B), :] = h
            return h

        # lstm1 -> lstm2 -> lstm3 (dropout1/2/3 are identity in eval mode)
        run_layer(x_ref[...], w1ih_ref, w1hh_ref, b1_ref, True)
        run_layer(seq_scr[...], w2ih_ref, w2hh_ref, b2_ref, True)
        h_last = run_layer(seq_scr[...], w3ih_ref, w3hh_ref, b3_ref, False)

        # MLP head: fc1 + ReLU, fc2 + ReLU, fc3 (dropout4/5 identity)
        z = jnp.maximum(
            jnp.dot(h_last, wf1_ref[...], preferred_element_type=jnp.float32)
            + bf1_ref[...], 0.0)
        z = jnp.maximum(
            jnp.dot(z, wf2_ref[...], preferred_element_type=jnp.float32)
            + bf2_ref[...], 0.0)
        out_ref[...] = (
            jnp.dot(z, wf3_ref[...], preferred_element_type=jnp.float32)
            + bf3_ref[...])

    return kernel


def lstm_model_forward(x, params):
    """x: (B, T, F_IN) float32 -> (B, PRED) float32."""
    B, T, _ = x.shape
    xt = jnp.swapaxes(x, 0, 1).reshape(T * B, F_IN)   # time-major, flattened

    args = [xt, *params]
    vmem = pl.BlockSpec(memory_space=pltpu.MemorySpace.VMEM)
    out = pl.pallas_call(
        make_kernel(T, B),
        out_shape=jax.ShapeDtypeStruct((B, PRED_PAD), jnp.float32),
        in_specs=[vmem] * len(args),
        out_specs=vmem,
        scratch_shapes=[
            pltpu.VMEM((T * B, HP), jnp.float32),       # hidden sequence of current layer
            pltpu.VMEM((T * B, 4 * HP), jnp.float32),   # hoisted input projections
        ],
    )(*args)
    return out[:, :PRED]


# ------------------------- parameter construction -------------------------

def _uniform(key, shape, bound):
    return jax.random.uniform(key, shape, jnp.float32, -bound, bound)


def init_raw_params(key):
    """PyTorch-style init: LSTM U(-1/sqrt(H), 1/sqrt(H)); Linear U(-1/sqrt(fan_in), .)."""
    keys = iter(jax.random.split(key, 32))
    raw = {}
    s = 1.0 / np.sqrt(HID)
    for name, din in (("l1", F_IN), ("l2", HID), ("l3", HID)):
        raw[name] = dict(
            w_ih=_uniform(next(keys), (4 * HID, din), s),
            w_hh=_uniform(next(keys), (4 * HID, HID), s),
            b_ih=_uniform(next(keys), (4 * HID,), s),
            b_hh=_uniform(next(keys), (4 * HID,), s))
    for name, din, dout in (("fc1", HID, FC1), ("fc2", FC1, FC2), ("fc3", FC2, PRED)):
        b = 1.0 / np.sqrt(din)
        raw[name] = dict(w=_uniform(next(keys), (dout, din), b),
                         b=_uniform(next(keys), (dout,), b))
    return raw


def _pad_to(a, shape):
    return jnp.pad(a, [(0, t - s) for s, t in zip(a.shape, shape)])


def pack_params_for_kernel(raw):
    # Fold tanh(x) = 2*sigmoid(2x) - 1 into the g-gate (index 2) columns.
    gate_scale = jnp.array([1.0, 1.0, 2.0, 1.0], jnp.float32)

    def pack_lstm(p, din, din_pad):
        # PyTorch layout: w_ih (4H, din), w_hh (4H, H), gate order (i, f, g, o)
        wih = p["w_ih"].reshape(4, HID, din).transpose(0, 2, 1)   # (4, din, H)
        whh = p["w_hh"].reshape(4, HID, HID).transpose(0, 2, 1)   # (4, H, H)
        b = (p["b_ih"] + p["b_hh"]).reshape(4, HID)               # (4, H)
        wih = wih * gate_scale[:, None, None]
        whh = whh * gate_scale[:, None, None]
        b = b * gate_scale[:, None]
        # zero-pad per-gate H -> HP (lanes) and input dim -> din_pad, fuse gates on lanes
        wih_p = _pad_to(wih, (4, din_pad, HP)).transpose(1, 0, 2).reshape(din_pad, 4 * HP)
        whh_p = _pad_to(whh, (4, HP, HP)).transpose(1, 0, 2).reshape(HP, 4 * HP)
        b_p = _pad_to(b, (4, HP)).reshape(1, 4 * HP)
        return wih_p, whh_p, b_p

    def pack_fc(p, din_pad, dout_pad):
        w = _pad_to(p["w"].T, (din_pad, dout_pad))
        b = _pad_to(p["b"].reshape(1, -1), (1, dout_pad))
        return w, b

    out = []
    out.extend(pack_lstm(raw["l1"], F_IN, F_IN))
    out.extend(pack_lstm(raw["l2"], HID, HP))
    out.extend(pack_lstm(raw["l3"], HID, HP))
    out.extend(pack_fc(raw["fc1"], HP, FC1))
    out.extend(pack_fc(raw["fc2"], FC1, FC2))
    out.extend(pack_fc(raw["fc3"], FC2, PRED_PAD))
    return tuple(out)


# ------------------------- pure-JAX reference -------------------------

def _lstm_ref(x, p):
    B = x.shape[0]
    h = jnp.zeros((B, HID), jnp.float32)
    c = jnp.zeros((B, HID), jnp.float32)

    def step(carry, x_t):
        h, c = carry
        gates = x_t @ p["w_ih"].T + h @ p["w_hh"].T + p["b_ih"] + p["b_hh"]
        i, f, g, o = jnp.split(gates, 4, axis=-1)
        i, f, g, o = jax.nn.sigmoid(i), jax.nn.sigmoid(f), jnp.tanh(g), jax.nn.sigmoid(o)
        c = f * c + i * g
        h = o * jnp.tanh(c)
        return (h, c), h

    (_, _), hs = jax.lax.scan(step, (h, c), jnp.swapaxes(x, 0, 1))
    return jnp.swapaxes(hs, 0, 1)                  # (B, T, H)


def forward_ref(x, raw):
    out = _lstm_ref(x, raw["l1"])
    out = _lstm_ref(out, raw["l2"])
    out = _lstm_ref(out, raw["l3"])[:, -1, :]
    out = jnp.maximum(out @ raw["fc1"]["w"].T + raw["fc1"]["b"], 0.0)
    out = jnp.maximum(out @ raw["fc2"]["w"].T + raw["fc2"]["b"], 0.0)
    return out @ raw["fc3"]["w"].T + raw["fc3"]["b"]


# ------------------------- main -------------------------

if __name__ == "__main__":
    key = jax.random.PRNGKey(0)
    k_x, k_p = jax.random.split(key)

    B, T = 2, 8
    x = jax.random.normal(k_x, (B, T, F_IN), jnp.float32)

    raw = init_raw_params(k_p)
    packed = pack_params_for_kernel(raw)

    y = jax.block_until_ready(lstm_model_forward(x, packed))

    y_ref = jax.block_until_ready(forward_ref(x, raw))
    np.testing.assert_allclose(np.asarray(y), np.asarray(y_ref), rtol=2e-3, atol=2e-3)

    assert y.shape == (B, PRED) and y.dtype == jnp.float32
    print("KERNEL_OK")
</pallas_src>

<mosaic_0001>
module attributes {stable_mosaic.version = 11 : i64} {
  func.func @kernel(%arg0: memref<16x13xf32, #tpu.memory_space<vmem>>, %arg1: memref<13x512xf32, #tpu.memory_space<vmem>>, %arg2: memref<128x512xf32, #tpu.memory_space<vmem>>, %arg3: memref<1x512xf32, #tpu.memory_space<vmem>>, %arg4: memref<128x512xf32, #tpu.memory_space<vmem>>, %arg5: memref<128x512xf32, #tpu.memory_space<vmem>>, %arg6: memref<1x512xf32, #tpu.memory_space<vmem>>, %arg7: memref<128x512xf32, #tpu.memory_space<vmem>>, %arg8: memref<128x512xf32, #tpu.memory_space<vmem>>, %arg9: memref<1x512xf32, #tpu.memory_space<vmem>>, %arg10: memref<128x64xf32, #tpu.memory_space<vmem>>, %arg11: memref<1x64xf32, #tpu.memory_space<vmem>>, %arg12: memref<64x32xf32, #tpu.memory_space<vmem>>, %arg13: memref<1x32xf32, #tpu.memory_space<vmem>>, %arg14: memref<32x256xf32, #tpu.memory_space<vmem>>, %arg15: memref<1x256xf32, #tpu.memory_space<vmem>>, %arg16: memref<2x256xf32, #tpu.memory_space<vmem>>, %arg17: memref<16x128xf32, #tpu.memory_space<vmem>>, %arg18: memref<16x512xf32, #tpu.memory_space<vmem>>) attributes {dimension_semantics = [], scalar_prefetch = 0 : i64, scratch_operands = 2 : i64, tpu.core_type = #tpu.core_type<tc>} {
    %c0 = arith.constant 0 : index
    %c0_0 = arith.constant 0 : index
    %0 = vector.load %arg0[%c0, %c0_0] : memref<16x13xf32, #tpu.memory_space<vmem>>, vector<16x13xf32>
    %c0_1 = arith.constant 0 : index
    %c0_2 = arith.constant 0 : index
    %1 = vector.load %arg1[%c0_1, %c0_2] : memref<13x512xf32, #tpu.memory_space<vmem>>, vector<13x512xf32>
    %cst = arith.constant dense<0.000000e+00> : vector<16x512xf32>
    %2 = tpu.matmul %0, %1, %cst {dimension_numbers = #tpu.dot_dimension_numbers<[1], [0], [0], [1], [0, 0, 1, 1], [], []>} : vector<16x13xf32>, vector<13x512xf32>, vector<16x512xf32> -> vector<16x512xf32>
    %c0_3 = arith.constant 0 : index
    %c0_4 = arith.constant 0 : index
    %3 = vector.load %arg3[%c0_3, %c0_4] : memref<1x512xf32, #tpu.memory_space<vmem>>, vector<1x512xf32>
    %4 = vector.broadcast %3 : vector<1x512xf32> to vector<16x512xf32>
    %5 = arith.addf %2, %4 : vector<16x512xf32>
    %c0_5 = arith.constant 0 : index
    %c0_6 = arith.constant 0 : index
    %6 = vector.load %arg18[%c0_5, %c0_6] : memref<16x512xf32, #tpu.memory_space<vmem>>, vector<16x512xf32>
    tpu.vector_store %arg18[%c0_5, %c0_6], %5 {strides = array<i32>} : memref<16x512xf32, #tpu.memory_space<vmem>>, vector<16x512xf32>,
    %c0_7 = arith.constant 0 : index
    %c0_8 = arith.constant 0 : index
    %7 = vector.load %arg2[%c0_7, %c0_8] : memref<128x512xf32, #tpu.memory_space<vmem>>, vector<128x512xf32>
    %cst_9 = arith.constant 0.000000e+00 : f32
    %8 = vector.broadcast %cst_9 : f32 to vector<2x128xf32>
    %cst_10 = arith.constant 0.000000e+00 : f32
    %9 = vector.broadcast %cst_10 : f32 to vector<2x128xf32>
    %c0_11 = arith.constant 0 : index
    %c0_12 = arith.constant 0 : index
    %10 = vector.load %arg18[%c0_11, %c0_12] : memref<16x512xf32, #tpu.memory_space<vmem>>, vector<2x512xf32>
    %cst_13 = arith.constant dense<0.000000e+00> : vector<2x512xf32>
    %11 = tpu.matmul %8, %7, %cst_13 {dimension_numbers = #tpu.dot_dimension_numbers<[1], [0], [0], [1], [0, 0, 1, 1], [], []>} : vector<2x128xf32>, vector<128x512xf32>, vector<2x512xf32> -> vector<2x512xf32>
    %12 = arith.addf %10, %11 : vector<2x512xf32>
    %13 = arith.negf %12 : vector<2x512xf32>
    %14 = math.exp %13 : vector<2x512xf32>
    %cst_14 = arith.constant 1.000000e+00 : f32
    %15 = vector.broadcast %cst_14 : f32 to vector<2x512xf32>
    %16 = arith.addf %15, %14 : vector<2x512xf32>
    %17 = arith.divf %15, %16 : vector<2x512xf32>
    %18 = vector.extract_strided_slice %17 {offsets = [0, 0], sizes = [2, 128], strides = [1, 1]} : vector<2x512xf32> to vector<2x128xf32>
    %19 = vector.extract_strided_slice %17 {offsets = [0, 128], sizes = [2, 128], strides = [1, 1]} : vector<2x512xf32> to vector<2x128xf32>
    %20 = vector.extract_strided_slice %17 {offsets = [0, 256], sizes = [2, 128], strides = [1, 1]} : vector<2x512xf32> to vector<2x128xf32>
    %cst_15 = arith.constant 2.000000e+00 : f32
    %21 = vector.broadcast %cst_15 : f32 to vector<2x128xf32>
    %22 = arith.mulf %21, %20 : vector<2x128xf32>
    %cst_16 = arith.constant 1.000000e+00 : f32
    %23 = vector.broadcast %cst_16 : f32 to vector<2x128xf32>
    %24 = arith.subf %22, %23 : vector<2x128xf32>
    %25 = vector.extract_strided_slice %17 {offsets = [0, 384], sizes = [2, 128], strides = [1, 1]} : vector<2x512xf32> to vector<2x128xf32>
    %26 = arith.mulf %19, %9 : vector<2x128xf32>
    %27 = arith.mulf %18, %24 : vector<2x128xf32>
    %28 = arith.addf %26, %27 : vector<2x128xf32>
    %29 = math.tanh %28 : vector<2x128xf32>
    %30 = arith.mulf %25, %29 : vector<2x128xf32>
    %c0_17 = arith.constant 0 : index
    %c0_18 = arith.constant 0 : index
    %31 = vector.load %arg17[%c0_17, %c0_18] : memref<16x128xf32, #tpu.memory_space<vmem>>, vector<2x128xf32>
    tpu.vector_store %arg17[%c0_17, %c0_18], %30 {strides = array<i32>} : memref<16x128xf32, #tpu.memory_space<vmem>>, vector<2x128xf32>,
    %c2 = arith.constant 2 : index
    %c0_19 = arith.constant 0 : index
    %32 = vector.load %arg18[%c2, %c0_19] : memref<16x512xf32, #tpu.memory_space<vmem>>, vector<2x512xf32>
    %cst_20 = arith.constant dense<0.000000e+00> : vector<2x512xf32>
    %33 = tpu.matmul %30, %7, %cst_20 {dimension_numbers = #tpu.dot_dimension_numbers<[1], [0], [0], [1], [0, 0, 1, 1], [], []>} : vector<2x128xf32>, vector<128x512xf32>, vector<2x512xf32> -> vector<2x512xf32>
    %34 = arith.addf %32, %33 : vector<2x512xf32>
    %35 = arith.negf %34 : vector<2x512xf32>
    %36 = math.exp %35 : vector<2x512xf32>
    %cst_21 = arith.constant 1.000000e+00 : f32
    %37 = vector.broadcast %cst_21 : f32 to vector<2x512xf32>
    %38 = arith.addf %37, %36 : vector<2x512xf32>
    %39 = arith.divf %37, %38 : vector<2x512xf32>
    %40 = vector.extract_strided_slice %39 {offsets = [0, 0], sizes = [2, 128], strides = [1, 1]} : vector<2x512xf32> to vector<2x128xf32>
    %41 = vector.extract_strided_slice %39 {offsets = [0, 128], sizes = [2, 128], strides = [1, 1]} : vector<2x512xf32> to vector<2x128xf32>
    %42 = vector.extract_strided_slice %39 {offsets = [0, 256], sizes = [2, 128], strides = [1, 1]} : vector<2x512xf32> to vector<2x128xf32>
    %cst_22 = arith.constant 2.000000e+00 : f32
    %43 = vector.broadcast %cst_22 : f32 to vector<2x128xf32>
    %44 = arith.mulf %43, %42 : vector<2x128xf32>
    %cst_23 = arith.constant 1.000000e+00 : f32
    %45 = vector.broadcast %cst_23 : f32 to vector<2x128xf32>
    %46 = arith.subf %44, %45 : vector<2x128xf32>
    %47 = vector.extract_strided_slice %39 {offsets = [0, 384], sizes = [2, 128], strides = [1, 1]} : vector<2x512xf32> to vector<2x128xf32>
    %48 = arith.mulf %41, %28 : vector<2x128xf32>
    %49 = arith.mulf %40, %46 : vector<2x128xf32>
    %50 = arith.addf %48, %49 : vector<2x128xf32>
    %51 = math.tanh %50 : vector<2x128xf32>
    %52 = arith.mulf %47, %51 : vector<2x128xf32>
    %c2_24 = arith.constant 2 : index
    %c0_25 = arith.constant 0 : index
    %53 = vector.load %arg17[%c2_24, %c0_25] : memref<16x128xf32, #tpu.memory_space<vmem>>, vector<2x128xf32>
    tpu.vector_store %arg17[%c2_24, %c0_25], %52 {strides = array<i32>} : memref<16x128xf32, #tpu.memory_space<vmem>>, vector<2x128xf32>,
    %c4 = arith.constant 4 : index
    %c0_26 = arith.constant 0 : index
    %54 = vector.load %arg18[%c4, %c0_26] : memref<16x512xf32, #tpu.memory_space<vmem>>, vector<2x512xf32>
    %cst_27 = arith.constant dense<0.000000e+00> : vector<2x512xf32>
    %55 = tpu.matmul %52, %7, %cst_27 {dimension_numbers = #tpu.dot_dimension_numbers<[1], [0], [0], [1], [0, 0, 1, 1], [], []>} : vector<2x128xf32>, vector<128x512xf32>, vector<2x512xf32> -> vector<2x512xf32>
    %56 = arith.addf %54, %55 : vector<2x512xf32>
    %57 = arith.negf %56 : vector<2x512xf32>
    %58 = math.exp %57 : vector<2x512xf32>
    %cst_28 = arith.constant 1.000000e+00 : f32
    %59 = vector.broadcast %cst_28 : f32 to vector<2x512xf32>
    %60 = arith.addf %59, %58 : vector<2x512xf32>
    %61 = arith.divf %59, %60 : vector<2x512xf32>
    %62 = vector.extract_strided_slice %61 {offsets = [0, 0], sizes = [2, 128], strides = [1, 1]} : vector<2x512xf32> to vector<2x128xf32>
    %63 = vector.extract_strided_slice %61 {offsets = [0, 128], sizes = [2, 128], strides = [1, 1]} : vector<2x512xf32> to vector<2x128xf32>
    %64 = vector.extract_strided_slice %61 {offsets = [0, 256], sizes = [2, 128], strides = [1, 1]} : vector<2x512xf32> to vector<2x128xf32>
    %cst_29 = arith.constant 2.000000e+00 : f32
    %65 = vector.broadcast %cst_29 : f32 to vector<2x128xf32>
    %66 = arith.mulf %65, %64 : vector<2x128xf32>
    %cst_30 = arith.constant 1.000000e+00 : f32
    %67 = vector.broadcast %cst_30 : f32 to vector<2x128xf32>
    %68 = arith.subf %66, %67 : vector<2x128xf32>
    %69 = vector.extract_strided_slice %61 {offsets = [0, 384], sizes = [2, 128], strides = [1, 1]} : vector<2x512xf32> to vector<2x128xf32>
    %70 = arith.mulf %63, %50 : vector<2x128xf32>
    %71 = arith.mulf %62, %68 : vector<2x128xf32>
    %72 = arith.addf %70, %71 : vector<2x128xf32>
    %73 = math.tanh %72 : vector<2x128xf32>
    %74 = arith.mulf %69, %73 : vector<2x128xf32>
    %c4_31 = arith.constant 4 : index
    %c0_32 = arith.constant 0 : index
    %75 = vector.load %arg17[%c4_31, %c0_32] : memref<16x128xf32, #tpu.memory_space<vmem>>, vector<2x128xf32>
    tpu.vector_store %arg17[%c4_31, %c0_32], %74 {strides = array<i32>} : memref<16x128xf32, #tpu.memory_space<vmem>>, vector<2x128xf32>,
    %c6 = arith.constant 6 : index
    %c0_33 = arith.constant 0 : index
    %76 = vector.load %arg18[%c6, %c0_33] : memref<16x512xf32, #tpu.memory_space<vmem>>, vector<2x512xf32>
    %cst_34 = arith.constant dense<0.000000e+00> : vector<2x512xf32>
    %77 = tpu.matmul %74, %7, %cst_34 {dimension_numbers = #tpu.dot_dimension_numbers<[1], [0], [0], [1], [0, 0, 1, 1], [], []>} : vector<2x128xf32>, vector<128x512xf32>, vector<2x512xf32> -> vector<2x512xf32>
    %78 = arith.addf %76, %77 : vector<2x512xf32>
    %79 = arith.negf %78 : vector<2x512xf32>
    %80 = math.exp %79 : vector<2x512xf32>
    %cst_35 = arith.constant 1.000000e+00 : f32
    %81 = vector.broadcast %cst_35 : f32 to vector<2x512xf32>
    %82 = arith.addf %81, %80 : vector<2x512xf32>
    %83 = arith.divf %81, %82 : vector<2x512xf32>
    %84 = vector.extract_strided_slice %83 {offsets = [0, 0], sizes = [2, 128], strides = [1, 1]} : vector<2x512xf32> to vector<2x128xf32>
    %85 = vector.extract_strided_slice %83 {offsets = [0, 128], sizes = [2, 128], strides = [1, 1]} : vector<2x512xf32> to vector<2x128xf32>
    %86 = vector.extract_strided_slice %83 {offsets = [0, 256], sizes = [2, 128], strides = [1, 1]} : vector<2x512xf32> to vector<2x128xf32>
    %cst_36 = arith.constant 2.000000e+00 : f32
    %87 = vector.broadcast %cst_36 : f32 to vector<2x128xf32>
    %88 = arith.mulf %87, %86 : vector<2x128xf32>
    %cst_37 = arith.constant 1.000000e+00 : f32
    %89 = vector.broadcast %cst_37 : f32 to vector<2x128xf32>
    %90 = arith.subf %88, %89 : vector<2x128xf32>
    %91 = vector.extract_strided_slice %83 {offsets = [0, 384], sizes = [2, 128], strides = [1, 1]} : vector<2x512xf32> to vector<2x128xf32>
    %92 = arith.mulf %85, %72 : vector<2x128xf32>
    %93 = arith.mulf %84, %90 : vector<2x128xf32>
    %94 = arith.addf %92, %93 : vector<2x128xf32>
    %95 = math.tanh %94 : vector<2x128xf32>
    %96 = arith.mulf %91, %95 : vector<2x128xf32>
    %c6_38 = arith.constant 6 : index
    %c0_39 = arith.constant 0 : index
    %97 = vector.load %arg17[%c6_38, %c0_39] : memref<16x128xf32, #tpu.memory_space<vmem>>, vector<2x128xf32>
    tpu.vector_store %arg17[%c6_38, %c0_39], %96 {strides = array<i32>} : memref<16x128xf32, #tpu.memory_space<vmem>>, vector<2x128xf32>,
    %c8 = arith.constant 8 : index
    %c0_40 = arith.constant 0 : index
    %98 = vector.load %arg18[%c8, %c0_40] : memref<16x512xf32, #tpu.memory_space<vmem>>, vector<2x512xf32>
    %cst_41 = arith.constant dense<0.000000e+00> : vector<2x512xf32>
    %99 = tpu.matmul %96, %7, %cst_41 {dimension_numbers = #tpu.dot_dimension_numbers<[1], [0], [0], [1], [0, 0, 1, 1], [], []>} : vector<2x128xf32>, vector<128x512xf32>, vector<2x512xf32> -> vector<2x512xf32>
    %100 = arith.addf %98, %99 : vector<2x512xf32>
    %101 = arith.negf %100 : vector<2x512xf32>
    %102 = math.exp %101 : vector<2x512xf32>
    %cst_42 = arith.constant 1.000000e+00 : f32
    %103 = vector.broadcast %cst_42 : f32 to vector<2x512xf32>
    %104 = arith.addf %103, %102 : vector<2x512xf32>
    %105 = arith.divf %103, %104 : vector<2x512xf32>
    %106 = vector.extract_strided_slice %105 {offsets = [0, 0], sizes = [2, 128], strides = [1, 1]} : vector<2x512xf32> to vector<2x128xf32>
    %107 = vector.extract_strided_slice %105 {offsets = [0, 128], sizes = [2, 128], strides = [1, 1]} : vector<2x512xf32> to vector<2x128xf32>
    %108 = vector.extract_strided_slice %105 {offsets = [0, 256], sizes = [2, 128], strides = [1, 1]} : vector<2x512xf32> to vector<2x128xf32>
    %cst_43 = arith.constant 2.000000e+00 : f32
    %109 = vector.broadcast %cst_43 : f32 to vector<2x128xf32>
    %110 = arith.mulf %109, %108 : vector<2x128xf32>
    %cst_44 = arith.constant 1.000000e+00 : f32
    %111 = vector.broadcast %cst_44 : f32 to vector<2x128xf32>
    %112 = arith.subf %110, %111 : vector<2x128xf32>
    %113 = vector.extract_strided_slice %105 {offsets = [0, 384], sizes = [2, 128], strides = [1, 1]} : vector<2x512xf32> to vector<2x128xf32>
    %114 = arith.mulf %107, %94 : vector<2x128xf32>
    %115 = arith.mulf %106, %112 : vector<2x128xf32>
    %116 = arith.addf %114, %115 : vector<2x128xf32>
    %117 = math.tanh %116 : vector<2x128xf32>
    %118 = arith.mulf %113, %117 : vector<2x128xf32>
    %c8_45 = arith.constant 8 : index
    %c0_46 = arith.constant 0 : index
    %119 = vector.load %arg17[%c8_45, %c0_46] : memref<16x128xf32, #tpu.memory_space<vmem>>, vector<2x128xf32>
    tpu.vector_store %arg17[%c8_45, %c0_46], %118 {strides = array<i32>} : memref<16x128xf32, #tpu.memory_space<vmem>>, vector<2x128xf32>,
    %c10 = arith.constant 10 : index
    %c0_47 = arith.constant 0 : index
    %120 = vector.load %arg18[%c10, %c0_47] : memref<16x512xf32, #tpu.memory_space<vmem>>, vector<2x512xf32>
    %cst_48 = arith.constant dense<0.000000e+00> : vector<2x512xf32>
    %121 = tpu.matmul %118, %7, %cst_48 {dimension_numbers = #tpu.dot_dimension_numbers<[1], [0], [0], [1], [0, 0, 1, 1], [], []>} : vector<2x128xf32>, vector<128x512xf32>, vector<2x512xf32> -> vector<2x512xf32>
    %122 = arith.addf %120, %121 : vector<2x512xf32>
    %123 = arith.negf %122 : vector<2x512xf32>
    %124 = math.exp %123 : vector<2x512xf32>
    %cst_49 = arith.constant 1.000000e+00 : f32
    %125 = vector.broadcast %cst_49 : f32 to vector<2x512xf32>
    %126 = arith.addf %125, %124 : vector<2x512xf32>
    %127 = arith.divf %125, %126 : vector<2x512xf32>
    %128 = vector.extract_strided_slice %127 {offsets = [0, 0], sizes = [2, 128], strides = [1, 1]} : vector<2x512xf32> to vector<2x128xf32>
    %129 = vector.extract_strided_slice %127 {offsets = [0, 128], sizes = [2, 128], strides = [1, 1]} : vector<2x512xf32> to vector<2x128xf32>
    %130 = vector.extract_strided_slice %127 {offsets = [0, 256], sizes = [2, 128], strides = [1, 1]} : vector<2x512xf32> to vector<2x128xf32>
    %cst_50 = arith.constant 2.000000e+00 : f32
    %131 = vector.broadcast %cst_50 : f32 to vector<2x128xf32>
    %132 = arith.mulf %131, %130 : vector<2x128xf32>
    %cst_51 = arith.constant 1.000000e+00 : f32
    %133 = vector.broadcast %cst_51 : f32 to vector<2x128xf32>
    %134 = arith.subf %132, %133 : vector<2x128xf32>
    %135 = vector.extract_strided_slice %127 {offsets = [0, 384], sizes = [2, 128], strides = [1, 1]} : vector<2x512xf32> to vector<2x128xf32>
    %136 = arith.mulf %129, %116 : vector<2x128xf32>
    %137 = arith.mulf %128, %134 : vector<2x128xf32>
    %138 = arith.addf %136, %137 : vector<2x128xf32>
    %139 = math.tanh %138 : vector<2x128xf32>
    %140 = arith.mulf %135, %139 : vector<2x128xf32>
    %c10_52 = arith.constant 10 : index
    %c0_53 = arith.constant 0 : index
    %141 = vector.load %arg17[%c10_52, %c0_53] : memref<16x128xf32, #tpu.memory_space<vmem>>, vector<2x128xf32>
    tpu.vector_store %arg17[%c10_52, %c0_53], %140 {strides = array<i32>} : memref<16x128xf32, #tpu.memory_space<vmem>>, vector<2x128xf32>,
    %c12 = arith.constant 12 : index
    %c0_54 = arith.constant 0 : index
    %142 = vector.load %arg18[%c12, %c0_54] : memref<16x512xf32, #tpu.memory_space<vmem>>, vector<2x512xf32>
    %cst_55 = arith.constant dense<0.000000e+00> : vector<2x512xf32>
    %143 = tpu.matmul %140, %7, %cst_55 {dimension_numbers = #tpu.dot_dimension_numbers<[1], [0], [0], [1], [0, 0, 1, 1], [], []>} : vector<2x128xf32>, vector<128x512xf32>, vector<2x512xf32> -> vector<2x512xf32>
    %144 = arith.addf %142, %143 : vector<2x512xf32>
    %145 = arith.negf %144 : vector<2x512xf32>
    %146 = math.exp %145 : vector<2x512xf32>
    %cst_56 = arith.constant 1.000000e+00 : f32
    %147 = vector.broadcast %cst_56 : f32 to vector<2x512xf32>
    %148 = arith.addf %147, %146 : vector<2x512xf32>
    %149 = arith.divf %147, %148 : vector<2x512xf32>
    %150 = vector.extract_strided_slice %149 {offsets = [0, 0], sizes = [2, 128], strides = [1, 1]} : vector<2x512xf32> to vector<2x128xf32>
    %151 = vector.extract_strided_slice %149 {offsets = [0, 128], sizes = [2, 128], strides = [1, 1]} : vector<2x512xf32> to vector<2x128xf32>
    %152 = vector.extract_strided_slice %149 {offsets = [0, 256], sizes = [2, 128], strides = [1, 1]} : vector<2x512xf32> to vector<2x128xf32>
    %cst_57 = arith.constant 2.000000e+00 : f32
    %153 = vector.broadcast %cst_57 : f32 to vector<2x128xf32>
    %154 = arith.mulf %153, %152 : vector<2x128xf32>
    %cst_58 = arith.constant 1.000000e+00 : f32
    %155 = vector.broadcast %cst_58 : f32 to vector<2x128xf32>
    %156 = arith.subf %154, %155 : vector<2x128xf32>
    %157 = vector.extract_strided_slice %149 {offsets = [0, 384], sizes = [2, 128], strides = [1, 1]} : vector<2x512xf32> to vector<2x128xf32>
    %158 = arith.mulf %151, %138 : vector<2x128xf32>
    %159 = arith.mulf %150, %156 : vector<2x128xf32>
    %160 = arith.addf %158, %159 : vector<2x128xf32>
    %161 = math.tanh %160 : vector<2x128xf32>
    %162 = arith.mulf %157, %161 : vector<2x128xf32>
    %c12_59 = arith.constant 12 : index
    %c0_60 = arith.constant 0 : index
    %163 = vector.load %arg17[%c12_59, %c0_60] : memref<16x128xf32, #tpu.memory_space<vmem>>, vector<2x128xf32>
    tpu.vector_store %arg17[%c12_59, %c0_60], %162 {strides = array<i32>} : memref<16x128xf32, #tpu.memory_space<vmem>>, vector<2x128xf32>,
    %c14 = arith.constant 14 : index
    %c0_61 = arith.constant 0 : index
    %164 = vector.load %arg18[%c14, %c0_61] : memref<16x512xf32, #tpu.memory_space<vmem>>, vector<2x512xf32>
    %cst_62 = arith.constant dense<0.000000e+00> : vector<2x512xf32>
    %165 = tpu.matmul %162, %7, %cst_62 {dimension_numbers = #tpu.dot_dimension_numbers<[1], [0], [0], [1], [0, 0, 1, 1], [], []>} : vector<2x128xf32>, vector<128x512xf32>, vector<2x512xf32> -> vector<2x512xf32>
    %166 = arith.addf %164, %165 : vector<2x512xf32>
    %167 = arith.negf %166 : vector<2x512xf32>
    %168 = math.exp %167 : vector<2x512xf32>
    %cst_63 = arith.constant 1.000000e+00 : f32
    %169 = vector.broadcast %cst_63 : f32 to vector<2x512xf32>
    %170 = arith.addf %169, %168 : vector<2x512xf32>
    %171 = arith.divf %169, %170 : vector<2x512xf32>
    %172 = vector.extract_strided_slice %171 {offsets = [0, 0], sizes = [2, 128], strides = [1, 1]} : vector<2x512xf32> to vector<2x128xf32>
    %173 = vector.extract_strided_slice %171 {offsets = [0, 128], sizes = [2, 128], strides = [1, 1]} : vector<2x512xf32> to vector<2x128xf32>
    %174 = vector.extract_strided_slice %171 {offsets = [0, 256], sizes = [2, 128], strides = [1, 1]} : vector<2x512xf32> to vector<2x128xf32>
    %cst_64 = arith.constant 2.000000e+00 : f32
    %175 = vector.broadcast %cst_64 : f32 to vector<2x128xf32>
    %176 = arith.mulf %175, %174 : vector<2x128xf32>
    %cst_65 = arith.constant 1.000000e+00 : f32
    %177 = vector.broadcast %cst_65 : f32 to vector<2x128xf32>
    %178 = arith.subf %176, %177 : vector<2x128xf32>
    %179 = vector.extract_strided_slice %171 {offsets = [0, 384], sizes = [2, 128], strides = [1, 1]} : vector<2x512xf32> to vector<2x128xf32>
    %180 = arith.mulf %173, %160 : vector<2x128xf32>
    %181 = arith.mulf %172, %178 : vector<2x128xf32>
    %182 = arith.addf %180, %181 : vector<2x128xf32>
    %183 = math.tanh %182 : vector<2x128xf32>
    %184 = arith.mulf %179, %183 : vector<2x128xf32>
    %c14_66 = arith.constant 14 : index
    %c0_67 = arith.constant 0 : index
    %185 = vector.load %arg17[%c14_66, %c0_67] : memref<16x128xf32, #tpu.memory_space<vmem>>, vector<2x128xf32>
    tpu.vector_store %arg17[%c14_66, %c0_67], %184 {strides = array<i32>} : memref<16x128xf32, #tpu.memory_space<vmem>>, vector<2x128xf32>,
    %c0_68 = arith.constant 0 : index
    %c0_69 = arith.constant 0 : index
    %186 = vector.load %arg17[%c0_68, %c0_69] : memref<16x128xf32, #tpu.memory_space<vmem>>, vector<16x128xf32>
    %c0_70 = arith.constant 0 : index
    %c0_71 = arith.constant 0 : index
    %187 = vector.load %arg4[%c0_70, %c0_71] : memref<128x512xf32, #tpu.memory_space<vmem>>, vector<128x512xf32>
    %cst_72 = arith.constant dense<0.000000e+00> : vector<16x512xf32>
    %188 = tpu.matmul %186, %187, %cst_72 {dimension_numbers = #tpu.dot_dimension_numbers<[1], [0], [0], [1], [0, 0, 1, 1], [], []>} : vector<16x128xf32>, vector<128x512xf32>, vector<16x512xf32> -> vector<16x512xf32>
    %c0_73 = arith.constant 0 : index
    %c0_74 = arith.constant 0 : index
    %189 = vector.load %arg6[%c0_73, %c0_74] : memref<1x512xf32, #tpu.memory_space<vmem>>, vector<1x512xf32>
    %190 = vector.broadcast %189 : vector<1x512xf32> to vector<16x512xf32>
    %191 = arith.addf %188, %190 : vector<16x512xf32>
    %c0_75 = arith.constant 0 : index
    %c0_76 = arith.constant 0 : index
    %192 = vector.load %arg18[%c0_75, %c0_76] : memref<16x512xf32, #tpu.memory_space<vmem>>, vector<16x512xf32>
    tpu.vector_store %arg18[%c0_75, %c0_76], %191 {strides = array<i32>} : memref<16x512xf32, #tpu.memory_space<vmem>>, vector<16x512xf32>,
    %c0_77 = arith.constant 0 : index
    %c0_78 = arith.constant 0 : index
    %193 = vector.load %arg5[%c0_77, %c0_78] : memref<128x512xf32, #tpu.memory_space<vmem>>, vector<128x512xf32>
    %cst_79 = arith.constant 0.000000e+00 : f32
    %194 = vector.broadcast %cst_79 : f32 to vector<2x128xf32>
    %cst_80 = arith.constant 0.000000e+00 : f32
    %195 = vector.broadcast %cst_80 : f32 to vector<2x128xf32>
    %c0_81 = arith.constant 0 : index
    %c0_82 = arith.constant 0 : index
    %196 = vector.load %arg18[%c0_81, %c0_82] : memref<16x512xf32, #tpu.memory_space<vmem>>, vector<2x512xf32>
    %cst_83 = arith.constant dense<0.000000e+00> : vector<2x512xf32>
    %197 = tpu.matmul %194, %193, %cst_83 {dimension_numbers = #tpu.dot_dimension_numbers<[1], [0], [0], [1], [0, 0, 1, 1], [], []>} : vector<2x128xf32>, vector<128x512xf32>, vector<2x512xf32> -> vector<2x512xf32>
    %198 = arith.addf %196, %197 : vector<2x512xf32>
    %199 = arith.negf %198 : vector<2x512xf32>
    %200 = math.exp %199 : vector<2x512xf32>
    %cst_84 = arith.constant 1.000000e+00 : f32
    %201 = vector.broadcast %cst_84 : f32 to vector<2x512xf32>
    %202 = arith.addf %201, %200 : vector<2x512xf32>
    %203 = arith.divf %201, %202 : vector<2x512xf32>
    %204 = vector.extract_strided_slice %203 {offsets = [0, 0], sizes = [2, 128], strides = [1, 1]} : vector<2x512xf32> to vector<2x128xf32>
    %205 = vector.extract_strided_slice %203 {offsets = [0, 128], sizes = [2, 128], strides = [1, 1]} : vector<2x512xf32> to vector<2x128xf32>
    %206 = vector.extract_strided_slice %203 {offsets = [0, 256], sizes = [2, 128], strides = [1, 1]} : vector<2x512xf32> to vector<2x128xf32>
    %cst_85 = arith.constant 2.000000e+00 : f32
    %207 = vector.broadcast %cst_85 : f32 to vector<2x128xf32>
    %208 = arith.mulf %207, %206 : vector<2x128xf32>
    %cst_86 = arith.constant 1.000000e+00 : f32
    %209 = vector.broadcast %cst_86 : f32 to vector<2x128xf32>
    %210 = arith.subf %208, %209 : vector<2x128xf32>
    %211 = vector.extract_strided_slice %203 {offsets = [0, 384], sizes = [2, 128], strides = [1, 1]} : vector<2x512xf32> to vector<2x128xf32>
    %212 = arith.mulf %205, %195 : vector<2x128xf32>
    %213 = arith.mulf %204, %210 : vector<2x128xf32>
    %214 = arith.addf %212, %213 : vector<2x128xf32>
    %215 = math.tanh %214 : vector<2x128xf32>
    %216 = arith.mulf %211, %215 : vector<2x128xf32>
    %c0_87 = arith.constant 0 : index
    %c0_88 = arith.constant 0 : index
    %217 = vector.load %arg17[%c0_87, %c0_88] : memref<16x128xf32, #tpu.memory_space<vmem>>, vector<2x128xf32>
    tpu.vector_store %arg17[%c0_87, %c0_88], %216 {strides = array<i32>} : memref<16x128xf32, #tpu.memory_space<vmem>>, vector<2x128xf32>,
    %c2_89 = arith.constant 2 : index
    %c0_90 = arith.constant 0 : index
    %218 = vector.load %arg18[%c2_89, %c0_90] : memref<16x512xf32, #tpu.memory_space<vmem>>, vector<2x512xf32>
    %cst_91 = arith.constant dense<0.000000e+00> : vector<2x512xf32>
    %219 = tpu.matmul %216, %193, %cst_91 {dimension_numbers = #tpu.dot_dimension_numbers<[1], [0], [0], [1], [0, 0, 1, 1], [], []>} : vector<2x128xf32>, vector<128x512xf32>, vector<2x512xf32> -> vector<2x512xf32>
    %220 = arith.addf %218, %219 : vector<2x512xf32>
    %221 = arith.negf %220 : vector<2x512xf32>
    %222 = math.exp %221 : vector<2x512xf32>
    %cst_92 = arith.constant 1.000000e+00 : f32
    %223 = vector.broadcast %cst_92 : f32 to vector<2x512xf32>
    %224 = arith.addf %223, %222 : vector<2x512xf32>
    %225 = arith.divf %223, %224 : vector<2x512xf32>
    %226 = vector.extract_strided_slice %225 {offsets = [0, 0], sizes = [2, 128], strides = [1, 1]} : vector<2x512xf32> to vector<2x128xf32>
    %227 = vector.extract_strided_slice %225 {offsets = [0, 128], sizes = [2, 128], strides = [1, 1]} : vector<2x512xf32> to vector<2x128xf32>
    %228 = vector.extract_strided_slice %225 {offsets = [0, 256], sizes = [2, 128], strides = [1, 1]} : vector<2x512xf32> to vector<2x128xf32>
    %cst_93 = arith.constant 2.000000e+00 : f32
    %229 = vector.broadcast %cst_93 : f32 to vector<2x128xf32>
    %230 = arith.mulf %229, %228 : vector<2x128xf32>
    %cst_94 = arith.constant 1.000000e+00 : f32
    %231 = vector.broadcast %cst_94 : f32 to vector<2x128xf32>
    %232 = arith.subf %230, %231 : vector<2x128xf32>
    %233 = vector.extract_strided_slice %225 {offsets = [0, 384], sizes = [2, 128], strides = [1, 1]} : vector<2x512xf32> to vector<2x128xf32>
    %234 = arith.mulf %227, %214 : vector<2x128xf32>
    %235 = arith.mulf %226, %232 : vector<2x128xf32>
    %236 = arith.addf %234, %235 : vector<2x128xf32>
    %237 = math.tanh %236 : vector<2x128xf32>
    %238 = arith.mulf %233, %237 : vector<2x128xf32>
    %c2_95 = arith.constant 2 : index
    %c0_96 = arith.constant 0 : index
    %239 = vector.load %arg17[%c2_95, %c0_96] : memref<16x128xf32, #tpu.memory_space<vmem>>, vector<2x128xf32>
    tpu.vector_store %arg17[%c2_95, %c0_96], %238 {strides = array<i32>} : memref<16x128xf32, #tpu.memory_space<vmem>>, vector<2x128xf32>,
    %c4_97 = arith.constant 4 : index
    %c0_98 = arith.constant 0 : index
    %240 = vector.load %arg18[%c4_97, %c0_98] : memref<16x512xf32, #tpu.memory_space<vmem>>, vector<2x512xf32>
    %cst_99 = arith.constant dense<0.000000e+00> : vector<2x512xf32>
    %241 = tpu.matmul %238, %193, %cst_99 {dimension_numbers = #tpu.dot_dimension_numbers<[1], [0], [0], [1], [0, 0, 1, 1], [], []>} : vector<2x128xf32>, vector<128x512xf32>, vector<2x512xf32> -> vector<2x512xf32>
    %242 = arith.addf %240, %241 : vector<2x512xf32>
    %243 = arith.negf %242 : vector<2x512xf32>
    %244 = math.exp %243 : vector<2x512xf32>
    %cst_100 = arith.constant 1.000000e+00 : f32
    %245 = vector.broadcast %cst_100 : f32 to vector<2x512xf32>
    %246 = arith.addf %245, %244 : vector<2x512xf32>
    %247 = arith.divf %245, %246 : vector<2x512xf32>
    %248 = vector.extract_strided_slice %247 {offsets = [0, 0], sizes = [2, 128], strides = [1, 1]} : vector<2x512xf32> to vector<2x128xf32>
    %249 = vector.extract_strided_slice %247 {offsets = [0, 128], sizes = [2, 128], strides = [1, 1]} : vector<2x512xf32> to vector<2x128xf32>
    %250 = vector.extract_strided_slice %247 {offsets = [0, 256], sizes = [2, 128], strides = [1, 1]} : vector<2x512xf32> to vector<2x128xf32>
    %cst_101 = arith.constant 2.000000e+00 : f32
    %251 = vector.broadcast %cst_101 : f32 to vector<2x128xf32>
    %252 = arith.mulf %251, %250 : vector<2x128xf32>
    %cst_102 = arith.constant 1.000000e+00 : f32
    %253 = vector.broadcast %cst_102 : f32 to vector<2x128xf32>
    %254 = arith.subf %252, %253 : vector<2x128xf32>
    %255 = vector.extract_strided_slice %247 {offsets = [0, 384], sizes = [2, 128], strides = [1, 1]} : vector<2x512xf32> to vector<2x128xf32>
    %256 = arith.mulf %249, %236 : vector<2x128xf32>
    %257 = arith.mulf %248, %254 : vector<2x128xf32>
    %258 = arith.addf %256, %257 : vector<2x128xf32>
    %259 = math.tanh %258 : vector<2x128xf32>
    %260 = arith.mulf %255, %259 : vector<2x128xf32>
    %c4_103 = arith.constant 4 : index
    %c0_104 = arith.constant 0 : index
    %261 = vector.load %arg17[%c4_103, %c0_104] : memref<16x128xf32, #tpu.memory_space<vmem>>, vector<2x128xf32>
    tpu.vector_store %arg17[%c4_103, %c0_104], %260 {strides = array<i32>} : memref<16x128xf32, #tpu.memory_space<vmem>>, vector<2x128xf32>,
    %c6_105 = arith.constant 6 : index
    %c0_106 = arith.constant 0 : index
    %262 = vector.load %arg18[%c6_105, %c0_106] : memref<16x512xf32, #tpu.memory_space<vmem>>, vector<2x512xf32>
    %cst_107 = arith.constant dense<0.000000e+00> : vector<2x512xf32>
    %263 = tpu.matmul %260, %193, %cst_107 {dimension_numbers = #tpu.dot_dimension_numbers<[1], [0], [0], [1], [0, 0, 1, 1], [], []>} : vector<2x128xf32>, vector<128x512xf32>, vector<2x512xf32> -> vector<2x512xf32>
    %264 = arith.addf %262, %263 : vector<2x512xf32>
    %265 = arith.negf %264 : vector<2x512xf32>
    %266 = math.exp %265 : vector<2x512xf32>
    %cst_108 = arith.constant 1.000000e+00 : f32
    %267 = vector.broadcast %cst_108 : f32 to vector<2x512xf32>
    %268 = arith.addf %267, %266 : vector<2x512xf32>
    %269 = arith.divf %267, %268 : vector<2x512xf32>
    %270 = vector.extract_strided_slice %269 {offsets = [0, 0], sizes = [2, 128], strides = [1, 1]} : vector<2x512xf32> to vector<2x128xf32>
    %271 = vector.extract_strided_slice %269 {offsets = [0, 128], sizes = [2, 128], strides = [1, 1]} : vector<2x512xf32> to vector<2x128xf32>
    %272 = vector.extract_strided_slice %269 {offsets = [0, 256], sizes = [2, 128], strides = [1, 1]} : vector<2x512xf32> to vector<2x128xf32>
    %cst_109 = arith.constant 2.000000e+00 : f32
    %273 = vector.broadcast %cst_109 : f32 to vector<2x128xf32>
    %274 = arith.mulf %273, %272 : vector<2x128xf32>
    %cst_110 = arith.constant 1.000000e+00 : f32
    %275 = vector.broadcast %cst_110 : f32 to vector<2x128xf32>
    %276 = arith.subf %274, %275 : vector<2x128xf32>
    %277 = vector.extract_strided_slice %269 {offsets = [0, 384], sizes = [2, 128], strides = [1, 1]} : vector<2x512xf32> to vector<2x128xf32>
    %278 = arith.mulf %271, %258 : vector<2x128xf32>
    %279 = arith.mulf %270, %276 : vector<2x128xf32>
    %280 = arith.addf %278, %279 : vector<2x128xf32>
    %281 = math.tanh %280 : vector<2x128xf32>
    %282 = arith.mulf %277, %281 : vector<2x128xf32>
    %c6_111 = arith.constant 6 : index
    %c0_112 = arith.constant 0 : index
    %283 = vector.load %arg17[%c6_111, %c0_112] : memref<16x128xf32, #tpu.memory_space<vmem>>, vector<2x128xf32>
    tpu.vector_store %arg17[%c6_111, %c0_112], %282 {strides = array<i32>} : memref<16x128xf32, #tpu.memory_space<vmem>>, vector<2x128xf32>,
    %c8_113 = arith.constant 8 : index
    %c0_114 = arith.constant 0 : index
    %284 = vector.load %arg18[%c8_113, %c0_114] : memref<16x512xf32, #tpu.memory_space<vmem>>, vector<2x512xf32>
    %cst_115 = arith.constant dense<0.000000e+00> : vector<2x512xf32>
    %285 = tpu.matmul %282, %193, %cst_115 {dimension_numbers = #tpu.dot_dimension_numbers<[1], [0], [0], [1], [0, 0, 1, 1], [], []>} : vector<2x128xf32>, vector<128x512xf32>, vector<2x512xf32> -> vector<2x512xf32>
    %286 = arith.addf %284, %285 : vector<2x512xf32>
    %287 = arith.negf %286 : vector<2x512xf32>
    %288 = math.exp %287 : vector<2x512xf32>
    %cst_116 = arith.constant 1.000000e+00 : f32
    %289 = vector.broadcast %cst_116 : f32 to vector<2x512xf32>
    %290 = arith.addf %289, %288 : vector<2x512xf32>
    %291 = arith.divf %289, %290 : vector<2x512xf32>
    %292 = vector.extract_strided_slice %291 {offsets = [0, 0], sizes = [2, 128], strides = [1, 1]} : vector<2x512xf32> to vector<2x128xf32>
    %293 = vector.extract_strided_slice %291 {offsets = [0, 128], sizes = [2, 128], strides = [1, 1]} : vector<2x512xf32> to vector<2x128xf32>
    %294 = vector.extract_strided_slice %291 {offsets = [0, 256], sizes = [2, 128], strides = [1, 1]} : vector<2x512xf32> to vector<2x128xf32>
    %cst_117 = arith.constant 2.000000e+00 : f32
    %295 = vector.broadcast %cst_117 : f32 to vector<2x128xf32>
    %296 = arith.mulf %295, %294 : vector<2x128xf32>
    %cst_118 = arith.constant 1.000000e+00 : f32
    %297 = vector.broadcast %cst_118 : f32 to vector<2x128xf32>
    %298 = arith.subf %296, %297 : vector<2x128xf32>
    %299 = vector.extract_strided_slice %291 {offsets = [0, 384], sizes = [2, 128], strides = [1, 1]} : vector<2x512xf32> to vector<2x128xf32>
    %300 = arith.mulf %293, %280 : vector<2x128xf32>
    %301 = arith.mulf %292, %298 : vector<2x128xf32>
    %302 = arith.addf %300, %301 : vector<2x128xf32>
    %303 = math.tanh %302 : vector<2x128xf32>
    %304 = arith.mulf %299, %303 : vector<2x128xf32>
    %c8_119 = arith.constant 8 : index
    %c0_120 = arith.constant 0 : index
    %305 = vector.load %arg17[%c8_119, %c0_120] : memref<16x128xf32, #tpu.memory_space<vmem>>, vector<2x128xf32>
    tpu.vector_store %arg17[%c8_119, %c0_120], %304 {strides = array<i32>} : memref<16x128xf32, #tpu.memory_space<vmem>>, vector<2x128xf32>,
    %c10_121 = arith.constant 10 : index
    %c0_122 = arith.constant 0 : index
    %306 = vector.load %arg18[%c10_121, %c0_122] : memref<16x512xf32, #tpu.memory_space<vmem>>, vector<2x512xf32>
    %cst_123 = arith.constant dense<0.000000e+00> : vector<2x512xf32>
    %307 = tpu.matmul %304, %193, %cst_123 {dimension_numbers = #tpu.dot_dimension_numbers<[1], [0], [0], [1], [0, 0, 1, 1], [], []>} : vector<2x128xf32>, vector<128x512xf32>, vector<2x512xf32> -> vector<2x512xf32>
    %308 = arith.addf %306, %307 : vector<2x512xf32>
    %309 = arith.negf %308 : vector<2x512xf32>
    %310 = math.exp %309 : vector<2x512xf32>
    %cst_124 = arith.constant 1.000000e+00 : f32
    %311 = vector.broadcast %cst_124 : f32 to vector<2x512xf32>
    %312 = arith.addf %311, %310 : vector<2x512xf32>
    %313 = arith.divf %311, %312 : vector<2x512xf32>
    %314 = vector.extract_strided_slice %313 {offsets = [0, 0], sizes = [2, 128], strides = [1, 1]} : vector<2x512xf32> to vector<2x128xf32>
    %315 = vector.extract_strided_slice %313 {offsets = [0, 128], sizes = [2, 128], strides = [1, 1]} : vector<2x512xf32> to vector<2x128xf32>
    %316 = vector.extract_strided_slice %313 {offsets = [0, 256], sizes = [2, 128], strides = [1, 1]} : vector<2x512xf32> to vector<2x128xf32>
    %cst_125 = arith.constant 2.000000e+00 : f32
    %317 = vector.broadcast %cst_125 : f32 to vector<2x128xf32>
    %318 = arith.mulf %317, %316 : vector<2x128xf32>
    %cst_126 = arith.constant 1.000000e+00 : f32
    %319 = vector.broadcast %cst_126 : f32 to vector<2x128xf32>
    %320 = arith.subf %318, %319 : vector<2x128xf32>
    %321 = vector.extract_strided_slice %313 {offsets = [0, 384], sizes = [2, 128], strides = [1, 1]} : vector<2x512xf32> to vector<2x128xf32>
    %322 = arith.mulf %315, %302 : vector<2x128xf32>
    %323 = arith.mulf %314, %320 : vector<2x128xf32>
    %324 = arith.addf %322, %323 : vector<2x128xf32>
    %325 = math.tanh %324 : vector<2x128xf32>
    %326 = arith.mulf %321, %325 : vector<2x128xf32>
    %c10_127 = arith.constant 10 : index
    %c0_128 = arith.constant 0 : index
    %327 = vector.load %arg17[%c10_127, %c0_128] : memref<16x128xf32, #tpu.memory_space<vmem>>, vector<2x128xf32>
    tpu.vector_store %arg17[%c10_127, %c0_128], %326 {strides = array<i32>} : memref<16x128xf32, #tpu.memory_space<vmem>>, vector<2x128xf32>,
    %c12_129 = arith.constant 12 : index
    %c0_130 = arith.constant 0 : index
    %328 = vector.load %arg18[%c12_129, %c0_130] : memref<16x512xf32, #tpu.memory_space<vmem>>, vector<2x512xf32>
    %cst_131 = arith.constant dense<0.000000e+00> : vector<2x512xf32>
    %329 = tpu.matmul %326, %193, %cst_131 {dimension_numbers = #tpu.dot_dimension_numbers<[1], [0], [0], [1], [0, 0, 1, 1], [], []>} : vector<2x128xf32>, vector<128x512xf32>, vector<2x512xf32> -> vector<2x512xf32>
    %330 = arith.addf %328, %329 : vector<2x512xf32>
    %331 = arith.negf %330 : vector<2x512xf32>
    %332 = math.exp %331 : vector<2x512xf32>
    %cst_132 = arith.constant 1.000000e+00 : f32
    %333 = vector.broadcast %cst_132 : f32 to vector<2x512xf32>
    %334 = arith.addf %333, %332 : vector<2x512xf32>
    %335 = arith.divf %333, %334 : vector<2x512xf32>
    %336 = vector.extract_strided_slice %335 {offsets = [0, 0], sizes = [2, 128], strides = [1, 1]} : vector<2x512xf32> to vector<2x128xf32>
    %337 = vector.extract_strided_slice %335 {offsets = [0, 128], sizes = [2, 128], strides = [1, 1]} : vector<2x512xf32> to vector<2x128xf32>
    %338 = vector.extract_strided_slice %335 {offsets = [0, 256], sizes = [2, 128], strides = [1, 1]} : vector<2x512xf32> to vector<2x128xf32>
    %cst_133 = arith.constant 2.000000e+00 : f32
    %339 = vector.broadcast %cst_133 : f32 to vector<2x128xf32>
    %340 = arith.mulf %339, %338 : vector<2x128xf32>
    %cst_134 = arith.constant 1.000000e+00 : f32
    %341 = vector.broadcast %cst_134 : f32 to vector<2x128xf32>
    %342 = arith.subf %340, %341 : vector<2x128xf32>
    %343 = vector.extract_strided_slice %335 {offsets = [0, 384], sizes = [2, 128], strides = [1, 1]} : vector<2x512xf32> to vector<2x128xf32>
    %344 = arith.mulf %337, %324 : vector<2x128xf32>
    %345 = arith.mulf %336, %342 : vector<2x128xf32>
    %346 = arith.addf %344, %345 : vector<2x128xf32>
    %347 = math.tanh %346 : vector<2x128xf32>
    %348 = arith.mulf %343, %347 : vector<2x128xf32>
    %c12_135 = arith.constant 12 : index
    %c0_136 = arith.constant 0 : index
    %349 = vector.load %arg17[%c12_135, %c0_136] : memref<16x128xf32, #tpu.memory_space<vmem>>, vector<2x128xf32>
    tpu.vector_store %arg17[%c12_135, %c0_136], %348 {strides = array<i32>} : memref<16x128xf32, #tpu.memory_space<vmem>>, vector<2x128xf32>,
    %c14_137 = arith.constant 14 : index
    %c0_138 = arith.constant 0 : index
    %350 = vector.load %arg18[%c14_137, %c0_138] : memref<16x512xf32, #tpu.memory_space<vmem>>, vector<2x512xf32>
    %cst_139 = arith.constant dense<0.000000e+00> : vector<2x512xf32>
    %351 = tpu.matmul %348, %193, %cst_139 {dimension_numbers = #tpu.dot_dimension_numbers<[1], [0], [0], [1], [0, 0, 1, 1], [], []>} : vector<2x128xf32>, vector<128x512xf32>, vector<2x512xf32> -> vector<2x512xf32>
    %352 = arith.addf %350, %351 : vector<2x512xf32>
    %353 = arith.negf %352 : vector<2x512xf32>
    %354 = math.exp %353 : vector<2x512xf32>
    %cst_140 = arith.constant 1.000000e+00 : f32
    %355 = vector.broadcast %cst_140 : f32 to vector<2x512xf32>
    %356 = arith.addf %355, %354 : vector<2x512xf32>
    %357 = arith.divf %355, %356 : vector<2x512xf32>
    %358 = vector.extract_strided_slice %357 {offsets = [0, 0], sizes = [2, 128], strides = [1, 1]} : vector<2x512xf32> to vector<2x128xf32>
    %359 = vector.extract_strided_slice %357 {offsets = [0, 128], sizes = [2, 128], strides = [1, 1]} : vector<2x512xf32> to vector<2x128xf32>
    %360 = vector.extract_strided_slice %357 {offsets = [0, 256], sizes = [2, 128], strides = [1, 1]} : vector<2x512xf32> to vector<2x128xf32>
    %cst_141 = arith.constant 2.000000e+00 : f32
    %361 = vector.broadcast %cst_141 : f32 to vector<2x128xf32>
    %362 = arith.mulf %361, %360 : vector<2x128xf32>
    %cst_142 = arith.constant 1.000000e+00 : f32
    %363 = vector.broadcast %cst_142 : f32 to vector<2x128xf32>
    %364 = arith.subf %362, %363 : vector<2x128xf32>
    %365 = vector.extract_strided_slice %357 {offsets = [0, 384], sizes = [2, 128], strides = [1, 1]} : vector<2x512xf32> to vector<2x128xf32>
    %366 = arith.mulf %359, %346 : vector<2x128xf32>
    %367 = arith.mulf %358, %364 : vector<2x128xf32>
    %368 = arith.addf %366, %367 : vector<2x128xf32>
    %369 = math.tanh %368 : vector<2x128xf32>
    %370 = arith.mulf %365, %369 : vector<2x128xf32>
    %c14_143 = arith.constant 14 : index
    %c0_144 = arith.constant 0 : index
    %371 = vector.load %arg17[%c14_143, %c0_144] : memref<16x128xf32, #tpu.memory_space<vmem>>, vector<2x128xf32>
    tpu.vector_store %arg17[%c14_143, %c0_144], %370 {strides = array<i32>} : memref<16x128xf32, #tpu.memory_space<vmem>>, vector<2x128xf32>,
    %c0_145 = arith.constant 0 : index
    %c0_146 = arith.constant 0 : index
    %372 = vector.load %arg17[%c0_145, %c0_146] : memref<16x128xf32, #tpu.memory_space<vmem>>, vector<16x128xf32>
    %c0_147 = arith.constant 0 : index
    %c0_148 = arith.constant 0 : index
    %373 = vector.load %arg7[%c0_147, %c0_148] : memref<128x512xf32, #tpu.memory_space<vmem>>, vector<128x512xf32>
    %cst_149 = arith.constant dense<0.000000e+00> : vector<16x512xf32>
    %374 = tpu.matmul %372, %373, %cst_149 {dimension_numbers = #tpu.dot_dimension_numbers<[1], [0], [0], [1], [0, 0, 1, 1], [], []>} : vector<16x128xf32>, vector<128x512xf32>, vector<16x512xf32> -> vector<16x512xf32>
    %c0_150 = arith.constant 0 : index
    %c0_151 = arith.constant 0 : index
    %375 = vector.load %arg9[%c0_150, %c0_151] : memref<1x512xf32, #tpu.memory_space<vmem>>, vector<1x512xf32>
    %376 = vector.broadcast %375 : vector<1x512xf32> to vector<16x512xf32>
    %377 = arith.addf %374, %376 : vector<16x512xf32>
    %c0_152 = arith.constant 0 : index
    %c0_153 = arith.constant 0 : index
    %378 = vector.load %arg18[%c0_152, %c0_153] : memref<16x512xf32, #tpu.memory_space<vmem>>, vector<16x512xf32>
    tpu.vector_store %arg18[%c0_152, %c0_153], %377 {strides = array<i32>} : memref<16x512xf32, #tpu.memory_space<vmem>>, vector<16x512xf32>,
    %c0_154 = arith.constant 0 : index
    %c0_155 = arith.constant 0 : index
    %379 = vector.load %arg8[%c0_154, %c0_155] : memref<128x512xf32, #tpu.memory_space<vmem>>, vector<128x512xf32>
    %cst_156 = arith.constant 0.000000e+00 : f32
    %380 = vector.broadcast %cst_156 : f32 to vector<2x128xf32>
    %cst_157 = arith.constant 0.000000e+00 : f32
    %381 = vector.broadcast %cst_157 : f32 to vector<2x128xf32>
    %c0_158 = arith.constant 0 : index
    %c0_159 = arith.constant 0 : index
    %382 = vector.load %arg18[%c0_158, %c0_159] : memref<16x512xf32, #tpu.memory_space<vmem>>, vector<2x512xf32>
    %cst_160 = arith.constant dense<0.000000e+00> : vector<2x512xf32>
    %383 = tpu.matmul %380, %379, %cst_160 {dimension_numbers = #tpu.dot_dimension_numbers<[1], [0], [0], [1], [0, 0, 1, 1], [], []>} : vector<2x128xf32>, vector<128x512xf32>, vector<2x512xf32> -> vector<2x512xf32>
    %384 = arith.addf %382, %383 : vector<2x512xf32>
    %385 = arith.negf %384 : vector<2x512xf32>
    %386 = math.exp %385 : vector<2x512xf32>
    %cst_161 = arith.constant 1.000000e+00 : f32
    %387 = vector.broadcast %cst_161 : f32 to vector<2x512xf32>
    %388 = arith.addf %387, %386 : vector<2x512xf32>
    %389 = arith.divf %387, %388 : vector<2x512xf32>
    %390 = vector.extract_strided_slice %389 {offsets = [0, 0], sizes = [2, 128], strides = [1, 1]} : vector<2x512xf32> to vector<2x128xf32>
    %391 = vector.extract_strided_slice %389 {offsets = [0, 128], sizes = [2, 128], strides = [1, 1]} : vector<2x512xf32> to vector<2x128xf32>
    %392 = vector.extract_strided_slice %389 {offsets = [0, 256], sizes = [2, 128], strides = [1, 1]} : vector<2x512xf32> to vector<2x128xf32>
    %cst_162 = arith.constant 2.000000e+00 : f32
    %393 = vector.broadcast %cst_162 : f32 to vector<2x128xf32>
    %394 = arith.mulf %393, %392 : vector<2x128xf32>
    %cst_163 = arith.constant 1.000000e+00 : f32
    %395 = vector.broadcast %cst_163 : f32 to vector<2x128xf32>
    %396 = arith.subf %394, %395 : vector<2x128xf32>
    %397 = vector.extract_strided_slice %389 {offsets = [0, 384], sizes = [2, 128], strides = [1, 1]} : vector<2x512xf32> to vector<2x128xf32>
    %398 = arith.mulf %391, %381 : vector<2x128xf32>
    %399 = arith.mulf %390, %396 : vector<2x128xf32>
    %400 = arith.addf %398, %399 : vector<2x128xf32>
    %401 = math.tanh %400 : vector<2x128xf32>
    %402 = arith.mulf %397, %401 : vector<2x128xf32>
    %c2_164 = arith.constant 2 : index
    %c0_165 = arith.constant 0 : index
    %403 = vector.load %arg18[%c2_164, %c0_165] : memref<16x512xf32, #tpu.memory_space<vmem>>, vector<2x512xf32>
    %cst_166 = arith.constant dense<0.000000e+00> : vector<2x512xf32>
    %404 = tpu.matmul %402, %379, %cst_166 {dimension_numbers = #tpu.dot_dimension_numbers<[1], [0], [0], [1], [0, 0, 1, 1], [], []>} : vector<2x128xf32>, vector<128x512xf32>, vector<2x512xf32> -> vector<2x512xf32>
    %405 = arith.addf %403, %404 : vector<2x512xf32>
    %406 = arith.negf %405 : vector<2x512xf32>
    %407 = math.exp %406 : vector<2x512xf32>
    %cst_167 = arith.constant 1.000000e+00 : f32
    %408 = vector.broadcast %cst_167 : f32 to vector<2x512xf32>
    %409 = arith.addf %408, %407 : vector<2x512xf32>
    %410 = arith.divf %408, %409 : vector<2x512xf32>
    %411 = vector.extract_strided_slice %410 {offsets = [0, 0], sizes = [2, 128], strides = [1, 1]} : vector<2x512xf32> to vector<2x128xf32>
    %412 = vector.extract_strided_slice %410 {offsets = [0, 128], sizes = [2, 128], strides = [1, 1]} : vector<2x512xf32> to vector<2x128xf32>
    %413 = vector.extract_strided_slice %410 {offsets = [0, 256], sizes = [2, 128], strides = [1, 1]} : vector<2x512xf32> to vector<2x128xf32>
    %cst_168 = arith.constant 2.000000e+00 : f32
    %414 = vector.broadcast %cst_168 : f32 to vector<2x128xf32>
    %415 = arith.mulf %414, %413 : vector<2x128xf32>
    %cst_169 = arith.constant 1.000000e+00 : f32
    %416 = vector.broadcast %cst_169 : f32 to vector<2x128xf32>
    %417 = arith.subf %415, %416 : vector<2x128xf32>
    %418 = vector.extract_strided_slice %410 {offsets = [0, 384], sizes = [2, 128], strides = [1, 1]} : vector<2x512xf32> to vector<2x128xf32>
    %419 = arith.mulf %412, %400 : vector<2x128xf32>
    %420 = arith.mulf %411, %417 : vector<2x128xf32>
    %421 = arith.addf %419, %420 : vector<2x128xf32>
    %422 = math.tanh %421 : vector<2x128xf32>
    %423 = arith.mulf %418, %422 : vector<2x128xf32>
    %c4_170 = arith.constant 4 : index
    %c0_171 = arith.constant 0 : index
    %424 = vector.load %arg18[%c4_170, %c0_171] : memref<16x512xf32, #tpu.memory_space<vmem>>, vector<2x512xf32>
    %cst_172 = arith.constant dense<0.000000e+00> : vector<2x512xf32>
    %425 = tpu.matmul %423, %379, %cst_172 {dimension_numbers = #tpu.dot_dimension_numbers<[1], [0], [0], [1], [0, 0, 1, 1], [], []>} : vector<2x128xf32>, vector<128x512xf32>, vector<2x512xf32> -> vector<2x512xf32>
    %426 = arith.addf %424, %425 : vector<2x512xf32>
    %427 = arith.negf %426 : vector<2x512xf32>
    %428 = math.exp %427 : vector<2x512xf32>
    %cst_173 = arith.constant 1.000000e+00 : f32
    %429 = vector.broadcast %cst_173 : f32 to vector<2x512xf32>
    %430 = arith.addf %429, %428 : vector<2x512xf32>
    %431 = arith.divf %429, %430 : vector<2x512xf32>
    %432 = vector.extract_strided_slice %431 {offsets = [0, 0], sizes = [2, 128], strides = [1, 1]} : vector<2x512xf32> to vector<2x128xf32>
    %433 = vector.extract_strided_slice %431 {offsets = [0, 128], sizes = [2, 128], strides = [1, 1]} : vector<2x512xf32> to vector<2x128xf32>
    %434 = vector.extract_strided_slice %431 {offsets = [0, 256], sizes = [2, 128], strides = [1, 1]} : vector<2x512xf32> to vector<2x128xf32>
    %cst_174 = arith.constant 2.000000e+00 : f32
    %435 = vector.broadcast %cst_174 : f32 to vector<2x128xf32>
    %436 = arith.mulf %435, %434 : vector<2x128xf32>
    %cst_175 = arith.constant 1.000000e+00 : f32
    %437 = vector.broadcast %cst_175 : f32 to vector<2x128xf32>
    %438 = arith.subf %436, %437 : vector<2x128xf32>
    %439 = vector.extract_strided_slice %431 {offsets = [0, 384], sizes = [2, 128], strides = [1, 1]} : vector<2x512xf32> to vector<2x128xf32>
    %440 = arith.mulf %433, %421 : vector<2x128xf32>
    %441 = arith.mulf %432, %438 : vector<2x128xf32>
    %442 = arith.addf %440, %441 : vector<2x128xf32>
    %443 = math.tanh %442 : vector<2x128xf32>
    %444 = arith.mulf %439, %443 : vector<2x128xf32>
    %c6_176 = arith.constant 6 : index
    %c0_177 = arith.constant 0 : index
    %445 = vector.load %arg18[%c6_176, %c0_177] : memref<16x512xf32, #tpu.memory_space<vmem>>, vector<2x512xf32>
    %cst_178 = arith.constant dense<0.000000e+00> : vector<2x512xf32>
    %446 = tpu.matmul %444, %379, %cst_178 {dimension_numbers = #tpu.dot_dimension_numbers<[1], [0], [0], [1], [0, 0, 1, 1], [], []>} : vector<2x128xf32>, vector<128x512xf32>, vector<2x512xf32> -> vector<2x512xf32>
    %447 = arith.addf %445, %446 : vector<2x512xf32>
    %448 = arith.negf %447 : vector<2x512xf32>
    %449 = math.exp %448 : vector<2x512xf32>
    %cst_179 = arith.constant 1.000000e+00 : f32
    %450 = vector.broadcast %cst_179 : f32 to vector<2x512xf32>
    %451 = arith.addf %450, %449 : vector<2x512xf32>
    %452 = arith.divf %450, %451 : vector<2x512xf32>
    %453 = vector.extract_strided_slice %452 {offsets = [0, 0], sizes = [2, 128], strides = [1, 1]} : vector<2x512xf32> to vector<2x128xf32>
    %454 = vector.extract_strided_slice %452 {offsets = [0, 128], sizes = [2, 128], strides = [1, 1]} : vector<2x512xf32> to vector<2x128xf32>
    %455 = vector.extract_strided_slice %452 {offsets = [0, 256], sizes = [2, 128], strides = [1, 1]} : vector<2x512xf32> to vector<2x128xf32>
    %cst_180 = arith.constant 2.000000e+00 : f32
    %456 = vector.broadcast %cst_180 : f32 to vector<2x128xf32>
    %457 = arith.mulf %456, %455 : vector<2x128xf32>
    %cst_181 = arith.constant 1.000000e+00 : f32
    %458 = vector.broadcast %cst_181 : f32 to vector<2x128xf32>
    %459 = arith.subf %457, %458 : vector<2x128xf32>
    %460 = vector.extract_strided_slice %452 {offsets = [0, 384], sizes = [2, 128], strides = [1, 1]} : vector<2x512xf32> to vector<2x128xf32>
    %461 = arith.mulf %454, %442 : vector<2x128xf32>
    %462 = arith.mulf %453, %459 : vector<2x128xf32>
    %463 = arith.addf %461, %462 : vector<2x128xf32>
    %464 = math.tanh %463 : vector<2x128xf32>
    %465 = arith.mulf %460, %464 : vector<2x128xf32>
    %c8_182 = arith.constant 8 : index
    %c0_183 = arith.constant 0 : index
    %466 = vector.load %arg18[%c8_182, %c0_183] : memref<16x512xf32, #tpu.memory_space<vmem>>, vector<2x512xf32>
    %cst_184 = arith.constant dense<0.000000e+00> : vector<2x512xf32>
    %467 = tpu.matmul %465, %379, %cst_184 {dimension_numbers = #tpu.dot_dimension_numbers<[1], [0], [0], [1], [0, 0, 1, 1], [], []>} : vector<2x128xf32>, vector<128x512xf32>, vector<2x512xf32> -> vector<2x512xf32>
    %468 = arith.addf %466, %467 : vector<2x512xf32>
    %469 = arith.negf %468 : vector<2x512xf32>
    %470 = math.exp %469 : vector<2x512xf32>
    %cst_185 = arith.constant 1.000000e+00 : f32
    %471 = vector.broadcast %cst_185 : f32 to vector<2x512xf32>
    %472 = arith.addf %471, %470 : vector<2x512xf32>
    %473 = arith.divf %471, %472 : vector<2x512xf32>
    %474 = vector.extract_strided_slice %473 {offsets = [0, 0], sizes = [2, 128], strides = [1, 1]} : vector<2x512xf32> to vector<2x128xf32>
    %475 = vector.extract_strided_slice %473 {offsets = [0, 128], sizes = [2, 128], strides = [1, 1]} : vector<2x512xf32> to vector<2x128xf32>
    %476 = vector.extract_strided_slice %473 {offsets = [0, 256], sizes = [2, 128], strides = [1, 1]} : vector<2x512xf32> to vector<2x128xf32>
    %cst_186 = arith.constant 2.000000e+00 : f32
    %477 = vector.broadcast %cst_186 : f32 to vector<2x128xf32>
    %478 = arith.mulf %477, %476 : vector<2x128xf32>
    %cst_187 = arith.constant 1.000000e+00 : f32
    %479 = vector.broadcast %cst_187 : f32 to vector<2x128xf32>
    %480 = arith.subf %478, %479 : vector<2x128xf32>
    %481 = vector.extract_strided_slice %473 {offsets = [0, 384], sizes = [2, 128], strides = [1, 1]} : vector<2x512xf32> to vector<2x128xf32>
    %482 = arith.mulf %475, %463 : vector<2x128xf32>
    %483 = arith.mulf %474, %480 : vector<2x128xf32>
    %484 = arith.addf %482, %483 : vector<2x128xf32>
    %485 = math.tanh %484 : vector<2x128xf32>
    %486 = arith.mulf %481, %485 : vector<2x128xf32>
    %c10_188 = arith.constant 10 : index
    %c0_189 = arith.constant 0 : index
    %487 = vector.load %arg18[%c10_188, %c0_189] : memref<16x512xf32, #tpu.memory_space<vmem>>, vector<2x512xf32>
    %cst_190 = arith.constant dense<0.000000e+00> : vector<2x512xf32>
    %488 = tpu.matmul %486, %379, %cst_190 {dimension_numbers = #tpu.dot_dimension_numbers<[1], [0], [0], [1], [0, 0, 1, 1], [], []>} : vector<2x128xf32>, vector<128x512xf32>, vector<2x512xf32> -> vector<2x512xf32>
    %489 = arith.addf %487, %488 : vector<2x512xf32>
    %490 = arith.negf %489 : vector<2x512xf32>
    %491 = math.exp %490 : vector<2x512xf32>
    %cst_191 = arith.constant 1.000000e+00 : f32
    %492 = vector.broadcast %cst_191 : f32 to vector<2x512xf32>
    %493 = arith.addf %492, %491 : vector<2x512xf32>
    %494 = arith.divf %492, %493 : vector<2x512xf32>
    %495 = vector.extract_strided_slice %494 {offsets = [0, 0], sizes = [2, 128], strides = [1, 1]} : vector<2x512xf32> to vector<2x128xf32>
    %496 = vector.extract_strided_slice %494 {offsets = [0, 128], sizes = [2, 128], strides = [1, 1]} : vector<2x512xf32> to vector<2x128xf32>
    %497 = vector.extract_strided_slice %494 {offsets = [0, 256], sizes = [2, 128], strides = [1, 1]} : vector<2x512xf32> to vector<2x128xf32>
    %cst_192 = arith.constant 2.000000e+00 : f32
    %498 = vector.broadcast %cst_192 : f32 to vector<2x128xf32>
    %499 = arith.mulf %498, %497 : vector<2x128xf32>
    %cst_193 = arith.constant 1.000000e+00 : f32
    %500 = vector.broadcast %cst_193 : f32 to vector<2x128xf32>
    %501 = arith.subf %499, %500 : vector<2x128xf32>
    %502 = vector.extract_strided_slice %494 {offsets = [0, 384], sizes = [2, 128], strides = [1, 1]} : vector<2x512xf32> to vector<2x128xf32>
    %503 = arith.mulf %496, %484 : vector<2x128xf32>
    %504 = arith.mulf %495, %501 : vector<2x128xf32>
    %505 = arith.addf %503, %504 : vector<2x128xf32>
    %506 = math.tanh %505 : vector<2x128xf32>
    %507 = arith.mulf %502, %506 : vector<2x128xf32>
    %c12_194 = arith.constant 12 : index
    %c0_195 = arith.constant 0 : index
    %508 = vector.load %arg18[%c12_194, %c0_195] : memref<16x512xf32, #tpu.memory_space<vmem>>, vector<2x512xf32>
    %cst_196 = arith.constant dense<0.000000e+00> : vector<2x512xf32>
    %509 = tpu.matmul %507, %379, %cst_196 {dimension_numbers = #tpu.dot_dimension_numbers<[1], [0], [0], [1], [0, 0, 1, 1], [], []>} : vector<2x128xf32>, vector<128x512xf32>, vector<2x512xf32> -> vector<2x512xf32>
    %510 = arith.addf %508, %509 : vector<2x512xf32>
    %511 = arith.negf %510 : vector<2x512xf32>
    %512 = math.exp %511 : vector<2x512xf32>
    %cst_197 = arith.constant 1.000000e+00 : f32
    %513 = vector.broadcast %cst_197 : f32 to vector<2x512xf32>
    %514 = arith.addf %513, %512 : vector<2x512xf32>
    %515 = arith.divf %513, %514 : vector<2x512xf32>
    %516 = vector.extract_strided_slice %515 {offsets = [0, 0], sizes = [2, 128], strides = [1, 1]} : vector<2x512xf32> to vector<2x128xf32>
    %517 = vector.extract_strided_slice %515 {offsets = [0, 128], sizes = [2, 128], strides = [1, 1]} : vector<2x512xf32> to vector<2x128xf32>
    %518 = vector.extract_strided_slice %515 {offsets = [0, 256], sizes = [2, 128], strides = [1, 1]} : vector<2x512xf32> to vector<2x128xf32>
    %cst_198 = arith.constant 2.000000e+00 : f32
    %519 = vector.broadcast %cst_198 : f32 to vector<2x128xf32>
    %520 = arith.mulf %519, %518 : vector<2x128xf32>
    %cst_199 = arith.constant 1.000000e+00 : f32
    %521 = vector.broadcast %cst_199 : f32 to vector<2x128xf32>
    %522 = arith.subf %520, %521 : vector<2x128xf32>
    %523 = vector.extract_strided_slice %515 {offsets = [0, 384], sizes = [2, 128], strides = [1, 1]} : vector<2x512xf32> to vector<2x128xf32>
    %524 = arith.mulf %517, %505 : vector<2x128xf32>
    %525 = arith.mulf %516, %522 : vector<2x128xf32>
    %526 = arith.addf %524, %525 : vector<2x128xf32>
    %527 = math.tanh %526 : vector<2x128xf32>
    %528 = arith.mulf %523, %527 : vector<2x128xf32>
    %c14_200 = arith.constant 14 : index
    %c0_201 = arith.constant 0 : index
    %529 = vector.load %arg18[%c14_200, %c0_201] : memref<16x512xf32, #tpu.memory_space<vmem>>, vector<2x512xf32>
    %cst_202 = arith.constant dense<0.000000e+00> : vector<2x512xf32>
    %530 = tpu.matmul %528, %379, %cst_202 {dimension_numbers = #tpu.dot_dimension_numbers<[1], [0], [0], [1], [0, 0, 1, 1], [], []>} : vector<2x128xf32>, vector<128x512xf32>, vector<2x512xf32> -> vector<2x512xf32>
    %531 = arith.addf %529, %530 : vector<2x512xf32>
    %532 = arith.negf %531 : vector<2x512xf32>
    %533 = math.exp %532 : vector<2x512xf32>
    %cst_203 = arith.constant 1.000000e+00 : f32
    %534 = vector.broadcast %cst_203 : f32 to vector<2x512xf32>
    %535 = arith.addf %534, %533 : vector<2x512xf32>
    %536 = arith.divf %534, %535 : vector<2x512xf32>
    %537 = vector.extract_strided_slice %536 {offsets = [0, 0], sizes = [2, 128], strides = [1, 1]} : vector<2x512xf32> to vector<2x128xf32>
    %538 = vector.extract_strided_slice %536 {offsets = [0, 128], sizes = [2, 128], strides = [1, 1]} : vector<2x512xf32> to vector<2x128xf32>
    %539 = vector.extract_strided_slice %536 {offsets = [0, 256], sizes = [2, 128], strides = [1, 1]} : vector<2x512xf32> to vector<2x128xf32>
    %cst_204 = arith.constant 2.000000e+00 : f32
    %540 = vector.broadcast %cst_204 : f32 to vector<2x128xf32>
    %541 = arith.mulf %540, %539 : vector<2x128xf32>
    %cst_205 = arith.constant 1.000000e+00 : f32
    %542 = vector.broadcast %cst_205 : f32 to vector<2x128xf32>
    %543 = arith.subf %541, %542 : vector<2x128xf32>
    %544 = vector.extract_strided_slice %536 {offsets = [0, 384], sizes = [2, 128], strides = [1, 1]} : vector<2x512xf32> to vector<2x128xf32>
    %545 = arith.mulf %538, %526 : vector<2x128xf32>
    %546 = arith.mulf %537, %543 : vector<2x128xf32>
    %547 = arith.addf %545, %546 : vector<2x128xf32>
    %548 = math.tanh %547 : vector<2x128xf32>
    %549 = arith.mulf %544, %548 : vector<2x128xf32>
    %c0_206 = arith.constant 0 : index
    %c0_207 = arith.constant 0 : index
    %550 = vector.load %arg10[%c0_206, %c0_207] : memref<128x64xf32, #tpu.memory_space<vmem>>, vector<128x64xf32>
    %cst_208 = arith.constant dense<0.000000e+00> : vector<2x64xf32>
    %551 = tpu.matmul %549, %550, %cst_208 {dimension_numbers = #tpu.dot_dimension_numbers<[1], [0], [0], [1], [0, 0, 1, 1], [], []>} : vector<2x128xf32>, vector<128x64xf32>, vector<2x64xf32> -> vector<2x64xf32>
    %c0_209 = arith.constant 0 : index
    %c0_210 = arith.constant 0 : index
    %552 = vector.load %arg11[%c0_209, %c0_210] : memref<1x64xf32, #tpu.memory_space<vmem>>, vector<1x64xf32>
    %553 = vector.broadcast %552 : vector<1x64xf32> to vector<2x64xf32>
    %554 = arith.addf %551, %553 : vector<2x64xf32>
    %cst_211 = arith.constant 0.000000e+00 : f32
    %555 = vector.broadcast %cst_211 : f32 to vector<2x64xf32>
    %556 = arith.maximumf %554, %555 : vector<2x64xf32>
    %c0_212 = arith.constant 0 : index
    %c0_213 = arith.constant 0 : index
    %557 = vector.load %arg12[%c0_212, %c0_213] : memref<64x32xf32, #tpu.memory_space<vmem>>, vector<64x32xf32>
    %cst_214 = arith.constant dense<0.000000e+00> : vector<2x32xf32>
    %558 = tpu.matmul %556, %557, %cst_214 {dimension_numbers = #tpu.dot_dimension_numbers<[1], [0], [0], [1], [0, 0, 1, 1], [], []>} : vector<2x64xf32>, vector<64x32xf32>, vector<2x32xf32> -> vector<2x32xf32>
    %c0_215 = arith.constant 0 : index
    %c0_216 = arith.constant 0 : index
    %559 = vector.load %arg13[%c0_215, %c0_216] : memref<1x32xf32, #tpu.memory_space<vmem>>, vector<1x32xf32>
    %560 = vector.broadcast %559 : vector<1x32xf32> to vector<2x32xf32>
    %561 = arith.addf %558, %560 : vector<2x32xf32>
    %cst_217 = arith.constant 0.000000e+00 : f32
    %562 = vector.broadcast %cst_217 : f32 to vector<2x32xf32>
    %563 = arith.maximumf %561, %562 : vector<2x32xf32>
    %c0_218 = arith.constant 0 : index
    %c0_219 = arith.constant 0 : index
    %564 = vector.load %arg14[%c0_218, %c0_219] : memref<32x256xf32, #tpu.memory_space<vmem>>, vector<32x256xf32>
    %cst_220 = arith.constant dense<0.000000e+00> : vector<2x256xf32>
    %565 = tpu.matmul %563, %564, %cst_220 {dimension_numbers = #tpu.dot_dimension_numbers<[1], [0], [0], [1], [0, 0, 1, 1], [], []>} : vector<2x32xf32>, vector<32x256xf32>, vector<2x256xf32> -> vector<2x256xf32>
    %c0_221 = arith.constant 0 : index
    %c0_222 = arith.constant 0 : index
    %566 = vector.load %arg15[%c0_221, %c0_222] : memref<1x256xf32, #tpu.memory_space<vmem>>, vector<1x256xf32>
    %567 = vector.broadcast %566 : vector<1x256xf32> to vector<2x256xf32>
    %568 = arith.addf %565, %567 : vector<2x256xf32>
    %c0_223 = arith.constant 0 : index
    %c0_224 = arith.constant 0 : index
    %569 = vector.load %arg16[%c0_223, %c0_224] : memref<2x256xf32, #tpu.memory_space<vmem>>, vector<2x256xf32>
    tpu.vector_store %arg16[%c0_223, %c0_224], %568 {strides = array<i32>} : memref<2x256xf32, #tpu.memory_space<vmem>>, vector<2x256xf32>,
    return
  }
}

</mosaic_0001>

<llo_original>
// kernel: tpu_custom_call.1
$region0: #{tpu_custom_call.1}
  #allocation0 [shape = 'u32[]', space=smem, size = 0x4, offset = 0x4, fixed_abs, tag = 'smem constant byte address 0x4 - core index']
  #allocation1 [shape = 'u32[72,128]{1,0:T(1,128)}', space=vmem, size = 0x9000, scoped, tag = 'internal scratch']
  #allocation2 [shape = 'f32[16,128]{1,0:T(8,128)}', space=vmem, size = 0x2000, scoped, tag = 'scratch operand']
  #allocation3 [shape = 'f32[16,512]{1,0:T(8,128)}', space=vmem, size = 0x8000, scoped, tag = 'scratch operand']
  %s0 = inlined_call_operand.vmem [shape: f32[16,13], index: 0, kind: input, shape index: {}]
  %s1 = inlined_call_operand.vmem [shape: f32[13,512], index: 1, kind: input, shape index: {}]
  %s2 = inlined_call_operand.hbm [shape: f32[128,512], index: 2, kind: input, shape index: {}]
  %s3 = inlined_call_operand.vmem [shape: f32[1,512], index: 3, kind: input, shape index: {}]
  %s4 = inlined_call_operand.hbm [shape: f32[128,512], index: 4, kind: input, shape index: {}]
  %s5 = inlined_call_operand.hbm [shape: f32[128,512], index: 5, kind: input, shape index: {}]
  %s6 = inlined_call_operand.vmem [shape: f32[1,512], index: 6, kind: input, shape index: {}]
  %s7 = inlined_call_operand.hbm [shape: f32[128,512], index: 7, kind: input, shape index: {}]
  %s8 = inlined_call_operand.hbm [shape: f32[128,512], index: 8, kind: input, shape index: {}]
  %s9 = inlined_call_operand.vmem [shape: f32[1,512], index: 9, kind: input, shape index: {}]
  %s10 = inlined_call_operand.vmem [shape: f32[128,64], index: 10, kind: input, shape index: {}]
  %s11 = inlined_call_operand.vmem [shape: f32[1,64], index: 11, kind: input, shape index: {}]
  %s12 = inlined_call_operand.vmem [shape: f32[64,32], index: 12, kind: input, shape index: {}]
  %s13 = inlined_call_operand.vmem [shape: f32[1,32], index: 13, kind: input, shape index: {}]
  %s14 = inlined_call_operand.vmem [shape: f32[32,256], index: 14, kind: input, shape index: {}]
  %s15 = inlined_call_operand.vmem [shape: f32[1,256], index: 15, kind: input, shape index: {}]
  %s16 = inlined_call_operand.hbm [shape: f32[2,256], index: 16, kind: output, shape index: {}]
  %s17 = sld [smem:[#allocation0]]
  $region94: #{tpu_custom_call.1} parent=0
    _
  %s19 = ssub.s32 1, %s17
  %s20 = scalar_select 0, %s19, %s17
  $region1: #{tpu_custom_call.1} parent=0
    #allocation4 [shape = 'u8[262144]{0}', space=vmem, size = 0x40000, scoped, tag = 'input window, operand 2, single buffered']
    #allocation5 [shape = 's32[1]{0}', space=sflag, size = 0x4, scoped, tag = 'scoped memory for tpu_custom_call.1']
    #allocation6 [shape = 's32[1]{0}', space=sflag, size = 0x4, scoped, tag = 'scoped memory for tpu_custom_call.1']
    #allocation7 [shape = 'u8[262144]{0}', space=vmem, size = 0x40000, scoped, tag = 'input window, operand 4, single buffered']
    #allocation8 [shape = 's32[1]{0}', space=sflag, size = 0x4, scoped, tag = 'scoped memory for tpu_custom_call.1']
    #allocation9 [shape = 'u8[262144]{0}', space=vmem, size = 0x40000, scoped, tag = 'input window, operand 5, single buffered']
    #allocation10 [shape = 'u8[262144]{0}', space=vmem, size = 0x40000, scoped, tag = 'input window, operand 7, single buffered']
    #allocation11 [shape = 's32[1]{0}', space=sflag, size = 0x4, scoped, tag = 'scoped memory for tpu_custom_call.1']
    #allocation12 [shape = 'u8[262144]{0}', space=vmem, size = 0x40000, scoped, tag = 'input window, operand 8, single buffered']
    #allocation13 [shape = 'u8[2048]{0}', space=vmem, size = 0x800, scoped, tag = 'output window, operand 0, single buffered']
    %21 = vsyncpa [#allocation5], 0
    %22 = vsyncpa [#allocation8], 0
    %23 = vsyncpa [#allocation11], 0
    %24 = vsyncpa [#allocation6], 0
    // Predicated region
    $region2: #{tpu_custom_call.1} parent=1 // pred_check
      _
    $region3: #{tpu_custom_call.1} parent=1 // pred_check_branch
      %26 = sbr.rel (0) target = $region5
    $region4: #{tpu_custom_call.1} parent=1 // pred_region
      _
    $region5: #{tpu_custom_call.1} parent=1 // pred_fallthru
      _
    // Predicated region
    $region6: #{tpu_custom_call.1} parent=1 // pred_check
      _
    $region7: #{tpu_custom_call.1} parent=1 // pred_check_branch
      %28 = sbr.rel (0) target = $region9
    $region8: #{tpu_custom_call.1} parent=1 // pred_region
      _
    $region9: #{tpu_custom_call.1} parent=1 // pred_fallthru
      _
    // Predicated region
    $region10: #{tpu_custom_call.1} parent=1 // pred_check
      _
    $region11: #{tpu_custom_call.1} parent=1 // pred_check_branch
      %30 = sbr.rel (0) target = $region13
    $region12: #{tpu_custom_call.1} parent=1 // pred_region
      %32 = vsyncadd [#allocation5], 0
      %s33 = sshll.u32 %s2, 4
      %s34 = int_to_ptr.hbm [resolvable:$true] %s33
      %s35 = sshll.u32 [#allocation4], 4
      %s36 = int_to_ptr.vmem [resolvable:$true] %s35
      %41 = dma.hbm_to_vmem [thread:$0]  %s34, 8192, %s36, [#allocation5], 512, 512, 32
    $region13: #{tpu_custom_call.1} parent=1 // pred_fallthru
      _
    // Predicated region
    $region14: #{tpu_custom_call.1} parent=1 // pred_check
      _
    $region15: #{tpu_custom_call.1} parent=1 // pred_check_branch
      %43 = sbr.rel (0) target = $region17
    $region16: #{tpu_custom_call.1} parent=1 // pred_region
      _
    $region17: #{tpu_custom_call.1} parent=1 // pred_fallthru
      _
    // Predicated region
    $region18: #{tpu_custom_call.1} parent=1 // pred_check
      _
    $region19: #{tpu_custom_call.1} parent=1 // pred_check_branch
      %45 = sbr.rel (0) target = $region21
    $region20: #{tpu_custom_call.1} parent=1 // pred_region
      %47 = vsyncadd [#allocation8], 0
      %s48 = sshll.u32 %s4, 4
      %s49 = int_to_ptr.hbm [resolvable:$true] %s48
      %s50 = sshll.u32 [#allocation7], 4
      %s51 = int_to_ptr.vmem [resolvable:$true] %s50
      %56 = dma.hbm_to_vmem [thread:$0]  %s49, 8192, %s51, [#allocation8], 512, 512, 32
    $region21: #{tpu_custom_call.1} parent=1 // pred_fallthru
      _
    // Predicated region
    $region22: #{tpu_custom_call.1} parent=1 // pred_check
      _
    $region23: #{tpu_custom_call.1} parent=1 // pred_check_branch
      %58 = sbr.rel (0) target = $region25
    $region24: #{tpu_custom_call.1} parent=1 // pred_region
      %60 = vsyncadd [#allocation8], 0
      %s61 = sshll.u32 %s5, 4
      %s62 = int_to_ptr.hbm [resolvable:$true] %s61
      %s63 = sshll.u32 [#allocation9], 4
      %s64 = int_to_ptr.vmem [resolvable:$true] %s63
      %69 = dma.hbm_to_vmem [thread:$0]  %s62, 8192, %s64, [#allocation8], 512, 512, 32
    $region25: #{tpu_custom_call.1} parent=1 // pred_fallthru
      _
    // Predicated region
    $region26: #{tpu_custom_call.1} parent=1 // pred_check
      _
    $region27: #{tpu_custom_call.1} parent=1 // pred_check_branch
      %71 = sbr.rel (0) target = $region29
    $region28: #{tpu_custom_call.1} parent=1 // pred_region
      _
    $region29: #{tpu_custom_call.1} parent=1 // pred_fallthru
      _
    // Predicated region
    $region30: #{tpu_custom_call.1} parent=1 // pred_check
      _
    $region31: #{tpu_custom_call.1} parent=1 // pred_check_branch
      %73 = sbr.rel (0) target = $region33
    $region32: #{tpu_custom_call.1} parent=1 // pred_region
      %75 = vsyncadd [#allocation11], 0
      %s76 = sshll.u32 %s7, 4
      %s77 = int_to_ptr.hbm [resolvable:$true] %s76
      %s78 = sshll.u32 [#allocation10], 4
      %s79 = int_to_ptr.vmem [resolvable:$true] %s78
      %84 = dma.hbm_to_vmem [thread:$0]  %s77, 8192, %s79, [#allocation11], 512, 512, 32
    $region33: #{tpu_custom_call.1} parent=1 // pred_fallthru
      _
    // Predicated region
    $region34: #{tpu_custom_call.1} parent=1 // pred_check
      _
    $region35: #{tpu_custom_call.1} parent=1 // pred_check_branch
      %86 = sbr.rel (0) target = $region37
    $region36: #{tpu_custom_call.1} parent=1 // pred_region
      %88 = vsyncadd [#allocation11], 0
      %s89 = sshll.u32 %s8, 4
      %s90 = int_to_ptr.hbm [resolvable:$true] %s89
      %s91 = sshll.u32 [#allocation12], 4
      %s92 = int_to_ptr.vmem [resolvable:$true] %s91
      %97 = dma.hbm_to_vmem [thread:$0]  %s90, 8192, %s92, [#allocation11], 512, 512, 32
    $region37: #{tpu_custom_call.1} parent=1 // pred_fallthru
      _
    // Predicated region
    $region38: #{tpu_custom_call.1} parent=1 // pred_check
      _
    $region39: #{tpu_custom_call.1} parent=1 // pred_check_branch
      %99 = sbr.rel (0) target = $region41
    $region40: #{tpu_custom_call.1} parent=1 // pred_region
      _
    $region41: #{tpu_custom_call.1} parent=1 // pred_fallthru
      _
    // Predicated region
    $region42: #{tpu_custom_call.1} parent=1 // pred_check
      _
    $region43: #{tpu_custom_call.1} parent=1 // pred_check_branch
      %101 = sbr.rel (0) target = $region45
    $region44: #{tpu_custom_call.1} parent=1 // pred_region
      _
    $region45: #{tpu_custom_call.1} parent=1 // pred_fallthru
      _
    // Predicated region
    $region46: #{tpu_custom_call.1} parent=1 // pred_check
      _
    $region47: #{tpu_custom_call.1} parent=1 // pred_check_branch
      %103 = sbr.rel (0) target = $region49
    $region48: #{tpu_custom_call.1} parent=1 // pred_region
      _
    $region49: #{tpu_custom_call.1} parent=1 // pred_fallthru
      _
    // Predicated region
    $region50: #{tpu_custom_call.1} parent=1 // pred_check
      _
    $region51: #{tpu_custom_call.1} parent=1 // pred_check_branch
      %105 = sbr.rel (0) target = $region53
    $region52: #{tpu_custom_call.1} parent=1 // pred_region
      _
    $region53: #{tpu_custom_call.1} parent=1 // pred_fallthru
      _
    // Predicated region
    $region54: #{tpu_custom_call.1} parent=1 // pred_check
      _
    $region55: #{tpu_custom_call.1} parent=1 // pred_check_branch
      %107 = sbr.rel (0) target = $region57
    $region56: #{tpu_custom_call.1} parent=1 // pred_region
      _
    $region57: #{tpu_custom_call.1} parent=1 // pred_fallthru
      _
    // Predicated region
    $region58: #{tpu_custom_call.1} parent=1 // pred_check
      _
    $region59: #{tpu_custom_call.1} parent=1 // pred_check_branch
      %109 = sbr.rel (0) target = $region61
    $region60: #{tpu_custom_call.1} parent=1 // pred_region
      _
    $region61: #{tpu_custom_call.1} parent=1 // pred_fallthru
      _
    // Predicated region
    $region62: #{tpu_custom_call.1} parent=1 // pred_check
      _
    $region63: #{tpu_custom_call.1} parent=1 // pred_check_branch
      %111 = sbr.rel (0) target = $region65
    $region64: #{tpu_custom_call.1} parent=1 // pred_region
      _
    $region65: #{tpu_custom_call.1} parent=1 // pred_fallthru
      _
    // Predicated region
    $region66: #{tpu_custom_call.1} parent=1 // pred_check
      _
    $region67: #{tpu_custom_call.1} parent=1 // pred_check_branch
      %113 = sbr.rel (0) target = $region69
    $region68: #{tpu_custom_call.1} parent=1 // pred_region
      %115 = dma.done [#allocation5], 8192
    $region69: #{tpu_custom_call.1} parent=1 // pred_fallthru
      _
    // Predicated region
    $region70: #{tpu_custom_call.1} parent=1 // pred_check
      _
    $region71: #{tpu_custom_call.1} parent=1 // pred_check_branch
      %117 = sbr.rel (0) target = $region73
    $region72: #{tpu_custom_call.1} parent=1 // pred_region
      %119 = dma.done [#allocation8], 8192
    $region73: #{tpu_custom_call.1} parent=1 // pred_fallthru
      _
    // Predicated region
    $region74: #{tpu_custom_call.1} parent=1 // pred_check
      _
    $region75: #{tpu_custom_call.1} parent=1 // pred_check_branch
      %121 = sbr.rel (0) target = $region77
    $region76: #{tpu_custom_call.1} parent=1 // pred_region
      %123 = dma.done [#allocation8], 8192
    $region77: #{tpu_custom_call.1} parent=1 // pred_fallthru
      _
    // Predicated region
    $region78: #{tpu_custom_call.1} parent=1 // pred_check
      _
    $region79: #{tpu_custom_call.1} parent=1 // pred_check_branch
      %125 = sbr.rel (0) target = $region81
    $region80: #{tpu_custom_call.1} parent=1 // pred_region
      %127 = dma.done [#allocation11], 8192
    $region81: #{tpu_custom_call.1} parent=1 // pred_fallthru
      _
    // Predicated region
    $region82: #{tpu_custom_call.1} parent=1 // pred_check
      _
    $region83: #{tpu_custom_call.1} parent=1 // pred_check_branch
      %129 = sbr.rel (0) target = $region85
    $region84: #{tpu_custom_call.1} parent=1 // pred_region
      %131 = dma.done [#allocation11], 8192
    $region85: #{tpu_custom_call.1} parent=1 // pred_fallthru
      _
    %v132 = vld [vmem:[%s0] sm:$0xff]
    %v133 = vld [vmem:[%s0 + $0x8] sm:$0xff]
    %v134 = vld [vmem:[%s1] sm:$0xff]
    %v135 = vld [vmem:[%s1 + $0x8] sm:$0xff]
    %v136 = vld [vmem:[%s1 + $0x10] sm:$0xff]
    %v137 = vld [vmem:[%s1 + $0x18] sm:$0xff]
    %v138 = vld [vmem:[%s1 + $0x20] sm:$0x1f]
    %v139 = vld [vmem:[%s1 + $0x28] sm:$0x1f]
    %v140 = vld [vmem:[%s1 + $0x30] sm:$0x1f]
    %v141 = vld [vmem:[%s1 + $0x38] sm:$0x1f]
    %v142 = vld [vmem:[%s3] sm:$0xf]
    %v144 = vperm.slane %v142, 0
    %v145 = vperm.slane %v142, 1
    %v146 = vperm.slane %v142, 2
    %v147 = vperm.slane %v142, 3
    %vm152 = vcmask 105472
    %v154 = vsel %vm152, %v132, 0
    %v157 = vsel %vm152, %v133, 0
    %vm159 = vcmask 1044480
    %v161 = vsel %vm159, %v138, 0
    %v164 = vsel %vm159, %v139, 0
    %v167 = vsel %vm159, %v140, 0
    %v170 = vsel %vm159, %v141, 0
    %172 = vmatpush.msra.mxu0 0.0
    %173 = vmatpush.msra.mxu0 0.0
    %174 = vmatpush.msra.mxu0 0.0
    %175 = vmatpush.msra.mxu0 0.0
    %176 = vmatpush.msra.mxu0 0.0
    %177 = vmatpush.msra.mxu0 0.0
    %178 = vmatpush.msra.mxu0 0.0
    %179 = vmatpush.msra.mxu0 0.0
    %180 = vmatpush.msra.mxu0 0.0
    %181 = vmatpush.msra.mxu0 0.0
    %182 = vmatpush.msra.mxu0 0.0
    %183 = vmatpush.msra.mxu0 0.0
    %184 = vmatpush.msra.mxu0 0.0
    %185 = vmatpush.msra.mxu0 0.0
    %186 = vmatpush.msra.mxu0 %v161
    %187 = vmatpush.msra.mxu0 %v134
    %188 = vmatmul.f32.gmra.mxu0 %v154
    %v189 = vpop.f32.mrf.mxu0
    %v190 = vadd.f32 %v144, %v189
    %191 = vmatmul.f32.gmra.mxu0 %v157
    %v192 = vpop.f32.mrf.mxu0
    %v193 = vadd.f32 %v144, %v192
    %194 = vdwg.mxu0
    %195 = vmatpush.msra.mxu0 0.0
    %196 = vmatpush.msra.mxu0 0.0
    %197 = vmatpush.msra.mxu0 0.0
    %198 = vmatpush.msra.mxu0 0.0
    %199 = vmatpush.msra.mxu0 0.0
    %200 = vmatpush.msra.mxu0 0.0
    %201 = vmatpush.msra.mxu0 0.0
    %202 = vmatpush.msra.mxu0 0.0
    %203 = vmatpush.msra.mxu0 0.0
    %204 = vmatpush.msra.mxu0 0.0
    %205 = vmatpush.msra.mxu0 0.0
    %206 = vmatpush.msra.mxu0 0.0
    %207 = vmatpush.msra.mxu0 0.0
    %208 = vmatpush.msra.mxu0 0.0
    %209 = vmatpush.msra.mxu0 %v164
    %210 = vmatpush.msra.mxu0 %v135
    %211 = vmatmul.f32.gmra.mxu0 %v154
    %v212 = vpop.f32.mrf.mxu0
    %v213 = vadd.f32 %v145, %v212
    %214 = vmatmul.f32.gmra.mxu0 %v157
    %v215 = vpop.f32.mrf.mxu0
    %v216 = vadd.f32 %v145, %v215
    %217 = vdwg.mxu0
    %218 = vmatpush.msra.mxu0 0.0
    %219 = vmatpush.msra.mxu0 0.0
    %220 = vmatpush.msra.mxu0 0.0
    %221 = vmatpush.msra.mxu0 0.0
    %222 = vmatpush.msra.mxu0 0.0
    %223 = vmatpush.msra.mxu0 0.0
    %224 = vmatpush.msra.mxu0 0.0
    %225 = vmatpush.msra.mxu0 0.0
    %226 = vmatpush.msra.mxu0 0.0
    %227 = vmatpush.msra.mxu0 0.0
    %228 = vmatpush.msra.mxu0 0.0
    %229 = vmatpush.msra.mxu0 0.0
    %230 = vmatpush.msra.mxu0 0.0
    %231 = vmatpush.msra.mxu0 0.0
    %232 = vmatpush.msra.mxu0 %v167
    %233 = vmatpush.msra.mxu0 %v136
    %234 = vmatmul.f32.gmra.mxu0 %v154
    %v235 = vpop.f32.mrf.mxu0
    %v236 = vadd.f32 %v146, %v235
    %237 = vmatmul.f32.gmra.mxu0 %v157
    %v238 = vpop.f32.mrf.mxu0
    %v239 = vadd.f32 %v146, %v238
    %240 = vdwg.mxu0
    %241 = vmatpush.msra.mxu0 0.0
    %242 = vmatpush.msra.mxu0 0.0
    %243 = vmatpush.msra.mxu0 0.0
    %244 = vmatpush.msra.mxu0 0.0
    %245 = vmatpush.msra.mxu0 0.0
    %246 = vmatpush.msra.mxu0 0.0
    %247 = vmatpush.msra.mxu0 0.0
    %248 = vmatpush.msra.mxu0 0.0
    %249 = vmatpush.msra.mxu0 0.0
    %250 = vmatpush.msra.mxu0 0.0
    %251 = vmatpush.msra.mxu0 0.0
    %252 = vmatpush.msra.mxu0 0.0
    %253 = vmatpush.msra.mxu0 0.0
    %254 = vmatpush.msra.mxu0 0.0
    %255 = vmatpush.msra.mxu0 %v170
    %256 = vmatpush.msra.mxu0 %v137
    %257 = vmatmul.f32.gmra.mxu0 %v154
    %v258 = vpop.f32.mrf.mxu0
    %v259 = vadd.f32 %v147, %v258
    %260 = vmatmul.f32.gmra.mxu0 %v157
    %v261 = vpop.f32.mrf.mxu0
    %v262 = vadd.f32 %v147, %v261
    %263 = vdwg.mxu0
    %264 = vst [vmem:[#allocation3] sm:$0xff] %v190
    %265 = vst [vmem:[#allocation3 + $0x8] sm:$0xff] %v213
    %266 = vst [vmem:[#allocation3 + $0x10] sm:$0xff] %v236
    %267 = vst [vmem:[#allocation3 + $0x18] sm:$0xff] %v259
    %268 = vst [vmem:[#allocation3 + $0x20] sm:$0xff] %v193
    %269 = vst [vmem:[#allocation3 + $0x28] sm:$0xff] %v216
    %270 = vst [vmem:[#allocation3 + $0x30] sm:$0xff] %v239
    %271 = vst [vmem:[#allocation3 + $0x38] sm:$0xff] %v262
    %v272 = vld [vmem:[#allocation4] sm:$0xff]
    %v273 = vld [vmem:[#allocation4 + $0x8] sm:$0xff]
    %v274 = vld [vmem:[#allocation4 + $0x10] sm:$0xff]
    %v275 = vld [vmem:[#allocation4 + $0x18] sm:$0xff]
    %v276 = vld [vmem:[#allocation4 + $0x20] sm:$0xff]
    %v277 = vld [vmem:[#allocation4 + $0x28] sm:$0xff]
    %v278 = vld [vmem:[#allocation4 + $0x30] sm:$0xff]
    %v279 = vld [vmem:[#allocation4 + $0x38] sm:$0xff]
    %v280 = vld [vmem:[#allocation4 + $0x40] sm:$0xff]
    %v281 = vld [vmem:[#allocation4 + $0x48] sm:$0xff]
    %v282 = vld [vmem:[#allocation4 + $0x50] sm:$0xff]
    %v283 = vld [vmem:[#allocation4 + $0x58] sm:$0xff]
    %v284 = vld [vmem:[#allocation4 + $0x60] sm:$0xff]
    %v285 = vld [vmem:[#allocation4 + $0x68] sm:$0xff]
    %v286 = vld [vmem:[#allocation4 + $0x70] sm:$0xff]
    %v287 = vld [vmem:[#allocation4 + $0x78] sm:$0xff]
    %v288 = vld [vmem:[#allocation4 + $0x80] sm:$0xff]
    %v289 = vld [vmem:[#allocation4 + $0x88] sm:$0xff]
    %v290 = vld [vmem:[#allocation4 + $0x90] sm:$0xff]
    %v291 = vld [vmem:[#allocation4 + $0x98] sm:$0xff]
    %v292 = vld [vmem:[#allocation4 + $0xa0] sm:$0xff]
    %v293 = vld [vmem:[#allocation4 + $0xa8] sm:$0xff]
    %v294 = vld [vmem:[#allocation4 + $0xb0] sm:$0xff]
    %v295 = vld [vmem:[#allocation4 + $0xb8] sm:$0xff]
    %v296 = vld [vmem:[#allocation4 + $0xc0] sm:$0xff]
    %v297 = vld [vmem:[#allocation4 + $0xc8] sm:$0xff]
    %v298 = vld [vmem:[#allocation4 + $0xd0] sm:$0xff]
    %v299 = vld [vmem:[#allocation4 + $0xd8] sm:$0xff]
    %v300 = vld [vmem:[#allocation4 + $0xe0] sm:$0xff]
    %v301 = vld [vmem:[#allocation4 + $0xe8] sm:$0xff]
    %v302 = vld [vmem:[#allocation4 + $0xf0] sm:$0xff]
    %v303 = vld [vmem:[#allocation4 + $0xf8] sm:$0xff]
    %v304 = vld [vmem:[#allocation4 + $0x100] sm:$0xff]
    %v305 = vld [vmem:[#allocation4 + $0x108] sm:$0xff]
    %v306 = vld [vmem:[#allocation4 + $0x110] sm:$0xff]
    %v307 = vld [vmem:[#allocation4 + $0x118] sm:$0xff]
    %v308 = vld [vmem:[#allocation4 + $0x120] sm:$0xff]
    %v309 = vld [vmem:[#allocation4 + $0x128] sm:$0xff]
    %v310 = vld [vmem:[#allocation4 + $0x130] sm:$0xff]
    %v311 = vld [vmem:[#allocation4 + $0x138] sm:$0xff]
    %v312 = vld [vmem:[#allocation4 + $0x140] sm:$0xff]
    %v313 = vld [vmem:[#allocation4 + $0x148] sm:$0xff]
    %v314 = vld [vmem:[#allocation4 + $0x150] sm:$0xff]
    %v315 = vld [vmem:[#allocation4 + $0x158] sm:$0xff]
    %v316 = vld [vmem:[#allocation4 + $0x160] sm:$0xff]
    %v317 = vld [vmem:[#allocation4 + $0x168] sm:$0xff]
    %v318 = vld [vmem:[#allocation4 + $0x170] sm:$0xff]
    %v319 = vld [vmem:[#allocation4 + $0x178] sm:$0xff]
    %v320 = vld [vmem:[#allocation4 + $0x180] sm:$0xff]
    %v321 = vld [vmem:[#allocation4 + $0x188] sm:$0xff]
    %v322 = vld [vmem:[#allocation4 + $0x190] sm:$0xff]
    %v323 = vld [vmem:[#allocation4 + $0x198] sm:$0xff]
    %v324 = vld [vmem:[#allocation4 + $0x1a0] sm:$0xff]
    %v325 = vld [vmem:[#allocation4 + $0x1a8] sm:$0xff]
    %v326 = vld [vmem:[#allocation4 + $0x1b0] sm:$0xff]
    %v327 = vld [vmem:[#allocation4 + $0x1b8] sm:$0xff]
    %v328 = vld [vmem:[#allocation4 + $0x1c0] sm:$0xff]
    %v329 = vld [vmem:[#allocation4 + $0x1c8] sm:$0xff]
    %v330 = vld [vmem:[#allocation4 + $0x1d0] sm:$0xff]
    %v331 = vld [vmem:[#allocation4 + $0x1d8] sm:$0xff]
    %v332 = vld [vmem:[#allocation4 + $0x1e0] sm:$0xff]
    %v333 = vld [vmem:[#allocation4 + $0x1e8] sm:$0xff]
    %v334 = vld [vmem:[#allocation4 + $0x1f0] sm:$0xff]
    %v335 = vld [vmem:[#allocation4 + $0x1f8] sm:$0xff]
    %v336 = vld [vmem:[#allocation3] sm:$0x3]
    %v337 = vld [vmem:[#allocation3 + $0x8] sm:$0x3]
    %v338 = vld [vmem:[#allocation3 + $0x10] sm:$0x3]
    %v339 = vld [vmem:[#allocation3 + $0x18] sm:$0x3]
    %340 = vmatpush.msra.mxu0 %v332
    %341 = vmatpush.msra.mxu0 %v328
    %342 = vmatpush.msra.mxu0 %v324
    %343 = vmatpush.msra.mxu0 %v320
    %344 = vmatpush.msra.mxu0 %v316
    %345 = vmatpush.msra.mxu0 %v312
    %346 = vmatpush.msra.mxu0 %v308
    %347 = vmatpush.msra.mxu0 %v304
    %348 = vmatpush.msra.mxu0 %v300
    %349 = vmatpush.msra.mxu0 %v296
    %350 = vmatpush.msra.mxu0 %v292
    %351 = vmatpush.msra.mxu0 %v288
    %352 = vmatpush.msra.mxu0 %v284
    %353 = vmatpush.msra.mxu0 %v280
    %354 = vmatpush.msra.mxu0 %v276
    %355 = vmatpush.msra.mxu0 %v272
    %356 = vmatmul.f32.gmra.mxu0 0.0
    %v357 = vpop.f32.mrf.mxu0
    %v358 = vadd.f32 0.0, %v357
    %359 = vdwg.mxu0
    %360 = vmatpush.msra.mxu0 %v333
    %361 = vmatpush.msra.mxu0 %v329
    %362 = vmatpush.msra.mxu0 %v325
    %363 = vmatpush.msra.mxu0 %v321
    %364 = vmatpush.msra.mxu0 %v317
    %365 = vmatpush.msra.mxu0 %v313
    %366 = vmatpush.msra.mxu0 %v309
    %367 = vmatpush.msra.mxu0 %v305
    %368 = vmatpush.msra.mxu0 %v301
    %369 = vmatpush.msra.mxu0 %v297
    %370 = vmatpush.msra.mxu0 %v293
    %371 = vmatpush.msra.mxu0 %v289
    %372 = vmatpush.msra.mxu0 %v285
    %373 = vmatpush.msra.mxu0 %v281
    %374 = vmatpush.msra.mxu0 %v277
    %375 = vmatpush.msra.mxu0 %v273
    %376 = vmatmul.f32.gmra.mxu0 0.0
    %v377 = vpop.f32.mrf.mxu0
    %v378 = vadd.f32 0.0, %v377
    %379 = vdwg.mxu0
    %380 = vmatpush.msra.mxu0 %v334
    %381 = vmatpush.msra.mxu0 %v330
    %382 = vmatpush.msra.mxu0 %v326
    %383 = vmatpush.msra.mxu0 %v322
    %384 = vmatpush.msra.mxu0 %v318
    %385 = vmatpush.msra.mxu0 %v314
    %386 = vmatpush.msra.mxu0 %v310
    %387 = vmatpush.msra.mxu0 %v306
    %388 = vmatpush.msra.mxu0 %v302
    %389 = vmatpush.msra.mxu0 %v298
    %390 = vmatpush.msra.mxu0 %v294
    %391 = vmatpush.msra.mxu0 %v290
    %392 = vmatpush.msra.mxu0 %v286
    %393 = vmatpush.msra.mxu0 %v282
    %394 = vmatpush.msra.mxu0 %v278
    %395 = vmatpush.msra.mxu0 %v274
    %396 = vmatmul.f32.gmra.mxu0 0.0
    %v397 = vpop.f32.mrf.mxu0
    %v398 = vadd.f32 0.0, %v397
    %399 = vdwg.mxu0
    %400 = vmatpush.msra.mxu0 %v335
    %401 = vmatpush.msra.mxu0 %v331
    %402 = vmatpush.msra.mxu0 %v327
    %403 = vmatpush.msra.mxu0 %v323
    %404 = vmatpush.msra.mxu0 %v319
    %405 = vmatpush.msra.mxu0 %v315
    %406 = vmatpush.msra.mxu0 %v311
    %407 = vmatpush.msra.mxu0 %v307
    %408 = vmatpush.msra.mxu0 %v303
    %409 = vmatpush.msra.mxu0 %v299
    %410 = vmatpush.msra.mxu0 %v295
    %411 = vmatpush.msra.mxu0 %v291
    %412 = vmatpush.msra.mxu0 %v287
    %413 = vmatpush.msra.mxu0 %v283
    %414 = vmatpush.msra.mxu0 %v279
    %415 = vmatpush.msra.mxu0 %v275
    %416 = vmatmul.f32.gmra.mxu0 0.0
    %v417 = vpop.f32.mrf.mxu0
    %v418 = vadd.f32 0.0, %v417
    %419 = vdwg.mxu0
    %v420 = vadd.f32 %v336, %v358
    %v421 = vadd.f32 %v337, %v378
    %v422 = vadd.f32 %v338, %v398
    %v423 = vadd.f32 %v339, %v418
    %v424 = vxor.u32 %v420, 2147483648
    %v425 = vxor.u32 %v421, 2147483648
    %v426 = vxor.u32 %v422, 2147483648
    %v427 = vxor.u32 %v423, 2147483648
    %v428 = vmul.f32 %v424, 1.442695
    %v429 = vpow.pop %v428
    %v430 = vmul.f32 %v425, 1.442695
    %v431 = vpow.pop %v430
    %v432 = vmul.f32 %v426, 1.442695
    %v433 = vpow.pop %v432
    %v434 = vmul.f32 %v427, 1.442695
    %v435 = vpow.pop %v434
    %v436 = vadd.f32 %v429, 1.0
    %v437 = vadd.f32 %v431, 1.0
    %v438 = vadd.f32 %v433, 1.0
    %v439 = vadd.f32 %v435, 1.0
    %v440 = vrcp.pop %v436
    %v441 = vmul.f32 %v436, %v440
    %v442 = vsub.f32 1.0, %v441
    %v443 = vmul.f32 %v440, %v442
    %v444 = vadd.f32 %v440, %v443
    %vm445 = vweird.f32 %v436
    %vm446 = vweird.f32 %v440
    %vm447 = vmor %vm445, %vm446
    %v448 = vsel %vm447, %v440, %v444
    %v449 = vand.u32 2147483647, %v436
    %vm450 = vcmp.eq.f32.partialorder %v449, 8.507059e+37
    %v451 = vand.u32 %v436, 2147483648
    %v452 = vor.u32 1.1754944e-38, %v451
    %v453 = vsel %vm450, %v452, %v448
    %v454 = vmul.f32 1.0, %v453
    %v455 = vrcp.pop %v437
    %v456 = vmul.f32 %v437, %v455
    %v457 = vsub.f32 1.0, %v456
    %v458 = vmul.f32 %v455, %v457
    %v459 = vadd.f32 %v455, %v458
    %vm460 = vweird.f32 %v437
    %vm461 = vweird.f32 %v455
    %vm462 = vmor %vm460, %vm461
    %v463 = vsel %vm462, %v455, %v459
    %v464 = vand.u32 2147483647, %v437
    %vm465 = vcmp.eq.f32.partialorder %v464, 8.507059e+37
    %v466 = vand.u32 %v437, 2147483648
    %v467 = vor.u32 1.1754944e-38, %v466
    %v468 = vsel %vm465, %v467, %v463
    %v469 = vmul.f32 1.0, %v468
    %v470 = vrcp.pop %v438
    %v471 = vmul.f32 %v438, %v470
    %v472 = vsub.f32 1.0, %v471
    %v473 = vmul.f32 %v470, %v472
    %v474 = vadd.f32 %v470, %v473
    %vm475 = vweird.f32 %v438
    %vm476 = vweird.f32 %v470
    %vm477 = vmor %vm475, %vm476
    %v478 = vsel %vm477, %v470, %v474
    %v479 = vand.u32 2147483647, %v438
    %vm480 = vcmp.eq.f32.partialorder %v479, 8.507059e+37
    %v481 = vand.u32 %v438, 2147483648
    %v482 = vor.u32 1.1754944e-38, %v481
    %v483 = vsel %vm480, %v482, %v478
    %v484 = vmul.f32 1.0, %v483
    %v485 = vrcp.pop %v439
    %v486 = vmul.f32 %v439, %v485
    %v487 = vsub.f32 1.0, %v486
    %v488 = vmul.f32 %v485, %v487
    %v489 = vadd.f32 %v485, %v488
    %vm490 = vweird.f32 %v439
    %vm491 = vweird.f32 %v485
    %vm492 = vmor %vm490, %vm491
    %v493 = vsel %vm492, %v485, %v489
    %v494 = vand.u32 2147483647, %v439
    %vm495 = vcmp.eq.f32.partialorder %v494, 8.507059e+37
    %v496 = vand.u32 %v439, 2147483648
    %v497 = vor.u32 1.1754944e-38, %v496
    %v498 = vsel %vm495, %v497, %v493
    %v499 = vmul.f32 1.0, %v498
    %v500 = vmul.f32 %v484, 2.0
    %v501 = vsub.f32 %v500, 1.0
    %v502 = vmul.f32 %v469, 0.0
    %v503 = vmul.f32 %v454, %v501
    %v504 = vadd.f32 %v502, %v503
    %v505 = vtanh.pop %v504
    %v506 = vmul.f32 %v499, %v505
    %507 = vst [vmem:[#allocation2] sm:$0x3] %v506
    %v508 = vld [vmem:[#allocation3] sm:$0xc]
    %v509 = vld [vmem:[#allocation3 + $0x8] sm:$0xc]
    %v510 = vld [vmem:[#allocation3 + $0x10] sm:$0xc]
    %v511 = vld [vmem:[#allocation3 + $0x18] sm:$0xc]
    %512 = vmatpush.msra.mxu0 %v332
    %513 = vmatpush.msra.mxu0 %v328
    %514 = vmatpush.msra.mxu0 %v324
    %515 = vmatpush.msra.mxu0 %v320
    %516 = vmatpush.msra.mxu0 %v316
    %517 = vmatpush.msra.mxu0 %v312
    %518 = vmatpush.msra.mxu0 %v308
    %519 = vmatpush.msra.mxu0 %v304
    %520 = vmatpush.msra.mxu0 %v300
    %521 = vmatpush.msra.mxu0 %v296
    %522 = vmatpush.msra.mxu0 %v292
    %523 = vmatpush.msra.mxu0 %v288
    %524 = vmatpush.msra.mxu0 %v284
    %525 = vmatpush.msra.mxu0 %v280
    %526 = vmatpush.msra.mxu0 %v276
    %527 = vmatpush.msra.mxu0 %v272
    %528 = vmatmul.f32.gmra.mxu0 %v506
    %v529 = vpop.f32.mrf.mxu0
    %v530 = vadd.f32 0.0, %v529
    %531 = vdwg.mxu0
    %532 = vmatpush.msra.mxu0 %v333
    %533 = vmatpush.msra.mxu0 %v329
    %534 = vmatpush.msra.mxu0 %v325
    %535 = vmatpush.msra.mxu0 %v321
    %536 = vmatpush.msra.mxu0 %v317
    %537 = vmatpush.msra.mxu0 %v313
    %538 = vmatpush.msra.mxu0 %v309
    %539 = vmatpush.msra.mxu0 %v305
    %540 = vmatpush.msra.mxu0 %v301
    %541 = vmatpush.msra.mxu0 %v297
    %542 = vmatpush.msra.mxu0 %v293
    %543 = vmatpush.msra.mxu0 %v289
    %544 = vmatpush.msra.mxu0 %v285
    %545 = vmatpush.msra.mxu0 %v281
    %546 = vmatpush.msra.mxu0 %v277
    %547 = vmatpush.msra.mxu0 %v273
    %548 = vmatmul.f32.gmra.mxu0 %v506
    %v549 = vpop.f32.mrf.mxu0
    %v550 = vadd.f32 0.0, %v549
    %551 = vdwg.mxu0
    %552 = vmatpush.msra.mxu0 %v334
    %553 = vmatpush.msra.mxu0 %v330
    %554 = vmatpush.msra.mxu0 %v326
    %555 = vmatpush.msra.mxu0 %v322
    %556 = vmatpush.msra.mxu0 %v318
    %557 = vmatpush.msra.mxu0 %v314
    %558 = vmatpush.msra.mxu0 %v310
    %559 = vmatpush.msra.mxu0 %v306
    %560 = vmatpush.msra.mxu0 %v302
    %561 = vmatpush.msra.mxu0 %v298
    %562 = vmatpush.msra.mxu0 %v294
    %563 = vmatpush.msra.mxu0 %v290
    %564 = vmatpush.msra.mxu0 %v286
    %565 = vmatpush.msra.mxu0 %v282
    %566 = vmatpush.msra.mxu0 %v278
    %567 = vmatpush.msra.mxu0 %v274
    %568 = vmatmul.f32.gmra.mxu0 %v506
    %v569 = vpop.f32.mrf.mxu0
    %v570 = vadd.f32 0.0, %v569
    %571 = vdwg.mxu0
    %572 = vmatpush.msra.mxu0 %v335
    %573 = vmatpush.msra.mxu0 %v331
    %574 = vmatpush.msra.mxu0 %v327
    %575 = vmatpush.msra.mxu0 %v323
    %576 = vmatpush.msra.mxu0 %v319
    %577 = vmatpush.msra.mxu0 %v315
    %578 = vmatpush.msra.mxu0 %v311
    %579 = vmatpush.msra.mxu0 %v307
    %580 = vmatpush.msra.mxu0 %v303
    %581 = vmatpush.msra.mxu0 %v299
    %582 = vmatpush.msra.mxu0 %v295
    %583 = vmatpush.msra.mxu0 %v291
    %584 = vmatpush.msra.mxu0 %v287
    %585 = vmatpush.msra.mxu0 %v283
    %586 = vmatpush.msra.mxu0 %v279
    %587 = vmatpush.msra.mxu0 %v275
    %588 = vmatmul.f32.gmra.mxu0 %v506
    %v589 = vpop.f32.mrf.mxu0
    %v590 = vadd.f32 0.0, %v589
    %591 = vdwg.mxu0
    %v596 = vrot.slane %v530, 6
    %v597 = vrot.slane %v550, 6
    %v598 = vrot.slane %v570, 6
    %v599 = vrot.slane %v590, 6
    %v604 = vadd.f32 %v508, %v596
    %v605 = vadd.f32 %v509, %v597
    %v606 = vadd.f32 %v510, %v598
    %v607 = vadd.f32 %v511, %v599
    %v608 = vxor.u32 %v604, 2147483648
    %v609 = vxor.u32 %v605, 2147483648
    %v610 = vxor.u32 %v606, 2147483648
    %v611 = vxor.u32 %v607, 2147483648
    %v612 = vmul.f32 %v608, 1.442695
    %v613 = vpow.pop %v612
    %v614 = vmul.f32 %v609, 1.442695
    %v615 = vpow.pop %v614
    %v616 = vmul.f32 %v610, 1.442695
    %v617 = vpow.pop %v616
    %v618 = vmul.f32 %v611, 1.442695
    %v619 = vpow.pop %v618
    %v620 = vadd.f32 %v613, 1.0
    %v621 = vadd.f32 %v615, 1.0
    %v622 = vadd.f32 %v617, 1.0
    %v623 = vadd.f32 %v619, 1.0
    %v624 = vrcp.pop %v620
    %v625 = vmul.f32 %v620, %v624
    %v626 = vsub.f32 1.0, %v625
    %v627 = vmul.f32 %v624, %v626
    %v628 = vadd.f32 %v624, %v627
    %vm629 = vweird.f32 %v620
    %vm630 = vweird.f32 %v624
    %vm631 = vmor %vm629, %vm630
    %v632 = vsel %vm631, %v624, %v628
    %v633 = vand.u32 2147483647, %v620
    %vm634 = vcmp.eq.f32.partialorder %v633, 8.507059e+37
    %v635 = vand.u32 %v620, 2147483648
    %v636 = vor.u32 1.1754944e-38, %v635
    %v637 = vsel %vm634, %v636, %v632
    %v638 = vmul.f32 1.0, %v637
    %v639 = vrcp.pop %v621
    %v640 = vmul.f32 %v621, %v639
    %v641 = vsub.f32 1.0, %v640
    %v642 = vmul.f32 %v639, %v641
    %v643 = vadd.f32 %v639, %v642
    %vm644 = vweird.f32 %v621
    %vm645 = vweird.f32 %v639
    %vm646 = vmor %vm644, %vm645
    %v647 = vsel %vm646, %v639, %v643
    %v648 = vand.u32 2147483647, %v621
    %vm649 = vcmp.eq.f32.partialorder %v648, 8.507059e+37
    %v650 = vand.u32 %v621, 2147483648
    %v651 = vor.u32 1.1754944e-38, %v650
    %v652 = vsel %vm649, %v651, %v647
    %v653 = vmul.f32 1.0, %v652
    %v654 = vrcp.pop %v622
    %v655 = vmul.f32 %v622, %v654
    %v656 = vsub.f32 1.0, %v655
    %v657 = vmul.f32 %v654, %v656
    %v658 = vadd.f32 %v654, %v657
    %vm659 = vweird.f32 %v622
    %vm660 = vweird.f32 %v654
    %vm661 = vmor %vm659, %vm660
    %v662 = vsel %vm661, %v654, %v658
    %v663 = vand.u32 2147483647, %v622
    %vm664 = vcmp.eq.f32.partialorder %v663, 8.507059e+37
    %v665 = vand.u32 %v622, 2147483648
    %v666 = vor.u32 1.1754944e-38, %v665
    %v667 = vsel %vm664, %v666, %v662
    %v668 = vmul.f32 1.0, %v667
    %v669 = vrcp.pop %v623
    %v670 = vmul.f32 %v623, %v669
    %v671 = vsub.f32 1.0, %v670
    %v672 = vmul.f32 %v669, %v671
    %v673 = vadd.f32 %v669, %v672
    %vm674 = vweird.f32 %v623
    %vm675 = vweird.f32 %v669
    %vm676 = vmor %vm674, %vm675
    %v677 = vsel %vm676, %v669, %v673
    %v678 = vand.u32 2147483647, %v623
    %vm679 = vcmp.eq.f32.partialorder %v678, 8.507059e+37
    %v680 = vand.u32 %v623, 2147483648
    %v681 = vor.u32 1.1754944e-38, %v680
    %v682 = vsel %vm679, %v681, %v677
    %v683 = vmul.f32 1.0, %v682
    %v684 = vmul.f32 %v668, 2.0
    %v685 = vsub.f32 %v684, 1.0
    %v687 = vrot.slane %v504, 6
    %v689 = vmul.f32 %v653, %v687
    %v690 = vmul.f32 %v638, %v685
    %v691 = vadd.f32 %v689, %v690
    %v692 = vtanh.pop %v691
    %v693 = vmul.f32 %v683, %v692
    %694 = vst [vmem:[#allocation2] sm:$0xc] %v693
    %v695 = vld [vmem:[#allocation3] sm:$0x30]
    %v696 = vld [vmem:[#allocation3 + $0x8] sm:$0x30]
    %v697 = vld [vmem:[#allocation3 + $0x10] sm:$0x30]
    %v698 = vld [vmem:[#allocation3 + $0x18] sm:$0x30]
    %v700 = vrot.slane %v693, 2
    %702 = vmatpush.msra.mxu0 %v332
    %703 = vmatpush.msra.mxu0 %v328
    %704 = vmatpush.msra.mxu0 %v324
    %705 = vmatpush.msra.mxu0 %v320
    %706 = vmatpush.msra.mxu0 %v316
    %707 = vmatpush.msra.mxu0 %v312
    %708 = vmatpush.msra.mxu0 %v308
    %709 = vmatpush.msra.mxu0 %v304
    %710 = vmatpush.msra.mxu0 %v300
    %711 = vmatpush.msra.mxu0 %v296
    %712 = vmatpush.msra.mxu0 %v292
    %713 = vmatpush.msra.mxu0 %v288
    %714 = vmatpush.msra.mxu0 %v284
    %715 = vmatpush.msra.mxu0 %v280
    %716 = vmatpush.msra.mxu0 %v276
    %717 = vmatpush.msra.mxu0 %v272
    %718 = vmatmul.f32.gmra.mxu0 %v700
    %v719 = vpop.f32.mrf.mxu0
    %v720 = vadd.f32 0.0, %v719
    %721 = vdwg.mxu0
    %722 = vmatpush.msra.mxu0 %v333
    %723 = vmatpush.msra.mxu0 %v329
    %724 = vmatpush.msra.mxu0 %v325
    %725 = vmatpush.msra.mxu0 %v321
    %726 = vmatpush.msra.mxu0 %v317
    %727 = vmatpush.msra.mxu0 %v313
    %728 = vmatpush.msra.mxu0 %v309
    %729 = vmatpush.msra.mxu0 %v305
    %730 = vmatpush.msra.mxu0 %v301
    %731 = vmatpush.msra.mxu0 %v297
    %732 = vmatpush.msra.mxu0 %v293
    %733 = vmatpush.msra.mxu0 %v289
    %734 = vmatpush.msra.mxu0 %v285
    %735 = vmatpush.msra.mxu0 %v281
    %736 = vmatpush.msra.mxu0 %v277
    %737 = vmatpush.msra.mxu0 %v273
    %738 = vmatmul.f32.gmra.mxu0 %v700
    %v739 = vpop.f32.mrf.mxu0
    %v740 = vadd.f32 0.0, %v739
    %741 = vdwg.mxu0
    %742 = vmatpush.msra.mxu0 %v334
    %743 = vmatpush.msra.mxu0 %v330
    %744 = vmatpush.msra.mxu0 %v326
    %745 = vmatpush.msra.mxu0 %v322
    %746 = vmatpush.msra.mxu0 %v318
    %747 = vmatpush.msra.mxu0 %v314
    %748 = vmatpush.msra.mxu0 %v310
    %749 = vmatpush.msra.mxu0 %v306
    %750 = vmatpush.msra.mxu0 %v302
    %751 = vmatpush.msra.mxu0 %v298
    %752 = vmatpush.msra.mxu0 %v294
    %753 = vmatpush.msra.mxu0 %v290
    %754 = vmatpush.msra.mxu0 %v286
    %755 = vmatpush.msra.mxu0 %v282
    %756 = vmatpush.msra.mxu0 %v278
    %757 = vmatpush.msra.mxu0 %v274
    %758 = vmatmul.f32.gmra.mxu0 %v700
    %v759 = vpop.f32.mrf.mxu0
    %v760 = vadd.f32 0.0, %v759
    %761 = vdwg.mxu0
    %762 = vmatpush.msra.mxu0 %v335
    %763 = vmatpush.msra.mxu0 %v331
    %764 = vmatpush.msra.mxu0 %v327
    %765 = vmatpush.msra.mxu0 %v323
    %766 = vmatpush.msra.mxu0 %v319
    %767 = vmatpush.msra.mxu0 %v315
    %768 = vmatpush.msra.mxu0 %v311
    %769 = vmatpush.msra.mxu0 %v307
    %770 = vmatpush.msra.mxu0 %v303
    %771 = vmatpush.msra.mxu0 %v299
    %772 = vmatpush.msra.mxu0 %v295
    %773 = vmatpush.msra.mxu0 %v291
    %774 = vmatpush.msra.mxu0 %v287
    %775 = vmatpush.msra.mxu0 %v283
    %776 = vmatpush.msra.mxu0 %v279
    %777 = vmatpush.msra.mxu0 %v275
    %778 = vmatmul.f32.gmra.mxu0 %v700
    %v779 = vpop.f32.mrf.mxu0
    %v780 = vadd.f32 0.0, %v779
    %781 = vdwg.mxu0
    %v786 = vrot.slane %v720, 4
    %v787 = vrot.slane %v740, 4
    %v788 = vrot.slane %v760, 4
    %v789 = vrot.slane %v780, 4
    %v794 = vadd.f32 %v695, %v786
    %v795 = vadd.f32 %v696, %v787
    %v796 = vadd.f32 %v697, %v788
    %v797 = vadd.f32 %v698, %v789
    %v798 = vxor.u32 %v794, 2147483648
    %v799 = vxor.u32 %v795, 2147483648
    %v800 = vxor.u32 %v796, 2147483648
    %v801 = vxor.u32 %v797, 2147483648
    %v802 = vmul.f32 %v798, 1.442695
    %v803 = vpow.pop %v802
    %v804 = vmul.f32 %v799, 1.442695
    %v805 = vpow.pop %v804
    %v806 = vmul.f32 %v800, 1.442695
    %v807 = vpow.pop %v806
    %v808 = vmul.f32 %v801, 1.442695
    %v809 = vpow.pop %v808
    %v810 = vadd.f32 %v803, 1.0
    %v811 = vadd.f32 %v805, 1.0
    %v812 = vadd.f32 %v807, 1.0
    %v813 = vadd.f32 %v809, 1.0
    %v814 = vrcp.pop %v810
    %v815 = vmul.f32 %v810, %v814
    %v816 = vsub.f32 1.0, %v815
    %v817 = vmul.f32 %v814, %v816
    %v818 = vadd.f32 %v814, %v817
    %vm819 = vweird.f32 %v810
    %vm820 = vweird.f32 %v814
    %vm821 = vmor %vm819, %vm820
    %v822 = vsel %vm821, %v814, %v818
    %v823 = vand.u32 2147483647, %v810
    %vm824 = vcmp.eq.f32.partialorder %v823, 8.507059e+37
    %v825 = vand.u32 %v810, 2147483648
    %v826 = vor.u32 1.1754944e-38, %v825
    %v827 = vsel %vm824, %v826, %v822
    %v828 = vmul.f32 1.0, %v827
    %v829 = vrcp.pop %v811
    %v830 = vmul.f32 %v811, %v829
    %v831 = vsub.f32 1.0, %v830
    %v832 = vmul.f32 %v829, %v831
    %v833 = vadd.f32 %v829, %v832
    %vm834 = vweird.f32 %v811
    %vm835 = vweird.f32 %v829
    %vm836 = vmor %vm834, %vm835
    %v837 = vsel %vm836, %v829, %v833
    %v838 = vand.u32 2147483647, %v811
    %vm839 = vcmp.eq.f32.partialorder %v838, 8.507059e+37
    %v840 = vand.u32 %v811, 2147483648
    %v841 = vor.u32 1.1754944e-38, %v840
    %v842 = vsel %vm839, %v841, %v837
    %v843 = vmul.f32 1.0, %v842
    %v844 = vrcp.pop %v812
    %v845 = vmul.f32 %v812, %v844
    %v846 = vsub.f32 1.0, %v845
    %v847 = vmul.f32 %v844, %v846
    %v848 = vadd.f32 %v844, %v847
    %vm849 = vweird.f32 %v812
    %vm850 = vweird.f32 %v844
    %vm851 = vmor %vm849, %vm850
    %v852 = vsel %vm851, %v844, %v848
    %v853 = vand.u32 2147483647, %v812
    %vm854 = vcmp.eq.f32.partialorder %v853, 8.507059e+37
    %v855 = vand.u32 %v812, 2147483648
    %v856 = vor.u32 1.1754944e-38, %v855
    %v857 = vsel %vm854, %v856, %v852
    %v858 = vmul.f32 1.0, %v857
    %v859 = vrcp.pop %v813
    %v860 = vmul.f32 %v813, %v859
    %v861 = vsub.f32 1.0, %v860
    %v862 = vmul.f32 %v859, %v861
    %v863 = vadd.f32 %v859, %v862
    %vm864 = vweird.f32 %v813
    %vm865 = vweird.f32 %v859
    %vm866 = vmor %vm864, %vm865
    %v867 = vsel %vm866, %v859, %v863
    %v868 = vand.u32 2147483647, %v813
    %vm869 = vcmp.eq.f32.partialorder %v868, 8.507059e+37
    %v870 = vand.u32 %v813, 2147483648
    %v871 = vor.u32 1.1754944e-38, %v870
    %v872 = vsel %vm869, %v871, %v867
    %v873 = vmul.f32 1.0, %v872
    %v874 = vmul.f32 %v858, 2.0
    %v875 = vsub.f32 %v874, 1.0
    %v877 = vrot.slane %v691, 6
    %v879 = vmul.f32 %v843, %v877
    %v880 = vmul.f32 %v828, %v875
    %v881 = vadd.f32 %v879, %v880
    %v882 = vtanh.pop %v881
    %v883 = vmul.f32 %v873, %v882
    %884 = vst [vmem:[#allocation2] sm:$0x30] %v883
    %v885 = vld [vmem:[#allocation3] sm:$0xc0]
    %v886 = vld [vmem:[#allocation3 + $0x8] sm:$0xc0]
    %v887 = vld [vmem:[#allocation3 + $0x10] sm:$0xc0]
    %v888 = vld [vmem:[#allocation3 + $0x18] sm:$0xc0]
    %v890 = vrot.slane %v883, 4
    %892 = vmatpush.msra.mxu0 %v332
    %893 = vmatpush.msra.mxu0 %v328
    %894 = vmatpush.msra.mxu0 %v324
    %895 = vmatpush.msra.mxu0 %v320
    %896 = vmatpush.msra.mxu0 %v316
    %897 = vmatpush.msra.mxu0 %v312
    %898 = vmatpush.msra.mxu0 %v308
    %899 = vmatpush.msra.mxu0 %v304
    %900 = vmatpush.msra.mxu0 %v300
    %901 = vmatpush.msra.mxu0 %v296
    %902 = vmatpush.msra.mxu0 %v292
    %903 = vmatpush.msra.mxu0 %v288
    %904 = vmatpush.msra.mxu0 %v284
    %905 = vmatpush.msra.mxu0 %v280
    %906 = vmatpush.msra.mxu0 %v276
    %907 = vmatpush.msra.mxu0 %v272
    %908 = vmatmul.f32.gmra.mxu0 %v890
    %v909 = vpop.f32.mrf.mxu0
    %v910 = vadd.f32 0.0, %v909
    %911 = vdwg.mxu0
    %912 = vmatpush.msra.mxu0 %v333
    %913 = vmatpush.msra.mxu0 %v329
    %914 = vmatpush.msra.mxu0 %v325
    %915 = vmatpush.msra.mxu0 %v321
    %916 = vmatpush.msra.mxu0 %v317
    %917 = vmatpush.msra.mxu0 %v313
    %918 = vmatpush.msra.mxu0 %v309
    %919 = vmatpush.msra.mxu0 %v305
    %920 = vmatpush.msra.mxu0 %v301
    %921 = vmatpush.msra.mxu0 %v297
    %922 = vmatpush.msra.mxu0 %v293
    %923 = vmatpush.msra.mxu0 %v289
    %924 = vmatpush.msra.mxu0 %v285
    %925 = vmatpush.msra.mxu0 %v281
    %926 = vmatpush.msra.mxu0 %v277
    %927 = vmatpush.msra.mxu0 %v273
    %928 = vmatmul.f32.gmra.mxu0 %v890
    %v929 = vpop.f32.mrf.mxu0
    %v930 = vadd.f32 0.0, %v929
    %931 = vdwg.mxu0
    %932 = vmatpush.msra.mxu0 %v334
    %933 = vmatpush.msra.mxu0 %v330
    %934 = vmatpush.msra.mxu0 %v326
    %935 = vmatpush.msra.mxu0 %v322
    %936 = vmatpush.msra.mxu0 %v318
    %937 = vmatpush.msra.mxu0 %v314
    %938 = vmatpush.msra.mxu0 %v310
    %939 = vmatpush.msra.mxu0 %v306
    %940 = vmatpush.msra.mxu0 %v302
    %941 = vmatpush.msra.mxu0 %v298
    %942 = vmatpush.msra.mxu0 %v294
    %943 = vmatpush.msra.mxu0 %v290
    %944 = vmatpush.msra.mxu0 %v286
    %945 = vmatpush.msra.mxu0 %v282
    %946 = vmatpush.msra.mxu0 %v278
    %947 = vmatpush.msra.mxu0 %v274
    %948 = vmatmul.f32.gmra.mxu0 %v890
    %v949 = vpop.f32.mrf.mxu0
    %v950 = vadd.f32 0.0, %v949
    %951 = vdwg.mxu0
    %952 = vmatpush.msra.mxu0 %v335
    %953 = vmatpush.msra.mxu0 %v331
    %954 = vmatpush.msra.mxu0 %v327
    %955 = vmatpush.msra.mxu0 %v323
    %956 = vmatpush.msra.mxu0 %v319
    %957 = vmatpush.msra.mxu0 %v315
    %958 = vmatpush.msra.mxu0 %v311
    %959 = vmatpush.msra.mxu0 %v307
    %960 = vmatpush.msra.mxu0 %v303
    %961 = vmatpush.msra.mxu0 %v299
    %962 = vmatpush.msra.mxu0 %v295
    %963 = vmatpush.msra.mxu0 %v291
    %964 = vmatpush.msra.mxu0 %v287
    %965 = vmatpush.msra.mxu0 %v283
    %966 = vmatpush.msra.mxu0 %v279
    %967 = vmatpush.msra.mxu0 %v275
    %968 = vmatmul.f32.gmra.mxu0 %v890
    %v969 = vpop.f32.mrf.mxu0
    %v970 = vadd.f32 0.0, %v969
    %971 = vdwg.mxu0
    %v976 = vrot.slane %v910, 2
    %v977 = vrot.slane %v930, 2
    %v978 = vrot.slane %v950, 2
    %v979 = vrot.slane %v970, 2
    %v984 = vadd.f32 %v885, %v976
    %v985 = vadd.f32 %v886, %v977
    %v986 = vadd.f32 %v887, %v978
    %v987 = vadd.f32 %v888, %v979
    %v988 = vxor.u32 %v984, 2147483648
    %v989 = vxor.u32 %v985, 2147483648
    %v990 = vxor.u32 %v986, 2147483648
    %v991 = vxor.u32 %v987, 2147483648
    %v992 = vmul.f32 %v988, 1.442695
    %v993 = vpow.pop %v992
    %v994 = vmul.f32 %v989, 1.442695
    %v995 = vpow.pop %v994
    %v996 = vmul.f32 %v990, 1.442695
    %v997 = vpow.pop %v996
    %v998 = vmul.f32 %v991, 1.442695
    %v999 = vpow.pop %v998
    %v1000 = vadd.f32 %v993, 1.0
    %v1001 = vadd.f32 %v995, 1.0
    %v1002 = vadd.f32 %v997, 1.0
    %v1003 = vadd.f32 %v999, 1.0
    %v1004 = vrcp.pop %v1000
    %v1005 = vmul.f32 %v1000, %v1004
    %v1006 = vsub.f32 1.0, %v1005
    %v1007 = vmul.f32 %v1004, %v1006
    %v1008 = vadd.f32 %v1004, %v1007
    %vm1009 = vweird.f32 %v1000
    %vm1010 = vweird.f32 %v1004
    %vm1011 = vmor %vm1009, %vm1010
    %v1012 = vsel %vm1011, %v1004, %v1008
    %v1013 = vand.u32 2147483647, %v1000
    %vm1014 = vcmp.eq.f32.partialorder %v1013, 8.507059e+37
    %v1015 = vand.u32 %v1000, 2147483648
    %v1016 = vor.u32 1.1754944e-38, %v1015
    %v1017 = vsel %vm1014, %v1016, %v1012
    %v1018 = vmul.f32 1.0, %v1017
    %v1019 = vrcp.pop %v1001
    %v1020 = vmul.f32 %v1001, %v1019
    %v1021 = vsub.f32 1.0, %v1020
    %v1022 = vmul.f32 %v1019, %v1021
    %v1023 = vadd.f32 %v1019, %v1022
    %vm1024 = vweird.f32 %v1001
    %vm1025 = vweird.f32 %v1019
    %vm1026 = vmor %vm1024, %vm1025
    %v1027 = vsel %vm1026, %v1019, %v1023
    %v1028 = vand.u32 2147483647, %v1001
    %vm1029 = vcmp.eq.f32.partialorder %v1028, 8.507059e+37
    %v1030 = vand.u32 %v1001, 2147483648
    %v1031 = vor.u32 1.1754944e-38, %v1030
    %v1032 = vsel %vm1029, %v1031, %v1027
    %v1033 = vmul.f32 1.0, %v1032
    %v1034 = vrcp.pop %v1002
    %v1035 = vmul.f32 %v1002, %v1034
    %v1036 = vsub.f32 1.0, %v1035
    %v1037 = vmul.f32 %v1034, %v1036
    %v1038 = vadd.f32 %v1034, %v1037
    %vm1039 = vweird.f32 %v1002
    %vm1040 = vweird.f32 %v1034
    %vm1041 = vmor %vm1039, %vm1040
    %v1042 = vsel %vm1041, %v1034, %v1038
    %v1043 = vand.u32 2147483647, %v1002
    %vm1044 = vcmp.eq.f32.partialorder %v1043, 8.507059e+37
    %v1045 = vand.u32 %v1002, 2147483648
    %v1046 = vor.u32 1.1754944e-38, %v1045
    %v1047 = vsel %vm1044, %v1046, %v1042
    %v1048 = vmul.f32 1.0, %v1047
    %v1049 = vrcp.pop %v1003
    %v1050 = vmul.f32 %v1003, %v1049
    %v1051 = vsub.f32 1.0, %v1050
    %v1052 = vmul.f32 %v1049, %v1051
    %v1053 = vadd.f32 %v1049, %v1052
    %vm1054 = vweird.f32 %v1003
    %vm1055 = vweird.f32 %v1049
    %vm1056 = vmor %vm1054, %vm1055
    %v1057 = vsel %vm1056, %v1049, %v1053
    %v1058 = vand.u32 2147483647, %v1003
    %vm1059 = vcmp.eq.f32.partialorder %v1058, 8.507059e+37
    %v1060 = vand.u32 %v1003, 2147483648
    %v1061 = vor.u32 1.1754944e-38, %v1060
    %v1062 = vsel %vm1059, %v1061, %v1057
    %v1063 = vmul.f32 1.0, %v1062
    %v1064 = vmul.f32 %v1048, 2.0
    %v1065 = vsub.f32 %v1064, 1.0
    %v1067 = vrot.slane %v881, 6
    %v1069 = vmul.f32 %v1033, %v1067
    %v1070 = vmul.f32 %v1018, %v1065
    %v1071 = vadd.f32 %v1069, %v1070
    %v1072 = vtanh.pop %v1071
    %v1073 = vmul.f32 %v1063, %v1072
    %1074 = vst [vmem:[#allocation2] sm:$0xc0] %v1073
    %v1075 = vld [vmem:[#allocation3 + $0x20] sm:$0x3]
    %v1076 = vld [vmem:[#allocation3 + $0x28] sm:$0x3]
    %v1077 = vld [vmem:[#allocation3 + $0x30] sm:$0x3]
    %v1078 = vld [vmem:[#allocation3 + $0x38] sm:$0x3]
    %v1080 = vrot.slane %v1073, 6
    %1082 = vmatpush.msra.mxu0 %v332
    %1083 = vmatpush.msra.mxu0 %v328
    %1084 = vmatpush.msra.mxu0 %v324
    %1085 = vmatpush.msra.mxu0 %v320
    %1086 = vmatpush.msra.mxu0 %v316
    %1087 = vmatpush.msra.mxu0 %v312
    %1088 = vmatpush.msra.mxu0 %v308
    %1089 = vmatpush.msra.mxu0 %v304
    %1090 = vmatpush.msra.mxu0 %v300
    %1091 = vmatpush.msra.mxu0 %v296
    %1092 = vmatpush.msra.mxu0 %v292
    %1093 = vmatpush.msra.mxu0 %v288
    %1094 = vmatpush.msra.mxu0 %v284
    %1095 = vmatpush.msra.mxu0 %v280
    %1096 = vmatpush.msra.mxu0 %v276
    %1097 = vmatpush.msra.mxu0 %v272
    %1098 = vmatmul.f32.gmra.mxu0 %v1080
    %v1099 = vpop.f32.mrf.mxu0
    %v1100 = vadd.f32 0.0, %v1099
    %1101 = vdwg.mxu0
    %1102 = vmatpush.msra.mxu0 %v333
    %1103 = vmatpush.msra.mxu0 %v329
    %1104 = vmatpush.msra.mxu0 %v325
    %1105 = vmatpush.msra.mxu0 %v321
    %1106 = vmatpush.msra.mxu0 %v317
    %1107 = vmatpush.msra.mxu0 %v313
    %1108 = vmatpush.msra.mxu0 %v309
    %1109 = vmatpush.msra.mxu0 %v305
    %1110 = vmatpush.msra.mxu0 %v301
    %1111 = vmatpush.msra.mxu0 %v297
    %1112 = vmatpush.msra.mxu0 %v293
    %1113 = vmatpush.msra.mxu0 %v289
    %1114 = vmatpush.msra.mxu0 %v285
    %1115 = vmatpush.msra.mxu0 %v281
    %1116 = vmatpush.msra.mxu0 %v277
    %1117 = vmatpush.msra.mxu0 %v273
    %1118 = vmatmul.f32.gmra.mxu0 %v1080
    %v1119 = vpop.f32.mrf.mxu0
    %v1120 = vadd.f32 0.0, %v1119
    %1121 = vdwg.mxu0
    %1122 = vmatpush.msra.mxu0 %v334
    %1123 = vmatpush.msra.mxu0 %v330
    %1124 = vmatpush.msra.mxu0 %v326
    %1125 = vmatpush.msra.mxu0 %v322
    %1126 = vmatpush.msra.mxu0 %v318
    %1127 = vmatpush.msra.mxu0 %v314
    %1128 = vmatpush.msra.mxu0 %v310
    %1129 = vmatpush.msra.mxu0 %v306
    %1130 = vmatpush.msra.mxu0 %v302
    %1131 = vmatpush.msra.mxu0 %v298
    %1132 = vmatpush.msra.mxu0 %v294
    %1133 = vmatpush.msra.mxu0 %v290
    %1134 = vmatpush.msra.mxu0 %v286
    %1135 = vmatpush.msra.mxu0 %v282
    %1136 = vmatpush.msra.mxu0 %v278
    %1137 = vmatpush.msra.mxu0 %v274
    %1138 = vmatmul.f32.gmra.mxu0 %v1080
    %v1139 = vpop.f32.mrf.mxu0
    %v1140 = vadd.f32 0.0, %v1139
    %1141 = vdwg.mxu0
    %1142 = vmatpush.msra.mxu0 %v335
    %1143 = vmatpush.msra.mxu0 %v331
    %1144 = vmatpush.msra.mxu0 %v327
    %1145 = vmatpush.msra.mxu0 %v323
    %1146 = vmatpush.msra.mxu0 %v319
    %1147 = vmatpush.msra.mxu0 %v315
    %1148 = vmatpush.msra.mxu0 %v311
    %1149 = vmatpush.msra.mxu0 %v307
    %1150 = vmatpush.msra.mxu0 %v303
    %1151 = vmatpush.msra.mxu0 %v299
    %1152 = vmatpush.msra.mxu0 %v295
    %1153 = vmatpush.msra.mxu0 %v291
    %1154 = vmatpush.msra.mxu0 %v287
    %1155 = vmatpush.msra.mxu0 %v283
    %1156 = vmatpush.msra.mxu0 %v279
    %1157 = vmatpush.msra.mxu0 %v275
    %1158 = vmatmul.f32.gmra.mxu0 %v1080
    %v1159 = vpop.f32.mrf.mxu0
    %v1160 = vadd.f32 0.0, %v1159
    %1161 = vdwg.mxu0
    %v1162 = vadd.f32 %v1075, %v1100
    %v1163 = vadd.f32 %v1076, %v1120
    %v1164 = vadd.f32 %v1077, %v1140
    %v1165 = vadd.f32 %v1078, %v1160
    %v1166 = vxor.u32 %v1162, 2147483648
    %v1167 = vxor.u32 %v1163, 2147483648
    %v1168 = vxor.u32 %v1164, 2147483648
    %v1169 = vxor.u32 %v1165, 2147483648
    %v1170 = vmul.f32 %v1166, 1.442695
    %v1171 = vpow.pop %v1170
    %v1172 = vmul.f32 %v1167, 1.442695
    %v1173 = vpow.pop %v1172
    %v1174 = vmul.f32 %v1168, 1.442695
    %v1175 = vpow.pop %v1174
    %v1176 = vmul.f32 %v1169, 1.442695
    %v1177 = vpow.pop %v1176
    %v1178 = vadd.f32 %v1171, 1.0
    %v1179 = vadd.f32 %v1173, 1.0
    %v1180 = vadd.f32 %v1175, 1.0
    %v1181 = vadd.f32 %v1177, 1.0
    %v1182 = vrcp.pop %v1178
    %v1183 = vmul.f32 %v1178, %v1182
    %v1184 = vsub.f32 1.0, %v1183
    %v1185 = vmul.f32 %v1182, %v1184
    %v1186 = vadd.f32 %v1182, %v1185
    %vm1187 = vweird.f32 %v1178
    %vm1188 = vweird.f32 %v1182
    %vm1189 = vmor %vm1187, %vm1188
    %v1190 = vsel %vm1189, %v1182, %v1186
    %v1191 = vand.u32 2147483647, %v1178
    %vm1192 = vcmp.eq.f32.partialorder %v1191, 8.507059e+37
    %v1193 = vand.u32 %v1178, 2147483648
    %v1194 = vor.u32 1.1754944e-38, %v1193
    %v1195 = vsel %vm1192, %v1194, %v1190
    %v1196 = vmul.f32 1.0, %v1195
    %v1197 = vrcp.pop %v1179
    %v1198 = vmul.f32 %v1179, %v1197
    %v1199 = vsub.f32 1.0, %v1198
    %v1200 = vmul.f32 %v1197, %v1199
    %v1201 = vadd.f32 %v1197, %v1200
    %vm1202 = vweird.f32 %v1179
    %vm1203 = vweird.f32 %v1197
    %vm1204 = vmor %vm1202, %vm1203
    %v1205 = vsel %vm1204, %v1197, %v1201
    %v1206 = vand.u32 2147483647, %v1179
    %vm1207 = vcmp.eq.f32.partialorder %v1206, 8.507059e+37
    %v1208 = vand.u32 %v1179, 2147483648
    %v1209 = vor.u32 1.1754944e-38, %v1208
    %v1210 = vsel %vm1207, %v1209, %v1205
    %v1211 = vmul.f32 1.0, %v1210
    %v1212 = vrcp.pop %v1180
    %v1213 = vmul.f32 %v1180, %v1212
    %v1214 = vsub.f32 1.0, %v1213
    %v1215 = vmul.f32 %v1212, %v1214
    %v1216 = vadd.f32 %v1212, %v1215
    %vm1217 = vweird.f32 %v1180
    %vm1218 = vweird.f32 %v1212
    %vm1219 = vmor %vm1217, %vm1218
    %v1220 = vsel %vm1219, %v1212, %v1216
    %v1221 = vand.u32 2147483647, %v1180
    %vm1222 = vcmp.eq.f32.partialorder %v1221, 8.507059e+37
    %v1223 = vand.u32 %v1180, 2147483648
    %v1224 = vor.u32 1.1754944e-38, %v1223
    %v1225 = vsel %vm1222, %v1224, %v1220
    %v1226 = vmul.f32 1.0, %v1225
    %v1227 = vrcp.pop %v1181
    %v1228 = vmul.f32 %v1181, %v1227
    %v1229 = vsub.f32 1.0, %v1228
    %v1230 = vmul.f32 %v1227, %v1229
    %v1231 = vadd.f32 %v1227, %v1230
    %vm1232 = vweird.f32 %v1181
    %vm1233 = vweird.f32 %v1227
    %vm1234 = vmor %vm1232, %vm1233
    %v1235 = vsel %vm1234, %v1227, %v1231
    %v1236 = vand.u32 2147483647, %v1181
    %vm1237 = vcmp.eq.f32.partialorder %v1236, 8.507059e+37
    %v1238 = vand.u32 %v1181, 2147483648
    %v1239 = vor.u32 1.1754944e-38, %v1238
    %v1240 = vsel %vm1237, %v1239, %v1235
    %v1241 = vmul.f32 1.0, %v1240
    %v1242 = vmul.f32 %v1226, 2.0
    %v1243 = vsub.f32 %v1242, 1.0
    %v1245 = vrot.slane %v1071, 6
    %v1247 = vmul.f32 %v1211, %v1245
    %v1248 = vmul.f32 %v1196, %v1243
    %v1249 = vadd.f32 %v1247, %v1248
    %v1250 = vtanh.pop %v1249
    %v1251 = vmul.f32 %v1241, %v1250
    %1252 = vst [vmem:[#allocation2 + $0x8] sm:$0x3] %v1251
    %v1253 = vld [vmem:[#allocation3 + $0x20] sm:$0xc]
    %v1254 = vld [vmem:[#allocation3 + $0x28] sm:$0xc]
    %v1255 = vld [vmem:[#allocation3 + $0x30] sm:$0xc]
    %v1256 = vld [vmem:[#allocation3 + $0x38] sm:$0xc]
    %1257 = vmatpush.msra.mxu0 %v332
    %1258 = vmatpush.msra.mxu0 %v328
    %1259 = vmatpush.msra.mxu0 %v324
    %1260 = vmatpush.msra.mxu0 %v320
    %1261 = vmatpush.msra.mxu0 %v316
    %1262 = vmatpush.msra.mxu0 %v312
    %1263 = vmatpush.msra.mxu0 %v308
    %1264 = vmatpush.msra.mxu0 %v304
    %1265 = vmatpush.msra.mxu0 %v300
    %1266 = vmatpush.msra.mxu0 %v296
    %1267 = vmatpush.msra.mxu0 %v292
    %1268 = vmatpush.msra.mxu0 %v288
    %1269 = vmatpush.msra.mxu0 %v284
    %1270 = vmatpush.msra.mxu0 %v280
    %1271 = vmatpush.msra.mxu0 %v276
    %1272 = vmatpush.msra.mxu0 %v272
    %1273 = vmatmul.f32.gmra.mxu0 %v1251
    %v1274 = vpop.f32.mrf.mxu0
    %v1275 = vadd.f32 0.0, %v1274
    %1276 = vdwg.mxu0
    %1277 = vmatpush.msra.mxu0 %v333
    %1278 = vmatpush.msra.mxu0 %v329
    %1279 = vmatpush.msra.mxu0 %v325
    %1280 = vmatpush.msra.mxu0 %v321
    %1281 = vmatpush.msra.mxu0 %v317
    %1282 = vmatpush.msra.mxu0 %v313
    %1283 = vmatpush.msra.mxu0 %v309
    %1284 = vmatpush.msra.mxu0 %v305
    %1285 = vmatpush.msra.mxu0 %v301
    %1286 = vmatpush.msra.mxu0 %v297
    %1287 = vmatpush.msra.mxu0 %v293
    %1288 = vmatpush.msra.mxu0 %v289
    %1289 = vmatpush.msra.mxu0 %v285
    %1290 = vmatpush.msra.mxu0 %v281
    %1291 = vmatpush.msra.mxu0 %v277
    %1292 = vmatpush.msra.mxu0 %v273
    %1293 = vmatmul.f32.gmra.mxu0 %v1251
    %v1294 = vpop.f32.mrf.mxu0
    %v1295 = vadd.f32 0.0, %v1294
    %1296 = vdwg.mxu0
    %1297 = vmatpush.msra.mxu0 %v334
    %1298 = vmatpush.msra.mxu0 %v330
    %1299 = vmatpush.msra.mxu0 %v326
    %1300 = vmatpush.msra.mxu0 %v322
    %1301 = vmatpush.msra.mxu0 %v318
    %1302 = vmatpush.msra.mxu0 %v314
    %1303 = vmatpush.msra.mxu0 %v310
    %1304 = vmatpush.msra.mxu0 %v306
    %1305 = vmatpush.msra.mxu0 %v302
    %1306 = vmatpush.msra.mxu0 %v298
    %1307 = vmatpush.msra.mxu0 %v294
    %1308 = vmatpush.msra.mxu0 %v290
    %1309 = vmatpush.msra.mxu0 %v286
    %1310 = vmatpush.msra.mxu0 %v282
    %1311 = vmatpush.msra.mxu0 %v278
    %1312 = vmatpush.msra.mxu0 %v274
    %1313 = vmatmul.f32.gmra.mxu0 %v1251
    %v1314 = vpop.f32.mrf.mxu0
    %v1315 = vadd.f32 0.0, %v1314
    %1316 = vdwg.mxu0
    %1317 = vmatpush.msra.mxu0 %v335
    %1318 = vmatpush.msra.mxu0 %v331
    %1319 = vmatpush.msra.mxu0 %v327
    %1320 = vmatpush.msra.mxu0 %v323
    %1321 = vmatpush.msra.mxu0 %v319
    %1322 = vmatpush.msra.mxu0 %v315
    %1323 = vmatpush.msra.mxu0 %v311
    %1324 = vmatpush.msra.mxu0 %v307
    %1325 = vmatpush.msra.mxu0 %v303
    %1326 = vmatpush.msra.mxu0 %v299
    %1327 = vmatpush.msra.mxu0 %v295
    %1328 = vmatpush.msra.mxu0 %v291
    %1329 = vmatpush.msra.mxu0 %v287
    %1330 = vmatpush.msra.mxu0 %v283
    %1331 = vmatpush.msra.mxu0 %v279
    %1332 = vmatpush.msra.mxu0 %v275
    %1333 = vmatmul.f32.gmra.mxu0 %v1251
    %v1334 = vpop.f32.mrf.mxu0
    %v1335 = vadd.f32 0.0, %v1334
    %1336 = vdwg.mxu0
    %v1341 = vrot.slane %v1275, 6
    %v1342 = vrot.slane %v1295, 6
    %v1343 = vrot.slane %v1315, 6
    %v1344 = vrot.slane %v1335, 6
    %v1349 = vadd.f32 %v1253, %v1341
    %v1350 = vadd.f32 %v1254, %v1342
    %v1351 = vadd.f32 %v1255, %v1343
    %v1352 = vadd.f32 %v1256, %v1344
    %v1353 = vxor.u32 %v1349, 2147483648
    %v1354 = vxor.u32 %v1350, 2147483648
    %v1355 = vxor.u32 %v1351, 2147483648
    %v1356 = vxor.u32 %v1352, 2147483648
    %v1357 = vmul.f32 %v1353, 1.442695
    %v1358 = vpow.pop %v1357
    %v1359 = vmul.f32 %v1354, 1.442695
    %v1360 = vpow.pop %v1359
    %v1361 = vmul.f32 %v1355, 1.442695
    %v1362 = vpow.pop %v1361
    %v1363 = vmul.f32 %v1356, 1.442695
    %v1364 = vpow.pop %v1363
    %v1365 = vadd.f32 %v1358, 1.0
    %v1366 = vadd.f32 %v1360, 1.0
    %v1367 = vadd.f32 %v1362, 1.0
    %v1368 = vadd.f32 %v1364, 1.0
    %v1369 = vrcp.pop %v1365
    %v1370 = vmul.f32 %v1365, %v1369
    %v1371 = vsub.f32 1.0, %v1370
    %v1372 = vmul.f32 %v1369, %v1371
    %v1373 = vadd.f32 %v1369, %v1372
    %vm1374 = vweird.f32 %v1365
    %vm1375 = vweird.f32 %v1369
    %vm1376 = vmor %vm1374, %vm1375
    %v1377 = vsel %vm1376, %v1369, %v1373
    %v1378 = vand.u32 2147483647, %v1365
    %vm1379 = vcmp.eq.f32.partialorder %v1378, 8.507059e+37
    %v1380 = vand.u32 %v1365, 2147483648
    %v1381 = vor.u32 1.1754944e-38, %v1380
    %v1382 = vsel %vm1379, %v1381, %v1377
    %v1383 = vmul.f32 1.0, %v1382
    %v1384 = vrcp.pop %v1366
    %v1385 = vmul.f32 %v1366, %v1384
    %v1386 = vsub.f32 1.0, %v1385
    %v1387 = vmul.f32 %v1384, %v1386
    %v1388 = vadd.f32 %v1384, %v1387
    %vm1389 = vweird.f32 %v1366
    %vm1390 = vweird.f32 %v1384
    %vm1391 = vmor %vm1389, %vm1390
    %v1392 = vsel %vm1391, %v1384, %v1388
    %v1393 = vand.u32 2147483647, %v1366
    %vm1394 = vcmp.eq.f32.partialorder %v1393, 8.507059e+37
    %v1395 = vand.u32 %v1366, 2147483648
    %v1396 = vor.u32 1.1754944e-38, %v1395
    %v1397 = vsel %vm1394, %v1396, %v1392
    %v1398 = vmul.f32 1.0, %v1397
    %v1399 = vrcp.pop %v1367
    %v1400 = vmul.f32 %v1367, %v1399
    %v1401 = vsub.f32 1.0, %v1400
    %v1402 = vmul.f32 %v1399, %v1401
    %v1403 = vadd.f32 %v1399, %v1402
    %vm1404 = vweird.f32 %v1367
    %vm1405 = vweird.f32 %v1399
    %vm1406 = vmor %vm1404, %vm1405
    %v1407 = vsel %vm1406, %v1399, %v1403
    %v1408 = vand.u32 2147483647, %v1367
    %vm1409 = vcmp.eq.f32.partialorder %v1408, 8.507059e+37
    %v1410 = vand.u32 %v1367, 2147483648
    %v1411 = vor.u32 1.1754944e-38, %v1410
    %v1412 = vsel %vm1409, %v1411, %v1407
    %v1413 = vmul.f32 1.0, %v1412
    %v1414 = vrcp.pop %v1368
    %v1415 = vmul.f32 %v1368, %v1414
    %v1416 = vsub.f32 1.0, %v1415
    %v1417 = vmul.f32 %v1414, %v1416
    %v1418 = vadd.f32 %v1414, %v1417
    %vm1419 = vweird.f32 %v1368
    %vm1420 = vweird.f32 %v1414
    %vm1421 = vmor %vm1419, %vm1420
    %v1422 = vsel %vm1421, %v1414, %v1418
    %v1423 = vand.u32 2147483647, %v1368
    %vm1424 = vcmp.eq.f32.partialorder %v1423, 8.507059e+37
    %v1425 = vand.u32 %v1368, 2147483648
    %v1426 = vor.u32 1.1754944e-38, %v1425
    %v1427 = vsel %vm1424, %v1426, %v1422
    %v1428 = vmul.f32 1.0, %v1427
    %v1429 = vmul.f32 %v1413, 2.0
    %v1430 = vsub.f32 %v1429, 1.0
    %v1432 = vrot.slane %v1249, 6
    %v1434 = vmul.f32 %v1398, %v1432
    %v1435 = vmul.f32 %v1383, %v1430
    %v1436 = vadd.f32 %v1434, %v1435
    %v1437 = vtanh.pop %v1436
    %v1438 = vmul.f32 %v1428, %v1437
    %1439 = vst [vmem:[#allocation2 + $0x8] sm:$0xc] %v1438
    %v1440 = vld [vmem:[#allocation3 + $0x20] sm:$0x30]
    %v1441 = vld [vmem:[#allocation3 + $0x28] sm:$0x30]
    %v1442 = vld [vmem:[#allocation3 + $0x30] sm:$0x30]
    %v1443 = vld [vmem:[#allocation3 + $0x38] sm:$0x30]
    %v1445 = vrot.slane %v1438, 2
    %1447 = vmatpush.msra.mxu0 %v332
    %1448 = vmatpush.msra.mxu0 %v328
    %1449 = vmatpush.msra.mxu0 %v324
    %1450 = vmatpush.msra.mxu0 %v320
    %1451 = vmatpush.msra.mxu0 %v316
    %1452 = vmatpush.msra.mxu0 %v312
    %1453 = vmatpush.msra.mxu0 %v308
    %1454 = vmatpush.msra.mxu0 %v304
    %1455 = vmatpush.msra.mxu0 %v300
    %1456 = vmatpush.msra.mxu0 %v296
    %1457 = vmatpush.msra.mxu0 %v292
    %1458 = vmatpush.msra.mxu0 %v288
    %1459 = vmatpush.msra.mxu0 %v284
    %1460 = vmatpush.msra.mxu0 %v280
    %1461 = vmatpush.msra.mxu0 %v276
    %1462 = vmatpush.msra.mxu0 %v272
    %1463 = vmatmul.f32.gmra.mxu0 %v1445
    %v1464 = vpop.f32.mrf.mxu0
    %v1465 = vadd.f32 0.0, %v1464
    %1466 = vdwg.mxu0
    %1467 = vmatpush.msra.mxu0 %v333
    %1468 = vmatpush.msra.mxu0 %v329
    %1469 = vmatpush.msra.mxu0 %v325
    %1470 = vmatpush.msra.mxu0 %v321
    %1471 = vmatpush.msra.mxu0 %v317
    %1472 = vmatpush.msra.mxu0 %v313
    %1473 = vmatpush.msra.mxu0 %v309
    %1474 = vmatpush.msra.mxu0 %v305
    %1475 = vmatpush.msra.mxu0 %v301
    %1476 = vmatpush.msra.mxu0 %v297
    %1477 = vmatpush.msra.mxu0 %v293
    %1478 = vmatpush.msra.mxu0 %v289
    %1479 = vmatpush.msra.mxu0 %v285
    %1480 = vmatpush.msra.mxu0 %v281
    %1481 = vmatpush.msra.mxu0 %v277
    %1482 = vmatpush.msra.mxu0 %v273
    %1483 = vmatmul.f32.gmra.mxu0 %v1445
    %v1484 = vpop.f32.mrf.mxu0
    %v1485 = vadd.f32 0.0, %v1484
    %1486 = vdwg.mxu0
    %1487 = vmatpush.msra.mxu0 %v334
    %1488 = vmatpush.msra.mxu0 %v330
    %1489 = vmatpush.msra.mxu0 %v326
    %1490 = vmatpush.msra.mxu0 %v322
    %1491 = vmatpush.msra.mxu0 %v318
    %1492 = vmatpush.msra.mxu0 %v314
    %1493 = vmatpush.msra.mxu0 %v310
    %1494 = vmatpush.msra.mxu0 %v306
    %1495 = vmatpush.msra.mxu0 %v302
    %1496 = vmatpush.msra.mxu0 %v298
    %1497 = vmatpush.msra.mxu0 %v294
    %1498 = vmatpush.msra.mxu0 %v290
    %1499 = vmatpush.msra.mxu0 %v286
    %1500 = vmatpush.msra.mxu0 %v282
    %1501 = vmatpush.msra.mxu0 %v278
    %1502 = vmatpush.msra.mxu0 %v274
    %1503 = vmatmul.f32.gmra.mxu0 %v1445
    %v1504 = vpop.f32.mrf.mxu0
    %v1505 = vadd.f32 0.0, %v1504
    %1506 = vdwg.mxu0
    %1507 = vmatpush.msra.mxu0 %v335
    %1508 = vmatpush.msra.mxu0 %v331
    %1509 = vmatpush.msra.mxu0 %v327
    %1510 = vmatpush.msra.mxu0 %v323
    %1511 = vmatpush.msra.mxu0 %v319
    %1512 = vmatpush.msra.mxu0 %v315
    %1513 = vmatpush.msra.mxu0 %v311
    %1514 = vmatpush.msra.mxu0 %v307
    %1515 = vmatpush.msra.mxu0 %v303
    %1516 = vmatpush.msra.mxu0 %v299
    %1517 = vmatpush.msra.mxu0 %v295
    %1518 = vmatpush.msra.mxu0 %v291
    %1519 = vmatpush.msra.mxu0 %v287
    %1520 = vmatpush.msra.mxu0 %v283
    %1521 = vmatpush.msra.mxu0 %v279
    %1522 = vmatpush.msra.mxu0 %v275
    %1523 = vmatmul.f32.gmra.mxu0 %v1445
    %v1524 = vpop.f32.mrf.mxu0
    %v1525 = vadd.f32 0.0, %v1524
    %1526 = vdwg.mxu0
    %v1531 = vrot.slane %v1465, 4
    %v1532 = vrot.slane %v1485, 4
    %v1533 = vrot.slane %v1505, 4
    %v1534 = vrot.slane %v1525, 4
    %v1539 = vadd.f32 %v1440, %v1531
    %v1540 = vadd.f32 %v1441, %v1532
    %v1541 = vadd.f32 %v1442, %v1533
    %v1542 = vadd.f32 %v1443, %v1534
    %v1543 = vxor.u32 %v1539, 2147483648
    %v1544 = vxor.u32 %v1540, 2147483648
    %v1545 = vxor.u32 %v1541, 2147483648
    %v1546 = vxor.u32 %v1542, 2147483648
    %v1547 = vmul.f32 %v1543, 1.442695
    %v1548 = vpow.pop %v1547
    %v1549 = vmul.f32 %v1544, 1.442695
    %v1550 = vpow.pop %v1549
    %v1551 = vmul.f32 %v1545, 1.442695
    %v1552 = vpow.pop %v1551
    %v1553 = vmul.f32 %v1546, 1.442695
    %v1554 = vpow.pop %v1553
    %v1555 = vadd.f32 %v1548, 1.0
    %v1556 = vadd.f32 %v1550, 1.0
    %v1557 = vadd.f32 %v1552, 1.0
    %v1558 = vadd.f32 %v1554, 1.0
    %v1559 = vrcp.pop %v1555
    %v1560 = vmul.f32 %v1555, %v1559
    %v1561 = vsub.f32 1.0, %v1560
    %v1562 = vmul.f32 %v1559, %v1561
    %v1563 = vadd.f32 %v1559, %v1562
    %vm1564 = vweird.f32 %v1555
    %vm1565 = vweird.f32 %v1559
    %vm1566 = vmor %vm1564, %vm1565
    %v1567 = vsel %vm1566, %v1559, %v1563
    %v1568 = vand.u32 2147483647, %v1555
    %vm1569 = vcmp.eq.f32.partialorder %v1568, 8.507059e+37
    %v1570 = vand.u32 %v1555, 2147483648
    %v1571 = vor.u32 1.1754944e-38, %v1570
    %v1572 = vsel %vm1569, %v1571, %v1567
    %v1573 = vmul.f32 1.0, %v1572
    %v1574 = vrcp.pop %v1556
    %v1575 = vmul.f32 %v1556, %v1574
    %v1576 = vsub.f32 1.0, %v1575
    %v1577 = vmul.f32 %v1574, %v1576
    %v1578 = vadd.f32 %v1574, %v1577
    %vm1579 = vweird.f32 %v1556
    %vm1580 = vweird.f32 %v1574
    %vm1581 = vmor %vm1579, %vm1580
    %v1582 = vsel %vm1581, %v1574, %v1578
    %v1583 = vand.u32 2147483647, %v1556
    %vm1584 = vcmp.eq.f32.partialorder %v1583, 8.507059e+37
    %v1585 = vand.u32 %v1556, 2147483648
    %v1586 = vor.u32 1.1754944e-38, %v1585
    %v1587 = vsel %vm1584, %v1586, %v1582
    %v1588 = vmul.f32 1.0, %v1587
    %v1589 = vrcp.pop %v1557
    %v1590 = vmul.f32 %v1557, %v1589
    %v1591 = vsub.f32 1.0, %v1590
    %v1592 = vmul.f32 %v1589, %v1591
    %v1593 = vadd.f32 %v1589, %v1592
    %vm1594 = vweird.f32 %v1557
    %vm1595 = vweird.f32 %v1589
    %vm1596 = vmor %vm1594, %vm1595
    %v1597 = vsel %vm1596, %v1589, %v1593
    %v1598 = vand.u32 2147483647, %v1557
    %vm1599 = vcmp.eq.f32.partialorder %v1598, 8.507059e+37
    %v1600 = vand.u32 %v1557, 2147483648
    %v1601 = vor.u32 1.1754944e-38, %v1600
    %v1602 = vsel %vm1599, %v1601, %v1597
    %v1603 = vmul.f32 1.0, %v1602
    %v1604 = vrcp.pop %v1558
    %v1605 = vmul.f32 %v1558, %v1604
    %v1606 = vsub.f32 1.0, %v1605
    %v1607 = vmul.f32 %v1604, %v1606
    %v1608 = vadd.f32 %v1604, %v1607
    %vm1609 = vweird.f32 %v1558
    %vm1610 = vweird.f32 %v1604
    %vm1611 = vmor %vm1609, %vm1610
    %v1612 = vsel %vm1611, %v1604, %v1608
    %v1613 = vand.u32 2147483647, %v1558
    %vm1614 = vcmp.eq.f32.partialorder %v1613, 8.507059e+37
    %v1615 = vand.u32 %v1558, 2147483648
    %v1616 = vor.u32 1.1754944e-38, %v1615
    %v1617 = vsel %vm1614, %v1616, %v1612
    %v1618 = vmul.f32 1.0, %v1617
    %v1619 = vmul.f32 %v1603, 2.0
    %v1620 = vsub.f32 %v1619, 1.0
    %v1622 = vrot.slane %v1436, 6
    %v1624 = vmul.f32 %v1588, %v1622
    %v1625 = vmul.f32 %v1573, %v1620
    %v1626 = vadd.f32 %v1624, %v1625
    %v1627 = vtanh.pop %v1626
    %v1628 = vmul.f32 %v1618, %v1627
    %1629 = vst [vmem:[#allocation2 + $0x8] sm:$0x30] %v1628
    %v1630 = vld [vmem:[#allocation3 + $0x20] sm:$0xc0]
    %v1631 = vld [vmem:[#allocation3 + $0x28] sm:$0xc0]
    %v1632 = vld [vmem:[#allocation3 + $0x30] sm:$0xc0]
    %v1633 = vld [vmem:[#allocation3 + $0x38] sm:$0xc0]
    %v1635 = vrot.slane %v1628, 4
    %1637 = vmatpush.msra.mxu0 %v332
    %1638 = vmatpush.msra.mxu0 %v328
    %1639 = vmatpush.msra.mxu0 %v324
    %1640 = vmatpush.msra.mxu0 %v320
    %1641 = vmatpush.msra.mxu0 %v316
    %1642 = vmatpush.msra.mxu0 %v312
    %1643 = vmatpush.msra.mxu0 %v308
    %1644 = vmatpush.msra.mxu0 %v304
    %1645 = vmatpush.msra.mxu0 %v300
    %1646 = vmatpush.msra.mxu0 %v296
    %1647 = vmatpush.msra.mxu0 %v292
    %1648 = vmatpush.msra.mxu0 %v288
    %1649 = vmatpush.msra.mxu0 %v284
    %1650 = vmatpush.msra.mxu0 %v280
    %1651 = vmatpush.msra.mxu0 %v276
    %1652 = vmatpush.msra.mxu0 %v272
    %1653 = vmatmul.f32.gmra.mxu0 %v1635
    %v1654 = vpop.f32.mrf.mxu0
    %v1655 = vadd.f32 0.0, %v1654
    %1656 = vdwg.mxu0
    %1657 = vmatpush.msra.mxu0 %v333
    %1658 = vmatpush.msra.mxu0 %v329
    %1659 = vmatpush.msra.mxu0 %v325
    %1660 = vmatpush.msra.mxu0 %v321
    %1661 = vmatpush.msra.mxu0 %v317
    %1662 = vmatpush.msra.mxu0 %v313
    %1663 = vmatpush.msra.mxu0 %v309
    %1664 = vmatpush.msra.mxu0 %v305
    %1665 = vmatpush.msra.mxu0 %v301
    %1666 = vmatpush.msra.mxu0 %v297
    %1667 = vmatpush.msra.mxu0 %v293
    %1668 = vmatpush.msra.mxu0 %v289
    %1669 = vmatpush.msra.mxu0 %v285
    %1670 = vmatpush.msra.mxu0 %v281
    %1671 = vmatpush.msra.mxu0 %v277
    %1672 = vmatpush.msra.mxu0 %v273
    %1673 = vmatmul.f32.gmra.mxu0 %v1635
    %v1674 = vpop.f32.mrf.mxu0
    %v1675 = vadd.f32 0.0, %v1674
    %1676 = vdwg.mxu0
    %1677 = vmatpush.msra.mxu0 %v334
    %1678 = vmatpush.msra.mxu0 %v330
    %1679 = vmatpush.msra.mxu0 %v326
    %1680 = vmatpush.msra.mxu0 %v322
    %1681 = vmatpush.msra.mxu0 %v318
    %1682 = vmatpush.msra.mxu0 %v314
    %1683 = vmatpush.msra.mxu0 %v310
    %1684 = vmatpush.msra.mxu0 %v306
    %1685 = vmatpush.msra.mxu0 %v302
    %1686 = vmatpush.msra.mxu0 %v298
    %1687 = vmatpush.msra.mxu0 %v294
    %1688 = vmatpush.msra.mxu0 %v290
    %1689 = vmatpush.msra.mxu0 %v286
    %1690 = vmatpush.msra.mxu0 %v282
    %1691 = vmatpush.msra.mxu0 %v278
    %1692 = vmatpush.msra.mxu0 %v274
    %1693 = vmatmul.f32.gmra.mxu0 %v1635
    %v1694 = vpop.f32.mrf.mxu0
    %v1695 = vadd.f32 0.0, %v1694
    %1696 = vdwg.mxu0
    %1697 = vmatpush.msra.mxu0 %v335
    %1698 = vmatpush.msra.mxu0 %v331
    %1699 = vmatpush.msra.mxu0 %v327
    %1700 = vmatpush.msra.mxu0 %v323
    %1701 = vmatpush.msra.mxu0 %v319
    %1702 = vmatpush.msra.mxu0 %v315
    %1703 = vmatpush.msra.mxu0 %v311
    %1704 = vmatpush.msra.mxu0 %v307
    %1705 = vmatpush.msra.mxu0 %v303
    %1706 = vmatpush.msra.mxu0 %v299
    %1707 = vmatpush.msra.mxu0 %v295
    %1708 = vmatpush.msra.mxu0 %v291
    %1709 = vmatpush.msra.mxu0 %v287
    %1710 = vmatpush.msra.mxu0 %v283
    %1711 = vmatpush.msra.mxu0 %v279
    %1712 = vmatpush.msra.mxu0 %v275
    %1713 = vmatmul.f32.gmra.mxu0 %v1635
    %v1714 = vpop.f32.mrf.mxu0
    %v1715 = vadd.f32 0.0, %v1714
    %1716 = vdwg.mxu0
    %v1721 = vrot.slane %v1655, 2
    %v1722 = vrot.slane %v1675, 2
    %v1723 = vrot.slane %v1695, 2
    %v1724 = vrot.slane %v1715, 2
    %v1729 = vadd.f32 %v1630, %v1721
    %v1730 = vadd.f32 %v1631, %v1722
    %v1731 = vadd.f32 %v1632, %v1723
    %v1732 = vadd.f32 %v1633, %v1724
    %v1733 = vxor.u32 %v1729, 2147483648
    %v1734 = vxor.u32 %v1730, 2147483648
    %v1735 = vxor.u32 %v1731, 2147483648
    %v1736 = vxor.u32 %v1732, 2147483648
    %v1737 = vmul.f32 %v1733, 1.442695
    %v1738 = vpow.pop %v1737
    %v1739 = vmul.f32 %v1734, 1.442695
    %v1740 = vpow.pop %v1739
    %v1741 = vmul.f32 %v1735, 1.442695
    %v1742 = vpow.pop %v1741
    %v1743 = vmul.f32 %v1736, 1.442695
    %v1744 = vpow.pop %v1743
    %v1745 = vadd.f32 %v1738, 1.0
    %v1746 = vadd.f32 %v1740, 1.0
    %v1747 = vadd.f32 %v1742, 1.0
    %v1748 = vadd.f32 %v1744, 1.0
    %v1749 = vrcp.pop %v1745
    %v1750 = vmul.f32 %v1745, %v1749
    %v1751 = vsub.f32 1.0, %v1750
    %v1752 = vmul.f32 %v1749, %v1751
    %v1753 = vadd.f32 %v1749, %v1752
    %vm1754 = vweird.f32 %v1745
    %vm1755 = vweird.f32 %v1749
    %vm1756 = vmor %vm1754, %vm1755
    %v1757 = vsel %vm1756, %v1749, %v1753
    %v1758 = vand.u32 2147483647, %v1745
    %vm1759 = vcmp.eq.f32.partialorder %v1758, 8.507059e+37
    %v1760 = vand.u32 %v1745, 2147483648
    %v1761 = vor.u32 1.1754944e-38, %v1760
    %v1762 = vsel %vm1759, %v1761, %v1757
    %v1763 = vmul.f32 1.0, %v1762
    %v1764 = vrcp.pop %v1746
    %v1765 = vmul.f32 %v1746, %v1764
    %v1766 = vsub.f32 1.0, %v1765
    %v1767 = vmul.f32 %v1764, %v1766
    %v1768 = vadd.f32 %v1764, %v1767
    %vm1769 = vweird.f32 %v1746
    %vm1770 = vweird.f32 %v1764
    %vm1771 = vmor %vm1769, %vm1770
    %v1772 = vsel %vm1771, %v1764, %v1768
    %v1773 = vand.u32 2147483647, %v1746
    %vm1774 = vcmp.eq.f32.partialorder %v1773, 8.507059e+37
    %v1775 = vand.u32 %v1746, 2147483648
    %v1776 = vor.u32 1.1754944e-38, %v1775
    %v1777 = vsel %vm1774, %v1776, %v1772
    %v1778 = vmul.f32 1.0, %v1777
    %v1779 = vrcp.pop %v1747
    %v1780 = vmul.f32 %v1747, %v1779
    %v1781 = vsub.f32 1.0, %v1780
    %v1782 = vmul.f32 %v1779, %v1781
    %v1783 = vadd.f32 %v1779, %v1782
    %vm1784 = vweird.f32 %v1747
    %vm1785 = vweird.f32 %v1779
    %vm1786 = vmor %vm1784, %vm1785
    %v1787 = vsel %vm1786, %v1779, %v1783
    %v1788 = vand.u32 2147483647, %v1747
    %vm1789 = vcmp.eq.f32.partialorder %v1788, 8.507059e+37
    %v1790 = vand.u32 %v1747, 2147483648
    %v1791 = vor.u32 1.1754944e-38, %v1790
    %v1792 = vsel %vm1789, %v1791, %v1787
    %v1793 = vmul.f32 1.0, %v1792
    %v1794 = vrcp.pop %v1748
    %v1795 = vmul.f32 %v1748, %v1794
    %v1796 = vsub.f32 1.0, %v1795
    %v1797 = vmul.f32 %v1794, %v1796
    %v1798 = vadd.f32 %v1794, %v1797
    %vm1799 = vweird.f32 %v1748
    %vm1800 = vweird.f32 %v1794
    %vm1801 = vmor %vm1799, %vm1800
    %v1802 = vsel %vm1801, %v1794, %v1798
    %v1803 = vand.u32 2147483647, %v1748
    %vm1804 = vcmp.eq.f32.partialorder %v1803, 8.507059e+37
    %v1805 = vand.u32 %v1748, 2147483648
    %v1806 = vor.u32 1.1754944e-38, %v1805
    %v1807 = vsel %vm1804, %v1806, %v1802
    %v1808 = vmul.f32 1.0, %v1807
    %v1809 = vmul.f32 %v1793, 2.0
    %v1810 = vsub.f32 %v1809, 1.0
    %v1812 = vrot.slane %v1626, 6
    %v1814 = vmul.f32 %v1778, %v1812
    %v1815 = vmul.f32 %v1763, %v1810
    %v1816 = vadd.f32 %v1814, %v1815
    %v1817 = vtanh.pop %v1816
    %v1818 = vmul.f32 %v1808, %v1817
    %1819 = vst [vmem:[#allocation2 + $0x8] sm:$0xc0] %v1818
    %v1820 = vld [vmem:[#allocation2] sm:$0xff]
    %v1821 = vld [vmem:[#allocation2 + $0x8] sm:$0xff]
    %v1822 = vld [vmem:[#allocation7] sm:$0xff]
    %v1823 = vld [vmem:[#allocation7 + $0x8] sm:$0xff]
    %v1824 = vld [vmem:[#allocation7 + $0x10] sm:$0xff]
    %v1825 = vld [vmem:[#allocation7 + $0x18] sm:$0xff]
    %v1826 = vld [vmem:[#allocation7 + $0x20] sm:$0xff]
    %v1827 = vld [vmem:[#allocation7 + $0x28] sm:$0xff]
    %v1828 = vld [vmem:[#allocation7 + $0x30] sm:$0xff]
    %v1829 = vld [vmem:[#allocation7 + $0x38] sm:$0xff]
    %v1830 = vld [vmem:[#allocation7 + $0x40] sm:$0xff]
    %v1831 = vld [vmem:[#allocation7 + $0x48] sm:$0xff]
    %v1832 = vld [vmem:[#allocation7 + $0x50] sm:$0xff]
    %v1833 = vld [vmem:[#allocation7 + $0x58] sm:$0xff]
    %v1834 = vld [vmem:[#allocation7 + $0x60] sm:$0xff]
    %v1835 = vld [vmem:[#allocation7 + $0x68] sm:$0xff]
    %v1836 = vld [vmem:[#allocation7 + $0x70] sm:$0xff]
    %v1837 = vld [vmem:[#allocation7 + $0x78] sm:$0xff]
    %v1838 = vld [vmem:[#allocation7 + $0x80] sm:$0xff]
    %v1839 = vld [vmem:[#allocation7 + $0x88] sm:$0xff]
    %v1840 = vld [vmem:[#allocation7 + $0x90] sm:$0xff]
    %v1841 = vld [vmem:[#allocation7 + $0x98] sm:$0xff]
    %v1842 = vld [vmem:[#allocation7 + $0xa0] sm:$0xff]
    %v1843 = vld [vmem:[#allocation7 + $0xa8] sm:$0xff]
    %v1844 = vld [vmem:[#allocation7 + $0xb0] sm:$0xff]
    %v1845 = vld [vmem:[#allocation7 + $0xb8] sm:$0xff]
    %v1846 = vld [vmem:[#allocation7 + $0xc0] sm:$0xff]
    %v1847 = vld [vmem:[#allocation7 + $0xc8] sm:$0xff]
    %v1848 = vld [vmem:[#allocation7 + $0xd0] sm:$0xff]
    %v1849 = vld [vmem:[#allocation7 + $0xd8] sm:$0xff]
    %v1850 = vld [vmem:[#allocation7 + $0xe0] sm:$0xff]
    %v1851 = vld [vmem:[#allocation7 + $0xe8] sm:$0xff]
    %v1852 = vld [vmem:[#allocation7 + $0xf0] sm:$0xff]
    %v1853 = vld [vmem:[#allocation7 + $0xf8] sm:$0xff]
    %v1854 = vld [vmem:[#allocation7 + $0x100] sm:$0xff]
    %v1855 = vld [vmem:[#allocation7 + $0x108] sm:$0xff]
    %v1856 = vld [vmem:[#allocation7 + $0x110] sm:$0xff]
    %v1857 = vld [vmem:[#allocation7 + $0x118] sm:$0xff]
    %v1858 = vld [vmem:[#allocation7 + $0x120] sm:$0xff]
    %v1859 = vld [vmem:[#allocation7 + $0x128] sm:$0xff]
    %v1860 = vld [vmem:[#allocation7 + $0x130] sm:$0xff]
    %v1861 = vld [vmem:[#allocation7 + $0x138] sm:$0xff]
    %v1862 = vld [vmem:[#allocation7 + $0x140] sm:$0xff]
    %v1863 = vld [vmem:[#allocation7 + $0x148] sm:$0xff]
    %v1864 = vld [vmem:[#allocation7 + $0x150] sm:$0xff]
    %v1865 = vld [vmem:[#allocation7 + $0x158] sm:$0xff]
    %v1866 = vld [vmem:[#allocation7 + $0x160] sm:$0xff]
    %v1867 = vld [vmem:[#allocation7 + $0x168] sm:$0xff]
    %v1868 = vld [vmem:[#allocation7 + $0x170] sm:$0xff]
    %v1869 = vld [vmem:[#allocation7 + $0x178] sm:$0xff]
    %v1870 = vld [vmem:[#allocation7 + $0x180] sm:$0xff]
    %v1871 = vld [vmem:[#allocation7 + $0x188] sm:$0xff]
    %v1872 = vld [vmem:[#allocation7 + $0x190] sm:$0xff]
    %v1873 = vld [vmem:[#allocation7 + $0x198] sm:$0xff]
    %v1874 = vld [vmem:[#allocation7 + $0x1a0] sm:$0xff]
    %v1875 = vld [vmem:[#allocation7 + $0x1a8] sm:$0xff]
    %v1876 = vld [vmem:[#allocation7 + $0x1b0] sm:$0xff]
    %v1877 = vld [vmem:[#allocation7 + $0x1b8] sm:$0xff]
    %v1878 = vld [vmem:[#allocation7 + $0x1c0] sm:$0xff]
    %v1879 = vld [vmem:[#allocation7 + $0x1c8] sm:$0xff]
    %v1880 = vld [vmem:[#allocation7 + $0x1d0] sm:$0xff]
    %v1881 = vld [vmem:[#allocation7 + $0x1d8] sm:$0xff]
    %v1882 = vld [vmem:[#allocation7 + $0x1e0] sm:$0xff]
    %v1883 = vld [vmem:[#allocation7 + $0x1e8] sm:$0xff]
    %v1884 = vld [vmem:[#allocation7 + $0x1f0] sm:$0xff]
    %v1885 = vld [vmem:[#allocation7 + $0x1f8] sm:$0xff]
    %v1886 = vld [vmem:[%s6] sm:$0xf]
    %v1888 = vperm.slane %v1886, 0
    %v1889 = vperm.slane %v1886, 1
    %v1890 = vperm.slane %v1886, 2
    %v1891 = vperm.slane %v1886, 3
    %1896 = vmatpush.msra.mxu0 %v1882
    %1897 = vmatpush.msra.mxu0 %v1878
    %1898 = vmatpush.msra.mxu0 %v1874
    %1899 = vmatpush.msra.mxu0 %v1870
    %1900 = vmatpush.msra.mxu0 %v1866
    %1901 = vmatpush.msra.mxu0 %v1862
    %1902 = vmatpush.msra.mxu0 %v1858
    %1903 = vmatpush.msra.mxu0 %v1854
    %1904 = vmatpush.msra.mxu0 %v1850
    %1905 = vmatpush.msra.mxu0 %v1846
    %1906 = vmatpush.msra.mxu0 %v1842
    %1907 = vmatpush.msra.mxu0 %v1838
    %1908 = vmatpush.msra.mxu0 %v1834
    %1909 = vmatpush.msra.mxu0 %v1830
    %1910 = vmatpush.msra.mxu0 %v1826
    %1911 = vmatpush.msra.mxu0 %v1822
    %1912 = vmatmul.f32.gmra.mxu0 %v1820
    %v1913 = vpop.f32.mrf.mxu0
    %v1914 = vadd.f32 %v1888, %v1913
    %1915 = vmatmul.f32.gmra.mxu0 %v1821
    %v1916 = vpop.f32.mrf.mxu0
    %v1917 = vadd.f32 %v1888, %v1916
    %1918 = vdwg.mxu0
    %1919 = vmatpush.msra.mxu0 %v1883
    %1920 = vmatpush.msra.mxu0 %v1879
    %1921 = vmatpush.msra.mxu0 %v1875
    %1922 = vmatpush.msra.mxu0 %v1871
    %1923 = vmatpush.msra.mxu0 %v1867
    %1924 = vmatpush.msra.mxu0 %v1863
    %1925 = vmatpush.msra.mxu0 %v1859
    %1926 = vmatpush.msra.mxu0 %v1855
    %1927 = vmatpush.msra.mxu0 %v1851
    %1928 = vmatpush.msra.mxu0 %v1847
    %1929 = vmatpush.msra.mxu0 %v1843
    %1930 = vmatpush.msra.mxu0 %v1839
    %1931 = vmatpush.msra.mxu0 %v1835
    %1932 = vmatpush.msra.mxu0 %v1831
    %1933 = vmatpush.msra.mxu0 %v1827
    %1934 = vmatpush.msra.mxu0 %v1823
    %1935 = vmatmul.f32.gmra.mxu0 %v1820
    %v1936 = vpop.f32.mrf.mxu0
    %v1937 = vadd.f32 %v1889, %v1936
    %1938 = vmatmul.f32.gmra.mxu0 %v1821
    %v1939 = vpop.f32.mrf.mxu0
    %v1940 = vadd.f32 %v1889, %v1939
    %1941 = vdwg.mxu0
    %1942 = vmatpush.msra.mxu0 %v1884
    %1943 = vmatpush.msra.mxu0 %v1880
    %1944 = vmatpush.msra.mxu0 %v1876
    %1945 = vmatpush.msra.mxu0 %v1872
    %1946 = vmatpush.msra.mxu0 %v1868
    %1947 = vmatpush.msra.mxu0 %v1864
    %1948 = vmatpush.msra.mxu0 %v1860
    %1949 = vmatpush.msra.mxu0 %v1856
    %1950 = vmatpush.msra.mxu0 %v1852
    %1951 = vmatpush.msra.mxu0 %v1848
    %1952 = vmatpush.msra.mxu0 %v1844
    %1953 = vmatpush.msra.mxu0 %v1840
    %1954 = vmatpush.msra.mxu0 %v1836
    %1955 = vmatpush.msra.mxu0 %v1832
    %1956 = vmatpush.msra.mxu0 %v1828
    %1957 = vmatpush.msra.mxu0 %v1824
    %1958 = vmatmul.f32.gmra.mxu0 %v1820
    %v1959 = vpop.f32.mrf.mxu0
    %v1960 = vadd.f32 %v1890, %v1959
    %1961 = vmatmul.f32.gmra.mxu0 %v1821
    %v1962 = vpop.f32.mrf.mxu0
    %v1963 = vadd.f32 %v1890, %v1962
    %1964 = vdwg.mxu0
    %1965 = vmatpush.msra.mxu0 %v1885
    %1966 = vmatpush.msra.mxu0 %v1881
    %1967 = vmatpush.msra.mxu0 %v1877
    %1968 = vmatpush.msra.mxu0 %v1873
    %1969 = vmatpush.msra.mxu0 %v1869
    %1970 = vmatpush.msra.mxu0 %v1865
    %1971 = vmatpush.msra.mxu0 %v1861
    %1972 = vmatpush.msra.mxu0 %v1857
    %1973 = vmatpush.msra.mxu0 %v1853
    %1974 = vmatpush.msra.mxu0 %v1849
    %1975 = vmatpush.msra.mxu0 %v1845
    %1976 = vmatpush.msra.mxu0 %v1841
    %1977 = vmatpush.msra.mxu0 %v1837
    %1978 = vmatpush.msra.mxu0 %v1833
    %1979 = vmatpush.msra.mxu0 %v1829
    %1980 = vmatpush.msra.mxu0 %v1825
    %1981 = vmatmul.f32.gmra.mxu0 %v1820
    %v1982 = vpop.f32.mrf.mxu0
    %v1983 = vadd.f32 %v1891, %v1982
    %1984 = vmatmul.f32.gmra.mxu0 %v1821
    %v1985 = vpop.f32.mrf.mxu0
    %v1986 = vadd.f32 %v1891, %v1985
    %1987 = vdwg.mxu0
    %1988 = vst [vmem:[#allocation3] sm:$0xff] %v1914
    %1989 = vst [vmem:[#allocation3 + $0x8] sm:$0xff] %v1937
    %1990 = vst [vmem:[#allocation3 + $0x10] sm:$0xff] %v1960
    %1991 = vst [vmem:[#allocation3 + $0x18] sm:$0xff] %v1983
    %1992 = vst [vmem:[#allocation3 + $0x20] sm:$0xff] %v1917
    %1993 = vst [vmem:[#allocation3 + $0x28] sm:$0xff] %v1940
    %1994 = vst [vmem:[#allocation3 + $0x30] sm:$0xff] %v1963
    %1995 = vst [vmem:[#allocation3 + $0x38] sm:$0xff] %v1986
    %v1996 = vld [vmem:[#allocation9] sm:$0xff]
    %v1997 = vld [vmem:[#allocation9 + $0x8] sm:$0xff]
    %v1998 = vld [vmem:[#allocation9 + $0x10] sm:$0xff]
    %v1999 = vld [vmem:[#allocation9 + $0x18] sm:$0xff]
    %v2000 = vld [vmem:[#allocation9 + $0x20] sm:$0xff]
    %v2001 = vld [vmem:[#allocation9 + $0x28] sm:$0xff]
    %v2002 = vld [vmem:[#allocation9 + $0x30] sm:$0xff]
    %v2003 = vld [vmem:[#allocation9 + $0x38] sm:$0xff]
    %v2004 = vld [vmem:[#allocation9 + $0x40] sm:$0xff]
    %v2005 = vld [vmem:[#allocation9 + $0x48] sm:$0xff]
    %v2006 = vld [vmem:[#allocation9 + $0x50] sm:$0xff]
    %v2007 = vld [vmem:[#allocation9 + $0x58] sm:$0xff]
    %v2008 = vld [vmem:[#allocation9 + $0x60] sm:$0xff]
    %v2009 = vld [vmem:[#allocation9 + $0x68] sm:$0xff]
    %v2010 = vld [vmem:[#allocation9 + $0x70] sm:$0xff]
    %v2011 = vld [vmem:[#allocation9 + $0x78] sm:$0xff]
    %v2012 = vld [vmem:[#allocation9 + $0x80] sm:$0xff]
    %v2013 = vld [vmem:[#allocation9 + $0x88] sm:$0xff]
    %v2014 = vld [vmem:[#allocation9 + $0x90] sm:$0xff]
    %v2015 = vld [vmem:[#allocation9 + $0x98] sm:$0xff]
    %v2016 = vld [vmem:[#allocation9 + $0xa0] sm:$0xff]
    %v2017 = vld [vmem:[#allocation9 + $0xa8] sm:$0xff]
    %v2018 = vld [vmem:[#allocation9 + $0xb0] sm:$0xff]
    %v2019 = vld [vmem:[#allocation9 + $0xb8] sm:$0xff]
    %v2020 = vld [vmem:[#allocation9 + $0xc0] sm:$0xff]
    %v2021 = vld [vmem:[#allocation9 + $0xc8] sm:$0xff]
    %v2022 = vld [vmem:[#allocation9 + $0xd0] sm:$0xff]
    %v2023 = vld [vmem:[#allocation9 + $0xd8] sm:$0xff]
    %v2024 = vld [vmem:[#allocation9 + $0xe0] sm:$0xff]
    %v2025 = vld [vmem:[#allocation9 + $0xe8] sm:$0xff]
    %v2026 = vld [vmem:[#allocation9 + $0xf0] sm:$0xff]
    %v2027 = vld [vmem:[#allocation9 + $0xf8] sm:$0xff]
    %v2028 = vld [vmem:[#allocation9 + $0x100] sm:$0xff]
    %v2029 = vld [vmem:[#allocation9 + $0x108] sm:$0xff]
    %v2030 = vld [vmem:[#allocation9 + $0x110] sm:$0xff]
    %v2031 = vld [vmem:[#allocation9 + $0x118] sm:$0xff]
    %v2032 = vld [vmem:[#allocation9 + $0x120] sm:$0xff]
    %v2033 = vld [vmem:[#allocation9 + $0x128] sm:$0xff]
    %v2034 = vld [vmem:[#allocation9 + $0x130] sm:$0xff]
    %v2035 = vld [vmem:[#allocation9 + $0x138] sm:$0xff]
    %v2036 = vld [vmem:[#allocation9 + $0x140] sm:$0xff]
    %v2037 = vld [vmem:[#allocation9 + $0x148] sm:$0xff]
    %v2038 = vld [vmem:[#allocation9 + $0x150] sm:$0xff]
    %v2039 = vld [vmem:[#allocation9 + $0x158] sm:$0xff]
    %v2040 = vld [vmem:[#allocation9 + $0x160] sm:$0xff]
    %v2041 = vld [vmem:[#allocation9 + $0x168] sm:$0xff]
    %v2042 = vld [vmem:[#allocation9 + $0x170] sm:$0xff]
    %v2043 = vld [vmem:[#allocation9 + $0x178] sm:$0xff]
    %v2044 = vld [vmem:[#allocation9 + $0x180] sm:$0xff]
    %v2045 = vld [vmem:[#allocation9 + $0x188] sm:$0xff]
    %v2046 = vld [vmem:[#allocation9 + $0x190] sm:$0xff]
    %v2047 = vld [vmem:[#allocation9 + $0x198] sm:$0xff]
    %v2048 = vld [vmem:[#allocation9 + $0x1a0] sm:$0xff]
    %v2049 = vld [vmem:[#allocation9 + $0x1a8] sm:$0xff]
    %v2050 = vld [vmem:[#allocation9 + $0x1b0] sm:$0xff]
    %v2051 = vld [vmem:[#allocation9 + $0x1b8] sm:$0xff]
    %v2052 = vld [vmem:[#allocation9 + $0x1c0] sm:$0xff]
    %v2053 = vld [vmem:[#allocation9 + $0x1c8] sm:$0xff]
    %v2054 = vld [vmem:[#allocation9 + $0x1d0] sm:$0xff]
    %v2055 = vld [vmem:[#allocation9 + $0x1d8] sm:$0xff]
    %v2056 = vld [vmem:[#allocation9 + $0x1e0] sm:$0xff]
    %v2057 = vld [vmem:[#allocation9 + $0x1e8] sm:$0xff]
    %v2058 = vld [vmem:[#allocation9 + $0x1f0] sm:$0xff]
    %v2059 = vld [vmem:[#allocation9 + $0x1f8] sm:$0xff]
    %v2060 = vld [vmem:[#allocation3] sm:$0x3]
    %v2061 = vld [vmem:[#allocation3 + $0x8] sm:$0x3]
    %v2062 = vld [vmem:[#allocation3 + $0x10] sm:$0x3]
    %v2063 = vld [vmem:[#allocation3 + $0x18] sm:$0x3]
    %2064 = vmatpush.msra.mxu0 %v2056
    %2065 = vmatpush.msra.mxu0 %v2052
    %2066 = vmatpush.msra.mxu0 %v2048
    %2067 = vmatpush.msra.mxu0 %v2044
    %2068 = vmatpush.msra.mxu0 %v2040
    %2069 = vmatpush.msra.mxu0 %v2036
    %2070 = vmatpush.msra.mxu0 %v2032
    %2071 = vmatpush.msra.mxu0 %v2028
    %2072 = vmatpush.msra.mxu0 %v2024
    %2073 = vmatpush.msra.mxu0 %v2020
    %2074 = vmatpush.msra.mxu0 %v2016
    %2075 = vmatpush.msra.mxu0 %v2012
    %2076 = vmatpush.msra.mxu0 %v2008
    %2077 = vmatpush.msra.mxu0 %v2004
    %2078 = vmatpush.msra.mxu0 %v2000
    %2079 = vmatpush.msra.mxu0 %v1996
    %2080 = vmatmul.f32.gmra.mxu0 0.0
    %v2081 = vpop.f32.mrf.mxu0
    %v2082 = vadd.f32 0.0, %v2081
    %2083 = vdwg.mxu0
    %2084 = vmatpush.msra.mxu0 %v2057
    %2085 = vmatpush.msra.mxu0 %v2053
    %2086 = vmatpush.msra.mxu0 %v2049
    %2087 = vmatpush.msra.mxu0 %v2045
    %2088 = vmatpush.msra.mxu0 %v2041
    %2089 = vmatpush.msra.mxu0 %v2037
    %2090 = vmatpush.msra.mxu0 %v2033
    %2091 = vmatpush.msra.mxu0 %v2029
    %2092 = vmatpush.msra.mxu0 %v2025
    %2093 = vmatpush.msra.mxu0 %v2021
    %2094 = vmatpush.msra.mxu0 %v2017
    %2095 = vmatpush.msra.mxu0 %v2013
    %2096 = vmatpush.msra.mxu0 %v2009
    %2097 = vmatpush.msra.mxu0 %v2005
    %2098 = vmatpush.msra.mxu0 %v2001
    %2099 = vmatpush.msra.mxu0 %v1997
    %2100 = vmatmul.f32.gmra.mxu0 0.0
    %v2101 = vpop.f32.mrf.mxu0
    %v2102 = vadd.f32 0.0, %v2101
    %2103 = vdwg.mxu0
    %2104 = vmatpush.msra.mxu0 %v2058
    %2105 = vmatpush.msra.mxu0 %v2054
    %2106 = vmatpush.msra.mxu0 %v2050
    %2107 = vmatpush.msra.mxu0 %v2046
    %2108 = vmatpush.msra.mxu0 %v2042
    %2109 = vmatpush.msra.mxu0 %v2038
    %2110 = vmatpush.msra.mxu0 %v2034
    %2111 = vmatpush.msra.mxu0 %v2030
    %2112 = vmatpush.msra.mxu0 %v2026
    %2113 = vmatpush.msra.mxu0 %v2022
    %2114 = vmatpush.msra.mxu0 %v2018
    %2115 = vmatpush.msra.mxu0 %v2014
    %2116 = vmatpush.msra.mxu0 %v2010
    %2117 = vmatpush.msra.mxu0 %v2006
    %2118 = vmatpush.msra.mxu0 %v2002
    %2119 = vmatpush.msra.mxu0 %v1998
    %2120 = vmatmul.f32.gmra.mxu0 0.0
    %v2121 = vpop.f32.mrf.mxu0
    %v2122 = vadd.f32 0.0, %v2121
    %2123 = vdwg.mxu0
    %2124 = vmatpush.msra.mxu0 %v2059
    %2125 = vmatpush.msra.mxu0 %v2055
    %2126 = vmatpush.msra.mxu0 %v2051
    %2127 = vmatpush.msra.mxu0 %v2047
    %2128 = vmatpush.msra.mxu0 %v2043
    %2129 = vmatpush.msra.mxu0 %v2039
    %2130 = vmatpush.msra.mxu0 %v2035
    %2131 = vmatpush.msra.mxu0 %v2031
    %2132 = vmatpush.msra.mxu0 %v2027
    %2133 = vmatpush.msra.mxu0 %v2023
    %2134 = vmatpush.msra.mxu0 %v2019
    %2135 = vmatpush.msra.mxu0 %v2015
    %2136 = vmatpush.msra.mxu0 %v2011
    %2137 = vmatpush.msra.mxu0 %v2007
    %2138 = vmatpush.msra.mxu0 %v2003
    %2139 = vmatpush.msra.mxu0 %v1999
    %2140 = vmatmul.f32.gmra.mxu0 0.0
    %v2141 = vpop.f32.mrf.mxu0
    %v2142 = vadd.f32 0.0, %v2141
    %2143 = vdwg.mxu0
    %v2144 = vadd.f32 %v2060, %v2082
    %v2145 = vadd.f32 %v2061, %v2102
    %v2146 = vadd.f32 %v2062, %v2122
    %v2147 = vadd.f32 %v2063, %v2142
    %v2148 = vxor.u32 %v2144, 2147483648
    %v2149 = vxor.u32 %v2145, 2147483648
    %v2150 = vxor.u32 %v2146, 2147483648
    %v2151 = vxor.u32 %v2147, 2147483648
    %v2152 = vmul.f32 %v2148, 1.442695
    %v2153 = vpow.pop %v2152
    %v2154 = vmul.f32 %v2149, 1.442695
    %v2155 = vpow.pop %v2154
    %v2156 = vmul.f32 %v2150, 1.442695
    %v2157 = vpow.pop %v2156
    %v2158 = vmul.f32 %v2151, 1.442695
    %v2159 = vpow.pop %v2158
    %v2160 = vadd.f32 %v2153, 1.0
    %v2161 = vadd.f32 %v2155, 1.0
    %v2162 = vadd.f32 %v2157, 1.0
    %v2163 = vadd.f32 %v2159, 1.0
    %v2164 = vrcp.pop %v2160
    %v2165 = vmul.f32 %v2160, %v2164
    %v2166 = vsub.f32 1.0, %v2165
    %v2167 = vmul.f32 %v2164, %v2166
    %v2168 = vadd.f32 %v2164, %v2167
    %vm2169 = vweird.f32 %v2160
    %vm2170 = vweird.f32 %v2164
    %vm2171 = vmor %vm2169, %vm2170
    %v2172 = vsel %vm2171, %v2164, %v2168
    %v2173 = vand.u32 2147483647, %v2160
    %vm2174 = vcmp.eq.f32.partialorder %v2173, 8.507059e+37
    %v2175 = vand.u32 %v2160, 2147483648
    %v2176 = vor.u32 1.1754944e-38, %v2175
    %v2177 = vsel %vm2174, %v2176, %v2172
    %v2178 = vmul.f32 1.0, %v2177
    %v2179 = vrcp.pop %v2161
    %v2180 = vmul.f32 %v2161, %v2179
    %v2181 = vsub.f32 1.0, %v2180
    %v2182 = vmul.f32 %v2179, %v2181
    %v2183 = vadd.f32 %v2179, %v2182
    %vm2184 = vweird.f32 %v2161
    %vm2185 = vweird.f32 %v2179
    %vm2186 = vmor %vm2184, %vm2185
    %v2187 = vsel %vm2186, %v2179, %v2183
    %v2188 = vand.u32 2147483647, %v2161
    %vm2189 = vcmp.eq.f32.partialorder %v2188, 8.507059e+37
    %v2190 = vand.u32 %v2161, 2147483648
    %v2191 = vor.u32 1.1754944e-38, %v2190
    %v2192 = vsel %vm2189, %v2191, %v2187
    %v2193 = vmul.f32 1.0, %v2192
    %v2194 = vrcp.pop %v2162
    %v2195 = vmul.f32 %v2162, %v2194
    %v2196 = vsub.f32 1.0, %v2195
    %v2197 = vmul.f32 %v2194, %v2196
    %v2198 = vadd.f32 %v2194, %v2197
    %vm2199 = vweird.f32 %v2162
    %vm2200 = vweird.f32 %v2194
    %vm2201 = vmor %vm2199, %vm2200
    %v2202 = vsel %vm2201, %v2194, %v2198
    %v2203 = vand.u32 2147483647, %v2162
    %vm2204 = vcmp.eq.f32.partialorder %v2203, 8.507059e+37
    %v2205 = vand.u32 %v2162, 2147483648
    %v2206 = vor.u32 1.1754944e-38, %v2205
    %v2207 = vsel %vm2204, %v2206, %v2202
    %v2208 = vmul.f32 1.0, %v2207
    %v2209 = vrcp.pop %v2163
    %v2210 = vmul.f32 %v2163, %v2209
    %v2211 = vsub.f32 1.0, %v2210
    %v2212 = vmul.f32 %v2209, %v2211
    %v2213 = vadd.f32 %v2209, %v2212
    %vm2214 = vweird.f32 %v2163
    %vm2215 = vweird.f32 %v2209
    %vm2216 = vmor %vm2214, %vm2215
    %v2217 = vsel %vm2216, %v2209, %v2213
    %v2218 = vand.u32 2147483647, %v2163
    %vm2219 = vcmp.eq.f32.partialorder %v2218, 8.507059e+37
    %v2220 = vand.u32 %v2163, 2147483648
    %v2221 = vor.u32 1.1754944e-38, %v2220
    %v2222 = vsel %vm2219, %v2221, %v2217
    %v2223 = vmul.f32 1.0, %v2222
    %v2224 = vmul.f32 %v2208, 2.0
    %v2225 = vsub.f32 %v2224, 1.0
    %v2226 = vmul.f32 %v2193, 0.0
    %v2227 = vmul.f32 %v2178, %v2225
    %v2228 = vadd.f32 %v2226, %v2227
    %v2229 = vtanh.pop %v2228
    %v2230 = vmul.f32 %v2223, %v2229
    %2231 = vst [vmem:[#allocation2] sm:$0x3] %v2230
    %v2232 = vld [vmem:[#allocation3] sm:$0xc]
    %v2233 = vld [vmem:[#allocation3 + $0x8] sm:$0xc]
    %v2234 = vld [vmem:[#allocation3 + $0x10] sm:$0xc]
    %v2235 = vld [vmem:[#allocation3 + $0x18] sm:$0xc]
    %2236 = vmatpush.msra.mxu0 %v2056
    %2237 = vmatpush.msra.mxu0 %v2052
    %2238 = vmatpush.msra.mxu0 %v2048
    %2239 = vmatpush.msra.mxu0 %v2044
    %2240 = vmatpush.msra.mxu0 %v2040
    %2241 = vmatpush.msra.mxu0 %v2036
    %2242 = vmatpush.msra.mxu0 %v2032
    %2243 = vmatpush.msra.mxu0 %v2028
    %2244 = vmatpush.msra.mxu0 %v2024
    %2245 = vmatpush.msra.mxu0 %v2020
    %2246 = vmatpush.msra.mxu0 %v2016
    %2247 = vmatpush.msra.mxu0 %v2012
    %2248 = vmatpush.msra.mxu0 %v2008
    %2249 = vmatpush.msra.mxu0 %v2004
    %2250 = vmatpush.msra.mxu0 %v2000
    %2251 = vmatpush.msra.mxu0 %v1996
    %2252 = vmatmul.f32.gmra.mxu0 %v2230
    %v2253 = vpop.f32.mrf.mxu0
    %v2254 = vadd.f32 0.0, %v2253
    %2255 = vdwg.mxu0
    %2256 = vmatpush.msra.mxu0 %v2057
    %2257 = vmatpush.msra.mxu0 %v2053
    %2258 = vmatpush.msra.mxu0 %v2049
    %2259 = vmatpush.msra.mxu0 %v2045
    %2260 = vmatpush.msra.mxu0 %v2041
    %2261 = vmatpush.msra.mxu0 %v2037
    %2262 = vmatpush.msra.mxu0 %v2033
    %2263 = vmatpush.msra.mxu0 %v2029
    %2264 = vmatpush.msra.mxu0 %v2025
    %2265 = vmatpush.msra.mxu0 %v2021
    %2266 = vmatpush.msra.mxu0 %v2017
    %2267 = vmatpush.msra.mxu0 %v2013
    %2268 = vmatpush.msra.mxu0 %v2009
    %2269 = vmatpush.msra.mxu0 %v2005
    %2270 = vmatpush.msra.mxu0 %v2001
    %2271 = vmatpush.msra.mxu0 %v1997
    %2272 = vmatmul.f32.gmra.mxu0 %v2230
    %v2273 = vpop.f32.mrf.mxu0
    %v2274 = vadd.f32 0.0, %v2273
    %2275 = vdwg.mxu0
    %2276 = vmatpush.msra.mxu0 %v2058
    %2277 = vmatpush.msra.mxu0 %v2054
    %2278 = vmatpush.msra.mxu0 %v2050
    %2279 = vmatpush.msra.mxu0 %v2046
    %2280 = vmatpush.msra.mxu0 %v2042
    %2281 = vmatpush.msra.mxu0 %v2038
    %2282 = vmatpush.msra.mxu0 %v2034
    %2283 = vmatpush.msra.mxu0 %v2030
    %2284 = vmatpush.msra.mxu0 %v2026
    %2285 = vmatpush.msra.mxu0 %v2022
    %2286 = vmatpush.msra.mxu0 %v2018
    %2287 = vmatpush.msra.mxu0 %v2014
    %2288 = vmatpush.msra.mxu0 %v2010
    %2289 = vmatpush.msra.mxu0 %v2006
    %2290 = vmatpush.msra.mxu0 %v2002
    %2291 = vmatpush.msra.mxu0 %v1998
    %2292 = vmatmul.f32.gmra.mxu0 %v2230
    %v2293 = vpop.f32.mrf.mxu0
    %v2294 = vadd.f32 0.0, %v2293
    %2295 = vdwg.mxu0
    %2296 = vmatpush.msra.mxu0 %v2059
    %2297 = vmatpush.msra.mxu0 %v2055
    %2298 = vmatpush.msra.mxu0 %v2051
    %2299 = vmatpush.msra.mxu0 %v2047
    %2300 = vmatpush.msra.mxu0 %v2043
    %2301 = vmatpush.msra.mxu0 %v2039
    %2302 = vmatpush.msra.mxu0 %v2035
    %2303 = vmatpush.msra.mxu0 %v2031
    %2304 = vmatpush.msra.mxu0 %v2027
    %2305 = vmatpush.msra.mxu0 %v2023
    %2306 = vmatpush.msra.mxu0 %v2019
    %2307 = vmatpush.msra.mxu0 %v2015
    %2308 = vmatpush.msra.mxu0 %v2011
    %2309 = vmatpush.msra.mxu0 %v2007
    %2310 = vmatpush.msra.mxu0 %v2003
    %2311 = vmatpush.msra.mxu0 %v1999
    %2312 = vmatmul.f32.gmra.mxu0 %v2230
    %v2313 = vpop.f32.mrf.mxu0
    %v2314 = vadd.f32 0.0, %v2313
    %2315 = vdwg.mxu0
    %v2320 = vrot.slane %v2254, 6
    %v2321 = vrot.slane %v2274, 6
    %v2322 = vrot.slane %v2294, 6
    %v2323 = vrot.slane %v2314, 6
    %v2328 = vadd.f32 %v2232, %v2320
    %v2329 = vadd.f32 %v2233, %v2321
    %v2330 = vadd.f32 %v2234, %v2322
    %v2331 = vadd.f32 %v2235, %v2323
    %v2332 = vxor.u32 %v2328, 2147483648
    %v2333 = vxor.u32 %v2329, 2147483648
    %v2334 = vxor.u32 %v2330, 2147483648
    %v2335 = vxor.u32 %v2331, 2147483648
    %v2336 = vmul.f32 %v2332, 1.442695
    %v2337 = vpow.pop %v2336
    %v2338 = vmul.f32 %v2333, 1.442695
    %v2339 = vpow.pop %v2338
    %v2340 = vmul.f32 %v2334, 1.442695
    %v2341 = vpow.pop %v2340
    %v2342 = vmul.f32 %v2335, 1.442695
    %v2343 = vpow.pop %v2342
    %v2344 = vadd.f32 %v2337, 1.0
    %v2345 = vadd.f32 %v2339, 1.0
    %v2346 = vadd.f32 %v2341, 1.0
    %v2347 = vadd.f32 %v2343, 1.0
    %v2348 = vrcp.pop %v2344
    %v2349 = vmul.f32 %v2344, %v2348
    %v2350 = vsub.f32 1.0, %v2349
    %v2351 = vmul.f32 %v2348, %v2350
    %v2352 = vadd.f32 %v2348, %v2351
    %vm2353 = vweird.f32 %v2344
    %vm2354 = vweird.f32 %v2348
    %vm2355 = vmor %vm2353, %vm2354
    %v2356 = vsel %vm2355, %v2348, %v2352
    %v2357 = vand.u32 2147483647, %v2344
    %vm2358 = vcmp.eq.f32.partialorder %v2357, 8.507059e+37
    %v2359 = vand.u32 %v2344, 2147483648
    %v2360 = vor.u32 1.1754944e-38, %v2359
    %v2361 = vsel %vm2358, %v2360, %v2356
    %v2362 = vmul.f32 1.0, %v2361
    %v2363 = vrcp.pop %v2345
    %v2364 = vmul.f32 %v2345, %v2363
    %v2365 = vsub.f32 1.0, %v2364
    %v2366 = vmul.f32 %v2363, %v2365
    %v2367 = vadd.f32 %v2363, %v2366
    %vm2368 = vweird.f32 %v2345
    %vm2369 = vweird.f32 %v2363
    %vm2370 = vmor %vm2368, %vm2369
    %v2371 = vsel %vm2370, %v2363, %v2367
    %v2372 = vand.u32 2147483647, %v2345
    %vm2373 = vcmp.eq.f32.partialorder %v2372, 8.507059e+37
    %v2374 = vand.u32 %v2345, 2147483648
    %v2375 = vor.u32 1.1754944e-38, %v2374
    %v2376 = vsel %vm2373, %v2375, %v2371
    %v2377 = vmul.f32 1.0, %v2376
    %v2378 = vrcp.pop %v2346
    %v2379 = vmul.f32 %v2346, %v2378
    %v2380 = vsub.f32 1.0, %v2379
    %v2381 = vmul.f32 %v2378, %v2380
    %v2382 = vadd.f32 %v2378, %v2381
    %vm2383 = vweird.f32 %v2346
    %vm2384 = vweird.f32 %v2378
    %vm2385 = vmor %vm2383, %vm2384
    %v2386 = vsel %vm2385, %v2378, %v2382
    %v2387 = vand.u32 2147483647, %v2346
    %vm2388 = vcmp.eq.f32.partialorder %v2387, 8.507059e+37
    %v2389 = vand.u32 %v2346, 2147483648
    %v2390 = vor.u32 1.1754944e-38, %v2389
    %v2391 = vsel %vm2388, %v2390, %v2386
    %v2392 = vmul.f32 1.0, %v2391
    %v2393 = vrcp.pop %v2347
    %v2394 = vmul.f32 %v2347, %v2393
    %v2395 = vsub.f32 1.0, %v2394
    %v2396 = vmul.f32 %v2393, %v2395
    %v2397 = vadd.f32 %v2393, %v2396
    %vm2398 = vweird.f32 %v2347
    %vm2399 = vweird.f32 %v2393
    %vm2400 = vmor %vm2398, %vm2399
    %v2401 = vsel %vm2400, %v2393, %v2397
    %v2402 = vand.u32 2147483647, %v2347
    %vm2403 = vcmp.eq.f32.partialorder %v2402, 8.507059e+37
    %v2404 = vand.u32 %v2347, 2147483648
    %v2405 = vor.u32 1.1754944e-38, %v2404
    %v2406 = vsel %vm2403, %v2405, %v2401
    %v2407 = vmul.f32 1.0, %v2406
    %v2408 = vmul.f32 %v2392, 2.0
    %v2409 = vsub.f32 %v2408, 1.0
    %v2411 = vrot.slane %v2228, 6
    %v2413 = vmul.f32 %v2377, %v2411
    %v2414 = vmul.f32 %v2362, %v2409
    %v2415 = vadd.f32 %v2413, %v2414
    %v2416 = vtanh.pop %v2415
    %v2417 = vmul.f32 %v2407, %v2416
    %2418 = vst [vmem:[#allocation2] sm:$0xc] %v2417
    %v2419 = vld [vmem:[#allocation3] sm:$0x30]
    %v2420 = vld [vmem:[#allocation3 + $0x8] sm:$0x30]
    %v2421 = vld [vmem:[#allocation3 + $0x10] sm:$0x30]
    %v2422 = vld [vmem:[#allocation3 + $0x18] sm:$0x30]
    %v2424 = vrot.slane %v2417, 2
    %2426 = vmatpush.msra.mxu0 %v2056
    %2427 = vmatpush.msra.mxu0 %v2052
    %2428 = vmatpush.msra.mxu0 %v2048
    %2429 = vmatpush.msra.mxu0 %v2044
    %2430 = vmatpush.msra.mxu0 %v2040
    %2431 = vmatpush.msra.mxu0 %v2036
    %2432 = vmatpush.msra.mxu0 %v2032
    %2433 = vmatpush.msra.mxu0 %v2028
    %2434 = vmatpush.msra.mxu0 %v2024
    %2435 = vmatpush.msra.mxu0 %v2020
    %2436 = vmatpush.msra.mxu0 %v2016
    %2437 = vmatpush.msra.mxu0 %v2012
    %2438 = vmatpush.msra.mxu0 %v2008
    %2439 = vmatpush.msra.mxu0 %v2004
    %2440 = vmatpush.msra.mxu0 %v2000
    %2441 = vmatpush.msra.mxu0 %v1996
    %2442 = vmatmul.f32.gmra.mxu0 %v2424
    %v2443 = vpop.f32.mrf.mxu0
    %v2444 = vadd.f32 0.0, %v2443
    %2445 = vdwg.mxu0
    %2446 = vmatpush.msra.mxu0 %v2057
    %2447 = vmatpush.msra.mxu0 %v2053
    %2448 = vmatpush.msra.mxu0 %v2049
    %2449 = vmatpush.msra.mxu0 %v2045
    %2450 = vmatpush.msra.mxu0 %v2041
    %2451 = vmatpush.msra.mxu0 %v2037
    %2452 = vmatpush.msra.mxu0 %v2033
    %2453 = vmatpush.msra.mxu0 %v2029
    %2454 = vmatpush.msra.mxu0 %v2025
    %2455 = vmatpush.msra.mxu0 %v2021
    %2456 = vmatpush.msra.mxu0 %v2017
    %2457 = vmatpush.msra.mxu0 %v2013
    %2458 = vmatpush.msra.mxu0 %v2009
    %2459 = vmatpush.msra.mxu0 %v2005
    %2460 = vmatpush.msra.mxu0 %v2001
    %2461 = vmatpush.msra.mxu0 %v1997
    %2462 = vmatmul.f32.gmra.mxu0 %v2424
    %v2463 = vpop.f32.mrf.mxu0
    %v2464 = vadd.f32 0.0, %v2463
    %2465 = vdwg.mxu0
    %2466 = vmatpush.msra.mxu0 %v2058
    %2467 = vmatpush.msra.mxu0 %v2054
    %2468 = vmatpush.msra.mxu0 %v2050
    %2469 = vmatpush.msra.mxu0 %v2046
    %2470 = vmatpush.msra.mxu0 %v2042
    %2471 = vmatpush.msra.mxu0 %v2038
    %2472 = vmatpush.msra.mxu0 %v2034
    %2473 = vmatpush.msra.mxu0 %v2030
    %2474 = vmatpush.msra.mxu0 %v2026
    %2475 = vmatpush.msra.mxu0 %v2022
    %2476 = vmatpush.msra.mxu0 %v2018
    %2477 = vmatpush.msra.mxu0 %v2014
    %2478 = vmatpush.msra.mxu0 %v2010
    %2479 = vmatpush.msra.mxu0 %v2006
    %2480 = vmatpush.msra.mxu0 %v2002
    %2481 = vmatpush.msra.mxu0 %v1998
    %2482 = vmatmul.f32.gmra.mxu0 %v2424
    %v2483 = vpop.f32.mrf.mxu0
    %v2484 = vadd.f32 0.0, %v2483
    %2485 = vdwg.mxu0
    %2486 = vmatpush.msra.mxu0 %v2059
    %2487 = vmatpush.msra.mxu0 %v2055
    %2488 = vmatpush.msra.mxu0 %v2051
    %2489 = vmatpush.msra.mxu0 %v2047
    %2490 = vmatpush.msra.mxu0 %v2043
    %2491 = vmatpush.msra.mxu0 %v2039
    %2492 = vmatpush.msra.mxu0 %v2035
    %2493 = vmatpush.msra.mxu0 %v2031
    %2494 = vmatpush.msra.mxu0 %v2027
    %2495 = vmatpush.msra.mxu0 %v2023
    %2496 = vmatpush.msra.mxu0 %v2019
    %2497 = vmatpush.msra.mxu0 %v2015
    %2498 = vmatpush.msra.mxu0 %v2011
    %2499 = vmatpush.msra.mxu0 %v2007
    %2500 = vmatpush.msra.mxu0 %v2003
    %2501 = vmatpush.msra.mxu0 %v1999
    %2502 = vmatmul.f32.gmra.mxu0 %v2424
    %v2503 = vpop.f32.mrf.mxu0
    %v2504 = vadd.f32 0.0, %v2503
    %2505 = vdwg.mxu0
    %v2510 = vrot.slane %v2444, 4
    %v2511 = vrot.slane %v2464, 4
    %v2512 = vrot.slane %v2484, 4
    %v2513 = vrot.slane %v2504, 4
    %v2518 = vadd.f32 %v2419, %v2510
    %v2519 = vadd.f32 %v2420, %v2511
    %v2520 = vadd.f32 %v2421, %v2512
    %v2521 = vadd.f32 %v2422, %v2513
    %v2522 = vxor.u32 %v2518, 2147483648
    %v2523 = vxor.u32 %v2519, 2147483648
    %v2524 = vxor.u32 %v2520, 2147483648
    %v2525 = vxor.u32 %v2521, 2147483648
    %v2526 = vmul.f32 %v2522, 1.442695
    %v2527 = vpow.pop %v2526
    %v2528 = vmul.f32 %v2523, 1.442695
    %v2529 = vpow.pop %v2528
    %v2530 = vmul.f32 %v2524, 1.442695
    %v2531 = vpow.pop %v2530
    %v2532 = vmul.f32 %v2525, 1.442695
    %v2533 = vpow.pop %v2532
    %v2534 = vadd.f32 %v2527, 1.0
    %v2535 = vadd.f32 %v2529, 1.0
    %v2536 = vadd.f32 %v2531, 1.0
    %v2537 = vadd.f32 %v2533, 1.0
    %v2538 = vrcp.pop %v2534
    %v2539 = vmul.f32 %v2534, %v2538
    %v2540 = vsub.f32 1.0, %v2539
    %v2541 = vmul.f32 %v2538, %v2540
    %v2542 = vadd.f32 %v2538, %v2541
    %vm2543 = vweird.f32 %v2534
    %vm2544 = vweird.f32 %v2538
    %vm2545 = vmor %vm2543, %vm2544
    %v2546 = vsel %vm2545, %v2538, %v2542
    %v2547 = vand.u32 2147483647, %v2534
    %vm2548 = vcmp.eq.f32.partialorder %v2547, 8.507059e+37
    %v2549 = vand.u32 %v2534, 2147483648
    %v2550 = vor.u32 1.1754944e-38, %v2549
    %v2551 = vsel %vm2548, %v2550, %v2546
    %v2552 = vmul.f32 1.0, %v2551
    %v2553 = vrcp.pop %v2535
    %v2554 = vmul.f32 %v2535, %v2553
    %v2555 = vsub.f32 1.0, %v2554
    %v2556 = vmul.f32 %v2553, %v2555
    %v2557 = vadd.f32 %v2553, %v2556
    %vm2558 = vweird.f32 %v2535
    %vm2559 = vweird.f32 %v2553
    %vm2560 = vmor %vm2558, %vm2559
    %v2561 = vsel %vm2560, %v2553, %v2557
    %v2562 = vand.u32 2147483647, %v2535
    %vm2563 = vcmp.eq.f32.partialorder %v2562, 8.507059e+37
    %v2564 = vand.u32 %v2535, 2147483648
    %v2565 = vor.u32 1.1754944e-38, %v2564
    %v2566 = vsel %vm2563, %v2565, %v2561
    %v2567 = vmul.f32 1.0, %v2566
    %v2568 = vrcp.pop %v2536
    %v2569 = vmul.f32 %v2536, %v2568
    %v2570 = vsub.f32 1.0, %v2569
    %v2571 = vmul.f32 %v2568, %v2570
    %v2572 = vadd.f32 %v2568, %v2571
    %vm2573 = vweird.f32 %v2536
    %vm2574 = vweird.f32 %v2568
    %vm2575 = vmor %vm2573, %vm2574
    %v2576 = vsel %vm2575, %v2568, %v2572
    %v2577 = vand.u32 2147483647, %v2536
    %vm2578 = vcmp.eq.f32.partialorder %v2577, 8.507059e+37
    %v2579 = vand.u32 %v2536, 2147483648
    %v2580 = vor.u32 1.1754944e-38, %v2579
    %v2581 = vsel %vm2578, %v2580, %v2576
    %v2582 = vmul.f32 1.0, %v2581
    %v2583 = vrcp.pop %v2537
    %v2584 = vmul.f32 %v2537, %v2583
    %v2585 = vsub.f32 1.0, %v2584
    %v2586 = vmul.f32 %v2583, %v2585
    %v2587 = vadd.f32 %v2583, %v2586
    %vm2588 = vweird.f32 %v2537
    %vm2589 = vweird.f32 %v2583
    %vm2590 = vmor %vm2588, %vm2589
    %v2591 = vsel %vm2590, %v2583, %v2587
    %v2592 = vand.u32 2147483647, %v2537
    %vm2593 = vcmp.eq.f32.partialorder %v2592, 8.507059e+37
    %v2594 = vand.u32 %v2537, 2147483648
    %v2595 = vor.u32 1.1754944e-38, %v2594
    %v2596 = vsel %vm2593, %v2595, %v2591
    %v2597 = vmul.f32 1.0, %v2596
    %v2598 = vmul.f32 %v2582, 2.0
    %v2599 = vsub.f32 %v2598, 1.0
    %v2601 = vrot.slane %v2415, 6
    %v2603 = vmul.f32 %v2567, %v2601
    %v2604 = vmul.f32 %v2552, %v2599
    %v2605 = vadd.f32 %v2603, %v2604
    %v2606 = vtanh.pop %v2605
    %v2607 = vmul.f32 %v2597, %v2606
    %2608 = vst [vmem:[#allocation2] sm:$0x30] %v2607
    %v2609 = vld [vmem:[#allocation3] sm:$0xc0]
    %v2610 = vld [vmem:[#allocation3 + $0x8] sm:$0xc0]
    %v2611 = vld [vmem:[#allocation3 + $0x10] sm:$0xc0]
    %v2612 = vld [vmem:[#allocation3 + $0x18] sm:$0xc0]
    %v2614 = vrot.slane %v2607, 4
    %2616 = vmatpush.msra.mxu0 %v2056
    %2617 = vmatpush.msra.mxu0 %v2052
    %2618 = vmatpush.msra.mxu0 %v2048
    %2619 = vmatpush.msra.mxu0 %v2044
    %2620 = vmatpush.msra.mxu0 %v2040
    %2621 = vmatpush.msra.mxu0 %v2036
    %2622 = vmatpush.msra.mxu0 %v2032
    %2623 = vmatpush.msra.mxu0 %v2028
    %2624 = vmatpush.msra.mxu0 %v2024
    %2625 = vmatpush.msra.mxu0 %v2020
    %2626 = vmatpush.msra.mxu0 %v2016
    %2627 = vmatpush.msra.mxu0 %v2012
    %2628 = vmatpush.msra.mxu0 %v2008
    %2629 = vmatpush.msra.mxu0 %v2004
    %2630 = vmatpush.msra.mxu0 %v2000
    %2631 = vmatpush.msra.mxu0 %v1996
    %2632 = vmatmul.f32.gmra.mxu0 %v2614
    %v2633 = vpop.f32.mrf.mxu0
    %v2634 = vadd.f32 0.0, %v2633
    %2635 = vdwg.mxu0
    %2636 = vmatpush.msra.mxu0 %v2057
    %2637 = vmatpush.msra.mxu0 %v2053
    %2638 = vmatpush.msra.mxu0 %v2049
    %2639 = vmatpush.msra.mxu0 %v2045
    %2640 = vmatpush.msra.mxu0 %v2041
    %2641 = vmatpush.msra.mxu0 %v2037
    %2642 = vmatpush.msra.mxu0 %v2033
    %2643 = vmatpush.msra.mxu0 %v2029
    %2644 = vmatpush.msra.mxu0 %v2025
    %2645 = vmatpush.msra.mxu0 %v2021
    %2646 = vmatpush.msra.mxu0 %v2017
    %2647 = vmatpush.msra.mxu0 %v2013
    %2648 = vmatpush.msra.mxu0 %v2009
    %2649 = vmatpush.msra.mxu0 %v2005
    %2650 = vmatpush.msra.mxu0 %v2001
    %2651 = vmatpush.msra.mxu0 %v1997
    %2652 = vmatmul.f32.gmra.mxu0 %v2614
    %v2653 = vpop.f32.mrf.mxu0
    %v2654 = vadd.f32 0.0, %v2653
    %2655 = vdwg.mxu0
    %2656 = vmatpush.msra.mxu0 %v2058
    %2657 = vmatpush.msra.mxu0 %v2054
    %2658 = vmatpush.msra.mxu0 %v2050
    %2659 = vmatpush.msra.mxu0 %v2046
    %2660 = vmatpush.msra.mxu0 %v2042
    %2661 = vmatpush.msra.mxu0 %v2038
    %2662 = vmatpush.msra.mxu0 %v2034
    %2663 = vmatpush.msra.mxu0 %v2030
    %2664 = vmatpush.msra.mxu0 %v2026
    %2665 = vmatpush.msra.mxu0 %v2022
    %2666 = vmatpush.msra.mxu0 %v2018
    %2667 = vmatpush.msra.mxu0 %v2014
    %2668 = vmatpush.msra.mxu0 %v2010
    %2669 = vmatpush.msra.mxu0 %v2006
    %2670 = vmatpush.msra.mxu0 %v2002
    %2671 = vmatpush.msra.mxu0 %v1998
    %2672 = vmatmul.f32.gmra.mxu0 %v2614
    %v2673 = vpop.f32.mrf.mxu0
    %v2674 = vadd.f32 0.0, %v2673
    %2675 = vdwg.mxu0
    %2676 = vmatpush.msra.mxu0 %v2059
    %2677 = vmatpush.msra.mxu0 %v2055
    %2678 = vmatpush.msra.mxu0 %v2051
    %2679 = vmatpush.msra.mxu0 %v2047
    %2680 = vmatpush.msra.mxu0 %v2043
    %2681 = vmatpush.msra.mxu0 %v2039
    %2682 = vmatpush.msra.mxu0 %v2035
    %2683 = vmatpush.msra.mxu0 %v2031
    %2684 = vmatpush.msra.mxu0 %v2027
    %2685 = vmatpush.msra.mxu0 %v2023
    %2686 = vmatpush.msra.mxu0 %v2019
    %2687 = vmatpush.msra.mxu0 %v2015
    %2688 = vmatpush.msra.mxu0 %v2011
    %2689 = vmatpush.msra.mxu0 %v2007
    %2690 = vmatpush.msra.mxu0 %v2003
    %2691 = vmatpush.msra.mxu0 %v1999
    %2692 = vmatmul.f32.gmra.mxu0 %v2614
    %v2693 = vpop.f32.mrf.mxu0
    %v2694 = vadd.f32 0.0, %v2693
    %2695 = vdwg.mxu0
    %v2700 = vrot.slane %v2634, 2
    %v2701 = vrot.slane %v2654, 2
    %v2702 = vrot.slane %v2674, 2
    %v2703 = vrot.slane %v2694, 2
    %v2708 = vadd.f32 %v2609, %v2700
    %v2709 = vadd.f32 %v2610, %v2701
    %v2710 = vadd.f32 %v2611, %v2702
    %v2711 = vadd.f32 %v2612, %v2703
    %v2712 = vxor.u32 %v2708, 2147483648
    %v2713 = vxor.u32 %v2709, 2147483648
    %v2714 = vxor.u32 %v2710, 2147483648
    %v2715 = vxor.u32 %v2711, 2147483648
    %v2716 = vmul.f32 %v2712, 1.442695
    %v2717 = vpow.pop %v2716
    %v2718 = vmul.f32 %v2713, 1.442695
    %v2719 = vpow.pop %v2718
    %v2720 = vmul.f32 %v2714, 1.442695
    %v2721 = vpow.pop %v2720
    %v2722 = vmul.f32 %v2715, 1.442695
    %v2723 = vpow.pop %v2722
    %v2724 = vadd.f32 %v2717, 1.0
    %v2725 = vadd.f32 %v2719, 1.0
    %v2726 = vadd.f32 %v2721, 1.0
    %v2727 = vadd.f32 %v2723, 1.0
    %v2728 = vrcp.pop %v2724
    %v2729 = vmul.f32 %v2724, %v2728
    %v2730 = vsub.f32 1.0, %v2729
    %v2731 = vmul.f32 %v2728, %v2730
    %v2732 = vadd.f32 %v2728, %v2731
    %vm2733 = vweird.f32 %v2724
    %vm2734 = vweird.f32 %v2728
    %vm2735 = vmor %vm2733, %vm2734
    %v2736 = vsel %vm2735, %v2728, %v2732
    %v2737 = vand.u32 2147483647, %v2724
    %vm2738 = vcmp.eq.f32.partialorder %v2737, 8.507059e+37
    %v2739 = vand.u32 %v2724, 2147483648
    %v2740 = vor.u32 1.1754944e-38, %v2739
    %v2741 = vsel %vm2738, %v2740, %v2736
    %v2742 = vmul.f32 1.0, %v2741
    %v2743 = vrcp.pop %v2725
    %v2744 = vmul.f32 %v2725, %v2743
    %v2745 = vsub.f32 1.0, %v2744
    %v2746 = vmul.f32 %v2743, %v2745
    %v2747 = vadd.f32 %v2743, %v2746
    %vm2748 = vweird.f32 %v2725
    %vm2749 = vweird.f32 %v2743
    %vm2750 = vmor %vm2748, %vm2749
    %v2751 = vsel %vm2750, %v2743, %v2747
    %v2752 = vand.u32 2147483647, %v2725
    %vm2753 = vcmp.eq.f32.partialorder %v2752, 8.507059e+37
    %v2754 = vand.u32 %v2725, 2147483648
    %v2755 = vor.u32 1.1754944e-38, %v2754
    %v2756 = vsel %vm2753, %v2755, %v2751
    %v2757 = vmul.f32 1.0, %v2756
    %v2758 = vrcp.pop %v2726
    %v2759 = vmul.f32 %v2726, %v2758
    %v2760 = vsub.f32 1.0, %v2759
    %v2761 = vmul.f32 %v2758, %v2760
    %v2762 = vadd.f32 %v2758, %v2761
    %vm2763 = vweird.f32 %v2726
    %vm2764 = vweird.f32 %v2758
    %vm2765 = vmor %vm2763, %vm2764
    %v2766 = vsel %vm2765, %v2758, %v2762
    %v2767 = vand.u32 2147483647, %v2726
    %vm2768 = vcmp.eq.f32.partialorder %v2767, 8.507059e+37
    %v2769 = vand.u32 %v2726, 2147483648
    %v2770 = vor.u32 1.1754944e-38, %v2769
    %v2771 = vsel %vm2768, %v2770, %v2766
    %v2772 = vmul.f32 1.0, %v2771
    %v2773 = vrcp.pop %v2727
    %v2774 = vmul.f32 %v2727, %v2773
    %v2775 = vsub.f32 1.0, %v2774
    %v2776 = vmul.f32 %v2773, %v2775
    %v2777 = vadd.f32 %v2773, %v2776
    %vm2778 = vweird.f32 %v2727
    %vm2779 = vweird.f32 %v2773
    %vm2780 = vmor %vm2778, %vm2779
    %v2781 = vsel %vm2780, %v2773, %v2777
    %v2782 = vand.u32 2147483647, %v2727
    %vm2783 = vcmp.eq.f32.partialorder %v2782, 8.507059e+37
    %v2784 = vand.u32 %v2727, 2147483648
    %v2785 = vor.u32 1.1754944e-38, %v2784
    %v2786 = vsel %vm2783, %v2785, %v2781
    %v2787 = vmul.f32 1.0, %v2786
    %v2788 = vmul.f32 %v2772, 2.0
    %v2789 = vsub.f32 %v2788, 1.0
    %v2791 = vrot.slane %v2605, 6
    %v2793 = vmul.f32 %v2757, %v2791
    %v2794 = vmul.f32 %v2742, %v2789
    %v2795 = vadd.f32 %v2793, %v2794
    %v2796 = vtanh.pop %v2795
    %v2797 = vmul.f32 %v2787, %v2796
    %2798 = vst [vmem:[#allocation2] sm:$0xc0] %v2797
    %v2799 = vld [vmem:[#allocation3 + $0x20] sm:$0x3]
    %v2800 = vld [vmem:[#allocation3 + $0x28] sm:$0x3]
    %v2801 = vld [vmem:[#allocation3 + $0x30] sm:$0x3]
    %v2802 = vld [vmem:[#allocation3 + $0x38] sm:$0x3]
    %v2804 = vrot.slane %v2797, 6
    %2806 = vmatpush.msra.mxu0 %v2056
    %2807 = vmatpush.msra.mxu0 %v2052
    %2808 = vmatpush.msra.mxu0 %v2048
    %2809 = vmatpush.msra.mxu0 %v2044
    %2810 = vmatpush.msra.mxu0 %v2040
    %2811 = vmatpush.msra.mxu0 %v2036
    %2812 = vmatpush.msra.mxu0 %v2032
    %2813 = vmatpush.msra.mxu0 %v2028
    %2814 = vmatpush.msra.mxu0 %v2024
    %2815 = vmatpush.msra.mxu0 %v2020
    %2816 = vmatpush.msra.mxu0 %v2016
    %2817 = vmatpush.msra.mxu0 %v2012
    %2818 = vmatpush.msra.mxu0 %v2008
    %2819 = vmatpush.msra.mxu0 %v2004
    %2820 = vmatpush.msra.mxu0 %v2000
    %2821 = vmatpush.msra.mxu0 %v1996
    %2822 = vmatmul.f32.gmra.mxu0 %v2804
    %v2823 = vpop.f32.mrf.mxu0
    %v2824 = vadd.f32 0.0, %v2823
    %2825 = vdwg.mxu0
    %2826 = vmatpush.msra.mxu0 %v2057
    %2827 = vmatpush.msra.mxu0 %v2053
    %2828 = vmatpush.msra.mxu0 %v2049
    %2829 = vmatpush.msra.mxu0 %v2045
    %2830 = vmatpush.msra.mxu0 %v2041
    %2831 = vmatpush.msra.mxu0 %v2037
    %2832 = vmatpush.msra.mxu0 %v2033
    %2833 = vmatpush.msra.mxu0 %v2029
    %2834 = vmatpush.msra.mxu0 %v2025
    %2835 = vmatpush.msra.mxu0 %v2021
    %2836 = vmatpush.msra.mxu0 %v2017
    %2837 = vmatpush.msra.mxu0 %v2013
    %2838 = vmatpush.msra.mxu0 %v2009
    %2839 = vmatpush.msra.mxu0 %v2005
    %2840 = vmatpush.msra.mxu0 %v2001
    %2841 = vmatpush.msra.mxu0 %v1997
    %2842 = vmatmul.f32.gmra.mxu0 %v2804
    %v2843 = vpop.f32.mrf.mxu0
    %v2844 = vadd.f32 0.0, %v2843
    %2845 = vdwg.mxu0
    %2846 = vmatpush.msra.mxu0 %v2058
    %2847 = vmatpush.msra.mxu0 %v2054
    %2848 = vmatpush.msra.mxu0 %v2050
    %2849 = vmatpush.msra.mxu0 %v2046
    %2850 = vmatpush.msra.mxu0 %v2042
    %2851 = vmatpush.msra.mxu0 %v2038
    %2852 = vmatpush.msra.mxu0 %v2034
    %2853 = vmatpush.msra.mxu0 %v2030
    %2854 = vmatpush.msra.mxu0 %v2026
    %2855 = vmatpush.msra.mxu0 %v2022
    %2856 = vmatpush.msra.mxu0 %v2018
    %2857 = vmatpush.msra.mxu0 %v2014
    %2858 = vmatpush.msra.mxu0 %v2010
    %2859 = vmatpush.msra.mxu0 %v2006
    %2860 = vmatpush.msra.mxu0 %v2002
    %2861 = vmatpush.msra.mxu0 %v1998
    %2862 = vmatmul.f32.gmra.mxu0 %v2804
    %v2863 = vpop.f32.mrf.mxu0
    %v2864 = vadd.f32 0.0, %v2863
    %2865 = vdwg.mxu0
    %2866 = vmatpush.msra.mxu0 %v2059
    %2867 = vmatpush.msra.mxu0 %v2055
    %2868 = vmatpush.msra.mxu0 %v2051
    %2869 = vmatpush.msra.mxu0 %v2047
    %2870 = vmatpush.msra.mxu0 %v2043
    %2871 = vmatpush.msra.mxu0 %v2039
    %2872 = vmatpush.msra.mxu0 %v2035
    %2873 = vmatpush.msra.mxu0 %v2031
    %2874 = vmatpush.msra.mxu0 %v2027
    %2875 = vmatpush.msra.mxu0 %v2023
    %2876 = vmatpush.msra.mxu0 %v2019
    %2877 = vmatpush.msra.mxu0 %v2015
    %2878 = vmatpush.msra.mxu0 %v2011
    %2879 = vmatpush.msra.mxu0 %v2007
    %2880 = vmatpush.msra.mxu0 %v2003
    %2881 = vmatpush.msra.mxu0 %v1999
    %2882 = vmatmul.f32.gmra.mxu0 %v2804
    %v2883 = vpop.f32.mrf.mxu0
    %v2884 = vadd.f32 0.0, %v2883
    %2885 = vdwg.mxu0
    %v2886 = vadd.f32 %v2799, %v2824
    %v2887 = vadd.f32 %v2800, %v2844
    %v2888 = vadd.f32 %v2801, %v2864
    %v2889 = vadd.f32 %v2802, %v2884
    %v2890 = vxor.u32 %v2886, 2147483648
    %v2891 = vxor.u32 %v2887, 2147483648
    %v2892 = vxor.u32 %v2888, 2147483648
    %v2893 = vxor.u32 %v2889, 2147483648
    %v2894 = vmul.f32 %v2890, 1.442695
    %v2895 = vpow.pop %v2894
    %v2896 = vmul.f32 %v2891, 1.442695
    %v2897 = vpow.pop %v2896
    %v2898 = vmul.f32 %v2892, 1.442695
    %v2899 = vpow.pop %v2898
    %v2900 = vmul.f32 %v2893, 1.442695
    %v2901 = vpow.pop %v2900
    %v2902 = vadd.f32 %v2895, 1.0
    %v2903 = vadd.f32 %v2897, 1.0
    %v2904 = vadd.f32 %v2899, 1.0
    %v2905 = vadd.f32 %v2901, 1.0
    %v2906 = vrcp.pop %v2902
    %v2907 = vmul.f32 %v2902, %v2906
    %v2908 = vsub.f32 1.0, %v2907
    %v2909 = vmul.f32 %v2906, %v2908
    %v2910 = vadd.f32 %v2906, %v2909
    %vm2911 = vweird.f32 %v2902
    %vm2912 = vweird.f32 %v2906
    %vm2913 = vmor %vm2911, %vm2912
    %v2914 = vsel %vm2913, %v2906, %v2910
    %v2915 = vand.u32 2147483647, %v2902
    %vm2916 = vcmp.eq.f32.partialorder %v2915, 8.507059e+37
    %v2917 = vand.u32 %v2902, 2147483648
    %v2918 = vor.u32 1.1754944e-38, %v2917
    %v2919 = vsel %vm2916, %v2918, %v2914
    %v2920 = vmul.f32 1.0, %v2919
    %v2921 = vrcp.pop %v2903
    %v2922 = vmul.f32 %v2903, %v2921
    %v2923 = vsub.f32 1.0, %v2922
    %v2924 = vmul.f32 %v2921, %v2923
    %v2925 = vadd.f32 %v2921, %v2924
    %vm2926 = vweird.f32 %v2903
    %vm2927 = vweird.f32 %v2921
    %vm2928 = vmor %vm2926, %vm2927
    %v2929 = vsel %vm2928, %v2921, %v2925
    %v2930 = vand.u32 2147483647, %v2903
    %vm2931 = vcmp.eq.f32.partialorder %v2930, 8.507059e+37
    %v2932 = vand.u32 %v2903, 2147483648
    %v2933 = vor.u32 1.1754944e-38, %v2932
    %v2934 = vsel %vm2931, %v2933, %v2929
    %v2935 = vmul.f32 1.0, %v2934
    %v2936 = vrcp.pop %v2904
    %v2937 = vmul.f32 %v2904, %v2936
    %v2938 = vsub.f32 1.0, %v2937
    %v2939 = vmul.f32 %v2936, %v2938
    %v2940 = vadd.f32 %v2936, %v2939
    %vm2941 = vweird.f32 %v2904
    %vm2942 = vweird.f32 %v2936
    %vm2943 = vmor %vm2941, %vm2942
    %v2944 = vsel %vm2943, %v2936, %v2940
    %v2945 = vand.u32 2147483647, %v2904
    %vm2946 = vcmp.eq.f32.partialorder %v2945, 8.507059e+37
    %v2947 = vand.u32 %v2904, 2147483648
    %v2948 = vor.u32 1.1754944e-38, %v2947
    %v2949 = vsel %vm2946, %v2948, %v2944
    %v2950 = vmul.f32 1.0, %v2949
    %v2951 = vrcp.pop %v2905
    %v2952 = vmul.f32 %v2905, %v2951
    %v2953 = vsub.f32 1.0, %v2952
    %v2954 = vmul.f32 %v2951, %v2953
    %v2955 = vadd.f32 %v2951, %v2954
    %vm2956 = vweird.f32 %v2905
    %vm2957 = vweird.f32 %v2951
    %vm2958 = vmor %vm2956, %vm2957
    %v2959 = vsel %vm2958, %v2951, %v2955
    %v2960 = vand.u32 2147483647, %v2905
    %vm2961 = vcmp.eq.f32.partialorder %v2960, 8.507059e+37
    %v2962 = vand.u32 %v2905, 2147483648
    %v2963 = vor.u32 1.1754944e-38, %v2962
    %v2964 = vsel %vm2961, %v2963, %v2959
    %v2965 = vmul.f32 1.0, %v2964
    %v2966 = vmul.f32 %v2950, 2.0
    %v2967 = vsub.f32 %v2966, 1.0
    %v2969 = vrot.slane %v2795, 6
    %v2971 = vmul.f32 %v2935, %v2969
    %v2972 = vmul.f32 %v2920, %v2967
    %v2973 = vadd.f32 %v2971, %v2972
    %v2974 = vtanh.pop %v2973
    %v2975 = vmul.f32 %v2965, %v2974
    %2976 = vst [vmem:[#allocation2 + $0x8] sm:$0x3] %v2975
    %v2977 = vld [vmem:[#allocation3 + $0x20] sm:$0xc]
    %v2978 = vld [vmem:[#allocation3 + $0x28] sm:$0xc]
    %v2979 = vld [vmem:[#allocation3 + $0x30] sm:$0xc]
    %v2980 = vld [vmem:[#allocation3 + $0x38] sm:$0xc]
    %2981 = vmatpush.msra.mxu0 %v2056
    %2982 = vmatpush.msra.mxu0 %v2052
    %2983 = vmatpush.msra.mxu0 %v2048
    %2984 = vmatpush.msra.mxu0 %v2044
    %2985 = vmatpush.msra.mxu0 %v2040
    %2986 = vmatpush.msra.mxu0 %v2036
    %2987 = vmatpush.msra.mxu0 %v2032
    %2988 = vmatpush.msra.mxu0 %v2028
    %2989 = vmatpush.msra.mxu0 %v2024
    %2990 = vmatpush.msra.mxu0 %v2020
    %2991 = vmatpush.msra.mxu0 %v2016
    %2992 = vmatpush.msra.mxu0 %v2012
    %2993 = vmatpush.msra.mxu0 %v2008
    %2994 = vmatpush.msra.mxu0 %v2004
    %2995 = vmatpush.msra.mxu0 %v2000
    %2996 = vmatpush.msra.mxu0 %v1996
    %2997 = vmatmul.f32.gmra.mxu0 %v2975
    %v2998 = vpop.f32.mrf.mxu0
    %v2999 = vadd.f32 0.0, %v2998
    %3000 = vdwg.mxu0
    %3001 = vmatpush.msra.mxu0 %v2057
    %3002 = vmatpush.msra.mxu0 %v2053
    %3003 = vmatpush.msra.mxu0 %v2049
    %3004 = vmatpush.msra.mxu0 %v2045
    %3005 = vmatpush.msra.mxu0 %v2041
    %3006 = vmatpush.msra.mxu0 %v2037
    %3007 = vmatpush.msra.mxu0 %v2033
    %3008 = vmatpush.msra.mxu0 %v2029
    %3009 = vmatpush.msra.mxu0 %v2025
    %3010 = vmatpush.msra.mxu0 %v2021
    %3011 = vmatpush.msra.mxu0 %v2017
    %3012 = vmatpush.msra.mxu0 %v2013
    %3013 = vmatpush.msra.mxu0 %v2009
    %3014 = vmatpush.msra.mxu0 %v2005
    %3015 = vmatpush.msra.mxu0 %v2001
    %3016 = vmatpush.msra.mxu0 %v1997
    %3017 = vmatmul.f32.gmra.mxu0 %v2975
    %v3018 = vpop.f32.mrf.mxu0
    %v3019 = vadd.f32 0.0, %v3018
    %3020 = vdwg.mxu0
    %3021 = vmatpush.msra.mxu0 %v2058
    %3022 = vmatpush.msra.mxu0 %v2054
    %3023 = vmatpush.msra.mxu0 %v2050
    %3024 = vmatpush.msra.mxu0 %v2046
    %3025 = vmatpush.msra.mxu0 %v2042
    %3026 = vmatpush.msra.mxu0 %v2038
    %3027 = vmatpush.msra.mxu0 %v2034
    %3028 = vmatpush.msra.mxu0 %v2030
    %3029 = vmatpush.msra.mxu0 %v2026
    %3030 = vmatpush.msra.mxu0 %v2022
    %3031 = vmatpush.msra.mxu0 %v2018
    %3032 = vmatpush.msra.mxu0 %v2014
    %3033 = vmatpush.msra.mxu0 %v2010
    %3034 = vmatpush.msra.mxu0 %v2006
    %3035 = vmatpush.msra.mxu0 %v2002
    %3036 = vmatpush.msra.mxu0 %v1998
    %3037 = vmatmul.f32.gmra.mxu0 %v2975
    %v3038 = vpop.f32.mrf.mxu0
    %v3039 = vadd.f32 0.0, %v3038
    %3040 = vdwg.mxu0
    %3041 = vmatpush.msra.mxu0 %v2059
    %3042 = vmatpush.msra.mxu0 %v2055
    %3043 = vmatpush.msra.mxu0 %v2051
    %3044 = vmatpush.msra.mxu0 %v2047
    %3045 = vmatpush.msra.mxu0 %v2043
    %3046 = vmatpush.msra.mxu0 %v2039
    %3047 = vmatpush.msra.mxu0 %v2035
    %3048 = vmatpush.msra.mxu0 %v2031
    %3049 = vmatpush.msra.mxu0 %v2027
    %3050 = vmatpush.msra.mxu0 %v2023
    %3051 = vmatpush.msra.mxu0 %v2019
    %3052 = vmatpush.msra.mxu0 %v2015
    %3053 = vmatpush.msra.mxu0 %v2011
    %3054 = vmatpush.msra.mxu0 %v2007
    %3055 = vmatpush.msra.mxu0 %v2003
    %3056 = vmatpush.msra.mxu0 %v1999
    %3057 = vmatmul.f32.gmra.mxu0 %v2975
    %v3058 = vpop.f32.mrf.mxu0
    %v3059 = vadd.f32 0.0, %v3058
    %3060 = vdwg.mxu0
    %v3065 = vrot.slane %v2999, 6
    %v3066 = vrot.slane %v3019, 6
    %v3067 = vrot.slane %v3039, 6
    %v3068 = vrot.slane %v3059, 6
    %v3073 = vadd.f32 %v2977, %v3065
    %v3074 = vadd.f32 %v2978, %v3066
    %v3075 = vadd.f32 %v2979, %v3067
    %v3076 = vadd.f32 %v2980, %v3068
    %v3077 = vxor.u32 %v3073, 2147483648
    %v3078 = vxor.u32 %v3074, 2147483648
    %v3079 = vxor.u32 %v3075, 2147483648
    %v3080 = vxor.u32 %v3076, 2147483648
    %v3081 = vmul.f32 %v3077, 1.442695
    %v3082 = vpow.pop %v3081
    %v3083 = vmul.f32 %v3078, 1.442695
    %v3084 = vpow.pop %v3083
    %v3085 = vmul.f32 %v3079, 1.442695
    %v3086 = vpow.pop %v3085
    %v3087 = vmul.f32 %v3080, 1.442695
    %v3088 = vpow.pop %v3087
    %v3089 = vadd.f32 %v3082, 1.0
    %v3090 = vadd.f32 %v3084, 1.0
    %v3091 = vadd.f32 %v3086, 1.0
    %v3092 = vadd.f32 %v3088, 1.0
    %v3093 = vrcp.pop %v3089
    %v3094 = vmul.f32 %v3089, %v3093
    %v3095 = vsub.f32 1.0, %v3094
    %v3096 = vmul.f32 %v3093, %v3095
    %v3097 = vadd.f32 %v3093, %v3096
    %vm3098 = vweird.f32 %v3089
    %vm3099 = vweird.f32 %v3093
    %vm3100 = vmor %vm3098, %vm3099
    %v3101 = vsel %vm3100, %v3093, %v3097
    %v3102 = vand.u32 2147483647, %v3089
    %vm3103 = vcmp.eq.f32.partialorder %v3102, 8.507059e+37
    %v3104 = vand.u32 %v3089, 2147483648
    %v3105 = vor.u32 1.1754944e-38, %v3104
    %v3106 = vsel %vm3103, %v3105, %v3101
    %v3107 = vmul.f32 1.0, %v3106
    %v3108 = vrcp.pop %v3090
    %v3109 = vmul.f32 %v3090, %v3108
    %v3110 = vsub.f32 1.0, %v3109
    %v3111 = vmul.f32 %v3108, %v3110
    %v3112 = vadd.f32 %v3108, %v3111
    %vm3113 = vweird.f32 %v3090
    %vm3114 = vweird.f32 %v3108
    %vm3115 = vmor %vm3113, %vm3114
    %v3116 = vsel %vm3115, %v3108, %v3112
    %v3117 = vand.u32 2147483647, %v3090
    %vm3118 = vcmp.eq.f32.partialorder %v3117, 8.507059e+37
    %v3119 = vand.u32 %v3090, 2147483648
    %v3120 = vor.u32 1.1754944e-38, %v3119
    %v3121 = vsel %vm3118, %v3120, %v3116
    %v3122 = vmul.f32 1.0, %v3121
    %v3123 = vrcp.pop %v3091
    %v3124 = vmul.f32 %v3091, %v3123
    %v3125 = vsub.f32 1.0, %v3124
    %v3126 = vmul.f32 %v3123, %v3125
    %v3127 = vadd.f32 %v3123, %v3126
    %vm3128 = vweird.f32 %v3091
    %vm3129 = vweird.f32 %v3123
    %vm3130 = vmor %vm3128, %vm3129
    %v3131 = vsel %vm3130, %v3123, %v3127
    %v3132 = vand.u32 2147483647, %v3091
    %vm3133 = vcmp.eq.f32.partialorder %v3132, 8.507059e+37
    %v3134 = vand.u32 %v3091, 2147483648
    %v3135 = vor.u32 1.1754944e-38, %v3134
    %v3136 = vsel %vm3133, %v3135, %v3131
    %v3137 = vmul.f32 1.0, %v3136
    %v3138 = vrcp.pop %v3092
    %v3139 = vmul.f32 %v3092, %v3138
    %v3140 = vsub.f32 1.0, %v3139
    %v3141 = vmul.f32 %v3138, %v3140
    %v3142 = vadd.f32 %v3138, %v3141
    %vm3143 = vweird.f32 %v3092
    %vm3144 = vweird.f32 %v3138
    %vm3145 = vmor %vm3143, %vm3144
    %v3146 = vsel %vm3145, %v3138, %v3142
    %v3147 = vand.u32 2147483647, %v3092
    %vm3148 = vcmp.eq.f32.partialorder %v3147, 8.507059e+37
    %v3149 = vand.u32 %v3092, 2147483648
    %v3150 = vor.u32 1.1754944e-38, %v3149
    %v3151 = vsel %vm3148, %v3150, %v3146
    %v3152 = vmul.f32 1.0, %v3151
    %v3153 = vmul.f32 %v3137, 2.0
    %v3154 = vsub.f32 %v3153, 1.0
    %v3156 = vrot.slane %v2973, 6
    %v3158 = vmul.f32 %v3122, %v3156
    %v3159 = vmul.f32 %v3107, %v3154
    %v3160 = vadd.f32 %v3158, %v3159
    %v3161 = vtanh.pop %v3160
    %v3162 = vmul.f32 %v3152, %v3161
    %3163 = vst [vmem:[#allocation2 + $0x8] sm:$0xc] %v3162
    %v3164 = vld [vmem:[#allocation3 + $0x20] sm:$0x30]
    %v3165 = vld [vmem:[#allocation3 + $0x28] sm:$0x30]
    %v3166 = vld [vmem:[#allocation3 + $0x30] sm:$0x30]
    %v3167 = vld [vmem:[#allocation3 + $0x38] sm:$0x30]
    %v3169 = vrot.slane %v3162, 2
    %3171 = vmatpush.msra.mxu0 %v2056
    %3172 = vmatpush.msra.mxu0 %v2052
    %3173 = vmatpush.msra.mxu0 %v2048
    %3174 = vmatpush.msra.mxu0 %v2044
    %3175 = vmatpush.msra.mxu0 %v2040
    %3176 = vmatpush.msra.mxu0 %v2036
    %3177 = vmatpush.msra.mxu0 %v2032
    %3178 = vmatpush.msra.mxu0 %v2028
    %3179 = vmatpush.msra.mxu0 %v2024
    %3180 = vmatpush.msra.mxu0 %v2020
    %3181 = vmatpush.msra.mxu0 %v2016
    %3182 = vmatpush.msra.mxu0 %v2012
    %3183 = vmatpush.msra.mxu0 %v2008
    %3184 = vmatpush.msra.mxu0 %v2004
    %3185 = vmatpush.msra.mxu0 %v2000
    %3186 = vmatpush.msra.mxu0 %v1996
    %3187 = vmatmul.f32.gmra.mxu0 %v3169
    %v3188 = vpop.f32.mrf.mxu0
    %v3189 = vadd.f32 0.0, %v3188
    %3190 = vdwg.mxu0
    %3191 = vmatpush.msra.mxu0 %v2057
    %3192 = vmatpush.msra.mxu0 %v2053
    %3193 = vmatpush.msra.mxu0 %v2049
    %3194 = vmatpush.msra.mxu0 %v2045
    %3195 = vmatpush.msra.mxu0 %v2041
    %3196 = vmatpush.msra.mxu0 %v2037
    %3197 = vmatpush.msra.mxu0 %v2033
    %3198 = vmatpush.msra.mxu0 %v2029
    %3199 = vmatpush.msra.mxu0 %v2025
    %3200 = vmatpush.msra.mxu0 %v2021
    %3201 = vmatpush.msra.mxu0 %v2017
    %3202 = vmatpush.msra.mxu0 %v2013
    %3203 = vmatpush.msra.mxu0 %v2009
    %3204 = vmatpush.msra.mxu0 %v2005
    %3205 = vmatpush.msra.mxu0 %v2001
    %3206 = vmatpush.msra.mxu0 %v1997
    %3207 = vmatmul.f32.gmra.mxu0 %v3169
    %v3208 = vpop.f32.mrf.mxu0
    %v3209 = vadd.f32 0.0, %v3208
    %3210 = vdwg.mxu0
    %3211 = vmatpush.msra.mxu0 %v2058
    %3212 = vmatpush.msra.mxu0 %v2054
    %3213 = vmatpush.msra.mxu0 %v2050
    %3214 = vmatpush.msra.mxu0 %v2046
    %3215 = vmatpush.msra.mxu0 %v2042
    %3216 = vmatpush.msra.mxu0 %v2038
    %3217 = vmatpush.msra.mxu0 %v2034
    %3218 = vmatpush.msra.mxu0 %v2030
    %3219 = vmatpush.msra.mxu0 %v2026
    %3220 = vmatpush.msra.mxu0 %v2022
    %3221 = vmatpush.msra.mxu0 %v2018
    %3222 = vmatpush.msra.mxu0 %v2014
    %3223 = vmatpush.msra.mxu0 %v2010
    %3224 = vmatpush.msra.mxu0 %v2006
    %3225 = vmatpush.msra.mxu0 %v2002
    %3226 = vmatpush.msra.mxu0 %v1998
    %3227 = vmatmul.f32.gmra.mxu0 %v3169
    %v3228 = vpop.f32.mrf.mxu0
    %v3229 = vadd.f32 0.0, %v3228
    %3230 = vdwg.mxu0
    %3231 = vmatpush.msra.mxu0 %v2059
    %3232 = vmatpush.msra.mxu0 %v2055
    %3233 = vmatpush.msra.mxu0 %v2051
    %3234 = vmatpush.msra.mxu0 %v2047
    %3235 = vmatpush.msra.mxu0 %v2043
    %3236 = vmatpush.msra.mxu0 %v2039
    %3237 = vmatpush.msra.mxu0 %v2035
    %3238 = vmatpush.msra.mxu0 %v2031
    %3239 = vmatpush.msra.mxu0 %v2027
    %3240 = vmatpush.msra.mxu0 %v2023
    %3241 = vmatpush.msra.mxu0 %v2019
    %3242 = vmatpush.msra.mxu0 %v2015
    %3243 = vmatpush.msra.mxu0 %v2011
    %3244 = vmatpush.msra.mxu0 %v2007
    %3245 = vmatpush.msra.mxu0 %v2003
    %3246 = vmatpush.msra.mxu0 %v1999
    %3247 = vmatmul.f32.gmra.mxu0 %v3169
    %v3248 = vpop.f32.mrf.mxu0
    %v3249 = vadd.f32 0.0, %v3248
    %3250 = vdwg.mxu0
    %v3255 = vrot.slane %v3189, 4
    %v3256 = vrot.slane %v3209, 4
    %v3257 = vrot.slane %v3229, 4
    %v3258 = vrot.slane %v3249, 4
    %v3263 = vadd.f32 %v3164, %v3255
    %v3264 = vadd.f32 %v3165, %v3256
    %v3265 = vadd.f32 %v3166, %v3257
    %v3266 = vadd.f32 %v3167, %v3258
    %v3267 = vxor.u32 %v3263, 2147483648
    %v3268 = vxor.u32 %v3264, 2147483648
    %v3269 = vxor.u32 %v3265, 2147483648
    %v3270 = vxor.u32 %v3266, 2147483648
    %v3271 = vmul.f32 %v3267, 1.442695
    %v3272 = vpow.pop %v3271
    %v3273 = vmul.f32 %v3268, 1.442695
    %v3274 = vpow.pop %v3273
    %v3275 = vmul.f32 %v3269, 1.442695
    %v3276 = vpow.pop %v3275
    %v3277 = vmul.f32 %v3270, 1.442695
    %v3278 = vpow.pop %v3277
    %v3279 = vadd.f32 %v3272, 1.0
    %v3280 = vadd.f32 %v3274, 1.0
    %v3281 = vadd.f32 %v3276, 1.0
    %v3282 = vadd.f32 %v3278, 1.0
    %v3283 = vrcp.pop %v3279
    %v3284 = vmul.f32 %v3279, %v3283
    %v3285 = vsub.f32 1.0, %v3284
    %v3286 = vmul.f32 %v3283, %v3285
    %v3287 = vadd.f32 %v3283, %v3286
    %vm3288 = vweird.f32 %v3279
    %vm3289 = vweird.f32 %v3283
    %vm3290 = vmor %vm3288, %vm3289
    %v3291 = vsel %vm3290, %v3283, %v3287
    %v3292 = vand.u32 2147483647, %v3279
    %vm3293 = vcmp.eq.f32.partialorder %v3292, 8.507059e+37
    %v3294 = vand.u32 %v3279, 2147483648
    %v3295 = vor.u32 1.1754944e-38, %v3294
    %v3296 = vsel %vm3293, %v3295, %v3291
    %v3297 = vmul.f32 1.0, %v3296
    %v3298 = vrcp.pop %v3280
    %v3299 = vmul.f32 %v3280, %v3298
    %v3300 = vsub.f32 1.0, %v3299
    %v3301 = vmul.f32 %v3298, %v3300
    %v3302 = vadd.f32 %v3298, %v3301
    %vm3303 = vweird.f32 %v3280
    %vm3304 = vweird.f32 %v3298
    %vm3305 = vmor %vm3303, %vm3304
    %v3306 = vsel %vm3305, %v3298, %v3302
    %v3307 = vand.u32 2147483647, %v3280
    %vm3308 = vcmp.eq.f32.partialorder %v3307, 8.507059e+37
    %v3309 = vand.u32 %v3280, 2147483648
    %v3310 = vor.u32 1.1754944e-38, %v3309
    %v3311 = vsel %vm3308, %v3310, %v3306
    %v3312 = vmul.f32 1.0, %v3311
    %v3313 = vrcp.pop %v3281
    %v3314 = vmul.f32 %v3281, %v3313
    %v3315 = vsub.f32 1.0, %v3314
    %v3316 = vmul.f32 %v3313, %v3315
    %v3317 = vadd.f32 %v3313, %v3316
    %vm3318 = vweird.f32 %v3281
    %vm3319 = vweird.f32 %v3313
    %vm3320 = vmor %vm3318, %vm3319
    %v3321 = vsel %vm3320, %v3313, %v3317
    %v3322 = vand.u32 2147483647, %v3281
    %vm3323 = vcmp.eq.f32.partialorder %v3322, 8.507059e+37
    %v3324 = vand.u32 %v3281, 2147483648
    %v3325 = vor.u32 1.1754944e-38, %v3324
    %v3326 = vsel %vm3323, %v3325, %v3321
    %v3327 = vmul.f32 1.0, %v3326
    %v3328 = vrcp.pop %v3282
    %v3329 = vmul.f32 %v3282, %v3328
    %v3330 = vsub.f32 1.0, %v3329
    %v3331 = vmul.f32 %v3328, %v3330
    %v3332 = vadd.f32 %v3328, %v3331
    %vm3333 = vweird.f32 %v3282
    %vm3334 = vweird.f32 %v3328
    %vm3335 = vmor %vm3333, %vm3334
    %v3336 = vsel %vm3335, %v3328, %v3332
    %v3337 = vand.u32 2147483647, %v3282
    %vm3338 = vcmp.eq.f32.partialorder %v3337, 8.507059e+37
    %v3339 = vand.u32 %v3282, 2147483648
    %v3340 = vor.u32 1.1754944e-38, %v3339
    %v3341 = vsel %vm3338, %v3340, %v3336
    %v3342 = vmul.f32 1.0, %v3341
    %v3343 = vmul.f32 %v3327, 2.0
    %v3344 = vsub.f32 %v3343, 1.0
    %v3346 = vrot.slane %v3160, 6
    %v3348 = vmul.f32 %v3312, %v3346
    %v3349 = vmul.f32 %v3297, %v3344
    %v3350 = vadd.f32 %v3348, %v3349
    %v3351 = vtanh.pop %v3350
    %v3352 = vmul.f32 %v3342, %v3351
    %3353 = vst [vmem:[#allocation2 + $0x8] sm:$0x30] %v3352
    %v3354 = vld [vmem:[#allocation3 + $0x20] sm:$0xc0]
    %v3355 = vld [vmem:[#allocation3 + $0x28] sm:$0xc0]
    %v3356 = vld [vmem:[#allocation3 + $0x30] sm:$0xc0]
    %v3357 = vld [vmem:[#allocation3 + $0x38] sm:$0xc0]
    %v3359 = vrot.slane %v3352, 4
    %3361 = vmatpush.msra.mxu0 %v2056
    %3362 = vmatpush.msra.mxu0 %v2052
    %3363 = vmatpush.msra.mxu0 %v2048
    %3364 = vmatpush.msra.mxu0 %v2044
    %3365 = vmatpush.msra.mxu0 %v2040
    %3366 = vmatpush.msra.mxu0 %v2036
    %3367 = vmatpush.msra.mxu0 %v2032
    %3368 = vmatpush.msra.mxu0 %v2028
    %3369 = vmatpush.msra.mxu0 %v2024
    %3370 = vmatpush.msra.mxu0 %v2020
    %3371 = vmatpush.msra.mxu0 %v2016
    %3372 = vmatpush.msra.mxu0 %v2012
    %3373 = vmatpush.msra.mxu0 %v2008
    %3374 = vmatpush.msra.mxu0 %v2004
    %3375 = vmatpush.msra.mxu0 %v2000
    %3376 = vmatpush.msra.mxu0 %v1996
    %3377 = vmatmul.f32.gmra.mxu0 %v3359
    %v3378 = vpop.f32.mrf.mxu0
    %v3379 = vadd.f32 0.0, %v3378
    %3380 = vdwg.mxu0
    %3381 = vmatpush.msra.mxu0 %v2057
    %3382 = vmatpush.msra.mxu0 %v2053
    %3383 = vmatpush.msra.mxu0 %v2049
    %3384 = vmatpush.msra.mxu0 %v2045
    %3385 = vmatpush.msra.mxu0 %v2041
    %3386 = vmatpush.msra.mxu0 %v2037
    %3387 = vmatpush.msra.mxu0 %v2033
    %3388 = vmatpush.msra.mxu0 %v2029
    %3389 = vmatpush.msra.mxu0 %v2025
    %3390 = vmatpush.msra.mxu0 %v2021
    %3391 = vmatpush.msra.mxu0 %v2017
    %3392 = vmatpush.msra.mxu0 %v2013
    %3393 = vmatpush.msra.mxu0 %v2009
    %3394 = vmatpush.msra.mxu0 %v2005
    %3395 = vmatpush.msra.mxu0 %v2001
    %3396 = vmatpush.msra.mxu0 %v1997
    %3397 = vmatmul.f32.gmra.mxu0 %v3359
    %v3398 = vpop.f32.mrf.mxu0
    %v3399 = vadd.f32 0.0, %v3398
    %3400 = vdwg.mxu0
    %3401 = vmatpush.msra.mxu0 %v2058
    %3402 = vmatpush.msra.mxu0 %v2054
    %3403 = vmatpush.msra.mxu0 %v2050
    %3404 = vmatpush.msra.mxu0 %v2046
    %3405 = vmatpush.msra.mxu0 %v2042
    %3406 = vmatpush.msra.mxu0 %v2038
    %3407 = vmatpush.msra.mxu0 %v2034
    %3408 = vmatpush.msra.mxu0 %v2030
    %3409 = vmatpush.msra.mxu0 %v2026
    %3410 = vmatpush.msra.mxu0 %v2022
    %3411 = vmatpush.msra.mxu0 %v2018
    %3412 = vmatpush.msra.mxu0 %v2014
    %3413 = vmatpush.msra.mxu0 %v2010
    %3414 = vmatpush.msra.mxu0 %v2006
    %3415 = vmatpush.msra.mxu0 %v2002
    %3416 = vmatpush.msra.mxu0 %v1998
    %3417 = vmatmul.f32.gmra.mxu0 %v3359
    %v3418 = vpop.f32.mrf.mxu0
    %v3419 = vadd.f32 0.0, %v3418
    %3420 = vdwg.mxu0
    %3421 = vmatpush.msra.mxu0 %v2059
    %3422 = vmatpush.msra.mxu0 %v2055
    %3423 = vmatpush.msra.mxu0 %v2051
    %3424 = vmatpush.msra.mxu0 %v2047
    %3425 = vmatpush.msra.mxu0 %v2043
    %3426 = vmatpush.msra.mxu0 %v2039
    %3427 = vmatpush.msra.mxu0 %v2035
    %3428 = vmatpush.msra.mxu0 %v2031
    %3429 = vmatpush.msra.mxu0 %v2027
    %3430 = vmatpush.msra.mxu0 %v2023
    %3431 = vmatpush.msra.mxu0 %v2019
    %3432 = vmatpush.msra.mxu0 %v2015
    %3433 = vmatpush.msra.mxu0 %v2011
    %3434 = vmatpush.msra.mxu0 %v2007
    %3435 = vmatpush.msra.mxu0 %v2003
    %3436 = vmatpush.msra.mxu0 %v1999
    %3437 = vmatmul.f32.gmra.mxu0 %v3359
    %v3438 = vpop.f32.mrf.mxu0
    %v3439 = vadd.f32 0.0, %v3438
    %3440 = vdwg.mxu0
    %v3445 = vrot.slane %v3379, 2
    %v3446 = vrot.slane %v3399, 2
    %v3447 = vrot.slane %v3419, 2
    %v3448 = vrot.slane %v3439, 2
    %v3453 = vadd.f32 %v3354, %v3445
    %v3454 = vadd.f32 %v3355, %v3446
    %v3455 = vadd.f32 %v3356, %v3447
    %v3456 = vadd.f32 %v3357, %v3448
    %v3457 = vxor.u32 %v3453, 2147483648
    %v3458 = vxor.u32 %v3454, 2147483648
    %v3459 = vxor.u32 %v3455, 2147483648
    %v3460 = vxor.u32 %v3456, 2147483648
    %v3461 = vmul.f32 %v3457, 1.442695
    %v3462 = vpow.pop %v3461
    %v3463 = vmul.f32 %v3458, 1.442695
    %v3464 = vpow.pop %v3463
    %v3465 = vmul.f32 %v3459, 1.442695
    %v3466 = vpow.pop %v3465
    %v3467 = vmul.f32 %v3460, 1.442695
    %v3468 = vpow.pop %v3467
    %v3469 = vadd.f32 %v3462, 1.0
    %v3470 = vadd.f32 %v3464, 1.0
    %v3471 = vadd.f32 %v3466, 1.0
    %v3472 = vadd.f32 %v3468, 1.0
    %v3473 = vrcp.pop %v3469
    %v3474 = vmul.f32 %v3469, %v3473
    %v3475 = vsub.f32 1.0, %v3474
    %v3476 = vmul.f32 %v3473, %v3475
    %v3477 = vadd.f32 %v3473, %v3476
    %vm3478 = vweird.f32 %v3469
    %vm3479 = vweird.f32 %v3473
    %vm3480 = vmor %vm3478, %vm3479
    %v3481 = vsel %vm3480, %v3473, %v3477
    %v3482 = vand.u32 2147483647, %v3469
    %vm3483 = vcmp.eq.f32.partialorder %v3482, 8.507059e+37
    %v3484 = vand.u32 %v3469, 2147483648
    %v3485 = vor.u32 1.1754944e-38, %v3484
    %v3486 = vsel %vm3483, %v3485, %v3481
    %v3487 = vmul.f32 1.0, %v3486
    %v3488 = vrcp.pop %v3470
    %v3489 = vmul.f32 %v3470, %v3488
    %v3490 = vsub.f32 1.0, %v3489
    %v3491 = vmul.f32 %v3488, %v3490
    %v3492 = vadd.f32 %v3488, %v3491
    %vm3493 = vweird.f32 %v3470
    %vm3494 = vweird.f32 %v3488
    %vm3495 = vmor %vm3493, %vm3494
    %v3496 = vsel %vm3495, %v3488, %v3492
    %v3497 = vand.u32 2147483647, %v3470
    %vm3498 = vcmp.eq.f32.partialorder %v3497, 8.507059e+37
    %v3499 = vand.u32 %v3470, 2147483648
    %v3500 = vor.u32 1.1754944e-38, %v3499
    %v3501 = vsel %vm3498, %v3500, %v3496
    %v3502 = vmul.f32 1.0, %v3501
    %v3503 = vrcp.pop %v3471
    %v3504 = vmul.f32 %v3471, %v3503
    %v3505 = vsub.f32 1.0, %v3504
    %v3506 = vmul.f32 %v3503, %v3505
    %v3507 = vadd.f32 %v3503, %v3506
    %vm3508 = vweird.f32 %v3471
    %vm3509 = vweird.f32 %v3503
    %vm3510 = vmor %vm3508, %vm3509
    %v3511 = vsel %vm3510, %v3503, %v3507
    %v3512 = vand.u32 2147483647, %v3471
    %vm3513 = vcmp.eq.f32.partialorder %v3512, 8.507059e+37
    %v3514 = vand.u32 %v3471, 2147483648
    %v3515 = vor.u32 1.1754944e-38, %v3514
    %v3516 = vsel %vm3513, %v3515, %v3511
    %v3517 = vmul.f32 1.0, %v3516
    %v3518 = vrcp.pop %v3472
    %v3519 = vmul.f32 %v3472, %v3518
    %v3520 = vsub.f32 1.0, %v3519
    %v3521 = vmul.f32 %v3518, %v3520
    %v3522 = vadd.f32 %v3518, %v3521
    %vm3523 = vweird.f32 %v3472
    %vm3524 = vweird.f32 %v3518
    %vm3525 = vmor %vm3523, %vm3524
    %v3526 = vsel %vm3525, %v3518, %v3522
    %v3527 = vand.u32 2147483647, %v3472
    %vm3528 = vcmp.eq.f32.partialorder %v3527, 8.507059e+37
    %v3529 = vand.u32 %v3472, 2147483648
    %v3530 = vor.u32 1.1754944e-38, %v3529
    %v3531 = vsel %vm3528, %v3530, %v3526
    %v3532 = vmul.f32 1.0, %v3531
    %v3533 = vmul.f32 %v3517, 2.0
    %v3534 = vsub.f32 %v3533, 1.0
    %v3536 = vrot.slane %v3350, 6
    %v3538 = vmul.f32 %v3502, %v3536
    %v3539 = vmul.f32 %v3487, %v3534
    %v3540 = vadd.f32 %v3538, %v3539
    %v3541 = vtanh.pop %v3540
    %v3542 = vmul.f32 %v3532, %v3541
    %3543 = vst [vmem:[#allocation2 + $0x8] sm:$0xc0] %v3542
    %v3544 = vld [vmem:[#allocation2] sm:$0xff]
    %v3545 = vld [vmem:[#allocation2 + $0x8] sm:$0xff]
    %v3546 = vld [vmem:[#allocation10] sm:$0xff]
    %v3547 = vld [vmem:[#allocation10 + $0x8] sm:$0xff]
    %v3548 = vld [vmem:[#allocation10 + $0x10] sm:$0xff]
    %v3549 = vld [vmem:[#allocation10 + $0x18] sm:$0xff]
    %v3550 = vld [vmem:[#allocation10 + $0x20] sm:$0xff]
    %v3551 = vld [vmem:[#allocation10 + $0x28] sm:$0xff]
    %v3552 = vld [vmem:[#allocation10 + $0x30] sm:$0xff]
    %v3553 = vld [vmem:[#allocation10 + $0x38] sm:$0xff]
    %v3554 = vld [vmem:[#allocation10 + $0x40] sm:$0xff]
    %v3555 = vld [vmem:[#allocation10 + $0x48] sm:$0xff]
    %v3556 = vld [vmem:[#allocation10 + $0x50] sm:$0xff]
    %v3557 = vld [vmem:[#allocation10 + $0x58] sm:$0xff]
    %v3558 = vld [vmem:[#allocation10 + $0x60] sm:$0xff]
    %v3559 = vld [vmem:[#allocation10 + $0x68] sm:$0xff]
    %v3560 = vld [vmem:[#allocation10 + $0x70] sm:$0xff]
    %v3561 = vld [vmem:[#allocation10 + $0x78] sm:$0xff]
    %v3562 = vld [vmem:[#allocation10 + $0x80] sm:$0xff]
    %v3563 = vld [vmem:[#allocation10 + $0x88] sm:$0xff]
    %v3564 = vld [vmem:[#allocation10 + $0x90] sm:$0xff]
    %v3565 = vld [vmem:[#allocation10 + $0x98] sm:$0xff]
    %v3566 = vld [vmem:[#allocation10 + $0xa0] sm:$0xff]
    %v3567 = vld [vmem:[#allocation10 + $0xa8] sm:$0xff]
    %v3568 = vld [vmem:[#allocation10 + $0xb0] sm:$0xff]
    %v3569 = vld [vmem:[#allocation10 + $0xb8] sm:$0xff]
    %v3570 = vld [vmem:[#allocation10 + $0xc0] sm:$0xff]
    %v3571 = vld [vmem:[#allocation10 + $0xc8] sm:$0xff]
    %v3572 = vld [vmem:[#allocation10 + $0xd0] sm:$0xff]
    %v3573 = vld [vmem:[#allocation10 + $0xd8] sm:$0xff]
    %v3574 = vld [vmem:[#allocation10 + $0xe0] sm:$0xff]
    %v3575 = vld [vmem:[#allocation10 + $0xe8] sm:$0xff]
    %v3576 = vld [vmem:[#allocation10 + $0xf0] sm:$0xff]
    %v3577 = vld [vmem:[#allocation10 + $0xf8] sm:$0xff]
    %v3578 = vld [vmem:[#allocation10 + $0x100] sm:$0xff]
    %v3579 = vld [vmem:[#allocation10 + $0x108] sm:$0xff]
    %v3580 = vld [vmem:[#allocation10 + $0x110] sm:$0xff]
    %v3581 = vld [vmem:[#allocation10 + $0x118] sm:$0xff]
    %v3582 = vld [vmem:[#allocation10 + $0x120] sm:$0xff]
    %v3583 = vld [vmem:[#allocation10 + $0x128] sm:$0xff]
    %v3584 = vld [vmem:[#allocation10 + $0x130] sm:$0xff]
    %v3585 = vld [vmem:[#allocation10 + $0x138] sm:$0xff]
    %v3586 = vld [vmem:[#allocation10 + $0x140] sm:$0xff]
    %v3587 = vld [vmem:[#allocation10 + $0x148] sm:$0xff]
    %v3588 = vld [vmem:[#allocation10 + $0x150] sm:$0xff]
    %v3589 = vld [vmem:[#allocation10 + $0x158] sm:$0xff]
    %v3590 = vld [vmem:[#allocation10 + $0x160] sm:$0xff]
    %v3591 = vld [vmem:[#allocation10 + $0x168] sm:$0xff]
    %v3592 = vld [vmem:[#allocation10 + $0x170] sm:$0xff]
    %v3593 = vld [vmem:[#allocation10 + $0x178] sm:$0xff]
    %v3594 = vld [vmem:[#allocation10 + $0x180] sm:$0xff]
    %v3595 = vld [vmem:[#allocation10 + $0x188] sm:$0xff]
    %v3596 = vld [vmem:[#allocation10 + $0x190] sm:$0xff]
    %v3597 = vld [vmem:[#allocation10 + $0x198] sm:$0xff]
    %v3598 = vld [vmem:[#allocation10 + $0x1a0] sm:$0xff]
    %v3599 = vld [vmem:[#allocation10 + $0x1a8] sm:$0xff]
    %v3600 = vld [vmem:[#allocation10 + $0x1b0] sm:$0xff]
    %v3601 = vld [vmem:[#allocation10 + $0x1b8] sm:$0xff]
    %v3602 = vld [vmem:[#allocation10 + $0x1c0] sm:$0xff]
    %v3603 = vld [vmem:[#allocation10 + $0x1c8] sm:$0xff]
    %v3604 = vld [vmem:[#allocation10 + $0x1d0] sm:$0xff]
    %v3605 = vld [vmem:[#allocation10 + $0x1d8] sm:$0xff]
    %v3606 = vld [vmem:[#allocation10 + $0x1e0] sm:$0xff]
    %v3607 = vld [vmem:[#allocation10 + $0x1e8] sm:$0xff]
    %v3608 = vld [vmem:[#allocation10 + $0x1f0] sm:$0xff]
    %v3609 = vld [vmem:[#allocation10 + $0x1f8] sm:$0xff]
    %v3610 = vld [vmem:[%s9] sm:$0xf]
    %v3612 = vperm.slane %v3610, 0
    %v3613 = vperm.slane %v3610, 1
    %v3614 = vperm.slane %v3610, 2
    %v3615 = vperm.slane %v3610, 3
    %3620 = vmatpush.msra.mxu0 %v3606
    %3621 = vmatpush.msra.mxu0 %v3602
    %3622 = vmatpush.msra.mxu0 %v3598
    %3623 = vmatpush.msra.mxu0 %v3594
    %3624 = vmatpush.msra.mxu0 %v3590
    %3625 = vmatpush.msra.mxu0 %v3586
    %3626 = vmatpush.msra.mxu0 %v3582
    %3627 = vmatpush.msra.mxu0 %v3578
    %3628 = vmatpush.msra.mxu0 %v3574
    %3629 = vmatpush.msra.mxu0 %v3570
    %3630 = vmatpush.msra.mxu0 %v3566
    %3631 = vmatpush.msra.mxu0 %v3562
    %3632 = vmatpush.msra.mxu0 %v3558
    %3633 = vmatpush.msra.mxu0 %v3554
    %3634 = vmatpush.msra.mxu0 %v3550
    %3635 = vmatpush.msra.mxu0 %v3546
    %3636 = vmatmul.f32.gmra.mxu0 %v3544
    %v3637 = vpop.f32.mrf.mxu0
    %v3638 = vadd.f32 %v3612, %v3637
    %3639 = vmatmul.f32.gmra.mxu0 %v3545
    %v3640 = vpop.f32.mrf.mxu0
    %v3641 = vadd.f32 %v3612, %v3640
    %3642 = vdwg.mxu0
    %3643 = vmatpush.msra.mxu0 %v3607
    %3644 = vmatpush.msra.mxu0 %v3603
    %3645 = vmatpush.msra.mxu0 %v3599
    %3646 = vmatpush.msra.mxu0 %v3595
    %3647 = vmatpush.msra.mxu0 %v3591
    %3648 = vmatpush.msra.mxu0 %v3587
    %3649 = vmatpush.msra.mxu0 %v3583
    %3650 = vmatpush.msra.mxu0 %v3579
    %3651 = vmatpush.msra.mxu0 %v3575
    %3652 = vmatpush.msra.mxu0 %v3571
    %3653 = vmatpush.msra.mxu0 %v3567
    %3654 = vmatpush.msra.mxu0 %v3563
    %3655 = vmatpush.msra.mxu0 %v3559
    %3656 = vmatpush.msra.mxu0 %v3555
    %3657 = vmatpush.msra.mxu0 %v3551
    %3658 = vmatpush.msra.mxu0 %v3547
    %3659 = vmatmul.f32.gmra.mxu0 %v3544
    %v3660 = vpop.f32.mrf.mxu0
    %v3661 = vadd.f32 %v3613, %v3660
    %3662 = vmatmul.f32.gmra.mxu0 %v3545
    %v3663 = vpop.f32.mrf.mxu0
    %v3664 = vadd.f32 %v3613, %v3663
    %3665 = vdwg.mxu0
    %3666 = vmatpush.msra.mxu0 %v3608
    %3667 = vmatpush.msra.mxu0 %v3604
    %3668 = vmatpush.msra.mxu0 %v3600
    %3669 = vmatpush.msra.mxu0 %v3596
    %3670 = vmatpush.msra.mxu0 %v3592
    %3671 = vmatpush.msra.mxu0 %v3588
    %3672 = vmatpush.msra.mxu0 %v3584
    %3673 = vmatpush.msra.mxu0 %v3580
    %3674 = vmatpush.msra.mxu0 %v3576
    %3675 = vmatpush.msra.mxu0 %v3572
    %3676 = vmatpush.msra.mxu0 %v3568
    %3677 = vmatpush.msra.mxu0 %v3564
    %3678 = vmatpush.msra.mxu0 %v3560
    %3679 = vmatpush.msra.mxu0 %v3556
    %3680 = vmatpush.msra.mxu0 %v3552
    %3681 = vmatpush.msra.mxu0 %v3548
    %3682 = vmatmul.f32.gmra.mxu0 %v3544
    %v3683 = vpop.f32.mrf.mxu0
    %v3684 = vadd.f32 %v3614, %v3683
    %3685 = vmatmul.f32.gmra.mxu0 %v3545
    %v3686 = vpop.f32.mrf.mxu0
    %v3687 = vadd.f32 %v3614, %v3686
    %3688 = vdwg.mxu0
    %3689 = vmatpush.msra.mxu0 %v3609
    %3690 = vmatpush.msra.mxu0 %v3605
    %3691 = vmatpush.msra.mxu0 %v3601
    %3692 = vmatpush.msra.mxu0 %v3597
    %3693 = vmatpush.msra.mxu0 %v3593
    %3694 = vmatpush.msra.mxu0 %v3589
    %3695 = vmatpush.msra.mxu0 %v3585
    %3696 = vmatpush.msra.mxu0 %v3581
    %3697 = vmatpush.msra.mxu0 %v3577
    %3698 = vmatpush.msra.mxu0 %v3573
    %3699 = vmatpush.msra.mxu0 %v3569
    %3700 = vmatpush.msra.mxu0 %v3565
    %3701 = vmatpush.msra.mxu0 %v3561
    %3702 = vmatpush.msra.mxu0 %v3557
    %3703 = vmatpush.msra.mxu0 %v3553
    %3704 = vmatpush.msra.mxu0 %v3549
    %3705 = vmatmul.f32.gmra.mxu0 %v3544
    %v3706 = vpop.f32.mrf.mxu0
    %v3707 = vadd.f32 %v3615, %v3706
    %3708 = vmatmul.f32.gmra.mxu0 %v3545
    %v3709 = vpop.f32.mrf.mxu0
    %v3710 = vadd.f32 %v3615, %v3709
    %3711 = vdwg.mxu0
    %3712 = vst [vmem:[#allocation3] sm:$0xff] %v3638
    %3713 = vst [vmem:[#allocation3 + $0x8] sm:$0xff] %v3661
    %3714 = vst [vmem:[#allocation3 + $0x10] sm:$0xff] %v3684
    %3715 = vst [vmem:[#allocation3 + $0x18] sm:$0xff] %v3707
    %3716 = vst [vmem:[#allocation3 + $0x20] sm:$0xff] %v3641
    %3717 = vst [vmem:[#allocation3 + $0x28] sm:$0xff] %v3664
    %3718 = vst [vmem:[#allocation3 + $0x30] sm:$0xff] %v3687
    %3719 = vst [vmem:[#allocation3 + $0x38] sm:$0xff] %v3710
    %v3720 = vld [vmem:[#allocation12] sm:$0xff]
    %v3721 = vld [vmem:[#allocation12 + $0x8] sm:$0xff]
    %v3722 = vld [vmem:[#allocation12 + $0x10] sm:$0xff]
    %v3723 = vld [vmem:[#allocation12 + $0x18] sm:$0xff]
    %v3724 = vld [vmem:[#allocation12 + $0x20] sm:$0xff]
    %v3725 = vld [vmem:[#allocation12 + $0x28] sm:$0xff]
    %v3726 = vld [vmem:[#allocation12 + $0x30] sm:$0xff]
    %v3727 = vld [vmem:[#allocation12 + $0x38] sm:$0xff]
    %v3728 = vld [vmem:[#allocation12 + $0x40] sm:$0xff]
    %v3729 = vld [vmem:[#allocation12 + $0x48] sm:$0xff]
    %v3730 = vld [vmem:[#allocation12 + $0x50] sm:$0xff]
    %v3731 = vld [vmem:[#allocation12 + $0x58] sm:$0xff]
    %v3732 = vld [vmem:[#allocation12 + $0x60] sm:$0xff]
    %v3733 = vld [vmem:[#allocation12 + $0x68] sm:$0xff]
    %v3734 = vld [vmem:[#allocation12 + $0x70] sm:$0xff]
    %v3735 = vld [vmem:[#allocation12 + $0x78] sm:$0xff]
    %v3736 = vld [vmem:[#allocation12 + $0x80] sm:$0xff]
    %v3737 = vld [vmem:[#allocation12 + $0x88] sm:$0xff]
    %v3738 = vld [vmem:[#allocation12 + $0x90] sm:$0xff]
    %v3739 = vld [vmem:[#allocation12 + $0x98] sm:$0xff]
    %v3740 = vld [vmem:[#allocation12 + $0xa0] sm:$0xff]
    %v3741 = vld [vmem:[#allocation12 + $0xa8] sm:$0xff]
    %v3742 = vld [vmem:[#allocation12 + $0xb0] sm:$0xff]
    %v3743 = vld [vmem:[#allocation12 + $0xb8] sm:$0xff]
    %v3744 = vld [vmem:[#allocation12 + $0xc0] sm:$0xff]
    %v3745 = vld [vmem:[#allocation12 + $0xc8] sm:$0xff]
    %v3746 = vld [vmem:[#allocation12 + $0xd0] sm:$0xff]
    %v3747 = vld [vmem:[#allocation12 + $0xd8] sm:$0xff]
    %v3748 = vld [vmem:[#allocation12 + $0xe0] sm:$0xff]
    %v3749 = vld [vmem:[#allocation12 + $0xe8] sm:$0xff]
    %v3750 = vld [vmem:[#allocation12 + $0xf0] sm:$0xff]
    %v3751 = vld [vmem:[#allocation12 + $0xf8] sm:$0xff]
    %v3752 = vld [vmem:[#allocation12 + $0x100] sm:$0xff]
    %v3753 = vld [vmem:[#allocation12 + $0x108] sm:$0xff]
    %v3754 = vld [vmem:[#allocation12 + $0x110] sm:$0xff]
    %v3755 = vld [vmem:[#allocation12 + $0x118] sm:$0xff]
    %v3756 = vld [vmem:[#allocation12 + $0x120] sm:$0xff]
    %v3757 = vld [vmem:[#allocation12 + $0x128] sm:$0xff]
    %v3758 = vld [vmem:[#allocation12 + $0x130] sm:$0xff]
    %v3759 = vld [vmem:[#allocation12 + $0x138] sm:$0xff]
    %v3760 = vld [vmem:[#allocation12 + $0x140] sm:$0xff]
    %v3761 = vld [vmem:[#allocation12 + $0x148] sm:$0xff]
    %v3762 = vld [vmem:[#allocation12 + $0x150] sm:$0xff]
    %v3763 = vld [vmem:[#allocation12 + $0x158] sm:$0xff]
    %v3764 = vld [vmem:[#allocation12 + $0x160] sm:$0xff]
    %v3765 = vld [vmem:[#allocation12 + $0x168] sm:$0xff]
    %v3766 = vld [vmem:[#allocation12 + $0x170] sm:$0xff]
    %v3767 = vld [vmem:[#allocation12 + $0x178] sm:$0xff]
    %v3768 = vld [vmem:[#allocation12 + $0x180] sm:$0xff]
    %v3769 = vld [vmem:[#allocation12 + $0x188] sm:$0xff]
    %v3770 = vld [vmem:[#allocation12 + $0x190] sm:$0xff]
    %v3771 = vld [vmem:[#allocation12 + $0x198] sm:$0xff]
    %v3772 = vld [vmem:[#allocation12 + $0x1a0] sm:$0xff]
    %v3773 = vld [vmem:[#allocation12 + $0x1a8] sm:$0xff]
    %v3774 = vld [vmem:[#allocation12 + $0x1b0] sm:$0xff]
    %v3775 = vld [vmem:[#allocation12 + $0x1b8] sm:$0xff]
    %v3776 = vld [vmem:[#allocation12 + $0x1c0] sm:$0xff]
    %v3777 = vld [vmem:[#allocation12 + $0x1c8] sm:$0xff]
    %v3778 = vld [vmem:[#allocation12 + $0x1d0] sm:$0xff]
    %v3779 = vld [vmem:[#allocation12 + $0x1d8] sm:$0xff]
    %v3780 = vld [vmem:[#allocation12 + $0x1e0] sm:$0xff]
    %v3781 = vld [vmem:[#allocation12 + $0x1e8] sm:$0xff]
    %v3782 = vld [vmem:[#allocation12 + $0x1f0] sm:$0xff]
    %v3783 = vld [vmem:[#allocation12 + $0x1f8] sm:$0xff]
    %v3784 = vld [vmem:[#allocation3] sm:$0x3]
    %v3785 = vld [vmem:[#allocation3 + $0x8] sm:$0x3]
    %v3786 = vld [vmem:[#allocation3 + $0x10] sm:$0x3]
    %v3787 = vld [vmem:[#allocation3 + $0x18] sm:$0x3]
    %3788 = vmatpush.msra.mxu0 %v3780
    %3789 = vmatpush.msra.mxu0 %v3776
    %3790 = vmatpush.msra.mxu0 %v3772
    %3791 = vmatpush.msra.mxu0 %v3768
    %3792 = vmatpush.msra.mxu0 %v3764
    %3793 = vmatpush.msra.mxu0 %v3760
    %3794 = vmatpush.msra.mxu0 %v3756
    %3795 = vmatpush.msra.mxu0 %v3752
    %3796 = vmatpush.msra.mxu0 %v3748
    %3797 = vmatpush.msra.mxu0 %v3744
    %3798 = vmatpush.msra.mxu0 %v3740
    %3799 = vmatpush.msra.mxu0 %v3736
    %3800 = vmatpush.msra.mxu0 %v3732
    %3801 = vmatpush.msra.mxu0 %v3728
    %3802 = vmatpush.msra.mxu0 %v3724
    %3803 = vmatpush.msra.mxu0 %v3720
    %3804 = vmatmul.f32.gmra.mxu0 0.0
    %v3805 = vpop.f32.mrf.mxu0
    %v3806 = vadd.f32 0.0, %v3805
    %3807 = vdwg.mxu0
    %3808 = vmatpush.msra.mxu0 %v3781
    %3809 = vmatpush.msra.mxu0 %v3777
    %3810 = vmatpush.msra.mxu0 %v3773
    %3811 = vmatpush.msra.mxu0 %v3769
    %3812 = vmatpush.msra.mxu0 %v3765
    %3813 = vmatpush.msra.mxu0 %v3761
    %3814 = vmatpush.msra.mxu0 %v3757
    %3815 = vmatpush.msra.mxu0 %v3753
    %3816 = vmatpush.msra.mxu0 %v3749
    %3817 = vmatpush.msra.mxu0 %v3745
    %3818 = vmatpush.msra.mxu0 %v3741
    %3819 = vmatpush.msra.mxu0 %v3737
    %3820 = vmatpush.msra.mxu0 %v3733
    %3821 = vmatpush.msra.mxu0 %v3729
    %3822 = vmatpush.msra.mxu0 %v3725
    %3823 = vmatpush.msra.mxu0 %v3721
    %3824 = vmatmul.f32.gmra.mxu0 0.0
    %v3825 = vpop.f32.mrf.mxu0
    %v3826 = vadd.f32 0.0, %v3825
    %3827 = vdwg.mxu0
    %3828 = vmatpush.msra.mxu0 %v3782
    %3829 = vmatpush.msra.mxu0 %v3778
    %3830 = vmatpush.msra.mxu0 %v3774
    %3831 = vmatpush.msra.mxu0 %v3770
    %3832 = vmatpush.msra.mxu0 %v3766
    %3833 = vmatpush.msra.mxu0 %v3762
    %3834 = vmatpush.msra.mxu0 %v3758
    %3835 = vmatpush.msra.mxu0 %v3754
    %3836 = vmatpush.msra.mxu0 %v3750
    %3837 = vmatpush.msra.mxu0 %v3746
    %3838 = vmatpush.msra.mxu0 %v3742
    %3839 = vmatpush.msra.mxu0 %v3738
    %3840 = vmatpush.msra.mxu0 %v3734
    %3841 = vmatpush.msra.mxu0 %v3730
    %3842 = vmatpush.msra.mxu0 %v3726
    %3843 = vmatpush.msra.mxu0 %v3722
    %3844 = vmatmul.f32.gmra.mxu0 0.0
    %v3845 = vpop.f32.mrf.mxu0
    %v3846 = vadd.f32 0.0, %v3845
    %3847 = vdwg.mxu0
    %3848 = vmatpush.msra.mxu0 %v3783
    %3849 = vmatpush.msra.mxu0 %v3779
    %3850 = vmatpush.msra.mxu0 %v3775
    %3851 = vmatpush.msra.mxu0 %v3771
    %3852 = vmatpush.msra.mxu0 %v3767
    %3853 = vmatpush.msra.mxu0 %v3763
    %3854 = vmatpush.msra.mxu0 %v3759
    %3855 = vmatpush.msra.mxu0 %v3755
    %3856 = vmatpush.msra.mxu0 %v3751
    %3857 = vmatpush.msra.mxu0 %v3747
    %3858 = vmatpush.msra.mxu0 %v3743
    %3859 = vmatpush.msra.mxu0 %v3739
    %3860 = vmatpush.msra.mxu0 %v3735
    %3861 = vmatpush.msra.mxu0 %v3731
    %3862 = vmatpush.msra.mxu0 %v3727
    %3863 = vmatpush.msra.mxu0 %v3723
    %3864 = vmatmul.f32.gmra.mxu0 0.0
    %v3865 = vpop.f32.mrf.mxu0
    %v3866 = vadd.f32 0.0, %v3865
    %3867 = vdwg.mxu0
    %v3868 = vadd.f32 %v3784, %v3806
    %v3869 = vadd.f32 %v3785, %v3826
    %v3870 = vadd.f32 %v3786, %v3846
    %v3871 = vadd.f32 %v3787, %v3866
    %v3872 = vxor.u32 %v3868, 2147483648
    %v3873 = vxor.u32 %v3869, 2147483648
    %v3874 = vxor.u32 %v3870, 2147483648
    %v3875 = vxor.u32 %v3871, 2147483648
    %v3876 = vmul.f32 %v3872, 1.442695
    %v3877 = vpow.pop %v3876
    %v3878 = vmul.f32 %v3873, 1.442695
    %v3879 = vpow.pop %v3878
    %v3880 = vmul.f32 %v3874, 1.442695
    %v3881 = vpow.pop %v3880
    %v3882 = vmul.f32 %v3875, 1.442695
    %v3883 = vpow.pop %v3882
    %v3884 = vadd.f32 %v3877, 1.0
    %v3885 = vadd.f32 %v3879, 1.0
    %v3886 = vadd.f32 %v3881, 1.0
    %v3887 = vadd.f32 %v3883, 1.0
    %v3888 = vrcp.pop %v3884
    %v3889 = vmul.f32 %v3884, %v3888
    %v3890 = vsub.f32 1.0, %v3889
    %v3891 = vmul.f32 %v3888, %v3890
    %v3892 = vadd.f32 %v3888, %v3891
    %vm3893 = vweird.f32 %v3884
    %vm3894 = vweird.f32 %v3888
    %vm3895 = vmor %vm3893, %vm3894
    %v3896 = vsel %vm3895, %v3888, %v3892
    %v3897 = vand.u32 2147483647, %v3884
    %vm3898 = vcmp.eq.f32.partialorder %v3897, 8.507059e+37
    %v3899 = vand.u32 %v3884, 2147483648
    %v3900 = vor.u32 1.1754944e-38, %v3899
    %v3901 = vsel %vm3898, %v3900, %v3896
    %v3902 = vmul.f32 1.0, %v3901
    %v3903 = vrcp.pop %v3885
    %v3904 = vmul.f32 %v3885, %v3903
    %v3905 = vsub.f32 1.0, %v3904
    %v3906 = vmul.f32 %v3903, %v3905
    %v3907 = vadd.f32 %v3903, %v3906
    %vm3908 = vweird.f32 %v3885
    %vm3909 = vweird.f32 %v3903
    %vm3910 = vmor %vm3908, %vm3909
    %v3911 = vsel %vm3910, %v3903, %v3907
    %v3912 = vand.u32 2147483647, %v3885
    %vm3913 = vcmp.eq.f32.partialorder %v3912, 8.507059e+37
    %v3914 = vand.u32 %v3885, 2147483648
    %v3915 = vor.u32 1.1754944e-38, %v3914
    %v3916 = vsel %vm3913, %v3915, %v3911
    %v3917 = vmul.f32 1.0, %v3916
    %v3918 = vrcp.pop %v3886
    %v3919 = vmul.f32 %v3886, %v3918
    %v3920 = vsub.f32 1.0, %v3919
    %v3921 = vmul.f32 %v3918, %v3920
    %v3922 = vadd.f32 %v3918, %v3921
    %vm3923 = vweird.f32 %v3886
    %vm3924 = vweird.f32 %v3918
    %vm3925 = vmor %vm3923, %vm3924
    %v3926 = vsel %vm3925, %v3918, %v3922
    %v3927 = vand.u32 2147483647, %v3886
    %vm3928 = vcmp.eq.f32.partialorder %v3927, 8.507059e+37
    %v3929 = vand.u32 %v3886, 2147483648
    %v3930 = vor.u32 1.1754944e-38, %v3929
    %v3931 = vsel %vm3928, %v3930, %v3926
    %v3932 = vmul.f32 1.0, %v3931
    %v3933 = vrcp.pop %v3887
    %v3934 = vmul.f32 %v3887, %v3933
    %v3935 = vsub.f32 1.0, %v3934
    %v3936 = vmul.f32 %v3933, %v3935
    %v3937 = vadd.f32 %v3933, %v3936
    %vm3938 = vweird.f32 %v3887
    %vm3939 = vweird.f32 %v3933
    %vm3940 = vmor %vm3938, %vm3939
    %v3941 = vsel %vm3940, %v3933, %v3937
    %v3942 = vand.u32 2147483647, %v3887
    %vm3943 = vcmp.eq.f32.partialorder %v3942, 8.507059e+37
    %v3944 = vand.u32 %v3887, 2147483648
    %v3945 = vor.u32 1.1754944e-38, %v3944
    %v3946 = vsel %vm3943, %v3945, %v3941
    %v3947 = vmul.f32 1.0, %v3946
    %v3948 = vmul.f32 %v3932, 2.0
    %v3949 = vsub.f32 %v3948, 1.0
    %v3950 = vmul.f32 %v3917, 0.0
    %v3951 = vmul.f32 %v3902, %v3949
    %v3952 = vadd.f32 %v3950, %v3951
    %v3953 = vtanh.pop %v3952
    %v3954 = vmul.f32 %v3947, %v3953
    %v3955 = vld [vmem:[#allocation3] sm:$0xc]
    %v3956 = vld [vmem:[#allocation3 + $0x8] sm:$0xc]
    %v3957 = vld [vmem:[#allocation3 + $0x10] sm:$0xc]
    %v3958 = vld [vmem:[#allocation3 + $0x18] sm:$0xc]
    %3959 = vmatpush.msra.mxu0 %v3780
    %3960 = vmatpush.msra.mxu0 %v3776
    %3961 = vmatpush.msra.mxu0 %v3772
    %3962 = vmatpush.msra.mxu0 %v3768
    %3963 = vmatpush.msra.mxu0 %v3764
    %3964 = vmatpush.msra.mxu0 %v3760
    %3965 = vmatpush.msra.mxu0 %v3756
    %3966 = vmatpush.msra.mxu0 %v3752
    %3967 = vmatpush.msra.mxu0 %v3748
    %3968 = vmatpush.msra.mxu0 %v3744
    %3969 = vmatpush.msra.mxu0 %v3740
    %3970 = vmatpush.msra.mxu0 %v3736
    %3971 = vmatpush.msra.mxu0 %v3732
    %3972 = vmatpush.msra.mxu0 %v3728
    %3973 = vmatpush.msra.mxu0 %v3724
    %3974 = vmatpush.msra.mxu0 %v3720
    %3975 = vmatmul.f32.gmra.mxu0 %v3954
    %v3976 = vpop.f32.mrf.mxu0
    %v3977 = vadd.f32 0.0, %v3976
    %3978 = vdwg.mxu0
    %3979 = vmatpush.msra.mxu0 %v3781
    %3980 = vmatpush.msra.mxu0 %v3777
    %3981 = vmatpush.msra.mxu0 %v3773
    %3982 = vmatpush.msra.mxu0 %v3769
    %3983 = vmatpush.msra.mxu0 %v3765
    %3984 = vmatpush.msra.mxu0 %v3761
    %3985 = vmatpush.msra.mxu0 %v3757
    %3986 = vmatpush.msra.mxu0 %v3753
    %3987 = vmatpush.msra.mxu0 %v3749
    %3988 = vmatpush.msra.mxu0 %v3745
    %3989 = vmatpush.msra.mxu0 %v3741
    %3990 = vmatpush.msra.mxu0 %v3737
    %3991 = vmatpush.msra.mxu0 %v3733
    %3992 = vmatpush.msra.mxu0 %v3729
    %3993 = vmatpush.msra.mxu0 %v3725
    %3994 = vmatpush.msra.mxu0 %v3721
    %3995 = vmatmul.f32.gmra.mxu0 %v3954
    %v3996 = vpop.f32.mrf.mxu0
    %v3997 = vadd.f32 0.0, %v3996
    %3998 = vdwg.mxu0
    %3999 = vmatpush.msra.mxu0 %v3782
    %4000 = vmatpush.msra.mxu0 %v3778
    %4001 = vmatpush.msra.mxu0 %v3774
    %4002 = vmatpush.msra.mxu0 %v3770
    %4003 = vmatpush.msra.mxu0 %v3766
    %4004 = vmatpush.msra.mxu0 %v3762
    %4005 = vmatpush.msra.mxu0 %v3758
    %4006 = vmatpush.msra.mxu0 %v3754
    %4007 = vmatpush.msra.mxu0 %v3750
    %4008 = vmatpush.msra.mxu0 %v3746
    %4009 = vmatpush.msra.mxu0 %v3742
    %4010 = vmatpush.msra.mxu0 %v3738
    %4011 = vmatpush.msra.mxu0 %v3734
    %4012 = vmatpush.msra.mxu0 %v3730
    %4013 = vmatpush.msra.mxu0 %v3726
    %4014 = vmatpush.msra.mxu0 %v3722
    %4015 = vmatmul.f32.gmra.mxu0 %v3954
    %v4016 = vpop.f32.mrf.mxu0
    %v4017 = vadd.f32 0.0, %v4016
    %4018 = vdwg.mxu0
    %4019 = vmatpush.msra.mxu0 %v3783
    %4020 = vmatpush.msra.mxu0 %v3779
    %4021 = vmatpush.msra.mxu0 %v3775
    %4022 = vmatpush.msra.mxu0 %v3771
    %4023 = vmatpush.msra.mxu0 %v3767
    %4024 = vmatpush.msra.mxu0 %v3763
    %4025 = vmatpush.msra.mxu0 %v3759
    %4026 = vmatpush.msra.mxu0 %v3755
    %4027 = vmatpush.msra.mxu0 %v3751
    %4028 = vmatpush.msra.mxu0 %v3747
    %4029 = vmatpush.msra.mxu0 %v3743
    %4030 = vmatpush.msra.mxu0 %v3739
    %4031 = vmatpush.msra.mxu0 %v3735
    %4032 = vmatpush.msra.mxu0 %v3731
    %4033 = vmatpush.msra.mxu0 %v3727
    %4034 = vmatpush.msra.mxu0 %v3723
    %4035 = vmatmul.f32.gmra.mxu0 %v3954
    %v4036 = vpop.f32.mrf.mxu0
    %v4037 = vadd.f32 0.0, %v4036
    %4038 = vdwg.mxu0
    %v4043 = vrot.slane %v3977, 6
    %v4044 = vrot.slane %v3997, 6
    %v4045 = vrot.slane %v4017, 6
    %v4046 = vrot.slane %v4037, 6
    %v4051 = vadd.f32 %v3955, %v4043
    %v4052 = vadd.f32 %v3956, %v4044
    %v4053 = vadd.f32 %v3957, %v4045
    %v4054 = vadd.f32 %v3958, %v4046
    %v4055 = vxor.u32 %v4051, 2147483648
    %v4056 = vxor.u32 %v4052, 2147483648
    %v4057 = vxor.u32 %v4053, 2147483648
    %v4058 = vxor.u32 %v4054, 2147483648
    %v4059 = vmul.f32 %v4055, 1.442695
    %v4060 = vpow.pop %v4059
    %v4061 = vmul.f32 %v4056, 1.442695
    %v4062 = vpow.pop %v4061
    %v4063 = vmul.f32 %v4057, 1.442695
    %v4064 = vpow.pop %v4063
    %v4065 = vmul.f32 %v4058, 1.442695
    %v4066 = vpow.pop %v4065
    %v4067 = vadd.f32 %v4060, 1.0
    %v4068 = vadd.f32 %v4062, 1.0
    %v4069 = vadd.f32 %v4064, 1.0
    %v4070 = vadd.f32 %v4066, 1.0
    %v4071 = vrcp.pop %v4067
    %v4072 = vmul.f32 %v4067, %v4071
    %v4073 = vsub.f32 1.0, %v4072
    %v4074 = vmul.f32 %v4071, %v4073
    %v4075 = vadd.f32 %v4071, %v4074
    %vm4076 = vweird.f32 %v4067
    %vm4077 = vweird.f32 %v4071
    %vm4078 = vmor %vm4076, %vm4077
    %v4079 = vsel %vm4078, %v4071, %v4075
    %v4080 = vand.u32 2147483647, %v4067
    %vm4081 = vcmp.eq.f32.partialorder %v4080, 8.507059e+37
    %v4082 = vand.u32 %v4067, 2147483648
    %v4083 = vor.u32 1.1754944e-38, %v4082
    %v4084 = vsel %vm4081, %v4083, %v4079
    %v4085 = vmul.f32 1.0, %v4084
    %v4086 = vrcp.pop %v4068
    %v4087 = vmul.f32 %v4068, %v4086
    %v4088 = vsub.f32 1.0, %v4087
    %v4089 = vmul.f32 %v4086, %v4088
    %v4090 = vadd.f32 %v4086, %v4089
    %vm4091 = vweird.f32 %v4068
    %vm4092 = vweird.f32 %v4086
    %vm4093 = vmor %vm4091, %vm4092
    %v4094 = vsel %vm4093, %v4086, %v4090
    %v4095 = vand.u32 2147483647, %v4068
    %vm4096 = vcmp.eq.f32.partialorder %v4095, 8.507059e+37
    %v4097 = vand.u32 %v4068, 2147483648
    %v4098 = vor.u32 1.1754944e-38, %v4097
    %v4099 = vsel %vm4096, %v4098, %v4094
    %v4100 = vmul.f32 1.0, %v4099
    %v4101 = vrcp.pop %v4069
    %v4102 = vmul.f32 %v4069, %v4101
    %v4103 = vsub.f32 1.0, %v4102
    %v4104 = vmul.f32 %v4101, %v4103
    %v4105 = vadd.f32 %v4101, %v4104
    %vm4106 = vweird.f32 %v4069
    %vm4107 = vweird.f32 %v4101
    %vm4108 = vmor %vm4106, %vm4107
    %v4109 = vsel %vm4108, %v4101, %v4105
    %v4110 = vand.u32 2147483647, %v4069
    %vm4111 = vcmp.eq.f32.partialorder %v4110, 8.507059e+37
    %v4112 = vand.u32 %v4069, 2147483648
    %v4113 = vor.u32 1.1754944e-38, %v4112
    %v4114 = vsel %vm4111, %v4113, %v4109
    %v4115 = vmul.f32 1.0, %v4114
    %v4116 = vrcp.pop %v4070
    %v4117 = vmul.f32 %v4070, %v4116
    %v4118 = vsub.f32 1.0, %v4117
    %v4119 = vmul.f32 %v4116, %v4118
    %v4120 = vadd.f32 %v4116, %v4119
    %vm4121 = vweird.f32 %v4070
    %vm4122 = vweird.f32 %v4116
    %vm4123 = vmor %vm4121, %vm4122
    %v4124 = vsel %vm4123, %v4116, %v4120
    %v4125 = vand.u32 2147483647, %v4070
    %vm4126 = vcmp.eq.f32.partialorder %v4125, 8.507059e+37
    %v4127 = vand.u32 %v4070, 2147483648
    %v4128 = vor.u32 1.1754944e-38, %v4127
    %v4129 = vsel %vm4126, %v4128, %v4124
    %v4130 = vmul.f32 1.0, %v4129
    %v4131 = vmul.f32 %v4115, 2.0
    %v4132 = vsub.f32 %v4131, 1.0
    %v4134 = vrot.slane %v3952, 6
    %v4136 = vmul.f32 %v4100, %v4134
    %v4137 = vmul.f32 %v4085, %v4132
    %v4138 = vadd.f32 %v4136, %v4137
    %v4139 = vtanh.pop %v4138
    %v4140 = vmul.f32 %v4130, %v4139
    %v4141 = vld [vmem:[#allocation3] sm:$0x30]
    %v4142 = vld [vmem:[#allocation3 + $0x8] sm:$0x30]
    %v4143 = vld [vmem:[#allocation3 + $0x10] sm:$0x30]
    %v4144 = vld [vmem:[#allocation3 + $0x18] sm:$0x30]
    %v4146 = vrot.slane %v4140, 2
    %4148 = vmatpush.msra.mxu0 %v3780
    %4149 = vmatpush.msra.mxu0 %v3776
    %4150 = vmatpush.msra.mxu0 %v3772
    %4151 = vmatpush.msra.mxu0 %v3768
    %4152 = vmatpush.msra.mxu0 %v3764
    %4153 = vmatpush.msra.mxu0 %v3760
    %4154 = vmatpush.msra.mxu0 %v3756
    %4155 = vmatpush.msra.mxu0 %v3752
    %4156 = vmatpush.msra.mxu0 %v3748
    %4157 = vmatpush.msra.mxu0 %v3744
    %4158 = vmatpush.msra.mxu0 %v3740
    %4159 = vmatpush.msra.mxu0 %v3736
    %4160 = vmatpush.msra.mxu0 %v3732
    %4161 = vmatpush.msra.mxu0 %v3728
    %4162 = vmatpush.msra.mxu0 %v3724
    %4163 = vmatpush.msra.mxu0 %v3720
    %4164 = vmatmul.f32.gmra.mxu0 %v4146
    %v4165 = vpop.f32.mrf.mxu0
    %v4166 = vadd.f32 0.0, %v4165
    %4167 = vdwg.mxu0
    %4168 = vmatpush.msra.mxu0 %v3781
    %4169 = vmatpush.msra.mxu0 %v3777
    %4170 = vmatpush.msra.mxu0 %v3773
    %4171 = vmatpush.msra.mxu0 %v3769
    %4172 = vmatpush.msra.mxu0 %v3765
    %4173 = vmatpush.msra.mxu0 %v3761
    %4174 = vmatpush.msra.mxu0 %v3757
    %4175 = vmatpush.msra.mxu0 %v3753
    %4176 = vmatpush.msra.mxu0 %v3749
    %4177 = vmatpush.msra.mxu0 %v3745
    %4178 = vmatpush.msra.mxu0 %v3741
    %4179 = vmatpush.msra.mxu0 %v3737
    %4180 = vmatpush.msra.mxu0 %v3733
    %4181 = vmatpush.msra.mxu0 %v3729
    %4182 = vmatpush.msra.mxu0 %v3725
    %4183 = vmatpush.msra.mxu0 %v3721
    %4184 = vmatmul.f32.gmra.mxu0 %v4146
    %v4185 = vpop.f32.mrf.mxu0
    %v4186 = vadd.f32 0.0, %v4185
    %4187 = vdwg.mxu0
    %4188 = vmatpush.msra.mxu0 %v3782
    %4189 = vmatpush.msra.mxu0 %v3778
    %4190 = vmatpush.msra.mxu0 %v3774
    %4191 = vmatpush.msra.mxu0 %v3770
    %4192 = vmatpush.msra.mxu0 %v3766
    %4193 = vmatpush.msra.mxu0 %v3762
    %4194 = vmatpush.msra.mxu0 %v3758
    %4195 = vmatpush.msra.mxu0 %v3754
    %4196 = vmatpush.msra.mxu0 %v3750
    %4197 = vmatpush.msra.mxu0 %v3746
    %4198 = vmatpush.msra.mxu0 %v3742
    %4199 = vmatpush.msra.mxu0 %v3738
    %4200 = vmatpush.msra.mxu0 %v3734
    %4201 = vmatpush.msra.mxu0 %v3730
    %4202 = vmatpush.msra.mxu0 %v3726
    %4203 = vmatpush.msra.mxu0 %v3722
    %4204 = vmatmul.f32.gmra.mxu0 %v4146
    %v4205 = vpop.f32.mrf.mxu0
    %v4206 = vadd.f32 0.0, %v4205
    %4207 = vdwg.mxu0
    %4208 = vmatpush.msra.mxu0 %v3783
    %4209 = vmatpush.msra.mxu0 %v3779
    %4210 = vmatpush.msra.mxu0 %v3775
    %4211 = vmatpush.msra.mxu0 %v3771
    %4212 = vmatpush.msra.mxu0 %v3767
    %4213 = vmatpush.msra.mxu0 %v3763
    %4214 = vmatpush.msra.mxu0 %v3759
    %4215 = vmatpush.msra.mxu0 %v3755
    %4216 = vmatpush.msra.mxu0 %v3751
    %4217 = vmatpush.msra.mxu0 %v3747
    %4218 = vmatpush.msra.mxu0 %v3743
    %4219 = vmatpush.msra.mxu0 %v3739
    %4220 = vmatpush.msra.mxu0 %v3735
    %4221 = vmatpush.msra.mxu0 %v3731
    %4222 = vmatpush.msra.mxu0 %v3727
    %4223 = vmatpush.msra.mxu0 %v3723
    %4224 = vmatmul.f32.gmra.mxu0 %v4146
    %v4225 = vpop.f32.mrf.mxu0
    %v4226 = vadd.f32 0.0, %v4225
    %4227 = vdwg.mxu0
    %v4232 = vrot.slane %v4166, 4
    %v4233 = vrot.slane %v4186, 4
    %v4234 = vrot.slane %v4206, 4
    %v4235 = vrot.slane %v4226, 4
    %v4240 = vadd.f32 %v4141, %v4232
    %v4241 = vadd.f32 %v4142, %v4233
    %v4242 = vadd.f32 %v4143, %v4234
    %v4243 = vadd.f32 %v4144, %v4235
    %v4244 = vxor.u32 %v4240, 2147483648
    %v4245 = vxor.u32 %v4241, 2147483648
    %v4246 = vxor.u32 %v4242, 2147483648
    %v4247 = vxor.u32 %v4243, 2147483648
    %v4248 = vmul.f32 %v4244, 1.442695
    %v4249 = vpow.pop %v4248
    %v4250 = vmul.f32 %v4245, 1.442695
    %v4251 = vpow.pop %v4250
    %v4252 = vmul.f32 %v4246, 1.442695
    %v4253 = vpow.pop %v4252
    %v4254 = vmul.f32 %v4247, 1.442695
    %v4255 = vpow.pop %v4254
    %v4256 = vadd.f32 %v4249, 1.0
    %v4257 = vadd.f32 %v4251, 1.0
    %v4258 = vadd.f32 %v4253, 1.0
    %v4259 = vadd.f32 %v4255, 1.0
    %v4260 = vrcp.pop %v4256
    %v4261 = vmul.f32 %v4256, %v4260
    %v4262 = vsub.f32 1.0, %v4261
    %v4263 = vmul.f32 %v4260, %v4262
    %v4264 = vadd.f32 %v4260, %v4263
    %vm4265 = vweird.f32 %v4256
    %vm4266 = vweird.f32 %v4260
    %vm4267 = vmor %vm4265, %vm4266
    %v4268 = vsel %vm4267, %v4260, %v4264
    %v4269 = vand.u32 2147483647, %v4256
    %vm4270 = vcmp.eq.f32.partialorder %v4269, 8.507059e+37
    %v4271 = vand.u32 %v4256, 2147483648
    %v4272 = vor.u32 1.1754944e-38, %v4271
    %v4273 = vsel %vm4270, %v4272, %v4268
    %v4274 = vmul.f32 1.0, %v4273
    %v4275 = vrcp.pop %v4257
    %v4276 = vmul.f32 %v4257, %v4275
    %v4277 = vsub.f32 1.0, %v4276
    %v4278 = vmul.f32 %v4275, %v4277
    %v4279 = vadd.f32 %v4275, %v4278
    %vm4280 = vweird.f32 %v4257
    %vm4281 = vweird.f32 %v4275
    %vm4282 = vmor %vm4280, %vm4281
    %v4283 = vsel %vm4282, %v4275, %v4279
    %v4284 = vand.u32 2147483647, %v4257
    %vm4285 = vcmp.eq.f32.partialorder %v4284, 8.507059e+37
    %v4286 = vand.u32 %v4257, 2147483648
    %v4287 = vor.u32 1.1754944e-38, %v4286
    %v4288 = vsel %vm4285, %v4287, %v4283
    %v4289 = vmul.f32 1.0, %v4288
    %v4290 = vrcp.pop %v4258
    %v4291 = vmul.f32 %v4258, %v4290
    %v4292 = vsub.f32 1.0, %v4291
    %v4293 = vmul.f32 %v4290, %v4292
    %v4294 = vadd.f32 %v4290, %v4293
    %vm4295 = vweird.f32 %v4258
    %vm4296 = vweird.f32 %v4290
    %vm4297 = vmor %vm4295, %vm4296
    %v4298 = vsel %vm4297, %v4290, %v4294
    %v4299 = vand.u32 2147483647, %v4258
    %vm4300 = vcmp.eq.f32.partialorder %v4299, 8.507059e+37
    %v4301 = vand.u32 %v4258, 2147483648
    %v4302 = vor.u32 1.1754944e-38, %v4301
    %v4303 = vsel %vm4300, %v4302, %v4298
    %v4304 = vmul.f32 1.0, %v4303
    %v4305 = vrcp.pop %v4259
    %v4306 = vmul.f32 %v4259, %v4305
    %v4307 = vsub.f32 1.0, %v4306
    %v4308 = vmul.f32 %v4305, %v4307
    %v4309 = vadd.f32 %v4305, %v4308
    %vm4310 = vweird.f32 %v4259
    %vm4311 = vweird.f32 %v4305
    %vm4312 = vmor %vm4310, %vm4311
    %v4313 = vsel %vm4312, %v4305, %v4309
    %v4314 = vand.u32 2147483647, %v4259
    %vm4315 = vcmp.eq.f32.partialorder %v4314, 8.507059e+37
    %v4316 = vand.u32 %v4259, 2147483648
    %v4317 = vor.u32 1.1754944e-38, %v4316
    %v4318 = vsel %vm4315, %v4317, %v4313
    %v4319 = vmul.f32 1.0, %v4318
    %v4320 = vmul.f32 %v4304, 2.0
    %v4321 = vsub.f32 %v4320, 1.0
    %v4323 = vrot.slane %v4138, 6
    %v4325 = vmul.f32 %v4289, %v4323
    %v4326 = vmul.f32 %v4274, %v4321
    %v4327 = vadd.f32 %v4325, %v4326
    %v4328 = vtanh.pop %v4327
    %v4329 = vmul.f32 %v4319, %v4328
    %v4330 = vld [vmem:[#allocation3] sm:$0xc0]
    %v4331 = vld [vmem:[#allocation3 + $0x8] sm:$0xc0]
    %v4332 = vld [vmem:[#allocation3 + $0x10] sm:$0xc0]
    %v4333 = vld [vmem:[#allocation3 + $0x18] sm:$0xc0]
    %v4335 = vrot.slane %v4329, 4
    %4337 = vmatpush.msra.mxu0 %v3780
    %4338 = vmatpush.msra.mxu0 %v3776
    %4339 = vmatpush.msra.mxu0 %v3772
    %4340 = vmatpush.msra.mxu0 %v3768
    %4341 = vmatpush.msra.mxu0 %v3764
    %4342 = vmatpush.msra.mxu0 %v3760
    %4343 = vmatpush.msra.mxu0 %v3756
    %4344 = vmatpush.msra.mxu0 %v3752
    %4345 = vmatpush.msra.mxu0 %v3748
    %4346 = vmatpush.msra.mxu0 %v3744
    %4347 = vmatpush.msra.mxu0 %v3740
    %4348 = vmatpush.msra.mxu0 %v3736
    %4349 = vmatpush.msra.mxu0 %v3732
    %4350 = vmatpush.msra.mxu0 %v3728
    %4351 = vmatpush.msra.mxu0 %v3724
    %4352 = vmatpush.msra.mxu0 %v3720
    %4353 = vmatmul.f32.gmra.mxu0 %v4335
    %v4354 = vpop.f32.mrf.mxu0
    %v4355 = vadd.f32 0.0, %v4354
    %4356 = vdwg.mxu0
    %4357 = vmatpush.msra.mxu0 %v3781
    %4358 = vmatpush.msra.mxu0 %v3777
    %4359 = vmatpush.msra.mxu0 %v3773
    %4360 = vmatpush.msra.mxu0 %v3769
    %4361 = vmatpush.msra.mxu0 %v3765
    %4362 = vmatpush.msra.mxu0 %v3761
    %4363 = vmatpush.msra.mxu0 %v3757
    %4364 = vmatpush.msra.mxu0 %v3753
    %4365 = vmatpush.msra.mxu0 %v3749
    %4366 = vmatpush.msra.mxu0 %v3745
    %4367 = vmatpush.msra.mxu0 %v3741
    %4368 = vmatpush.msra.mxu0 %v3737
    %4369 = vmatpush.msra.mxu0 %v3733
    %4370 = vmatpush.msra.mxu0 %v3729
    %4371 = vmatpush.msra.mxu0 %v3725
    %4372 = vmatpush.msra.mxu0 %v3721
    %4373 = vmatmul.f32.gmra.mxu0 %v4335
    %v4374 = vpop.f32.mrf.mxu0
    %v4375 = vadd.f32 0.0, %v4374
    %4376 = vdwg.mxu0
    %4377 = vmatpush.msra.mxu0 %v3782
    %4378 = vmatpush.msra.mxu0 %v3778
    %4379 = vmatpush.msra.mxu0 %v3774
    %4380 = vmatpush.msra.mxu0 %v3770
    %4381 = vmatpush.msra.mxu0 %v3766
    %4382 = vmatpush.msra.mxu0 %v3762
    %4383 = vmatpush.msra.mxu0 %v3758
    %4384 = vmatpush.msra.mxu0 %v3754
    %4385 = vmatpush.msra.mxu0 %v3750
    %4386 = vmatpush.msra.mxu0 %v3746
    %4387 = vmatpush.msra.mxu0 %v3742
    %4388 = vmatpush.msra.mxu0 %v3738
    %4389 = vmatpush.msra.mxu0 %v3734
    %4390 = vmatpush.msra.mxu0 %v3730
    %4391 = vmatpush.msra.mxu0 %v3726
    %4392 = vmatpush.msra.mxu0 %v3722
    %4393 = vmatmul.f32.gmra.mxu0 %v4335
    %v4394 = vpop.f32.mrf.mxu0
    %v4395 = vadd.f32 0.0, %v4394
    %4396 = vdwg.mxu0
    %4397 = vmatpush.msra.mxu0 %v3783
    %4398 = vmatpush.msra.mxu0 %v3779
    %4399 = vmatpush.msra.mxu0 %v3775
    %4400 = vmatpush.msra.mxu0 %v3771
    %4401 = vmatpush.msra.mxu0 %v3767
    %4402 = vmatpush.msra.mxu0 %v3763
    %4403 = vmatpush.msra.mxu0 %v3759
    %4404 = vmatpush.msra.mxu0 %v3755
    %4405 = vmatpush.msra.mxu0 %v3751
    %4406 = vmatpush.msra.mxu0 %v3747
    %4407 = vmatpush.msra.mxu0 %v3743
    %4408 = vmatpush.msra.mxu0 %v3739
    %4409 = vmatpush.msra.mxu0 %v3735
    %4410 = vmatpush.msra.mxu0 %v3731
    %4411 = vmatpush.msra.mxu0 %v3727
    %4412 = vmatpush.msra.mxu0 %v3723
    %4413 = vmatmul.f32.gmra.mxu0 %v4335
    %v4414 = vpop.f32.mrf.mxu0
    %v4415 = vadd.f32 0.0, %v4414
    %4416 = vdwg.mxu0
    %v4421 = vrot.slane %v4355, 2
    %v4422 = vrot.slane %v4375, 2
    %v4423 = vrot.slane %v4395, 2
    %v4424 = vrot.slane %v4415, 2
    %v4429 = vadd.f32 %v4330, %v4421
    %v4430 = vadd.f32 %v4331, %v4422
    %v4431 = vadd.f32 %v4332, %v4423
    %v4432 = vadd.f32 %v4333, %v4424
    %v4433 = vxor.u32 %v4429, 2147483648
    %v4434 = vxor.u32 %v4430, 2147483648
    %v4435 = vxor.u32 %v4431, 2147483648
    %v4436 = vxor.u32 %v4432, 2147483648
    %v4437 = vmul.f32 %v4433, 1.442695
    %v4438 = vpow.pop %v4437
    %v4439 = vmul.f32 %v4434, 1.442695
    %v4440 = vpow.pop %v4439
    %v4441 = vmul.f32 %v4435, 1.442695
    %v4442 = vpow.pop %v4441
    %v4443 = vmul.f32 %v4436, 1.442695
    %v4444 = vpow.pop %v4443
    %v4445 = vadd.f32 %v4438, 1.0
    %v4446 = vadd.f32 %v4440, 1.0
    %v4447 = vadd.f32 %v4442, 1.0
    %v4448 = vadd.f32 %v4444, 1.0
    %v4449 = vrcp.pop %v4445
    %v4450 = vmul.f32 %v4445, %v4449
    %v4451 = vsub.f32 1.0, %v4450
    %v4452 = vmul.f32 %v4449, %v4451
    %v4453 = vadd.f32 %v4449, %v4452
    %vm4454 = vweird.f32 %v4445
    %vm4455 = vweird.f32 %v4449
    %vm4456 = vmor %vm4454, %vm4455
    %v4457 = vsel %vm4456, %v4449, %v4453
    %v4458 = vand.u32 2147483647, %v4445
    %vm4459 = vcmp.eq.f32.partialorder %v4458, 8.507059e+37
    %v4460 = vand.u32 %v4445, 2147483648
    %v4461 = vor.u32 1.1754944e-38, %v4460
    %v4462 = vsel %vm4459, %v4461, %v4457
    %v4463 = vmul.f32 1.0, %v4462
    %v4464 = vrcp.pop %v4446
    %v4465 = vmul.f32 %v4446, %v4464
    %v4466 = vsub.f32 1.0, %v4465
    %v4467 = vmul.f32 %v4464, %v4466
    %v4468 = vadd.f32 %v4464, %v4467
    %vm4469 = vweird.f32 %v4446
    %vm4470 = vweird.f32 %v4464
    %vm4471 = vmor %vm4469, %vm4470
    %v4472 = vsel %vm4471, %v4464, %v4468
    %v4473 = vand.u32 2147483647, %v4446
    %vm4474 = vcmp.eq.f32.partialorder %v4473, 8.507059e+37
    %v4475 = vand.u32 %v4446, 2147483648
    %v4476 = vor.u32 1.1754944e-38, %v4475
    %v4477 = vsel %vm4474, %v4476, %v4472
    %v4478 = vmul.f32 1.0, %v4477
    %v4479 = vrcp.pop %v4447
    %v4480 = vmul.f32 %v4447, %v4479
    %v4481 = vsub.f32 1.0, %v4480
    %v4482 = vmul.f32 %v4479, %v4481
    %v4483 = vadd.f32 %v4479, %v4482
    %vm4484 = vweird.f32 %v4447
    %vm4485 = vweird.f32 %v4479
    %vm4486 = vmor %vm4484, %vm4485
    %v4487 = vsel %vm4486, %v4479, %v4483
    %v4488 = vand.u32 2147483647, %v4447
    %vm4489 = vcmp.eq.f32.partialorder %v4488, 8.507059e+37
    %v4490 = vand.u32 %v4447, 2147483648
    %v4491 = vor.u32 1.1754944e-38, %v4490
    %v4492 = vsel %vm4489, %v4491, %v4487
    %v4493 = vmul.f32 1.0, %v4492
    %v4494 = vrcp.pop %v4448
    %v4495 = vmul.f32 %v4448, %v4494
    %v4496 = vsub.f32 1.0, %v4495
    %v4497 = vmul.f32 %v4494, %v4496
    %v4498 = vadd.f32 %v4494, %v4497
    %vm4499 = vweird.f32 %v4448
    %vm4500 = vweird.f32 %v4494
    %vm4501 = vmor %vm4499, %vm4500
    %v4502 = vsel %vm4501, %v4494, %v4498
    %v4503 = vand.u32 2147483647, %v4448
    %vm4504 = vcmp.eq.f32.partialorder %v4503, 8.507059e+37
    %v4505 = vand.u32 %v4448, 2147483648
    %v4506 = vor.u32 1.1754944e-38, %v4505
    %v4507 = vsel %vm4504, %v4506, %v4502
    %v4508 = vmul.f32 1.0, %v4507
    %v4509 = vmul.f32 %v4493, 2.0
    %v4510 = vsub.f32 %v4509, 1.0
    %v4512 = vrot.slane %v4327, 6
    %v4514 = vmul.f32 %v4478, %v4512
    %v4515 = vmul.f32 %v4463, %v4510
    %v4516 = vadd.f32 %v4514, %v4515
    %v4517 = vtanh.pop %v4516
    %v4518 = vmul.f32 %v4508, %v4517
    %v4519 = vld [vmem:[#allocation3 + $0x20] sm:$0x3]
    %v4520 = vld [vmem:[#allocation3 + $0x28] sm:$0x3]
    %v4521 = vld [vmem:[#allocation3 + $0x30] sm:$0x3]
    %v4522 = vld [vmem:[#allocation3 + $0x38] sm:$0x3]
    %v4524 = vrot.slane %v4518, 6
    %4526 = vmatpush.msra.mxu0 %v3780
    %4527 = vmatpush.msra.mxu0 %v3776
    %4528 = vmatpush.msra.mxu0 %v3772
    %4529 = vmatpush.msra.mxu0 %v3768
    %4530 = vmatpush.msra.mxu0 %v3764
    %4531 = vmatpush.msra.mxu0 %v3760
    %4532 = vmatpush.msra.mxu0 %v3756
    %4533 = vmatpush.msra.mxu0 %v3752
    %4534 = vmatpush.msra.mxu0 %v3748
    %4535 = vmatpush.msra.mxu0 %v3744
    %4536 = vmatpush.msra.mxu0 %v3740
    %4537 = vmatpush.msra.mxu0 %v3736
    %4538 = vmatpush.msra.mxu0 %v3732
    %4539 = vmatpush.msra.mxu0 %v3728
    %4540 = vmatpush.msra.mxu0 %v3724
    %4541 = vmatpush.msra.mxu0 %v3720
    %4542 = vmatmul.f32.gmra.mxu0 %v4524
    %v4543 = vpop.f32.mrf.mxu0
    %v4544 = vadd.f32 0.0, %v4543
    %4545 = vdwg.mxu0
    %4546 = vmatpush.msra.mxu0 %v3781
    %4547 = vmatpush.msra.mxu0 %v3777
    %4548 = vmatpush.msra.mxu0 %v3773
    %4549 = vmatpush.msra.mxu0 %v3769
    %4550 = vmatpush.msra.mxu0 %v3765
    %4551 = vmatpush.msra.mxu0 %v3761
    %4552 = vmatpush.msra.mxu0 %v3757
    %4553 = vmatpush.msra.mxu0 %v3753
    %4554 = vmatpush.msra.mxu0 %v3749
    %4555 = vmatpush.msra.mxu0 %v3745
    %4556 = vmatpush.msra.mxu0 %v3741
    %4557 = vmatpush.msra.mxu0 %v3737
    %4558 = vmatpush.msra.mxu0 %v3733
    %4559 = vmatpush.msra.mxu0 %v3729
    %4560 = vmatpush.msra.mxu0 %v3725
    %4561 = vmatpush.msra.mxu0 %v3721
    %4562 = vmatmul.f32.gmra.mxu0 %v4524
    %v4563 = vpop.f32.mrf.mxu0
    %v4564 = vadd.f32 0.0, %v4563
    %4565 = vdwg.mxu0
    %4566 = vmatpush.msra.mxu0 %v3782
    %4567 = vmatpush.msra.mxu0 %v3778
    %4568 = vmatpush.msra.mxu0 %v3774
    %4569 = vmatpush.msra.mxu0 %v3770
    %4570 = vmatpush.msra.mxu0 %v3766
    %4571 = vmatpush.msra.mxu0 %v3762
    %4572 = vmatpush.msra.mxu0 %v3758
    %4573 = vmatpush.msra.mxu0 %v3754
    %4574 = vmatpush.msra.mxu0 %v3750
    %4575 = vmatpush.msra.mxu0 %v3746
    %4576 = vmatpush.msra.mxu0 %v3742
    %4577 = vmatpush.msra.mxu0 %v3738
    %4578 = vmatpush.msra.mxu0 %v3734
    %4579 = vmatpush.msra.mxu0 %v3730
    %4580 = vmatpush.msra.mxu0 %v3726
    %4581 = vmatpush.msra.mxu0 %v3722
    %4582 = vmatmul.f32.gmra.mxu0 %v4524
    %v4583 = vpop.f32.mrf.mxu0
    %v4584 = vadd.f32 0.0, %v4583
    %4585 = vdwg.mxu0
    %4586 = vmatpush.msra.mxu0 %v3783
    %4587 = vmatpush.msra.mxu0 %v3779
    %4588 = vmatpush.msra.mxu0 %v3775
    %4589 = vmatpush.msra.mxu0 %v3771
    %4590 = vmatpush.msra.mxu0 %v3767
    %4591 = vmatpush.msra.mxu0 %v3763
    %4592 = vmatpush.msra.mxu0 %v3759
    %4593 = vmatpush.msra.mxu0 %v3755
    %4594 = vmatpush.msra.mxu0 %v3751
    %4595 = vmatpush.msra.mxu0 %v3747
    %4596 = vmatpush.msra.mxu0 %v3743
    %4597 = vmatpush.msra.mxu0 %v3739
    %4598 = vmatpush.msra.mxu0 %v3735
    %4599 = vmatpush.msra.mxu0 %v3731
    %4600 = vmatpush.msra.mxu0 %v3727
    %4601 = vmatpush.msra.mxu0 %v3723
    %4602 = vmatmul.f32.gmra.mxu0 %v4524
    %v4603 = vpop.f32.mrf.mxu0
    %v4604 = vadd.f32 0.0, %v4603
    %4605 = vdwg.mxu0
    %v4606 = vadd.f32 %v4519, %v4544
    %v4607 = vadd.f32 %v4520, %v4564
    %v4608 = vadd.f32 %v4521, %v4584
    %v4609 = vadd.f32 %v4522, %v4604
    %v4610 = vxor.u32 %v4606, 2147483648
    %v4611 = vxor.u32 %v4607, 2147483648
    %v4612 = vxor.u32 %v4608, 2147483648
    %v4613 = vxor.u32 %v4609, 2147483648
    %v4614 = vmul.f32 %v4610, 1.442695
    %v4615 = vpow.pop %v4614
    %v4616 = vmul.f32 %v4611, 1.442695
    %v4617 = vpow.pop %v4616
    %v4618 = vmul.f32 %v4612, 1.442695
    %v4619 = vpow.pop %v4618
    %v4620 = vmul.f32 %v4613, 1.442695
    %v4621 = vpow.pop %v4620
    %v4622 = vadd.f32 %v4615, 1.0
    %v4623 = vadd.f32 %v4617, 1.0
    %v4624 = vadd.f32 %v4619, 1.0
    %v4625 = vadd.f32 %v4621, 1.0
    %v4626 = vrcp.pop %v4622
    %v4627 = vmul.f32 %v4622, %v4626
    %v4628 = vsub.f32 1.0, %v4627
    %v4629 = vmul.f32 %v4626, %v4628
    %v4630 = vadd.f32 %v4626, %v4629
    %vm4631 = vweird.f32 %v4622
    %vm4632 = vweird.f32 %v4626
    %vm4633 = vmor %vm4631, %vm4632
    %v4634 = vsel %vm4633, %v4626, %v4630
    %v4635 = vand.u32 2147483647, %v4622
    %vm4636 = vcmp.eq.f32.partialorder %v4635, 8.507059e+37
    %v4637 = vand.u32 %v4622, 2147483648
    %v4638 = vor.u32 1.1754944e-38, %v4637
    %v4639 = vsel %vm4636, %v4638, %v4634
    %v4640 = vmul.f32 1.0, %v4639
    %v4641 = vrcp.pop %v4623
    %v4642 = vmul.f32 %v4623, %v4641
    %v4643 = vsub.f32 1.0, %v4642
    %v4644 = vmul.f32 %v4641, %v4643
    %v4645 = vadd.f32 %v4641, %v4644
    %vm4646 = vweird.f32 %v4623
    %vm4647 = vweird.f32 %v4641
    %vm4648 = vmor %vm4646, %vm4647
    %v4649 = vsel %vm4648, %v4641, %v4645
    %v4650 = vand.u32 2147483647, %v4623
    %vm4651 = vcmp.eq.f32.partialorder %v4650, 8.507059e+37
    %v4652 = vand.u32 %v4623, 2147483648
    %v4653 = vor.u32 1.1754944e-38, %v4652
    %v4654 = vsel %vm4651, %v4653, %v4649
    %v4655 = vmul.f32 1.0, %v4654
    %v4656 = vrcp.pop %v4624
    %v4657 = vmul.f32 %v4624, %v4656
    %v4658 = vsub.f32 1.0, %v4657
    %v4659 = vmul.f32 %v4656, %v4658
    %v4660 = vadd.f32 %v4656, %v4659
    %vm4661 = vweird.f32 %v4624
    %vm4662 = vweird.f32 %v4656
    %vm4663 = vmor %vm4661, %vm4662
    %v4664 = vsel %vm4663, %v4656, %v4660
    %v4665 = vand.u32 2147483647, %v4624
    %vm4666 = vcmp.eq.f32.partialorder %v4665, 8.507059e+37
    %v4667 = vand.u32 %v4624, 2147483648
    %v4668 = vor.u32 1.1754944e-38, %v4667
    %v4669 = vsel %vm4666, %v4668, %v4664
    %v4670 = vmul.f32 1.0, %v4669
    %v4671 = vrcp.pop %v4625
    %v4672 = vmul.f32 %v4625, %v4671
    %v4673 = vsub.f32 1.0, %v4672
    %v4674 = vmul.f32 %v4671, %v4673
    %v4675 = vadd.f32 %v4671, %v4674
    %vm4676 = vweird.f32 %v4625
    %vm4677 = vweird.f32 %v4671
    %vm4678 = vmor %vm4676, %vm4677
    %v4679 = vsel %vm4678, %v4671, %v4675
    %v4680 = vand.u32 2147483647, %v4625
    %vm4681 = vcmp.eq.f32.partialorder %v4680, 8.507059e+37
    %v4682 = vand.u32 %v4625, 2147483648
    %v4683 = vor.u32 1.1754944e-38, %v4682
    %v4684 = vsel %vm4681, %v4683, %v4679
    %v4685 = vmul.f32 1.0, %v4684
    %v4686 = vmul.f32 %v4670, 2.0
    %v4687 = vsub.f32 %v4686, 1.0
    %v4689 = vrot.slane %v4516, 6
    %v4691 = vmul.f32 %v4655, %v4689
    %v4692 = vmul.f32 %v4640, %v4687
    %v4693 = vadd.f32 %v4691, %v4692
    %v4694 = vtanh.pop %v4693
    %v4695 = vmul.f32 %v4685, %v4694
    %v4696 = vld [vmem:[#allocation3 + $0x20] sm:$0xc]
    %v4697 = vld [vmem:[#allocation3 + $0x28] sm:$0xc]
    %v4698 = vld [vmem:[#allocation3 + $0x30] sm:$0xc]
    %v4699 = vld [vmem:[#allocation3 + $0x38] sm:$0xc]
    %4700 = vmatpush.msra.mxu0 %v3780
    %4701 = vmatpush.msra.mxu0 %v3776
    %4702 = vmatpush.msra.mxu0 %v3772
    %4703 = vmatpush.msra.mxu0 %v3768
    %4704 = vmatpush.msra.mxu0 %v3764
    %4705 = vmatpush.msra.mxu0 %v3760
    %4706 = vmatpush.msra.mxu0 %v3756
    %4707 = vmatpush.msra.mxu0 %v3752
    %4708 = vmatpush.msra.mxu0 %v3748
    %4709 = vmatpush.msra.mxu0 %v3744
    %4710 = vmatpush.msra.mxu0 %v3740
    %4711 = vmatpush.msra.mxu0 %v3736
    %4712 = vmatpush.msra.mxu0 %v3732
    %4713 = vmatpush.msra.mxu0 %v3728
    %4714 = vmatpush.msra.mxu0 %v3724
    %4715 = vmatpush.msra.mxu0 %v3720
    %4716 = vmatmul.f32.gmra.mxu0 %v4695
    %v4717 = vpop.f32.mrf.mxu0
    %v4718 = vadd.f32 0.0, %v4717
    %4719 = vdwg.mxu0
    %4720 = vmatpush.msra.mxu0 %v3781
    %4721 = vmatpush.msra.mxu0 %v3777
    %4722 = vmatpush.msra.mxu0 %v3773
    %4723 = vmatpush.msra.mxu0 %v3769
    %4724 = vmatpush.msra.mxu0 %v3765
    %4725 = vmatpush.msra.mxu0 %v3761
    %4726 = vmatpush.msra.mxu0 %v3757
    %4727 = vmatpush.msra.mxu0 %v3753
    %4728 = vmatpush.msra.mxu0 %v3749
    %4729 = vmatpush.msra.mxu0 %v3745
    %4730 = vmatpush.msra.mxu0 %v3741
    %4731 = vmatpush.msra.mxu0 %v3737
    %4732 = vmatpush.msra.mxu0 %v3733
    %4733 = vmatpush.msra.mxu0 %v3729
    %4734 = vmatpush.msra.mxu0 %v3725
    %4735 = vmatpush.msra.mxu0 %v3721
    %4736 = vmatmul.f32.gmra.mxu0 %v4695
    %v4737 = vpop.f32.mrf.mxu0
    %v4738 = vadd.f32 0.0, %v4737
    %4739 = vdwg.mxu0
    %4740 = vmatpush.msra.mxu0 %v3782
    %4741 = vmatpush.msra.mxu0 %v3778
    %4742 = vmatpush.msra.mxu0 %v3774
    %4743 = vmatpush.msra.mxu0 %v3770
    %4744 = vmatpush.msra.mxu0 %v3766
    %4745 = vmatpush.msra.mxu0 %v3762
    %4746 = vmatpush.msra.mxu0 %v3758
    %4747 = vmatpush.msra.mxu0 %v3754
    %4748 = vmatpush.msra.mxu0 %v3750
    %4749 = vmatpush.msra.mxu0 %v3746
    %4750 = vmatpush.msra.mxu0 %v3742
    %4751 = vmatpush.msra.mxu0 %v3738
    %4752 = vmatpush.msra.mxu0 %v3734
    %4753 = vmatpush.msra.mxu0 %v3730
    %4754 = vmatpush.msra.mxu0 %v3726
    %4755 = vmatpush.msra.mxu0 %v3722
    %4756 = vmatmul.f32.gmra.mxu0 %v4695
    %v4757 = vpop.f32.mrf.mxu0
    %v4758 = vadd.f32 0.0, %v4757
    %4759 = vdwg.mxu0
    %4760 = vmatpush.msra.mxu0 %v3783
    %4761 = vmatpush.msra.mxu0 %v3779
    %4762 = vmatpush.msra.mxu0 %v3775
    %4763 = vmatpush.msra.mxu0 %v3771
    %4764 = vmatpush.msra.mxu0 %v3767
    %4765 = vmatpush.msra.mxu0 %v3763
    %4766 = vmatpush.msra.mxu0 %v3759
    %4767 = vmatpush.msra.mxu0 %v3755
    %4768 = vmatpush.msra.mxu0 %v3751
    %4769 = vmatpush.msra.mxu0 %v3747
    %4770 = vmatpush.msra.mxu0 %v3743
    %4771 = vmatpush.msra.mxu0 %v3739
    %4772 = vmatpush.msra.mxu0 %v3735
    %4773 = vmatpush.msra.mxu0 %v3731
    %4774 = vmatpush.msra.mxu0 %v3727
    %4775 = vmatpush.msra.mxu0 %v3723
    %4776 = vmatmul.f32.gmra.mxu0 %v4695
    %v4777 = vpop.f32.mrf.mxu0
    %v4778 = vadd.f32 0.0, %v4777
    %4779 = vdwg.mxu0
    %v4784 = vrot.slane %v4718, 6
    %v4785 = vrot.slane %v4738, 6
    %v4786 = vrot.slane %v4758, 6
    %v4787 = vrot.slane %v4778, 6
    %v4792 = vadd.f32 %v4696, %v4784
    %v4793 = vadd.f32 %v4697, %v4785
    %v4794 = vadd.f32 %v4698, %v4786
    %v4795 = vadd.f32 %v4699, %v4787
    %v4796 = vxor.u32 %v4792, 2147483648
    %v4797 = vxor.u32 %v4793, 2147483648
    %v4798 = vxor.u32 %v4794, 2147483648
    %v4799 = vxor.u32 %v4795, 2147483648
    %v4800 = vmul.f32 %v4796, 1.442695
    %v4801 = vpow.pop %v4800
    %v4802 = vmul.f32 %v4797, 1.442695
    %v4803 = vpow.pop %v4802
    %v4804 = vmul.f32 %v4798, 1.442695
    %v4805 = vpow.pop %v4804
    %v4806 = vmul.f32 %v4799, 1.442695
    %v4807 = vpow.pop %v4806
    %v4808 = vadd.f32 %v4801, 1.0
    %v4809 = vadd.f32 %v4803, 1.0
    %v4810 = vadd.f32 %v4805, 1.0
    %v4811 = vadd.f32 %v4807, 1.0
    %v4812 = vrcp.pop %v4808
    %v4813 = vmul.f32 %v4808, %v4812
    %v4814 = vsub.f32 1.0, %v4813
    %v4815 = vmul.f32 %v4812, %v4814
    %v4816 = vadd.f32 %v4812, %v4815
    %vm4817 = vweird.f32 %v4808
    %vm4818 = vweird.f32 %v4812
    %vm4819 = vmor %vm4817, %vm4818
    %v4820 = vsel %vm4819, %v4812, %v4816
    %v4821 = vand.u32 2147483647, %v4808
    %vm4822 = vcmp.eq.f32.partialorder %v4821, 8.507059e+37
    %v4823 = vand.u32 %v4808, 2147483648
    %v4824 = vor.u32 1.1754944e-38, %v4823
    %v4825 = vsel %vm4822, %v4824, %v4820
    %v4826 = vmul.f32 1.0, %v4825
    %v4827 = vrcp.pop %v4809
    %v4828 = vmul.f32 %v4809, %v4827
    %v4829 = vsub.f32 1.0, %v4828
    %v4830 = vmul.f32 %v4827, %v4829
    %v4831 = vadd.f32 %v4827, %v4830
    %vm4832 = vweird.f32 %v4809
    %vm4833 = vweird.f32 %v4827
    %vm4834 = vmor %vm4832, %vm4833
    %v4835 = vsel %vm4834, %v4827, %v4831
    %v4836 = vand.u32 2147483647, %v4809
    %vm4837 = vcmp.eq.f32.partialorder %v4836, 8.507059e+37
    %v4838 = vand.u32 %v4809, 2147483648
    %v4839 = vor.u32 1.1754944e-38, %v4838
    %v4840 = vsel %vm4837, %v4839, %v4835
    %v4841 = vmul.f32 1.0, %v4840
    %v4842 = vrcp.pop %v4810
    %v4843 = vmul.f32 %v4810, %v4842
    %v4844 = vsub.f32 1.0, %v4843
    %v4845 = vmul.f32 %v4842, %v4844
    %v4846 = vadd.f32 %v4842, %v4845
    %vm4847 = vweird.f32 %v4810
    %vm4848 = vweird.f32 %v4842
    %vm4849 = vmor %vm4847, %vm4848
    %v4850 = vsel %vm4849, %v4842, %v4846
    %v4851 = vand.u32 2147483647, %v4810
    %vm4852 = vcmp.eq.f32.partialorder %v4851, 8.507059e+37
    %v4853 = vand.u32 %v4810, 2147483648
    %v4854 = vor.u32 1.1754944e-38, %v4853
    %v4855 = vsel %vm4852, %v4854, %v4850
    %v4856 = vmul.f32 1.0, %v4855
    %v4857 = vrcp.pop %v4811
    %v4858 = vmul.f32 %v4811, %v4857
    %v4859 = vsub.f32 1.0, %v4858
    %v4860 = vmul.f32 %v4857, %v4859
    %v4861 = vadd.f32 %v4857, %v4860
    %vm4862 = vweird.f32 %v4811
    %vm4863 = vweird.f32 %v4857
    %vm4864 = vmor %vm4862, %vm4863
    %v4865 = vsel %vm4864, %v4857, %v4861
    %v4866 = vand.u32 2147483647, %v4811
    %vm4867 = vcmp.eq.f32.partialorder %v4866, 8.507059e+37
    %v4868 = vand.u32 %v4811, 2147483648
    %v4869 = vor.u32 1.1754944e-38, %v4868
    %v4870 = vsel %vm4867, %v4869, %v4865
    %v4871 = vmul.f32 1.0, %v4870
    %v4872 = vmul.f32 %v4856, 2.0
    %v4873 = vsub.f32 %v4872, 1.0
    %v4875 = vrot.slane %v4693, 6
    %v4877 = vmul.f32 %v4841, %v4875
    %v4878 = vmul.f32 %v4826, %v4873
    %v4879 = vadd.f32 %v4877, %v4878
    %v4880 = vtanh.pop %v4879
    %v4881 = vmul.f32 %v4871, %v4880
    %v4882 = vld [vmem:[#allocation3 + $0x20] sm:$0x30]
    %v4883 = vld [vmem:[#allocation3 + $0x28] sm:$0x30]
    %v4884 = vld [vmem:[#allocation3 + $0x30] sm:$0x30]
    %v4885 = vld [vmem:[#allocation3 + $0x38] sm:$0x30]
    %v4887 = vrot.slane %v4881, 2
    %4889 = vmatpush.msra.mxu0 %v3780
    %4890 = vmatpush.msra.mxu0 %v3776
    %4891 = vmatpush.msra.mxu0 %v3772
    %4892 = vmatpush.msra.mxu0 %v3768
    %4893 = vmatpush.msra.mxu0 %v3764
    %4894 = vmatpush.msra.mxu0 %v3760
    %4895 = vmatpush.msra.mxu0 %v3756
    %4896 = vmatpush.msra.mxu0 %v3752
    %4897 = vmatpush.msra.mxu0 %v3748
    %4898 = vmatpush.msra.mxu0 %v3744
    %4899 = vmatpush.msra.mxu0 %v3740
    %4900 = vmatpush.msra.mxu0 %v3736
    %4901 = vmatpush.msra.mxu0 %v3732
    %4902 = vmatpush.msra.mxu0 %v3728
    %4903 = vmatpush.msra.mxu0 %v3724
    %4904 = vmatpush.msra.mxu0 %v3720
    %4905 = vmatmul.f32.gmra.mxu0 %v4887
    %v4906 = vpop.f32.mrf.mxu0
    %v4907 = vadd.f32 0.0, %v4906
    %4908 = vdwg.mxu0
    %4909 = vmatpush.msra.mxu0 %v3781
    %4910 = vmatpush.msra.mxu0 %v3777
    %4911 = vmatpush.msra.mxu0 %v3773
    %4912 = vmatpush.msra.mxu0 %v3769
    %4913 = vmatpush.msra.mxu0 %v3765
    %4914 = vmatpush.msra.mxu0 %v3761
    %4915 = vmatpush.msra.mxu0 %v3757
    %4916 = vmatpush.msra.mxu0 %v3753
    %4917 = vmatpush.msra.mxu0 %v3749
    %4918 = vmatpush.msra.mxu0 %v3745
    %4919 = vmatpush.msra.mxu0 %v3741
    %4920 = vmatpush.msra.mxu0 %v3737
    %4921 = vmatpush.msra.mxu0 %v3733
    %4922 = vmatpush.msra.mxu0 %v3729
    %4923 = vmatpush.msra.mxu0 %v3725
    %4924 = vmatpush.msra.mxu0 %v3721
    %4925 = vmatmul.f32.gmra.mxu0 %v4887
    %v4926 = vpop.f32.mrf.mxu0
    %v4927 = vadd.f32 0.0, %v4926
    %4928 = vdwg.mxu0
    %4929 = vmatpush.msra.mxu0 %v3782
    %4930 = vmatpush.msra.mxu0 %v3778
    %4931 = vmatpush.msra.mxu0 %v3774
    %4932 = vmatpush.msra.mxu0 %v3770
    %4933 = vmatpush.msra.mxu0 %v3766
    %4934 = vmatpush.msra.mxu0 %v3762
    %4935 = vmatpush.msra.mxu0 %v3758
    %4936 = vmatpush.msra.mxu0 %v3754
    %4937 = vmatpush.msra.mxu0 %v3750
    %4938 = vmatpush.msra.mxu0 %v3746
    %4939 = vmatpush.msra.mxu0 %v3742
    %4940 = vmatpush.msra.mxu0 %v3738
    %4941 = vmatpush.msra.mxu0 %v3734
    %4942 = vmatpush.msra.mxu0 %v3730
    %4943 = vmatpush.msra.mxu0 %v3726
    %4944 = vmatpush.msra.mxu0 %v3722
    %4945 = vmatmul.f32.gmra.mxu0 %v4887
    %v4946 = vpop.f32.mrf.mxu0
    %v4947 = vadd.f32 0.0, %v4946
    %4948 = vdwg.mxu0
    %4949 = vmatpush.msra.mxu0 %v3783
    %4950 = vmatpush.msra.mxu0 %v3779
    %4951 = vmatpush.msra.mxu0 %v3775
    %4952 = vmatpush.msra.mxu0 %v3771
    %4953 = vmatpush.msra.mxu0 %v3767
    %4954 = vmatpush.msra.mxu0 %v3763
    %4955 = vmatpush.msra.mxu0 %v3759
    %4956 = vmatpush.msra.mxu0 %v3755
    %4957 = vmatpush.msra.mxu0 %v3751
    %4958 = vmatpush.msra.mxu0 %v3747
    %4959 = vmatpush.msra.mxu0 %v3743
    %4960 = vmatpush.msra.mxu0 %v3739
    %4961 = vmatpush.msra.mxu0 %v3735
    %4962 = vmatpush.msra.mxu0 %v3731
    %4963 = vmatpush.msra.mxu0 %v3727
    %4964 = vmatpush.msra.mxu0 %v3723
    %4965 = vmatmul.f32.gmra.mxu0 %v4887
    %v4966 = vpop.f32.mrf.mxu0
    %v4967 = vadd.f32 0.0, %v4966
    %4968 = vdwg.mxu0
    %v4973 = vrot.slane %v4907, 4
    %v4974 = vrot.slane %v4927, 4
    %v4975 = vrot.slane %v4947, 4
    %v4976 = vrot.slane %v4967, 4
    %v4981 = vadd.f32 %v4882, %v4973
    %v4982 = vadd.f32 %v4883, %v4974
    %v4983 = vadd.f32 %v4884, %v4975
    %v4984 = vadd.f32 %v4885, %v4976
    %v4985 = vxor.u32 %v4981, 2147483648
    %v4986 = vxor.u32 %v4982, 2147483648
    %v4987 = vxor.u32 %v4983, 2147483648
    %v4988 = vxor.u32 %v4984, 2147483648
    %v4989 = vmul.f32 %v4985, 1.442695
    %v4990 = vpow.pop %v4989
    %v4991 = vmul.f32 %v4986, 1.442695
    %v4992 = vpow.pop %v4991
    %v4993 = vmul.f32 %v4987, 1.442695
    %v4994 = vpow.pop %v4993
    %v4995 = vmul.f32 %v4988, 1.442695
    %v4996 = vpow.pop %v4995
    %v4997 = vadd.f32 %v4990, 1.0
    %v4998 = vadd.f32 %v4992, 1.0
    %v4999 = vadd.f32 %v4994, 1.0
    %v5000 = vadd.f32 %v4996, 1.0
    %v5001 = vrcp.pop %v4997
    %v5002 = vmul.f32 %v4997, %v5001
    %v5003 = vsub.f32 1.0, %v5002
    %v5004 = vmul.f32 %v5001, %v5003
    %v5005 = vadd.f32 %v5001, %v5004
    %vm5006 = vweird.f32 %v4997
    %vm5007 = vweird.f32 %v5001
    %vm5008 = vmor %vm5006, %vm5007
    %v5009 = vsel %vm5008, %v5001, %v5005
    %v5010 = vand.u32 2147483647, %v4997
    %vm5011 = vcmp.eq.f32.partialorder %v5010, 8.507059e+37
    %v5012 = vand.u32 %v4997, 2147483648
    %v5013 = vor.u32 1.1754944e-38, %v5012
    %v5014 = vsel %vm5011, %v5013, %v5009
    %v5015 = vmul.f32 1.0, %v5014
    %v5016 = vrcp.pop %v4998
    %v5017 = vmul.f32 %v4998, %v5016
    %v5018 = vsub.f32 1.0, %v5017
    %v5019 = vmul.f32 %v5016, %v5018
    %v5020 = vadd.f32 %v5016, %v5019
    %vm5021 = vweird.f32 %v4998
    %vm5022 = vweird.f32 %v5016
    %vm5023 = vmor %vm5021, %vm5022
    %v5024 = vsel %vm5023, %v5016, %v5020
    %v5025 = vand.u32 2147483647, %v4998
    %vm5026 = vcmp.eq.f32.partialorder %v5025, 8.507059e+37
    %v5027 = vand.u32 %v4998, 2147483648
    %v5028 = vor.u32 1.1754944e-38, %v5027
    %v5029 = vsel %vm5026, %v5028, %v5024
    %v5030 = vmul.f32 1.0, %v5029
    %v5031 = vrcp.pop %v4999
    %v5032 = vmul.f32 %v4999, %v5031
    %v5033 = vsub.f32 1.0, %v5032
    %v5034 = vmul.f32 %v5031, %v5033
    %v5035 = vadd.f32 %v5031, %v5034
    %vm5036 = vweird.f32 %v4999
    %vm5037 = vweird.f32 %v5031
    %vm5038 = vmor %vm5036, %vm5037
    %v5039 = vsel %vm5038, %v5031, %v5035
    %v5040 = vand.u32 2147483647, %v4999
    %vm5041 = vcmp.eq.f32.partialorder %v5040, 8.507059e+37
    %v5042 = vand.u32 %v4999, 2147483648
    %v5043 = vor.u32 1.1754944e-38, %v5042
    %v5044 = vsel %vm5041, %v5043, %v5039
    %v5045 = vmul.f32 1.0, %v5044
    %v5046 = vrcp.pop %v5000
    %v5047 = vmul.f32 %v5000, %v5046
    %v5048 = vsub.f32 1.0, %v5047
    %v5049 = vmul.f32 %v5046, %v5048
    %v5050 = vadd.f32 %v5046, %v5049
    %vm5051 = vweird.f32 %v5000
    %vm5052 = vweird.f32 %v5046
    %vm5053 = vmor %vm5051, %vm5052
    %v5054 = vsel %vm5053, %v5046, %v5050
    %v5055 = vand.u32 2147483647, %v5000
    %vm5056 = vcmp.eq.f32.partialorder %v5055, 8.507059e+37
    %v5057 = vand.u32 %v5000, 2147483648
    %v5058 = vor.u32 1.1754944e-38, %v5057
    %v5059 = vsel %vm5056, %v5058, %v5054
    %v5060 = vmul.f32 1.0, %v5059
    %v5061 = vmul.f32 %v5045, 2.0
    %v5062 = vsub.f32 %v5061, 1.0
    %v5064 = vrot.slane %v4879, 6
    %v5066 = vmul.f32 %v5030, %v5064
    %v5067 = vmul.f32 %v5015, %v5062
    %v5068 = vadd.f32 %v5066, %v5067
    %v5069 = vtanh.pop %v5068
    %v5070 = vmul.f32 %v5060, %v5069
    %v5071 = vld [vmem:[#allocation3 + $0x20] sm:$0xc0]
    %v5072 = vld [vmem:[#allocation3 + $0x28] sm:$0xc0]
    %v5073 = vld [vmem:[#allocation3 + $0x30] sm:$0xc0]
    %v5074 = vld [vmem:[#allocation3 + $0x38] sm:$0xc0]
    %v5076 = vrot.slane %v5070, 4
    %5078 = vmatpush.msra.mxu0 %v3780
    %5079 = vmatpush.msra.mxu0 %v3776
    %5080 = vmatpush.msra.mxu0 %v3772
    %5081 = vmatpush.msra.mxu0 %v3768
    %5082 = vmatpush.msra.mxu0 %v3764
    %5083 = vmatpush.msra.mxu0 %v3760
    %5084 = vmatpush.msra.mxu0 %v3756
    %5085 = vmatpush.msra.mxu0 %v3752
    %5086 = vmatpush.msra.mxu0 %v3748
    %5087 = vmatpush.msra.mxu0 %v3744
    %5088 = vmatpush.msra.mxu0 %v3740
    %5089 = vmatpush.msra.mxu0 %v3736
    %5090 = vmatpush.msra.mxu0 %v3732
    %5091 = vmatpush.msra.mxu0 %v3728
    %5092 = vmatpush.msra.mxu0 %v3724
    %5093 = vmatpush.msra.mxu0 %v3720
    %5094 = vmatmul.f32.gmra.mxu0 %v5076
    %v5095 = vpop.f32.mrf.mxu0
    %v5096 = vadd.f32 0.0, %v5095
    %5097 = vdwg.mxu0
    %5098 = vmatpush.msra.mxu0 %v3781
    %5099 = vmatpush.msra.mxu0 %v3777
    %5100 = vmatpush.msra.mxu0 %v3773
    %5101 = vmatpush.msra.mxu0 %v3769
    %5102 = vmatpush.msra.mxu0 %v3765
    %5103 = vmatpush.msra.mxu0 %v3761
    %5104 = vmatpush.msra.mxu0 %v3757
    %5105 = vmatpush.msra.mxu0 %v3753
    %5106 = vmatpush.msra.mxu0 %v3749
    %5107 = vmatpush.msra.mxu0 %v3745
    %5108 = vmatpush.msra.mxu0 %v3741
    %5109 = vmatpush.msra.mxu0 %v3737
    %5110 = vmatpush.msra.mxu0 %v3733
    %5111 = vmatpush.msra.mxu0 %v3729
    %5112 = vmatpush.msra.mxu0 %v3725
    %5113 = vmatpush.msra.mxu0 %v3721
    %5114 = vmatmul.f32.gmra.mxu0 %v5076
    %v5115 = vpop.f32.mrf.mxu0
    %v5116 = vadd.f32 0.0, %v5115
    %5117 = vdwg.mxu0
    %5118 = vmatpush.msra.mxu0 %v3782
    %5119 = vmatpush.msra.mxu0 %v3778
    %5120 = vmatpush.msra.mxu0 %v3774
    %5121 = vmatpush.msra.mxu0 %v3770
    %5122 = vmatpush.msra.mxu0 %v3766
    %5123 = vmatpush.msra.mxu0 %v3762
    %5124 = vmatpush.msra.mxu0 %v3758
    %5125 = vmatpush.msra.mxu0 %v3754
    %5126 = vmatpush.msra.mxu0 %v3750
    %5127 = vmatpush.msra.mxu0 %v3746
    %5128 = vmatpush.msra.mxu0 %v3742
    %5129 = vmatpush.msra.mxu0 %v3738
    %5130 = vmatpush.msra.mxu0 %v3734
    %5131 = vmatpush.msra.mxu0 %v3730
    %5132 = vmatpush.msra.mxu0 %v3726
    %5133 = vmatpush.msra.mxu0 %v3722
    %5134 = vmatmul.f32.gmra.mxu0 %v5076
    %v5135 = vpop.f32.mrf.mxu0
    %v5136 = vadd.f32 0.0, %v5135
    %5137 = vdwg.mxu0
    %5138 = vmatpush.msra.mxu0 %v3783
    %5139 = vmatpush.msra.mxu0 %v3779
    %5140 = vmatpush.msra.mxu0 %v3775
    %5141 = vmatpush.msra.mxu0 %v3771
    %5142 = vmatpush.msra.mxu0 %v3767
    %5143 = vmatpush.msra.mxu0 %v3763
    %5144 = vmatpush.msra.mxu0 %v3759
    %5145 = vmatpush.msra.mxu0 %v3755
    %5146 = vmatpush.msra.mxu0 %v3751
    %5147 = vmatpush.msra.mxu0 %v3747
    %5148 = vmatpush.msra.mxu0 %v3743
    %5149 = vmatpush.msra.mxu0 %v3739
    %5150 = vmatpush.msra.mxu0 %v3735
    %5151 = vmatpush.msra.mxu0 %v3731
    %5152 = vmatpush.msra.mxu0 %v3727
    %5153 = vmatpush.msra.mxu0 %v3723
    %5154 = vmatmul.f32.gmra.mxu0 %v5076
    %v5155 = vpop.f32.mrf.mxu0
    %v5156 = vadd.f32 0.0, %v5155
    %5157 = vdwg.mxu0
    %v5162 = vrot.slane %v5096, 2
    %v5163 = vrot.slane %v5116, 2
    %v5164 = vrot.slane %v5136, 2
    %v5165 = vrot.slane %v5156, 2
    %v5170 = vadd.f32 %v5071, %v5162
    %v5171 = vadd.f32 %v5072, %v5163
    %v5172 = vadd.f32 %v5073, %v5164
    %v5173 = vadd.f32 %v5074, %v5165
    %v5174 = vxor.u32 %v5170, 2147483648
    %v5175 = vxor.u32 %v5171, 2147483648
    %v5176 = vxor.u32 %v5172, 2147483648
    %v5177 = vxor.u32 %v5173, 2147483648
    %v5178 = vmul.f32 %v5174, 1.442695
    %v5179 = vpow.pop %v5178
    %v5180 = vmul.f32 %v5175, 1.442695
    %v5181 = vpow.pop %v5180
    %v5182 = vmul.f32 %v5176, 1.442695
    %v5183 = vpow.pop %v5182
    %v5184 = vmul.f32 %v5177, 1.442695
    %v5185 = vpow.pop %v5184
    %v5186 = vadd.f32 %v5179, 1.0
    %v5187 = vadd.f32 %v5181, 1.0
    %v5188 = vadd.f32 %v5183, 1.0
    %v5189 = vadd.f32 %v5185, 1.0
    %v5190 = vrcp.pop %v5186
    %v5191 = vmul.f32 %v5186, %v5190
    %v5192 = vsub.f32 1.0, %v5191
    %v5193 = vmul.f32 %v5190, %v5192
    %v5194 = vadd.f32 %v5190, %v5193
    %vm5195 = vweird.f32 %v5186
    %vm5196 = vweird.f32 %v5190
    %vm5197 = vmor %vm5195, %vm5196
    %v5198 = vsel %vm5197, %v5190, %v5194
    %v5199 = vand.u32 2147483647, %v5186
    %vm5200 = vcmp.eq.f32.partialorder %v5199, 8.507059e+37
    %v5201 = vand.u32 %v5186, 2147483648
    %v5202 = vor.u32 1.1754944e-38, %v5201
    %v5203 = vsel %vm5200, %v5202, %v5198
    %v5204 = vmul.f32 1.0, %v5203
    %v5205 = vrcp.pop %v5187
    %v5206 = vmul.f32 %v5187, %v5205
    %v5207 = vsub.f32 1.0, %v5206
    %v5208 = vmul.f32 %v5205, %v5207
    %v5209 = vadd.f32 %v5205, %v5208
    %vm5210 = vweird.f32 %v5187
    %vm5211 = vweird.f32 %v5205
    %vm5212 = vmor %vm5210, %vm5211
    %v5213 = vsel %vm5212, %v5205, %v5209
    %v5214 = vand.u32 2147483647, %v5187
    %vm5215 = vcmp.eq.f32.partialorder %v5214, 8.507059e+37
    %v5216 = vand.u32 %v5187, 2147483648
    %v5217 = vor.u32 1.1754944e-38, %v5216
    %v5218 = vsel %vm5215, %v5217, %v5213
    %v5219 = vmul.f32 1.0, %v5218
    %v5220 = vrcp.pop %v5188
    %v5221 = vmul.f32 %v5188, %v5220
    %v5222 = vsub.f32 1.0, %v5221
    %v5223 = vmul.f32 %v5220, %v5222
    %v5224 = vadd.f32 %v5220, %v5223
    %vm5225 = vweird.f32 %v5188
    %vm5226 = vweird.f32 %v5220
    %vm5227 = vmor %vm5225, %vm5226
    %v5228 = vsel %vm5227, %v5220, %v5224
    %v5229 = vand.u32 2147483647, %v5188
    %vm5230 = vcmp.eq.f32.partialorder %v5229, 8.507059e+37
    %v5231 = vand.u32 %v5188, 2147483648
    %v5232 = vor.u32 1.1754944e-38, %v5231
    %v5233 = vsel %vm5230, %v5232, %v5228
    %v5234 = vmul.f32 1.0, %v5233
    %v5235 = vrcp.pop %v5189
    %v5236 = vmul.f32 %v5189, %v5235
    %v5237 = vsub.f32 1.0, %v5236
    %v5238 = vmul.f32 %v5235, %v5237
    %v5239 = vadd.f32 %v5235, %v5238
    %vm5240 = vweird.f32 %v5189
    %vm5241 = vweird.f32 %v5235
    %vm5242 = vmor %vm5240, %vm5241
    %v5243 = vsel %vm5242, %v5235, %v5239
    %v5244 = vand.u32 2147483647, %v5189
    %vm5245 = vcmp.eq.f32.partialorder %v5244, 8.507059e+37
    %v5246 = vand.u32 %v5189, 2147483648
    %v5247 = vor.u32 1.1754944e-38, %v5246
    %v5248 = vsel %vm5245, %v5247, %v5243
    %v5249 = vmul.f32 1.0, %v5248
    %v5250 = vmul.f32 %v5234, 2.0
    %v5251 = vsub.f32 %v5250, 1.0
    %v5253 = vrot.slane %v5068, 6
    %v5255 = vmul.f32 %v5219, %v5253
    %v5256 = vmul.f32 %v5204, %v5251
    %v5257 = vadd.f32 %v5255, %v5256
    %v5258 = vtanh.pop %v5257
    %v5259 = vmul.f32 %v5249, %v5258
    %v5260 = vld [vmem:[%s10] sm:$0xff]
    %v5261 = vld [vmem:[%s10 + $0x8] sm:$0xff]
    %v5262 = vld [vmem:[%s10 + $0x10] sm:$0xff]
    %v5263 = vld [vmem:[%s10 + $0x18] sm:$0xff]
    %v5264 = vld [vmem:[%s10 + $0x20] sm:$0xff]
    %v5265 = vld [vmem:[%s10 + $0x28] sm:$0xff]
    %v5266 = vld [vmem:[%s10 + $0x30] sm:$0xff]
    %v5267 = vld [vmem:[%s10 + $0x38] sm:$0xff]
    %v5268 = vld [vmem:[%s10 + $0x40] sm:$0xff]
    %v5269 = vld [vmem:[%s10 + $0x48] sm:$0xff]
    %v5270 = vld [vmem:[%s10 + $0x50] sm:$0xff]
    %v5271 = vld [vmem:[%s10 + $0x58] sm:$0xff]
    %v5272 = vld [vmem:[%s10 + $0x60] sm:$0xff]
    %v5273 = vld [vmem:[%s10 + $0x68] sm:$0xff]
    %v5274 = vld [vmem:[%s10 + $0x70] sm:$0xff]
    %v5275 = vld [vmem:[%s10 + $0x78] sm:$0xff]
    %v5276 = vld [vmem:[%s11] sm:$0x1]
    %v5278 = vperm.slane %v5276, 0
    %v5281 = vrot.slane %v5259, 6
    %5283 = vmatpush.msra.mxu0 %v5275
    %5284 = vmatpush.msra.mxu0 %v5274
    %5285 = vmatpush.msra.mxu0 %v5273
    %5286 = vmatpush.msra.mxu0 %v5272
    %5287 = vmatpush.msra.mxu0 %v5271
    %5288 = vmatpush.msra.mxu0 %v5270
    %5289 = vmatpush.msra.mxu0 %v5269
    %5290 = vmatpush.msra.mxu0 %v5268
    %5291 = vmatpush.msra.mxu0 %v5267
    %5292 = vmatpush.msra.mxu0 %v5266
    %5293 = vmatpush.msra.mxu0 %v5265
    %5294 = vmatpush.msra.mxu0 %v5264
    %5295 = vmatpush.msra.mxu0 %v5263
    %5296 = vmatpush.msra.mxu0 %v5262
    %5297 = vmatpush.msra.mxu0 %v5261
    %5298 = vmatpush.msra.mxu0 %v5260
    %5299 = vmatmul.f32.gmra.mxu0 %v5281
    %v5300 = vpop.f32.mrf.mxu0
    %v5301 = vadd.f32 %v5278, %v5300
    %5302 = vdwg.mxu0
    %v5303 = vmax.f32 %v5301, 0.0
    %v5304 = vld [vmem:[%s12] sm:$0xff]
    %v5305 = vld [vmem:[%s12 + $0x8] sm:$0xff]
    %v5306 = vld [vmem:[%s12 + $0x10] sm:$0xff]
    %v5307 = vld [vmem:[%s12 + $0x18] sm:$0xff]
    %v5308 = vld [vmem:[%s12 + $0x20] sm:$0xff]
    %v5309 = vld [vmem:[%s12 + $0x28] sm:$0xff]
    %v5310 = vld [vmem:[%s12 + $0x30] sm:$0xff]
    %v5311 = vld [vmem:[%s12 + $0x38] sm:$0xff]
    %v5312 = vld [vmem:[%s13] sm:$0x1]
    %v5314 = vperm.slane %v5312, 0
    %vm5316 = vcmask 523264
    %v5318 = vsel %vm5316, %v5303, 0
    %5320 = vmatpush.msra.mxu0 0.0
    %5321 = vmatpush.msra.mxu0 0.0
    %5322 = vmatpush.msra.mxu0 0.0
    %5323 = vmatpush.msra.mxu0 0.0
    %5324 = vmatpush.msra.mxu0 0.0
    %5325 = vmatpush.msra.mxu0 0.0
    %5326 = vmatpush.msra.mxu0 0.0
    %5327 = vmatpush.msra.mxu0 0.0
    %5328 = vmatpush.msra.mxu0 %v5311
    %5329 = vmatpush.msra.mxu0 %v5310
    %5330 = vmatpush.msra.mxu0 %v5309
    %5331 = vmatpush.msra.mxu0 %v5308
    %5332 = vmatpush.msra.mxu0 %v5307
    %5333 = vmatpush.msra.mxu0 %v5306
    %5334 = vmatpush.msra.mxu0 %v5305
    %5335 = vmatpush.msra.mxu0 %v5304
    %5336 = vmatmul.f32.gmra.mxu0 %v5318
    %v5337 = vpop.f32.mrf.mxu0
    %v5338 = vadd.f32 %v5314, %v5337
    %5339 = vdwg.mxu0
    %v5340 = vmax.f32 %v5338, 0.0
    %v5341 = vld [vmem:[%s14] sm:$0xff]
    %v5342 = vld [vmem:[%s14 + $0x8] sm:$0xff]
    %v5343 = vld [vmem:[%s14 + $0x10] sm:$0xff]
    %v5344 = vld [vmem:[%s14 + $0x18] sm:$0xff]
    %v5345 = vld [vmem:[%s14 + $0x20] sm:$0xff]
    %v5346 = vld [vmem:[%s14 + $0x28] sm:$0xff]
    %v5347 = vld [vmem:[%s14 + $0x30] sm:$0xff]
    %v5348 = vld [vmem:[%s14 + $0x38] sm:$0xff]
    %v5349 = vld [vmem:[%s15] sm:$0x3]
    %v5351 = vperm.slane %v5349, 0
    %v5352 = vperm.slane %v5349, 1
    %vm5355 = vcmask 261120
    %v5357 = vsel %vm5355, %v5340, 0
    %5359 = vmatpush.msra.mxu0 0.0
    %5360 = vmatpush.msra.mxu0 0.0
    %5361 = vmatpush.msra.mxu0 0.0
    %5362 = vmatpush.msra.mxu0 0.0
    %5363 = vmatpush.msra.mxu0 0.0
    %5364 = vmatpush.msra.mxu0 0.0
    %5365 = vmatpush.msra.mxu0 0.0
    %5366 = vmatpush.msra.mxu0 0.0
    %5367 = vmatpush.msra.mxu0 0.0
    %5368 = vmatpush.msra.mxu0 0.0
    %5369 = vmatpush.msra.mxu0 0.0
    %5370 = vmatpush.msra.mxu0 0.0
    %5371 = vmatpush.msra.mxu0 %v5347
    %5372 = vmatpush.msra.mxu0 %v5345
    %5373 = vmatpush.msra.mxu0 %v5343
    %5374 = vmatpush.msra.mxu0 %v5341
    %5375 = vmatmul.f32.gmra.mxu0 %v5357
    %v5376 = vpop.f32.mrf.mxu0
    %v5377 = vadd.f32 %v5351, %v5376
    %5378 = vdwg.mxu0
    %5379 = vmatpush.msra.mxu0 0.0
    %5380 = vmatpush.msra.mxu0 0.0
    %5381 = vmatpush.msra.mxu0 0.0
    %5382 = vmatpush.msra.mxu0 0.0
    %5383 = vmatpush.msra.mxu0 0.0
    %5384 = vmatpush.msra.mxu0 0.0
    %5385 = vmatpush.msra.mxu0 0.0
    %5386 = vmatpush.msra.mxu0 0.0
    %5387 = vmatpush.msra.mxu0 0.0
    %5388 = vmatpush.msra.mxu0 0.0
    %5389 = vmatpush.msra.mxu0 0.0
    %5390 = vmatpush.msra.mxu0 0.0
    %5391 = vmatpush.msra.mxu0 %v5348
    %5392 = vmatpush.msra.mxu0 %v5346
    %5393 = vmatpush.msra.mxu0 %v5344
    %5394 = vmatpush.msra.mxu0 %v5342
    %5395 = vmatmul.f32.gmra.mxu0 %v5357
    %v5396 = vpop.f32.mrf.mxu0
    %v5397 = vadd.f32 %v5352, %v5396
    %5398 = vdwg.mxu0
    %v5401 = vrot.slane %v5397, 6
    %vm5402 = vcmask 1041408
    %v5403 = vsel %vm5402, %v5377, %v5401
    %5405 = vst [vmem:[#allocation13] sm:$0xf] %v5403
    // Predicated region
    $region86: #{tpu_custom_call.1} parent=1 // pred_check
      _
    $region87: #{tpu_custom_call.1} parent=1 // pred_check_branch
      %5407 = sbr.rel (0) target = $region89
    $region88: #{tpu_custom_call.1} parent=1 // pred_region
      %5409 = vsyncadd [#allocation6], 0
      %s5411 = sshll.u32 [#allocation13], 4
      %s5412 = int_to_ptr.vmem [resolvable:$true] %s5411
      %s5413 = sshll.u32 %s16, 4
      %s5414 = int_to_ptr.hbm [resolvable:$true] %s5413
      %5416 = dma.vmem_to_hbm [thread:$0]  %s5412, 64, %s5414, [#allocation6]
    $region89: #{tpu_custom_call.1} parent=1 // pred_fallthru
      _
    // Predicated region
    $region90: #{tpu_custom_call.1} parent=1 // pred_check
      _
    $region91: #{tpu_custom_call.1} parent=1 // pred_check_branch
      %5418 = sbr.rel (0) target = $region93
    $region92: #{tpu_custom_call.1} parent=1 // pred_region
      %5420 = dma.done [#allocation6], 64
    $region93: #{tpu_custom_call.1} parent=1 // pred_fallthru
      _
    %5421 = vsyncpa [#allocation5], 1
    %5422 = vsyncpa [#allocation8], 1
    %5423 = vsyncpa [#allocation11], 1
    %5424 = vsyncpa [#allocation6], 1

</llo_original>
